<compile_context>
chip_gen: v7x
topology: tpu7x:2x2x1
jax: 0.10.0
libtpu: 0.0.40
codegen_flags: <defaults>
</compile_context>

<pallas_src>
import jax
import jax.numpy as jnp
import numpy as np
from jax.experimental import pallas as pl
from jax.experimental.pallas import tpu as pltpu


# ----------------------------------------------------------------------------- kernel

def aux_inception_kernel(x_ref, w0_ref, b0_ref, w1_ref, b1_ref, wfc_ref, bfc_ref,
                         out_ref, y0_ref):
    # x_ref:   (25, TN, 768)  bf16  pooled activations, tap p = kh*5 + kw on axis 0
    # w0_ref:  (768, 128)     bf16  conv0 weight (BN scale folded)
    # b0_ref:  (1, 128)       f32   conv0 BN shift
    # w1_ref:  (3200, 768)    bf16  conv1 weight packed as (p*128 + ci, co), BN scale folded
    # b1_ref:  (1, 768)       f32   conv1 BN shift
    # wfc_ref: (768, 1024)    bf16  fc weight, lanes padded 1000 -> 1024
    # bfc_ref: (1, 1024)      f32   fc bias, padded
    # out_ref: (TN, 1024)     f32
    # y0_ref:  (TN, 3200)     bf16  VMEM scratch: conv0 outputs lane-packed by tap
    tn = out_ref.shape[0]

    # --- conv0 (1x1, 768 -> 128) over all 25 taps as ONE matmul, M = 25*TN ---
    x_all = x_ref[...].reshape(25 * tn, 768)          # layout-free collapse (TN mult. of 16)
    y0f = jnp.dot(x_all, w0_ref[...], preferred_element_type=jnp.float32)   # (25*TN, 128) f32

    b0 = b0_ref[...]                                  # (1, 128) -- implicit broadcast in add
    for p in range(25):                               # fuse bias+ReLU+cast into the relayout
        blk = jnp.maximum(y0f[p * tn:(p + 1) * tn, :] + b0, 0.0)
        y0_ref[:, p * 128:(p + 1) * 128] = blk.astype(jnp.bfloat16)

    # --- conv1 (5x5 'valid' on the 5x5 map, 128 -> 768) as ONE K=3200 matmul ---
    y1 = jnp.dot(y0_ref[...], w1_ref[...], preferred_element_type=jnp.float32)   # (TN, 768)
    y1 = jnp.maximum(y1 + b1_ref[...], 0.0).astype(jnp.bfloat16)

    # flatten is a no-op; dropout(p=0.7) is identity in eval mode.
    # TODO(synk): training-mode stochastic dropout masking is not implemented.
    out = jnp.dot(y1, wfc_ref[...], preferred_element_type=jnp.float32) + bfc_ref[...]
    out_ref[...] = out.astype(out_ref.dtype)                                      # (TN, 1024)


# ----------------------------------------------------------------------------- wrapper

def _round_up(a, b):
    return ((a + b - 1) // b) * b


def _pool_matrix(H, W):
    """(H*W, 25) averaging matrix reproducing F.adaptive_avg_pool2d(x, (5,5)) bins.

    Bin i covers rows [floor(i*H/5), ceil((i+1)*H/5)); same for columns — exact PyTorch
    uneven-bin semantics (e.g. 17x17)."""
    P = np.zeros((H * W, 25), np.float32)
    for i in range(5):
        h0, h1 = (i * H) // 5, ((i + 1) * H + 4) // 5
        for j in range(5):
            w0, w1 = (j * W) // 5, ((j + 1) * W + 4) // 5
            inv = 1.0 / float((h1 - h0) * (w1 - w0))
            for h in range(h0, h1):
                for w in range(w0, w1):
                    P[h * W + w, i * 5 + j] = inv
    return P


def adaptive_avg_pool_5x5_matmul(x_nchw):
    """adaptive_avg_pool2d(x, (5,5)) as a single pooling matmul -> (25, N, C) bf16."""
    N, C, H, W = x_nchw.shape
    P = jnp.asarray(_pool_matrix(H, W))                                  # (H*W, 25)
    pooled = jnp.dot(x_nchw.reshape(N * C, H * W), P,
                     precision=jax.lax.Precision.HIGHEST)                # (N*C, 25), one HBM pass
    pooled = jnp.transpose(pooled.reshape(N, C, 25), (2, 0, 1))          # (25, N, C)
    return pooled.astype(jnp.bfloat16)


def adaptive_avg_pool_5x5_ref(x_nchw):
    """Explicit slice-mean pooling (PyTorch semantics) used by the f32 reference."""
    N, C, H, W = x_nchw.shape
    cells = []
    for i in range(5):
        h0, h1 = (i * H) // 5, ((i + 1) * H + 4) // 5
        for j in range(5):
            w0, w1 = (j * W) // 5, ((j + 1) * W + 4) // 5
            cells.append(jnp.mean(x_nchw[:, :, h0:h1, w0:w1], axis=(2, 3)))
    return jnp.stack(cells, axis=0)                                      # (25, N, C)


def aux_inception_forward(x_nchw, params):
    """x_nchw: (N, 768, H, W), H, W >= 5."""
    N, C, H, W = x_nchw.shape
    assert C == 768 and H >= 5 and W >= 5

    # Pool in the wrapper (single pass over the big NCHW tensor), emit kernel layout.
    x_k = adaptive_avg_pool_5x5_matmul(x_nchw)                           # (25, N, 768) bf16

    # Batch tile: multiple of 16 sublanes (bf16 native packing), capped at 256.
    TN = min(256, _round_up(N, 16))
    # v7x has two TensorCores: prefer >= 2 parallel grid steps when the batch allows it.
    if N >= 32 and _round_up(N, TN) // TN < 2:
        TN = _round_up((N + 1) // 2, 16)
    N_pad = _round_up(N, TN)
    if N_pad > N:
        x_k = jnp.pad(x_k, ((0, 0), (0, N_pad - N), (0, 0)))

    w0, b0 = params["w0"], params["b0"]
    w1, b1 = params["w1"], params["b1"]
    wfc, bfc = params["wfc"], params["bfc"]

    # Advisory cost for XLA scheduling around the custom call.
    flops = 2 * N_pad * (25 * 768 * 128 + 3200 * 768 + 768 * 1024)
    bytes_accessed = (
        25 * N_pad * 768 * 2                                  # pooled activations (bf16)
        + (768 * 128 + 3200 * 768 + 768 * 1024) * 2           # bf16 weights
        + (128 + 768 + 1024) * 4                              # f32 biases
        + N_pad * 1024 * 4                                    # f32 output
    )

    const = dict(pipeline_mode=pl.Buffered(1))  # weights never change across grid steps

    out_padded = pl.pallas_call(
        aux_inception_kernel,
        out_shape=jax.ShapeDtypeStruct((N_pad, 1024), jnp.float32),
        grid_spec=pltpu.PrefetchScalarGridSpec(
            num_scalar_prefetch=0,
            grid=(N_pad // TN,),
            in_specs=[
                pl.BlockSpec((25, TN, 768), lambda n: (0, n, 0)),
                pl.BlockSpec((768, 128), lambda n: (0, 0), **const),
                pl.BlockSpec((1, 128), lambda n: (0, 0), **const),
                pl.BlockSpec((3200, 768), lambda n: (0, 0), **const),
                pl.BlockSpec((1, 768), lambda n: (0, 0), **const),
                pl.BlockSpec((768, 1024), lambda n: (0, 0), **const),
                pl.BlockSpec((1, 1024), lambda n: (0, 0), **const),
            ],
            out_specs=pl.BlockSpec((TN, 1024), lambda n: (n, 0)),
            scratch_shapes=[pltpu.VMEM((TN, 3200), jnp.bfloat16)],
        ),
        compiler_params=pltpu.CompilerParams(
            dimension_semantics=("parallel",),
            vmem_limit_bytes=48 * 1024 * 1024,
        ),
        cost_estimate=pl.CostEstimate(
            flops=flops, transcendentals=0, bytes_accessed=bytes_accessed),
    )(x_k, w0, b0, w1, b1, wfc, bfc)

    return out_padded[:N, :1000]


# ----------------------------------------------------------------------------- params

def make_params():
    """Deterministic synthetic parameters with the same shapes as the PyTorch module."""
    keys = jax.random.split(jax.random.PRNGKey(0), 12)
    eps = 1e-5  # nn.BatchNorm2d default

    # conv0: Conv2d(768, 128, k=1, bias=False)  -> weight (128, 768, 1, 1)
    w0_t = jax.random.normal(keys[0], (128, 768, 1, 1), jnp.float32) * 0.05
    # conv1: Conv2d(128, 768, k=5, bias=False)  -> weight (768, 128, 5, 5)
    w1_t = jax.random.normal(keys[1], (768, 128, 5, 5), jnp.float32) * 0.02
    # fc: Linear(768, 1000)
    fc_w = jax.random.normal(keys[2], (1000, 768), jnp.float32) * 0.02
    fc_b = jax.random.normal(keys[3], (1000,), jnp.float32) * 0.02

    # BatchNorm2d(128) -- inference stats folded into scale/shift
    g0 = 1.0 + 0.1 * jax.random.normal(keys[4], (128,), jnp.float32)
    be0 = 0.1 * jax.random.normal(keys[5], (128,), jnp.float32)
    rm0 = 0.1 * jax.random.normal(keys[6], (128,), jnp.float32)
    rv0 = jnp.abs(jax.random.normal(keys[7], (128,), jnp.float32)) + 0.5
    s0 = g0 / jnp.sqrt(rv0 + eps)
    b0 = be0 - rm0 * s0

    # BatchNorm2d(768)
    g1 = 1.0 + 0.1 * jax.random.normal(keys[8], (768,), jnp.float32)
    be1 = 0.1 * jax.random.normal(keys[9], (768,), jnp.float32)
    rm1 = 0.1 * jax.random.normal(keys[10], (768,), jnp.float32)
    rv1 = jnp.abs(jax.random.normal(keys[11], (768,), jnp.float32)) + 0.5
    s1 = g1 / jnp.sqrt(rv1 + eps)
    b1 = be1 - rm1 * s1

    # ---- kernel-ready packing (BN scale folded into conv weights, bf16 operands) ----
    w0_k = (w0_t[:, :, 0, 0] * s0[:, None]).T                               # (768, 128)
    w1_k = jnp.transpose(w1_t * s1[:, None, None, None], (2, 3, 1, 0))      # (5,5,128,768)
    w1_k = w1_k.reshape(25 * 128, 768)                                      # row = p*128 + ci
    wfc_k = jnp.zeros((768, 1024), jnp.float32).at[:, :1000].set(fc_w.T)    # pad 1000->1024
    bfc_k = jnp.zeros((1, 1024), jnp.float32).at[:, :1000].set(fc_b)

    return {
        "w0": w0_k.astype(jnp.bfloat16),
        "b0": b0.reshape(1, 128),
        "w1": w1_k.astype(jnp.bfloat16),
        "b1": b1.reshape(1, 768),
        "wfc": wfc_k.astype(jnp.bfloat16),
        "bfc": bfc_k,
        # original-layout copies for the reference check
        "w0_t": w0_t, "w1_t": w1_t, "fc_w": fc_w, "fc_b": fc_b,
        "s0_v": s0, "b0_v": b0, "s1_v": s1, "b1_v": b1,
    }


# ----------------------------------------------------------------------------- reference

def reference(x_nchw, p):
    """Pure-JAX f32 reference with identical inference semantics (incl. uneven-bin pooling)."""
    pooled = adaptive_avg_pool_5x5_ref(x_nchw)                   # (25, N, 768)
    xp = jnp.transpose(pooled, (1, 0, 2))                        # (N, 25, 768)
    y0 = jnp.einsum("npc,oc->npo", xp, p["w0_t"][:, :, 0, 0])    # (N, 25, 128)
    y0 = jnp.maximum(y0 * p["s0_v"][None, None, :] + p["b0_v"][None, None, :], 0.0)
    w1r = p["w1_t"].reshape(768, 128, 25)                        # (o, ci, p)
    y1 = jnp.einsum("npc,ocp->no", y0, w1r)                      # (N, 768)
    y1 = jnp.maximum(y1 * p["s1_v"][None, :] + p["b1_v"][None, :], 0.0)
    return y1 @ p["fc_w"].T + p["fc_b"][None, :]                 # (N, 1000)


# ----------------------------------------------------------------------------- main

if __name__ == "__main__":
    key = jax.random.PRNGKey(0)
    # Real Inception-v3 aux-head spatial size (17x17) to exercise uneven pooling bins.
    x = jax.random.normal(key, (2, 768, 17, 17), jnp.float32)

    params = make_params()
    out = aux_inception_forward(x, params)
    out = jax.block_until_ready(out)
    assert out.shape == (2, 1000) and out.dtype == jnp.float32

    ref = jax.block_until_ready(reference(x, params))
    # bf16 matmul operands (f32 accumulation) -> slightly looser tolerance than pure f32.
    np.testing.assert_allclose(np.asarray(out), np.asarray(ref), rtol=2e-2, atol=2e-2)

    print("KERNEL_OK")
</pallas_src>

<mosaic_0001>
module attributes {stable_mosaic.version = 11 : i64} {
  func.func @aux_inception_kernel(%arg0: i32, %arg1: memref<25x16x768xbf16, #tpu.memory_space<vmem>>, %arg2: memref<768x128xbf16, #tpu.memory_space<vmem>>, %arg3: memref<1x128xf32, #tpu.memory_space<vmem>>, %arg4: memref<3200x768xbf16, #tpu.memory_space<vmem>>, %arg5: memref<1x768xf32, #tpu.memory_space<vmem>>, %arg6: memref<768x1024xbf16, #tpu.memory_space<vmem>>, %arg7: memref<1x1024xf32, #tpu.memory_space<vmem>>, %arg8: memref<16x1024xf32, #tpu.memory_space<vmem>>, %arg9: memref<16x3200xbf16, #tpu.memory_space<vmem>>) attributes {dimension_semantics = [#tpu.dimension_semantics<parallel>], iteration_bounds = array<i64: 1>, scalar_prefetch = 0 : i64, scratch_operands = 1 : i64, tpu.core_type = #tpu.core_type<tc>, window_params = [{transform_indices = @transform_0, window_bounds = array<i64: 25, 16, 768>}, {pipeline_mode = #tpu.pipeline_mode<synchronous>, transform_indices = @transform_1, window_bounds = array<i64: 768, 128>}, {pipeline_mode = #tpu.pipeline_mode<synchronous>, transform_indices = @transform_2, window_bounds = array<i64: 1, 128>}, {pipeline_mode = #tpu.pipeline_mode<synchronous>, transform_indices = @transform_3, window_bounds = array<i64: 3200, 768>}, {pipeline_mode = #tpu.pipeline_mode<synchronous>, transform_indices = @transform_4, window_bounds = array<i64: 1, 768>}, {pipeline_mode = #tpu.pipeline_mode<synchronous>, transform_indices = @transform_5, window_bounds = array<i64: 768, 1024>}, {pipeline_mode = #tpu.pipeline_mode<synchronous>, transform_indices = @transform_6, window_bounds = array<i64: 1, 1024>}, {transform_indices = @transform_7, window_bounds = array<i64: 16, 1024>}]} {
    %c0 = arith.constant 0 : index
    %c0_0 = arith.constant 0 : index
    %c0_1 = arith.constant 0 : index
    %0 = vector.load %arg1[%c0, %c0_0, %c0_1] : memref<25x16x768xbf16, #tpu.memory_space<vmem>>, vector<25x16x768xbf16>
    %1 = vector.shape_cast %0 : vector<25x16x768xbf16> to vector<400x768xbf16>
    %c0_2 = arith.constant 0 : index
    %c0_3 = arith.constant 0 : index
    %2 = vector.load %arg2[%c0_2, %c0_3] : memref<768x128xbf16, #tpu.memory_space<vmem>>, vector<768x128xbf16>
    %cst = arith.constant dense<0.000000e+00> : vector<400x128xf32>
    %3 = tpu.matmul %1, %2, %cst {dimension_numbers = #tpu.dot_dimension_numbers<[1], [0], [0], [1], [0, 0, 1, 1], [], []>} : vector<400x768xbf16>, vector<768x128xbf16>, vector<400x128xf32> -> vector<400x128xf32>
    %c0_4 = arith.constant 0 : index
    %c0_5 = arith.constant 0 : index
    %4 = vector.load %arg3[%c0_4, %c0_5] : memref<1x128xf32, #tpu.memory_space<vmem>>, vector<1x128xf32>
    %5 = vector.extract_strided_slice %3 {offsets = [0, 0], sizes = [16, 128], strides = [1, 1]} : vector<400x128xf32> to vector<16x128xf32>
    %6 = vector.broadcast %4 : vector<1x128xf32> to vector<16x128xf32>
    %7 = arith.addf %5, %6 : vector<16x128xf32>
    %cst_6 = arith.constant 0.000000e+00 : f32
    %8 = vector.broadcast %cst_6 : f32 to vector<16x128xf32>
    %9 = arith.maximumf %7, %8 : vector<16x128xf32>
    %10 = arith.truncf %9 : vector<16x128xf32> to vector<16x128xbf16>
    %c0_7 = arith.constant 0 : index
    %c0_8 = arith.constant 0 : index
    %11 = vector.load %arg9[%c0_7, %c0_8] : memref<16x3200xbf16, #tpu.memory_space<vmem>>, vector<16x128xbf16>
    tpu.vector_store %arg9[%c0_7, %c0_8], %10 {strides = array<i32>} : memref<16x3200xbf16, #tpu.memory_space<vmem>>, vector<16x128xbf16>,
    %12 = vector.extract_strided_slice %3 {offsets = [16, 0], sizes = [16, 128], strides = [1, 1]} : vector<400x128xf32> to vector<16x128xf32>
    %13 = vector.broadcast %4 : vector<1x128xf32> to vector<16x128xf32>
    %14 = arith.addf %12, %13 : vector<16x128xf32>
    %cst_9 = arith.constant 0.000000e+00 : f32
    %15 = vector.broadcast %cst_9 : f32 to vector<16x128xf32>
    %16 = arith.maximumf %14, %15 : vector<16x128xf32>
    %17 = arith.truncf %16 : vector<16x128xf32> to vector<16x128xbf16>
    %c0_10 = arith.constant 0 : index
    %c128 = arith.constant 128 : index
    %18 = vector.load %arg9[%c0_10, %c128] : memref<16x3200xbf16, #tpu.memory_space<vmem>>, vector<16x128xbf16>
    tpu.vector_store %arg9[%c0_10, %c128], %17 {strides = array<i32>} : memref<16x3200xbf16, #tpu.memory_space<vmem>>, vector<16x128xbf16>,
    %19 = vector.extract_strided_slice %3 {offsets = [32, 0], sizes = [16, 128], strides = [1, 1]} : vector<400x128xf32> to vector<16x128xf32>
    %20 = vector.broadcast %4 : vector<1x128xf32> to vector<16x128xf32>
    %21 = arith.addf %19, %20 : vector<16x128xf32>
    %cst_11 = arith.constant 0.000000e+00 : f32
    %22 = vector.broadcast %cst_11 : f32 to vector<16x128xf32>
    %23 = arith.maximumf %21, %22 : vector<16x128xf32>
    %24 = arith.truncf %23 : vector<16x128xf32> to vector<16x128xbf16>
    %c0_12 = arith.constant 0 : index
    %c256 = arith.constant 256 : index
    %25 = vector.load %arg9[%c0_12, %c256] : memref<16x3200xbf16, #tpu.memory_space<vmem>>, vector<16x128xbf16>
    tpu.vector_store %arg9[%c0_12, %c256], %24 {strides = array<i32>} : memref<16x3200xbf16, #tpu.memory_space<vmem>>, vector<16x128xbf16>,
    %26 = vector.extract_strided_slice %3 {offsets = [48, 0], sizes = [16, 128], strides = [1, 1]} : vector<400x128xf32> to vector<16x128xf32>
    %27 = vector.broadcast %4 : vector<1x128xf32> to vector<16x128xf32>
    %28 = arith.addf %26, %27 : vector<16x128xf32>
    %cst_13 = arith.constant 0.000000e+00 : f32
    %29 = vector.broadcast %cst_13 : f32 to vector<16x128xf32>
    %30 = arith.maximumf %28, %29 : vector<16x128xf32>
    %31 = arith.truncf %30 : vector<16x128xf32> to vector<16x128xbf16>
    %c0_14 = arith.constant 0 : index
    %c384 = arith.constant 384 : index
    %32 = vector.load %arg9[%c0_14, %c384] : memref<16x3200xbf16, #tpu.memory_space<vmem>>, vector<16x128xbf16>
    tpu.vector_store %arg9[%c0_14, %c384], %31 {strides = array<i32>} : memref<16x3200xbf16, #tpu.memory_space<vmem>>, vector<16x128xbf16>,
    %33 = vector.extract_strided_slice %3 {offsets = [64, 0], sizes = [16, 128], strides = [1, 1]} : vector<400x128xf32> to vector<16x128xf32>
    %34 = vector.broadcast %4 : vector<1x128xf32> to vector<16x128xf32>
    %35 = arith.addf %33, %34 : vector<16x128xf32>
    %cst_15 = arith.constant 0.000000e+00 : f32
    %36 = vector.broadcast %cst_15 : f32 to vector<16x128xf32>
    %37 = arith.maximumf %35, %36 : vector<16x128xf32>
    %38 = arith.truncf %37 : vector<16x128xf32> to vector<16x128xbf16>
    %c0_16 = arith.constant 0 : index
    %c512 = arith.constant 512 : index
    %39 = vector.load %arg9[%c0_16, %c512] : memref<16x3200xbf16, #tpu.memory_space<vmem>>, vector<16x128xbf16>
    tpu.vector_store %arg9[%c0_16, %c512], %38 {strides = array<i32>} : memref<16x3200xbf16, #tpu.memory_space<vmem>>, vector<16x128xbf16>,
    %40 = vector.extract_strided_slice %3 {offsets = [80, 0], sizes = [16, 128], strides = [1, 1]} : vector<400x128xf32> to vector<16x128xf32>
    %41 = vector.broadcast %4 : vector<1x128xf32> to vector<16x128xf32>
    %42 = arith.addf %40, %41 : vector<16x128xf32>
    %cst_17 = arith.constant 0.000000e+00 : f32
    %43 = vector.broadcast %cst_17 : f32 to vector<16x128xf32>
    %44 = arith.maximumf %42, %43 : vector<16x128xf32>
    %45 = arith.truncf %44 : vector<16x128xf32> to vector<16x128xbf16>
    %c0_18 = arith.constant 0 : index
    %c640 = arith.constant 640 : index
    %46 = vector.load %arg9[%c0_18, %c640] : memref<16x3200xbf16, #tpu.memory_space<vmem>>, vector<16x128xbf16>
    tpu.vector_store %arg9[%c0_18, %c640], %45 {strides = array<i32>} : memref<16x3200xbf16, #tpu.memory_space<vmem>>, vector<16x128xbf16>,
    %47 = vector.extract_strided_slice %3 {offsets = [96, 0], sizes = [16, 128], strides = [1, 1]} : vector<400x128xf32> to vector<16x128xf32>
    %48 = vector.broadcast %4 : vector<1x128xf32> to vector<16x128xf32>
    %49 = arith.addf %47, %48 : vector<16x128xf32>
    %cst_19 = arith.constant 0.000000e+00 : f32
    %50 = vector.broadcast %cst_19 : f32 to vector<16x128xf32>
    %51 = arith.maximumf %49, %50 : vector<16x128xf32>
    %52 = arith.truncf %51 : vector<16x128xf32> to vector<16x128xbf16>
    %c0_20 = arith.constant 0 : index
    %c768 = arith.constant 768 : index
    %53 = vector.load %arg9[%c0_20, %c768] : memref<16x3200xbf16, #tpu.memory_space<vmem>>, vector<16x128xbf16>
    tpu.vector_store %arg9[%c0_20, %c768], %52 {strides = array<i32>} : memref<16x3200xbf16, #tpu.memory_space<vmem>>, vector<16x128xbf16>,
    %54 = vector.extract_strided_slice %3 {offsets = [112, 0], sizes = [16, 128], strides = [1, 1]} : vector<400x128xf32> to vector<16x128xf32>
    %55 = vector.broadcast %4 : vector<1x128xf32> to vector<16x128xf32>
    %56 = arith.addf %54, %55 : vector<16x128xf32>
    %cst_21 = arith.constant 0.000000e+00 : f32
    %57 = vector.broadcast %cst_21 : f32 to vector<16x128xf32>
    %58 = arith.maximumf %56, %57 : vector<16x128xf32>
    %59 = arith.truncf %58 : vector<16x128xf32> to vector<16x128xbf16>
    %c0_22 = arith.constant 0 : index
    %c896 = arith.constant 896 : index
    %60 = vector.load %arg9[%c0_22, %c896] : memref<16x3200xbf16, #tpu.memory_space<vmem>>, vector<16x128xbf16>
    tpu.vector_store %arg9[%c0_22, %c896], %59 {strides = array<i32>} : memref<16x3200xbf16, #tpu.memory_space<vmem>>, vector<16x128xbf16>,
    %61 = vector.extract_strided_slice %3 {offsets = [128, 0], sizes = [16, 128], strides = [1, 1]} : vector<400x128xf32> to vector<16x128xf32>
    %62 = vector.broadcast %4 : vector<1x128xf32> to vector<16x128xf32>
    %63 = arith.addf %61, %62 : vector<16x128xf32>
    %cst_23 = arith.constant 0.000000e+00 : f32
    %64 = vector.broadcast %cst_23 : f32 to vector<16x128xf32>
    %65 = arith.maximumf %63, %64 : vector<16x128xf32>
    %66 = arith.truncf %65 : vector<16x128xf32> to vector<16x128xbf16>
    %c0_24 = arith.constant 0 : index
    %c1024 = arith.constant 1024 : index
    %67 = vector.load %arg9[%c0_24, %c1024] : memref<16x3200xbf16, #tpu.memory_space<vmem>>, vector<16x128xbf16>
    tpu.vector_store %arg9[%c0_24, %c1024], %66 {strides = array<i32>} : memref<16x3200xbf16, #tpu.memory_space<vmem>>, vector<16x128xbf16>,
    %68 = vector.extract_strided_slice %3 {offsets = [144, 0], sizes = [16, 128], strides = [1, 1]} : vector<400x128xf32> to vector<16x128xf32>
    %69 = vector.broadcast %4 : vector<1x128xf32> to vector<16x128xf32>
    %70 = arith.addf %68, %69 : vector<16x128xf32>
    %cst_25 = arith.constant 0.000000e+00 : f32
    %71 = vector.broadcast %cst_25 : f32 to vector<16x128xf32>
    %72 = arith.maximumf %70, %71 : vector<16x128xf32>
    %73 = arith.truncf %72 : vector<16x128xf32> to vector<16x128xbf16>
    %c0_26 = arith.constant 0 : index
    %c1152 = arith.constant 1152 : index
    %74 = vector.load %arg9[%c0_26, %c1152] : memref<16x3200xbf16, #tpu.memory_space<vmem>>, vector<16x128xbf16>
    tpu.vector_store %arg9[%c0_26, %c1152], %73 {strides = array<i32>} : memref<16x3200xbf16, #tpu.memory_space<vmem>>, vector<16x128xbf16>,
    %75 = vector.extract_strided_slice %3 {offsets = [160, 0], sizes = [16, 128], strides = [1, 1]} : vector<400x128xf32> to vector<16x128xf32>
    %76 = vector.broadcast %4 : vector<1x128xf32> to vector<16x128xf32>
    %77 = arith.addf %75, %76 : vector<16x128xf32>
    %cst_27 = arith.constant 0.000000e+00 : f32
    %78 = vector.broadcast %cst_27 : f32 to vector<16x128xf32>
    %79 = arith.maximumf %77, %78 : vector<16x128xf32>
    %80 = arith.truncf %79 : vector<16x128xf32> to vector<16x128xbf16>
    %c0_28 = arith.constant 0 : index
    %c1280 = arith.constant 1280 : index
    %81 = vector.load %arg9[%c0_28, %c1280] : memref<16x3200xbf16, #tpu.memory_space<vmem>>, vector<16x128xbf16>
    tpu.vector_store %arg9[%c0_28, %c1280], %80 {strides = array<i32>} : memref<16x3200xbf16, #tpu.memory_space<vmem>>, vector<16x128xbf16>,
    %82 = vector.extract_strided_slice %3 {offsets = [176, 0], sizes = [16, 128], strides = [1, 1]} : vector<400x128xf32> to vector<16x128xf32>
    %83 = vector.broadcast %4 : vector<1x128xf32> to vector<16x128xf32>
    %84 = arith.addf %82, %83 : vector<16x128xf32>
    %cst_29 = arith.constant 0.000000e+00 : f32
    %85 = vector.broadcast %cst_29 : f32 to vector<16x128xf32>
    %86 = arith.maximumf %84, %85 : vector<16x128xf32>
    %87 = arith.truncf %86 : vector<16x128xf32> to vector<16x128xbf16>
    %c0_30 = arith.constant 0 : index
    %c1408 = arith.constant 1408 : index
    %88 = vector.load %arg9[%c0_30, %c1408] : memref<16x3200xbf16, #tpu.memory_space<vmem>>, vector<16x128xbf16>
    tpu.vector_store %arg9[%c0_30, %c1408], %87 {strides = array<i32>} : memref<16x3200xbf16, #tpu.memory_space<vmem>>, vector<16x128xbf16>,
    %89 = vector.extract_strided_slice %3 {offsets = [192, 0], sizes = [16, 128], strides = [1, 1]} : vector<400x128xf32> to vector<16x128xf32>
    %90 = vector.broadcast %4 : vector<1x128xf32> to vector<16x128xf32>
    %91 = arith.addf %89, %90 : vector<16x128xf32>
    %cst_31 = arith.constant 0.000000e+00 : f32
    %92 = vector.broadcast %cst_31 : f32 to vector<16x128xf32>
    %93 = arith.maximumf %91, %92 : vector<16x128xf32>
    %94 = arith.truncf %93 : vector<16x128xf32> to vector<16x128xbf16>
    %c0_32 = arith.constant 0 : index
    %c1536 = arith.constant 1536 : index
    %95 = vector.load %arg9[%c0_32, %c1536] : memref<16x3200xbf16, #tpu.memory_space<vmem>>, vector<16x128xbf16>
    tpu.vector_store %arg9[%c0_32, %c1536], %94 {strides = array<i32>} : memref<16x3200xbf16, #tpu.memory_space<vmem>>, vector<16x128xbf16>,
    %96 = vector.extract_strided_slice %3 {offsets = [208, 0], sizes = [16, 128], strides = [1, 1]} : vector<400x128xf32> to vector<16x128xf32>
    %97 = vector.broadcast %4 : vector<1x128xf32> to vector<16x128xf32>
    %98 = arith.addf %96, %97 : vector<16x128xf32>
    %cst_33 = arith.constant 0.000000e+00 : f32
    %99 = vector.broadcast %cst_33 : f32 to vector<16x128xf32>
    %100 = arith.maximumf %98, %99 : vector<16x128xf32>
    %101 = arith.truncf %100 : vector<16x128xf32> to vector<16x128xbf16>
    %c0_34 = arith.constant 0 : index
    %c1664 = arith.constant 1664 : index
    %102 = vector.load %arg9[%c0_34, %c1664] : memref<16x3200xbf16, #tpu.memory_space<vmem>>, vector<16x128xbf16>
    tpu.vector_store %arg9[%c0_34, %c1664], %101 {strides = array<i32>} : memref<16x3200xbf16, #tpu.memory_space<vmem>>, vector<16x128xbf16>,
    %103 = vector.extract_strided_slice %3 {offsets = [224, 0], sizes = [16, 128], strides = [1, 1]} : vector<400x128xf32> to vector<16x128xf32>
    %104 = vector.broadcast %4 : vector<1x128xf32> to vector<16x128xf32>
    %105 = arith.addf %103, %104 : vector<16x128xf32>
    %cst_35 = arith.constant 0.000000e+00 : f32
    %106 = vector.broadcast %cst_35 : f32 to vector<16x128xf32>
    %107 = arith.maximumf %105, %106 : vector<16x128xf32>
    %108 = arith.truncf %107 : vector<16x128xf32> to vector<16x128xbf16>
    %c0_36 = arith.constant 0 : index
    %c1792 = arith.constant 1792 : index
    %109 = vector.load %arg9[%c0_36, %c1792] : memref<16x3200xbf16, #tpu.memory_space<vmem>>, vector<16x128xbf16>
    tpu.vector_store %arg9[%c0_36, %c1792], %108 {strides = array<i32>} : memref<16x3200xbf16, #tpu.memory_space<vmem>>, vector<16x128xbf16>,
    %110 = vector.extract_strided_slice %3 {offsets = [240, 0], sizes = [16, 128], strides = [1, 1]} : vector<400x128xf32> to vector<16x128xf32>
    %111 = vector.broadcast %4 : vector<1x128xf32> to vector<16x128xf32>
    %112 = arith.addf %110, %111 : vector<16x128xf32>
    %cst_37 = arith.constant 0.000000e+00 : f32
    %113 = vector.broadcast %cst_37 : f32 to vector<16x128xf32>
    %114 = arith.maximumf %112, %113 : vector<16x128xf32>
    %115 = arith.truncf %114 : vector<16x128xf32> to vector<16x128xbf16>
    %c0_38 = arith.constant 0 : index
    %c1920 = arith.constant 1920 : index
    %116 = vector.load %arg9[%c0_38, %c1920] : memref<16x3200xbf16, #tpu.memory_space<vmem>>, vector<16x128xbf16>
    tpu.vector_store %arg9[%c0_38, %c1920], %115 {strides = array<i32>} : memref<16x3200xbf16, #tpu.memory_space<vmem>>, vector<16x128xbf16>,
    %117 = vector.extract_strided_slice %3 {offsets = [256, 0], sizes = [16, 128], strides = [1, 1]} : vector<400x128xf32> to vector<16x128xf32>
    %118 = vector.broadcast %4 : vector<1x128xf32> to vector<16x128xf32>
    %119 = arith.addf %117, %118 : vector<16x128xf32>
    %cst_39 = arith.constant 0.000000e+00 : f32
    %120 = vector.broadcast %cst_39 : f32 to vector<16x128xf32>
    %121 = arith.maximumf %119, %120 : vector<16x128xf32>
    %122 = arith.truncf %121 : vector<16x128xf32> to vector<16x128xbf16>
    %c0_40 = arith.constant 0 : index
    %c2048 = arith.constant 2048 : index
    %123 = vector.load %arg9[%c0_40, %c2048] : memref<16x3200xbf16, #tpu.memory_space<vmem>>, vector<16x128xbf16>
    tpu.vector_store %arg9[%c0_40, %c2048], %122 {strides = array<i32>} : memref<16x3200xbf16, #tpu.memory_space<vmem>>, vector<16x128xbf16>,
    %124 = vector.extract_strided_slice %3 {offsets = [272, 0], sizes = [16, 128], strides = [1, 1]} : vector<400x128xf32> to vector<16x128xf32>
    %125 = vector.broadcast %4 : vector<1x128xf32> to vector<16x128xf32>
    %126 = arith.addf %124, %125 : vector<16x128xf32>
    %cst_41 = arith.constant 0.000000e+00 : f32
    %127 = vector.broadcast %cst_41 : f32 to vector<16x128xf32>
    %128 = arith.maximumf %126, %127 : vector<16x128xf32>
    %129 = arith.truncf %128 : vector<16x128xf32> to vector<16x128xbf16>
    %c0_42 = arith.constant 0 : index
    %c2176 = arith.constant 2176 : index
    %130 = vector.load %arg9[%c0_42, %c2176] : memref<16x3200xbf16, #tpu.memory_space<vmem>>, vector<16x128xbf16>
    tpu.vector_store %arg9[%c0_42, %c2176], %129 {strides = array<i32>} : memref<16x3200xbf16, #tpu.memory_space<vmem>>, vector<16x128xbf16>,
    %131 = vector.extract_strided_slice %3 {offsets = [288, 0], sizes = [16, 128], strides = [1, 1]} : vector<400x128xf32> to vector<16x128xf32>
    %132 = vector.broadcast %4 : vector<1x128xf32> to vector<16x128xf32>
    %133 = arith.addf %131, %132 : vector<16x128xf32>
    %cst_43 = arith.constant 0.000000e+00 : f32
    %134 = vector.broadcast %cst_43 : f32 to vector<16x128xf32>
    %135 = arith.maximumf %133, %134 : vector<16x128xf32>
    %136 = arith.truncf %135 : vector<16x128xf32> to vector<16x128xbf16>
    %c0_44 = arith.constant 0 : index
    %c2304 = arith.constant 2304 : index
    %137 = vector.load %arg9[%c0_44, %c2304] : memref<16x3200xbf16, #tpu.memory_space<vmem>>, vector<16x128xbf16>
    tpu.vector_store %arg9[%c0_44, %c2304], %136 {strides = array<i32>} : memref<16x3200xbf16, #tpu.memory_space<vmem>>, vector<16x128xbf16>,
    %138 = vector.extract_strided_slice %3 {offsets = [304, 0], sizes = [16, 128], strides = [1, 1]} : vector<400x128xf32> to vector<16x128xf32>
    %139 = vector.broadcast %4 : vector<1x128xf32> to vector<16x128xf32>
    %140 = arith.addf %138, %139 : vector<16x128xf32>
    %cst_45 = arith.constant 0.000000e+00 : f32
    %141 = vector.broadcast %cst_45 : f32 to vector<16x128xf32>
    %142 = arith.maximumf %140, %141 : vector<16x128xf32>
    %143 = arith.truncf %142 : vector<16x128xf32> to vector<16x128xbf16>
    %c0_46 = arith.constant 0 : index
    %c2432 = arith.constant 2432 : index
    %144 = vector.load %arg9[%c0_46, %c2432] : memref<16x3200xbf16, #tpu.memory_space<vmem>>, vector<16x128xbf16>
    tpu.vector_store %arg9[%c0_46, %c2432], %143 {strides = array<i32>} : memref<16x3200xbf16, #tpu.memory_space<vmem>>, vector<16x128xbf16>,
    %145 = vector.extract_strided_slice %3 {offsets = [320, 0], sizes = [16, 128], strides = [1, 1]} : vector<400x128xf32> to vector<16x128xf32>
    %146 = vector.broadcast %4 : vector<1x128xf32> to vector<16x128xf32>
    %147 = arith.addf %145, %146 : vector<16x128xf32>
    %cst_47 = arith.constant 0.000000e+00 : f32
    %148 = vector.broadcast %cst_47 : f32 to vector<16x128xf32>
    %149 = arith.maximumf %147, %148 : vector<16x128xf32>
    %150 = arith.truncf %149 : vector<16x128xf32> to vector<16x128xbf16>
    %c0_48 = arith.constant 0 : index
    %c2560 = arith.constant 2560 : index
    %151 = vector.load %arg9[%c0_48, %c2560] : memref<16x3200xbf16, #tpu.memory_space<vmem>>, vector<16x128xbf16>
    tpu.vector_store %arg9[%c0_48, %c2560], %150 {strides = array<i32>} : memref<16x3200xbf16, #tpu.memory_space<vmem>>, vector<16x128xbf16>,
    %152 = vector.extract_strided_slice %3 {offsets = [336, 0], sizes = [16, 128], strides = [1, 1]} : vector<400x128xf32> to vector<16x128xf32>
    %153 = vector.broadcast %4 : vector<1x128xf32> to vector<16x128xf32>
    %154 = arith.addf %152, %153 : vector<16x128xf32>
    %cst_49 = arith.constant 0.000000e+00 : f32
    %155 = vector.broadcast %cst_49 : f32 to vector<16x128xf32>
    %156 = arith.maximumf %154, %155 : vector<16x128xf32>
    %157 = arith.truncf %156 : vector<16x128xf32> to vector<16x128xbf16>
    %c0_50 = arith.constant 0 : index
    %c2688 = arith.constant 2688 : index
    %158 = vector.load %arg9[%c0_50, %c2688] : memref<16x3200xbf16, #tpu.memory_space<vmem>>, vector<16x128xbf16>
    tpu.vector_store %arg9[%c0_50, %c2688], %157 {strides = array<i32>} : memref<16x3200xbf16, #tpu.memory_space<vmem>>, vector<16x128xbf16>,
    %159 = vector.extract_strided_slice %3 {offsets = [352, 0], sizes = [16, 128], strides = [1, 1]} : vector<400x128xf32> to vector<16x128xf32>
    %160 = vector.broadcast %4 : vector<1x128xf32> to vector<16x128xf32>
    %161 = arith.addf %159, %160 : vector<16x128xf32>
    %cst_51 = arith.constant 0.000000e+00 : f32
    %162 = vector.broadcast %cst_51 : f32 to vector<16x128xf32>
    %163 = arith.maximumf %161, %162 : vector<16x128xf32>
    %164 = arith.truncf %163 : vector<16x128xf32> to vector<16x128xbf16>
    %c0_52 = arith.constant 0 : index
    %c2816 = arith.constant 2816 : index
    %165 = vector.load %arg9[%c0_52, %c2816] : memref<16x3200xbf16, #tpu.memory_space<vmem>>, vector<16x128xbf16>
    tpu.vector_store %arg9[%c0_52, %c2816], %164 {strides = array<i32>} : memref<16x3200xbf16, #tpu.memory_space<vmem>>, vector<16x128xbf16>,
    %166 = vector.extract_strided_slice %3 {offsets = [368, 0], sizes = [16, 128], strides = [1, 1]} : vector<400x128xf32> to vector<16x128xf32>
    %167 = vector.broadcast %4 : vector<1x128xf32> to vector<16x128xf32>
    %168 = arith.addf %166, %167 : vector<16x128xf32>
    %cst_53 = arith.constant 0.000000e+00 : f32
    %169 = vector.broadcast %cst_53 : f32 to vector<16x128xf32>
    %170 = arith.maximumf %168, %169 : vector<16x128xf32>
    %171 = arith.truncf %170 : vector<16x128xf32> to vector<16x128xbf16>
    %c0_54 = arith.constant 0 : index
    %c2944 = arith.constant 2944 : index
    %172 = vector.load %arg9[%c0_54, %c2944] : memref<16x3200xbf16, #tpu.memory_space<vmem>>, vector<16x128xbf16>
    tpu.vector_store %arg9[%c0_54, %c2944], %171 {strides = array<i32>} : memref<16x3200xbf16, #tpu.memory_space<vmem>>, vector<16x128xbf16>,
    %173 = vector.extract_strided_slice %3 {offsets = [384, 0], sizes = [16, 128], strides = [1, 1]} : vector<400x128xf32> to vector<16x128xf32>
    %174 = vector.broadcast %4 : vector<1x128xf32> to vector<16x128xf32>
    %175 = arith.addf %173, %174 : vector<16x128xf32>
    %cst_55 = arith.constant 0.000000e+00 : f32
    %176 = vector.broadcast %cst_55 : f32 to vector<16x128xf32>
    %177 = arith.maximumf %175, %176 : vector<16x128xf32>
    %178 = arith.truncf %177 : vector<16x128xf32> to vector<16x128xbf16>
    %c0_56 = arith.constant 0 : index
    %c3072 = arith.constant 3072 : index
    %179 = vector.load %arg9[%c0_56, %c3072] : memref<16x3200xbf16, #tpu.memory_space<vmem>>, vector<16x128xbf16>
    tpu.vector_store %arg9[%c0_56, %c3072], %178 {strides = array<i32>} : memref<16x3200xbf16, #tpu.memory_space<vmem>>, vector<16x128xbf16>,
    %c0_57 = arith.constant 0 : index
    %c0_58 = arith.constant 0 : index
    %180 = vector.load %arg9[%c0_57, %c0_58] : memref<16x3200xbf16, #tpu.memory_space<vmem>>, vector<16x3200xbf16>
    %c0_59 = arith.constant 0 : index
    %c0_60 = arith.constant 0 : index
    %181 = vector.load %arg4[%c0_59, %c0_60] : memref<3200x768xbf16, #tpu.memory_space<vmem>>, vector<3200x768xbf16>
    %cst_61 = arith.constant dense<0.000000e+00> : vector<16x768xf32>
    %182 = tpu.matmul %180, %181, %cst_61 {dimension_numbers = #tpu.dot_dimension_numbers<[1], [0], [0], [1], [0, 0, 1, 1], [], []>} : vector<16x3200xbf16>, vector<3200x768xbf16>, vector<16x768xf32> -> vector<16x768xf32>
    %c0_62 = arith.constant 0 : index
    %c0_63 = arith.constant 0 : index
    %183 = vector.load %arg5[%c0_62, %c0_63] : memref<1x768xf32, #tpu.memory_space<vmem>>, vector<1x768xf32>
    %184 = vector.broadcast %183 : vector<1x768xf32> to vector<16x768xf32>
    %185 = arith.addf %182, %184 : vector<16x768xf32>
    %cst_64 = arith.constant 0.000000e+00 : f32
    %186 = vector.broadcast %cst_64 : f32 to vector<16x768xf32>
    %187 = arith.maximumf %185, %186 : vector<16x768xf32>
    %188 = arith.truncf %187 : vector<16x768xf32> to vector<16x768xbf16>
    %c0_65 = arith.constant 0 : index
    %c0_66 = arith.constant 0 : index
    %189 = vector.load %arg6[%c0_65, %c0_66] : memref<768x1024xbf16, #tpu.memory_space<vmem>>, vector<768x1024xbf16>
    %cst_67 = arith.constant dense<0.000000e+00> : vector<16x1024xf32>
    %190 = tpu.matmul %188, %189, %cst_67 {dimension_numbers = #tpu.dot_dimension_numbers<[1], [0], [0], [1], [0, 0, 1, 1], [], []>} : vector<16x768xbf16>, vector<768x1024xbf16>, vector<16x1024xf32> -> vector<16x1024xf32>
    %c0_68 = arith.constant 0 : index
    %c0_69 = arith.constant 0 : index
    %191 = vector.load %arg7[%c0_68, %c0_69] : memref<1x1024xf32, #tpu.memory_space<vmem>>, vector<1x1024xf32>
    %192 = vector.broadcast %191 : vector<1x1024xf32> to vector<16x1024xf32>
    %193 = arith.addf %190, %192 : vector<16x1024xf32>
    %c0_70 = arith.constant 0 : index
    %c0_71 = arith.constant 0 : index
    %194 = vector.load %arg8[%c0_70, %c0_71] : memref<16x1024xf32, #tpu.memory_space<vmem>>, vector<16x1024xf32>
    tpu.vector_store %arg8[%c0_70, %c0_71], %193 {strides = array<i32>} : memref<16x1024xf32, #tpu.memory_space<vmem>>, vector<16x1024xf32>,
    return
  }
  func.func @transform_0(%arg0: i32) -> (i32, i32, i32) {
    %c0_i32 = arith.constant 0 : i32
    %c0_i32_0 = arith.constant 0 : i32
    %c0_i32_1 = arith.constant 0 : i32
    return %c0_i32, %arg0, %c0_i32_0 : i32, i32, i32
  }
  func.func @transform_1(%arg0: i32) -> (i32, i32) {
    %c0_i32 = arith.constant 0 : i32
    %c0_i32_0 = arith.constant 0 : i32
    %c0_i32_1 = arith.constant 0 : i32
    return %c0_i32, %c0_i32_0 : i32, i32
  }
  func.func @transform_2(%arg0: i32) -> (i32, i32) {
    %c0_i32 = arith.constant 0 : i32
    %c0_i32_0 = arith.constant 0 : i32
    %c0_i32_1 = arith.constant 0 : i32
    return %c0_i32, %c0_i32_0 : i32, i32
  }
  func.func @transform_3(%arg0: i32) -> (i32, i32) {
    %c0_i32 = arith.constant 0 : i32
    %c0_i32_0 = arith.constant 0 : i32
    %c0_i32_1 = arith.constant 0 : i32
    return %c0_i32, %c0_i32_0 : i32, i32
  }
  func.func @transform_4(%arg0: i32) -> (i32, i32) {
    %c0_i32 = arith.constant 0 : i32
    %c0_i32_0 = arith.constant 0 : i32
    %c0_i32_1 = arith.constant 0 : i32
    return %c0_i32, %c0_i32_0 : i32, i32
  }
  func.func @transform_5(%arg0: i32) -> (i32, i32) {
    %c0_i32 = arith.constant 0 : i32
    %c0_i32_0 = arith.constant 0 : i32
    %c0_i32_1 = arith.constant 0 : i32
    return %c0_i32, %c0_i32_0 : i32, i32
  }
  func.func @transform_6(%arg0: i32) -> (i32, i32) {
    %c0_i32 = arith.constant 0 : i32
    %c0_i32_0 = arith.constant 0 : i32
    %c0_i32_1 = arith.constant 0 : i32
    return %c0_i32, %c0_i32_0 : i32, i32
  }
  func.func @transform_7(%arg0: i32) -> (i32, i32) {
    %c0_i32 = arith.constant 0 : i32
    %c0_i32_0 = arith.constant 0 : i32
    return %arg0, %c0_i32 : i32, i32
  }
}

</mosaic_0001>

<llo_original>
// kernel: tpu_custom_call.1
$region0: #{tpu_custom_call.1}
  #allocation0 [shape = 'u32[]', space=smem, size = 0x4, offset = 0x4, fixed_abs, tag = 'smem constant byte address 0x4 - core index']
  #allocation1 [shape = 'u32[144,128]{1,0:T(1,128)}', space=vmem, size = 0x12000, scoped, tag = 'internal scratch']
  #allocation2 [shape = 'bf16[16,3200]{1,0:T(16,128)(2,1)}', space=vmem, size = 0x19000, scoped, tag = 'scratch operand']
  %s0 = inlined_call_operand.hbm [shape: bf16[25,16,768], index: 0, kind: input, shape index: {}]
  %s1 = inlined_call_operand.hbm [shape: bf16[768,128], index: 1, kind: input, shape index: {}]
  %s2 = inlined_call_operand.hbm [shape: f32[1,128], index: 2, kind: input, shape index: {}]
  %s3 = inlined_call_operand.hbm [shape: bf16[3200,768], index: 3, kind: input, shape index: {}]
  %s4 = inlined_call_operand.hbm [shape: f32[1,768], index: 4, kind: input, shape index: {}]
  %s5 = inlined_call_operand.hbm [shape: bf16[768,1024], index: 5, kind: input, shape index: {}]
  %s6 = inlined_call_operand.hbm [shape: f32[1,1024], index: 6, kind: input, shape index: {}]
  %s7 = inlined_call_operand.hbm [shape: f32[16,1024], index: 7, kind: output, shape index: {}]
  %s8 = sld [smem:[#allocation0]]
  $region66: #{tpu_custom_call.1} parent=0
    _
  %s10 = ssub.s32 1, %s8
  %s11 = scalar_select 0, %s10, %s8
  $region1: #{tpu_custom_call.1} parent=0
    #allocation3 [shape = 'u8[614400]{0}', space=vmem, size = 0x96000, scoped, tag = 'input window, operand 0, single buffered']
    #allocation4 [shape = 's32[1]{0}', space=sflag, size = 0x4, scoped, tag = 'scoped memory for tpu_custom_call.1']
    #allocation5 [shape = 's32[1]{0}', space=sflag, size = 0x4, scoped, tag = 'scoped memory for tpu_custom_call.1']
    #allocation6 [shape = 'u8[196608]{0}', space=vmem, size = 0x30000, scoped, tag = 'input window, operand 1, single buffered']
    #allocation7 [shape = 's32[1]{0}', space=sflag, size = 0x4, scoped, tag = 'scoped memory for tpu_custom_call.1']
    #allocation8 [shape = 'u8[512]{0}', space=vmem, size = 0x400, scoped, tag = 'input window, operand 2, single buffered']
    #allocation9 [shape = 'u8[4915200]{0}', space=vmem, size = 0x4b0000, scoped, tag = 'input window, operand 3, single buffered']
    #allocation10 [shape = 's32[1]{0}', space=sflag, size = 0x4, scoped, tag = 'scoped memory for tpu_custom_call.1']
    #allocation11 [shape = 'u8[3072]{0}', space=vmem, size = 0xc00, scoped, tag = 'input window, operand 4, single buffered']
    #allocation12 [shape = 'u8[1572864]{0}', space=vmem, size = 0x180000, scoped, tag = 'input window, operand 5, single buffered']
    #allocation13 [shape = 's32[1]{0}', space=sflag, size = 0x4, scoped, tag = 'scoped memory for tpu_custom_call.1']
    #allocation14 [shape = 'u8[4096]{0}', space=vmem, size = 0x1000, scoped, tag = 'input window, operand 6, single buffered']
    #allocation15 [shape = 'u8[65536]{0}', space=vmem, size = 0x10000, scoped, tag = 'output window, operand 0, single buffered']
    %12 = vsyncpa [#allocation4], 0
    %13 = vsyncpa [#allocation7], 0
    %14 = vsyncpa [#allocation10], 0
    %15 = vsyncpa [#allocation13], 0
    %16 = vsyncpa [#allocation5], 0
    // Predicated region
    $region2: #{tpu_custom_call.1} parent=1 // pred_check
      _
    $region3: #{tpu_custom_call.1} parent=1 // pred_check_branch
      %18 = sbr.rel (0) target = $region5
    $region4: #{tpu_custom_call.1} parent=1 // pred_region
      %s20 = ssub.s32 19200, 19200
      %21 = vsyncadd [#allocation4], %s20
      %s22 = sshll.u32 [#allocation3], 4
      %s23 = int_to_ptr.vmem [resolvable:$true] %s22
      %28 = dma.hbm_to_vmem [thread:$0]  %s0, 19200, %s23, [#allocation4], 384, 384, 24
    $region5: #{tpu_custom_call.1} parent=1 // pred_fallthru
      _
    // Predicated region
    $region6: #{tpu_custom_call.1} parent=1 // pred_check
      _
    $region7: #{tpu_custom_call.1} parent=1 // pred_check_branch
      %30 = sbr.rel (0) target = $region9
    $region8: #{tpu_custom_call.1} parent=1 // pred_region
      %s32 = ssub.s32 6144, 6144
      %33 = vsyncadd [#allocation7], %s32
      %s34 = sshll.u32 [#allocation6], 4
      %s35 = int_to_ptr.vmem [resolvable:$true] %s34
      %40 = dma.hbm_to_vmem [thread:$0]  %s1, 6144, %s35, [#allocation7], 64, 64, 4
    $region9: #{tpu_custom_call.1} parent=1 // pred_fallthru
      _
    // Predicated region
    $region10: #{tpu_custom_call.1} parent=1 // pred_check
      _
    $region11: #{tpu_custom_call.1} parent=1 // pred_check_branch
      %42 = sbr.rel (0) target = $region13
    $region12: #{tpu_custom_call.1} parent=1 // pred_region
      %s44 = ssub.s32 16, 16
      %45 = vsyncadd [#allocation7], %s44
      %s47 = sshll.u32 [#allocation8], 4
      %s48 = int_to_ptr.vmem [resolvable:$true] %s47
      %50 = dma.hbm_to_vmem [thread:$0]  %s2, 16, %s48, [#allocation7]
    $region13: #{tpu_custom_call.1} parent=1 // pred_fallthru
      _
    // Predicated region
    $region14: #{tpu_custom_call.1} parent=1 // pred_check
      _
    $region15: #{tpu_custom_call.1} parent=1 // pred_check_branch
      %52 = sbr.rel (0) target = $region17
    $region16: #{tpu_custom_call.1} parent=1 // pred_region
      %s54 = ssub.s32 153600, 153600
      %55 = vsyncadd [#allocation10], %s54
      %s56 = sshll.u32 [#allocation9], 4
      %s57 = int_to_ptr.vmem [resolvable:$true] %s56
      %62 = dma.hbm_to_vmem [thread:$0]  %s3, 153600, %s57, [#allocation10], 384, 384, 24
    $region17: #{tpu_custom_call.1} parent=1 // pred_fallthru
      _
    // Predicated region
    $region18: #{tpu_custom_call.1} parent=1 // pred_check
      _
    $region19: #{tpu_custom_call.1} parent=1 // pred_check_branch
      %64 = sbr.rel (0) target = $region21
    $region20: #{tpu_custom_call.1} parent=1 // pred_region
      %s66 = ssub.s32 96, 96
      %67 = vsyncadd [#allocation10], %s66
      %s69 = sshll.u32 [#allocation11], 4
      %s70 = int_to_ptr.vmem [resolvable:$true] %s69
      %72 = dma.hbm_to_vmem [thread:$0]  %s4, 96, %s70, [#allocation10]
    $region21: #{tpu_custom_call.1} parent=1 // pred_fallthru
      _
    // Predicated region
    $region22: #{tpu_custom_call.1} parent=1 // pred_check
      _
    $region23: #{tpu_custom_call.1} parent=1 // pred_check_branch
      %74 = sbr.rel (0) target = $region25
    $region24: #{tpu_custom_call.1} parent=1 // pred_region
      %s76 = ssub.s32 49152, 49152
      %77 = vsyncadd [#allocation13], %s76
      %s78 = sshll.u32 [#allocation12], 4
      %s79 = int_to_ptr.vmem [resolvable:$true] %s78
      %84 = dma.hbm_to_vmem [thread:$0]  %s5, 49152, %s79, [#allocation13], 512, 512, 32
    $region25: #{tpu_custom_call.1} parent=1 // pred_fallthru
      _
    // Predicated region
    $region26: #{tpu_custom_call.1} parent=1 // pred_check
      _
    $region27: #{tpu_custom_call.1} parent=1 // pred_check_branch
      %86 = sbr.rel (0) target = $region29
    $region28: #{tpu_custom_call.1} parent=1 // pred_region
      %s88 = ssub.s32 128, 128
      %89 = vsyncadd [#allocation13], %s88
      %s91 = sshll.u32 [#allocation14], 4
      %s92 = int_to_ptr.vmem [resolvable:$true] %s91
      %94 = dma.hbm_to_vmem [thread:$0]  %s6, 128, %s92, [#allocation13]
    $region29: #{tpu_custom_call.1} parent=1 // pred_fallthru
      _
    // Predicated region
    $region30: #{tpu_custom_call.1} parent=1 // pred_check
      _
    $region31: #{tpu_custom_call.1} parent=1 // pred_check_branch
      %96 = sbr.rel (0) target = $region33
    $region32: #{tpu_custom_call.1} parent=1 // pred_region
      %97 = dma.done [#allocation4], 19200
    $region33: #{tpu_custom_call.1} parent=1 // pred_fallthru
      _
    // Predicated region
    $region34: #{tpu_custom_call.1} parent=1 // pred_check
      _
    $region35: #{tpu_custom_call.1} parent=1 // pred_check_branch
      %99 = sbr.rel (0) target = $region37
    $region36: #{tpu_custom_call.1} parent=1 // pred_region
      %100 = dma.done [#allocation7], 6144
    $region37: #{tpu_custom_call.1} parent=1 // pred_fallthru
      _
    // Predicated region
    $region38: #{tpu_custom_call.1} parent=1 // pred_check
      _
    $region39: #{tpu_custom_call.1} parent=1 // pred_check_branch
      %102 = sbr.rel (0) target = $region41
    $region40: #{tpu_custom_call.1} parent=1 // pred_region
      %103 = dma.done [#allocation7], 16
    $region41: #{tpu_custom_call.1} parent=1 // pred_fallthru
      _
    // Predicated region
    $region42: #{tpu_custom_call.1} parent=1 // pred_check
      _
    $region43: #{tpu_custom_call.1} parent=1 // pred_check_branch
      %105 = sbr.rel (0) target = $region45
    $region44: #{tpu_custom_call.1} parent=1 // pred_region
      %106 = dma.done [#allocation10], 153600
    $region45: #{tpu_custom_call.1} parent=1 // pred_fallthru
      _
    // Predicated region
    $region46: #{tpu_custom_call.1} parent=1 // pred_check
      _
    $region47: #{tpu_custom_call.1} parent=1 // pred_check_branch
      %108 = sbr.rel (0) target = $region49
    $region48: #{tpu_custom_call.1} parent=1 // pred_region
      %109 = dma.done [#allocation10], 96
    $region49: #{tpu_custom_call.1} parent=1 // pred_fallthru
      _
    // Predicated region
    $region50: #{tpu_custom_call.1} parent=1 // pred_check
      _
    $region51: #{tpu_custom_call.1} parent=1 // pred_check_branch
      %111 = sbr.rel (0) target = $region53
    $region52: #{tpu_custom_call.1} parent=1 // pred_region
      %112 = dma.done [#allocation13], 49152
    $region53: #{tpu_custom_call.1} parent=1 // pred_fallthru
      _
    // Predicated region
    $region54: #{tpu_custom_call.1} parent=1 // pred_check
      _
    $region55: #{tpu_custom_call.1} parent=1 // pred_check_branch
      %114 = sbr.rel (0) target = $region57
    $region56: #{tpu_custom_call.1} parent=1 // pred_region
      %115 = dma.done [#allocation13], 128
    $region57: #{tpu_custom_call.1} parent=1 // pred_fallthru
      _
    %v117 = vld [vmem:[#allocation3] sm:$0xff]
    %v118 = vld [vmem:[#allocation3 + $0x8] sm:$0xff]
    %v119 = vld [vmem:[#allocation3 + $0x10] sm:$0xff]
    %v120 = vld [vmem:[#allocation3 + $0x18] sm:$0xff]
    %v121 = vld [vmem:[#allocation3 + $0x20] sm:$0xff]
    %v122 = vld [vmem:[#allocation3 + $0x28] sm:$0xff]
    %v123 = vld [vmem:[#allocation3 + $0x30] sm:$0xff]
    %v124 = vld [vmem:[#allocation3 + $0x38] sm:$0xff]
    %v125 = vld [vmem:[#allocation3 + $0x40] sm:$0xff]
    %v126 = vld [vmem:[#allocation3 + $0x48] sm:$0xff]
    %v127 = vld [vmem:[#allocation3 + $0x50] sm:$0xff]
    %v128 = vld [vmem:[#allocation3 + $0x58] sm:$0xff]
    %v129 = vld [vmem:[#allocation3 + $0x60] sm:$0xff]
    %v130 = vld [vmem:[#allocation3 + $0x68] sm:$0xff]
    %v131 = vld [vmem:[#allocation3 + $0x70] sm:$0xff]
    %v132 = vld [vmem:[#allocation3 + $0x78] sm:$0xff]
    %v133 = vld [vmem:[#allocation3 + $0x80] sm:$0xff]
    %v134 = vld [vmem:[#allocation3 + $0x88] sm:$0xff]
    %v135 = vld [vmem:[#allocation3 + $0x90] sm:$0xff]
    %v136 = vld [vmem:[#allocation3 + $0x98] sm:$0xff]
    %v137 = vld [vmem:[#allocation3 + $0xa0] sm:$0xff]
    %v138 = vld [vmem:[#allocation3 + $0xa8] sm:$0xff]
    %v139 = vld [vmem:[#allocation3 + $0xb0] sm:$0xff]
    %v140 = vld [vmem:[#allocation3 + $0xb8] sm:$0xff]
    %v141 = vld [vmem:[#allocation3 + $0xc0] sm:$0xff]
    %v142 = vld [vmem:[#allocation3 + $0xc8] sm:$0xff]
    %v143 = vld [vmem:[#allocation3 + $0xd0] sm:$0xff]
    %v144 = vld [vmem:[#allocation3 + $0xd8] sm:$0xff]
    %v145 = vld [vmem:[#allocation3 + $0xe0] sm:$0xff]
    %v146 = vld [vmem:[#allocation3 + $0xe8] sm:$0xff]
    %v147 = vld [vmem:[#allocation3 + $0xf0] sm:$0xff]
    %v148 = vld [vmem:[#allocation3 + $0xf8] sm:$0xff]
    %v149 = vld [vmem:[#allocation3 + $0x100] sm:$0xff]
    %v150 = vld [vmem:[#allocation3 + $0x108] sm:$0xff]
    %v151 = vld [vmem:[#allocation3 + $0x110] sm:$0xff]
    %v152 = vld [vmem:[#allocation3 + $0x118] sm:$0xff]
    %v153 = vld [vmem:[#allocation3 + $0x120] sm:$0xff]
    %v154 = vld [vmem:[#allocation3 + $0x128] sm:$0xff]
    %v155 = vld [vmem:[#allocation3 + $0x130] sm:$0xff]
    %v156 = vld [vmem:[#allocation3 + $0x138] sm:$0xff]
    %v157 = vld [vmem:[#allocation3 + $0x140] sm:$0xff]
    %v158 = vld [vmem:[#allocation3 + $0x148] sm:$0xff]
    %v159 = vld [vmem:[#allocation3 + $0x150] sm:$0xff]
    %v160 = vld [vmem:[#allocation3 + $0x158] sm:$0xff]
    %v161 = vld [vmem:[#allocation3 + $0x160] sm:$0xff]
    %v162 = vld [vmem:[#allocation3 + $0x168] sm:$0xff]
    %v163 = vld [vmem:[#allocation3 + $0x170] sm:$0xff]
    %v164 = vld [vmem:[#allocation3 + $0x178] sm:$0xff]
    %v165 = vld [vmem:[#allocation3 + $0x180] sm:$0xff]
    %v166 = vld [vmem:[#allocation3 + $0x188] sm:$0xff]
    %v167 = vld [vmem:[#allocation3 + $0x190] sm:$0xff]
    %v168 = vld [vmem:[#allocation3 + $0x198] sm:$0xff]
    %v169 = vld [vmem:[#allocation3 + $0x1a0] sm:$0xff]
    %v170 = vld [vmem:[#allocation3 + $0x1a8] sm:$0xff]
    %v171 = vld [vmem:[#allocation3 + $0x1b0] sm:$0xff]
    %v172 = vld [vmem:[#allocation3 + $0x1b8] sm:$0xff]
    %v173 = vld [vmem:[#allocation3 + $0x1c0] sm:$0xff]
    %v174 = vld [vmem:[#allocation3 + $0x1c8] sm:$0xff]
    %v175 = vld [vmem:[#allocation3 + $0x1d0] sm:$0xff]
    %v176 = vld [vmem:[#allocation3 + $0x1d8] sm:$0xff]
    %v177 = vld [vmem:[#allocation3 + $0x1e0] sm:$0xff]
    %v178 = vld [vmem:[#allocation3 + $0x1e8] sm:$0xff]
    %v179 = vld [vmem:[#allocation3 + $0x1f0] sm:$0xff]
    %v180 = vld [vmem:[#allocation3 + $0x1f8] sm:$0xff]
    %v181 = vld [vmem:[#allocation3 + $0x200] sm:$0xff]
    %v182 = vld [vmem:[#allocation3 + $0x208] sm:$0xff]
    %v183 = vld [vmem:[#allocation3 + $0x210] sm:$0xff]
    %v184 = vld [vmem:[#allocation3 + $0x218] sm:$0xff]
    %v185 = vld [vmem:[#allocation3 + $0x220] sm:$0xff]
    %v186 = vld [vmem:[#allocation3 + $0x228] sm:$0xff]
    %v187 = vld [vmem:[#allocation3 + $0x230] sm:$0xff]
    %v188 = vld [vmem:[#allocation3 + $0x238] sm:$0xff]
    %v189 = vld [vmem:[#allocation3 + $0x240] sm:$0xff]
    %v190 = vld [vmem:[#allocation3 + $0x248] sm:$0xff]
    %v191 = vld [vmem:[#allocation3 + $0x250] sm:$0xff]
    %v192 = vld [vmem:[#allocation3 + $0x258] sm:$0xff]
    %v193 = vld [vmem:[#allocation3 + $0x260] sm:$0xff]
    %v194 = vld [vmem:[#allocation3 + $0x268] sm:$0xff]
    %v195 = vld [vmem:[#allocation3 + $0x270] sm:$0xff]
    %v196 = vld [vmem:[#allocation3 + $0x278] sm:$0xff]
    %v197 = vld [vmem:[#allocation3 + $0x280] sm:$0xff]
    %v198 = vld [vmem:[#allocation3 + $0x288] sm:$0xff]
    %v199 = vld [vmem:[#allocation3 + $0x290] sm:$0xff]
    %v200 = vld [vmem:[#allocation3 + $0x298] sm:$0xff]
    %v201 = vld [vmem:[#allocation3 + $0x2a0] sm:$0xff]
    %v202 = vld [vmem:[#allocation3 + $0x2a8] sm:$0xff]
    %v203 = vld [vmem:[#allocation3 + $0x2b0] sm:$0xff]
    %v204 = vld [vmem:[#allocation3 + $0x2b8] sm:$0xff]
    %v205 = vld [vmem:[#allocation3 + $0x2c0] sm:$0xff]
    %v206 = vld [vmem:[#allocation3 + $0x2c8] sm:$0xff]
    %v207 = vld [vmem:[#allocation3 + $0x2d0] sm:$0xff]
    %v208 = vld [vmem:[#allocation3 + $0x2d8] sm:$0xff]
    %v209 = vld [vmem:[#allocation3 + $0x2e0] sm:$0xff]
    %v210 = vld [vmem:[#allocation3 + $0x2e8] sm:$0xff]
    %v211 = vld [vmem:[#allocation3 + $0x2f0] sm:$0xff]
    %v212 = vld [vmem:[#allocation3 + $0x2f8] sm:$0xff]
    %v213 = vld [vmem:[#allocation3 + $0x300] sm:$0xff]
    %v214 = vld [vmem:[#allocation3 + $0x308] sm:$0xff]
    %v215 = vld [vmem:[#allocation3 + $0x310] sm:$0xff]
    %v216 = vld [vmem:[#allocation3 + $0x318] sm:$0xff]
    %v217 = vld [vmem:[#allocation3 + $0x320] sm:$0xff]
    %v218 = vld [vmem:[#allocation3 + $0x328] sm:$0xff]
    %v219 = vld [vmem:[#allocation3 + $0x330] sm:$0xff]
    %v220 = vld [vmem:[#allocation3 + $0x338] sm:$0xff]
    %v221 = vld [vmem:[#allocation3 + $0x340] sm:$0xff]
    %v222 = vld [vmem:[#allocation3 + $0x348] sm:$0xff]
    %v223 = vld [vmem:[#allocation3 + $0x350] sm:$0xff]
    %v224 = vld [vmem:[#allocation3 + $0x358] sm:$0xff]
    %v225 = vld [vmem:[#allocation3 + $0x360] sm:$0xff]
    %v226 = vld [vmem:[#allocation3 + $0x368] sm:$0xff]
    %v227 = vld [vmem:[#allocation3 + $0x370] sm:$0xff]
    %v228 = vld [vmem:[#allocation3 + $0x378] sm:$0xff]
    %v229 = vld [vmem:[#allocation3 + $0x380] sm:$0xff]
    %v230 = vld [vmem:[#allocation3 + $0x388] sm:$0xff]
    %v231 = vld [vmem:[#allocation3 + $0x390] sm:$0xff]
    %v232 = vld [vmem:[#allocation3 + $0x398] sm:$0xff]
    %v233 = vld [vmem:[#allocation3 + $0x3a0] sm:$0xff]
    %v234 = vld [vmem:[#allocation3 + $0x3a8] sm:$0xff]
    %v235 = vld [vmem:[#allocation3 + $0x3b0] sm:$0xff]
    %v236 = vld [vmem:[#allocation3 + $0x3b8] sm:$0xff]
    %v237 = vld [vmem:[#allocation3 + $0x3c0] sm:$0xff]
    %v238 = vld [vmem:[#allocation3 + $0x3c8] sm:$0xff]
    %v239 = vld [vmem:[#allocation3 + $0x3d0] sm:$0xff]
    %v240 = vld [vmem:[#allocation3 + $0x3d8] sm:$0xff]
    %v241 = vld [vmem:[#allocation3 + $0x3e0] sm:$0xff]
    %v242 = vld [vmem:[#allocation3 + $0x3e8] sm:$0xff]
    %v243 = vld [vmem:[#allocation3 + $0x3f0] sm:$0xff]
    %v244 = vld [vmem:[#allocation3 + $0x3f8] sm:$0xff]
    %v245 = vld [vmem:[#allocation3 + $0x400] sm:$0xff]
    %v246 = vld [vmem:[#allocation3 + $0x408] sm:$0xff]
    %v247 = vld [vmem:[#allocation3 + $0x410] sm:$0xff]
    %v248 = vld [vmem:[#allocation3 + $0x418] sm:$0xff]
    %v249 = vld [vmem:[#allocation3 + $0x420] sm:$0xff]
    %v250 = vld [vmem:[#allocation3 + $0x428] sm:$0xff]
    %v251 = vld [vmem:[#allocation3 + $0x430] sm:$0xff]
    %v252 = vld [vmem:[#allocation3 + $0x438] sm:$0xff]
    %v253 = vld [vmem:[#allocation3 + $0x440] sm:$0xff]
    %v254 = vld [vmem:[#allocation3 + $0x448] sm:$0xff]
    %v255 = vld [vmem:[#allocation3 + $0x450] sm:$0xff]
    %v256 = vld [vmem:[#allocation3 + $0x458] sm:$0xff]
    %v257 = vld [vmem:[#allocation3 + $0x460] sm:$0xff]
    %v258 = vld [vmem:[#allocation3 + $0x468] sm:$0xff]
    %v259 = vld [vmem:[#allocation3 + $0x470] sm:$0xff]
    %v260 = vld [vmem:[#allocation3 + $0x478] sm:$0xff]
    %v261 = vld [vmem:[#allocation3 + $0x480] sm:$0xff]
    %v262 = vld [vmem:[#allocation3 + $0x488] sm:$0xff]
    %v263 = vld [vmem:[#allocation3 + $0x490] sm:$0xff]
    %v264 = vld [vmem:[#allocation3 + $0x498] sm:$0xff]
    %v265 = vld [vmem:[#allocation3 + $0x4a0] sm:$0xff]
    %v266 = vld [vmem:[#allocation3 + $0x4a8] sm:$0xff]
    %v267 = vld [vmem:[#allocation6] sm:$0xf]
    %v268 = vld [vmem:[#allocation6 + $0x4] sm:$0xf]
    %v269 = vld [vmem:[#allocation6 + $0x8] sm:$0xf]
    %v270 = vld [vmem:[#allocation6 + $0xc] sm:$0xf]
    %v271 = vld [vmem:[#allocation6 + $0x10] sm:$0xf]
    %v272 = vld [vmem:[#allocation6 + $0x14] sm:$0xf]
    %v273 = vld [vmem:[#allocation6 + $0x18] sm:$0xf]
    %v274 = vld [vmem:[#allocation6 + $0x1c] sm:$0xf]
    %v275 = vld [vmem:[#allocation6 + $0x20] sm:$0xf]
    %v276 = vld [vmem:[#allocation6 + $0x24] sm:$0xf]
    %v277 = vld [vmem:[#allocation6 + $0x28] sm:$0xf]
    %v278 = vld [vmem:[#allocation6 + $0x2c] sm:$0xf]
    %v279 = vld [vmem:[#allocation6 + $0x30] sm:$0xf]
    %v280 = vld [vmem:[#allocation6 + $0x34] sm:$0xf]
    %v281 = vld [vmem:[#allocation6 + $0x38] sm:$0xf]
    %v282 = vld [vmem:[#allocation6 + $0x3c] sm:$0xf]
    %v283 = vld [vmem:[#allocation6 + $0x40] sm:$0xf]
    %v284 = vld [vmem:[#allocation6 + $0x44] sm:$0xf]
    %v285 = vld [vmem:[#allocation6 + $0x48] sm:$0xf]
    %v286 = vld [vmem:[#allocation6 + $0x4c] sm:$0xf]
    %v287 = vld [vmem:[#allocation6 + $0x50] sm:$0xf]
    %v288 = vld [vmem:[#allocation6 + $0x54] sm:$0xf]
    %v289 = vld [vmem:[#allocation6 + $0x58] sm:$0xf]
    %v290 = vld [vmem:[#allocation6 + $0x5c] sm:$0xf]
    %v291 = vld [vmem:[#allocation6 + $0x60] sm:$0xf]
    %v292 = vld [vmem:[#allocation6 + $0x64] sm:$0xf]
    %v293 = vld [vmem:[#allocation6 + $0x68] sm:$0xf]
    %v294 = vld [vmem:[#allocation6 + $0x6c] sm:$0xf]
    %v295 = vld [vmem:[#allocation6 + $0x70] sm:$0xf]
    %v296 = vld [vmem:[#allocation6 + $0x74] sm:$0xf]
    %v297 = vld [vmem:[#allocation6 + $0x78] sm:$0xf]
    %v298 = vld [vmem:[#allocation6 + $0x7c] sm:$0xf]
    %v299 = vld [vmem:[#allocation6 + $0x80] sm:$0xf]
    %v300 = vld [vmem:[#allocation6 + $0x84] sm:$0xf]
    %v301 = vld [vmem:[#allocation6 + $0x88] sm:$0xf]
    %v302 = vld [vmem:[#allocation6 + $0x8c] sm:$0xf]
    %v303 = vld [vmem:[#allocation6 + $0x90] sm:$0xf]
    %v304 = vld [vmem:[#allocation6 + $0x94] sm:$0xf]
    %v305 = vld [vmem:[#allocation6 + $0x98] sm:$0xf]
    %v306 = vld [vmem:[#allocation6 + $0x9c] sm:$0xf]
    %v307 = vld [vmem:[#allocation6 + $0xa0] sm:$0xf]
    %v308 = vld [vmem:[#allocation6 + $0xa4] sm:$0xf]
    %v309 = vld [vmem:[#allocation6 + $0xa8] sm:$0xf]
    %v310 = vld [vmem:[#allocation6 + $0xac] sm:$0xf]
    %v311 = vld [vmem:[#allocation6 + $0xb0] sm:$0xf]
    %v312 = vld [vmem:[#allocation6 + $0xb4] sm:$0xf]
    %v313 = vld [vmem:[#allocation6 + $0xb8] sm:$0xf]
    %v314 = vld [vmem:[#allocation6 + $0xbc] sm:$0xf]
    %v315 = vld [vmem:[#allocation6 + $0xc0] sm:$0xf]
    %v316 = vld [vmem:[#allocation6 + $0xc4] sm:$0xf]
    %v317 = vld [vmem:[#allocation6 + $0xc8] sm:$0xf]
    %v318 = vld [vmem:[#allocation6 + $0xcc] sm:$0xf]
    %v319 = vld [vmem:[#allocation6 + $0xd0] sm:$0xf]
    %v320 = vld [vmem:[#allocation6 + $0xd4] sm:$0xf]
    %v321 = vld [vmem:[#allocation6 + $0xd8] sm:$0xf]
    %v322 = vld [vmem:[#allocation6 + $0xdc] sm:$0xf]
    %v323 = vld [vmem:[#allocation6 + $0xe0] sm:$0xf]
    %v324 = vld [vmem:[#allocation6 + $0xe4] sm:$0xf]
    %v325 = vld [vmem:[#allocation6 + $0xe8] sm:$0xf]
    %v326 = vld [vmem:[#allocation6 + $0xec] sm:$0xf]
    %v327 = vld [vmem:[#allocation6 + $0xf0] sm:$0xf]
    %v328 = vld [vmem:[#allocation6 + $0xf4] sm:$0xf]
    %v329 = vld [vmem:[#allocation6 + $0xf8] sm:$0xf]
    %v330 = vld [vmem:[#allocation6 + $0xfc] sm:$0xf]
    %v331 = vld [vmem:[#allocation6 + $0x100] sm:$0xf]
    %v332 = vld [vmem:[#allocation6 + $0x104] sm:$0xf]
    %v333 = vld [vmem:[#allocation6 + $0x108] sm:$0xf]
    %v334 = vld [vmem:[#allocation6 + $0x10c] sm:$0xf]
    %v335 = vld [vmem:[#allocation6 + $0x110] sm:$0xf]
    %v336 = vld [vmem:[#allocation6 + $0x114] sm:$0xf]
    %v337 = vld [vmem:[#allocation6 + $0x118] sm:$0xf]
    %v338 = vld [vmem:[#allocation6 + $0x11c] sm:$0xf]
    %v339 = vld [vmem:[#allocation6 + $0x120] sm:$0xf]
    %v340 = vld [vmem:[#allocation6 + $0x124] sm:$0xf]
    %v341 = vld [vmem:[#allocation6 + $0x128] sm:$0xf]
    %v342 = vld [vmem:[#allocation6 + $0x12c] sm:$0xf]
    %v343 = vld [vmem:[#allocation6 + $0x130] sm:$0xf]
    %v344 = vld [vmem:[#allocation6 + $0x134] sm:$0xf]
    %v345 = vld [vmem:[#allocation6 + $0x138] sm:$0xf]
    %v346 = vld [vmem:[#allocation6 + $0x13c] sm:$0xf]
    %v347 = vld [vmem:[#allocation6 + $0x140] sm:$0xf]
    %v348 = vld [vmem:[#allocation6 + $0x144] sm:$0xf]
    %v349 = vld [vmem:[#allocation6 + $0x148] sm:$0xf]
    %v350 = vld [vmem:[#allocation6 + $0x14c] sm:$0xf]
    %v351 = vld [vmem:[#allocation6 + $0x150] sm:$0xf]
    %v352 = vld [vmem:[#allocation6 + $0x154] sm:$0xf]
    %v353 = vld [vmem:[#allocation6 + $0x158] sm:$0xf]
    %v354 = vld [vmem:[#allocation6 + $0x15c] sm:$0xf]
    %v355 = vld [vmem:[#allocation6 + $0x160] sm:$0xf]
    %v356 = vld [vmem:[#allocation6 + $0x164] sm:$0xf]
    %v357 = vld [vmem:[#allocation6 + $0x168] sm:$0xf]
    %v358 = vld [vmem:[#allocation6 + $0x16c] sm:$0xf]
    %v359 = vld [vmem:[#allocation6 + $0x170] sm:$0xf]
    %v360 = vld [vmem:[#allocation6 + $0x174] sm:$0xf]
    %v361 = vld [vmem:[#allocation6 + $0x178] sm:$0xf]
    %v362 = vld [vmem:[#allocation6 + $0x17c] sm:$0xf]
    %v513 = vunpack.c.l.b16 %v117
    %v514 = vunpack.c.h.b16 %v117
    %v515 = vunpack.c.l.b16 %v118
    %v516 = vunpack.c.h.b16 %v118
    %v517 = vunpack.c.l.b16 %v119
    %v518 = vunpack.c.h.b16 %v119
    %v519 = vunpack.c.l.b16 %v120
    %v520 = vunpack.c.h.b16 %v120
    %v521 = vunpack.c.l.b16 %v121
    %v522 = vunpack.c.h.b16 %v121
    %v523 = vunpack.c.l.b16 %v122
    %v524 = vunpack.c.h.b16 %v122
    %v525 = vunpack.c.l.b16 %v123
    %v526 = vunpack.c.h.b16 %v123
    %v527 = vunpack.c.l.b16 %v124
    %v528 = vunpack.c.h.b16 %v124
    %v529 = vunpack.c.l.b16 %v125
    %v530 = vunpack.c.h.b16 %v125
    %v531 = vunpack.c.l.b16 %v126
    %v532 = vunpack.c.h.b16 %v126
    %v533 = vunpack.c.l.b16 %v127
    %v534 = vunpack.c.h.b16 %v127
    %v535 = vunpack.c.l.b16 %v128
    %v536 = vunpack.c.h.b16 %v128
    %v537 = vunpack.c.l.b16 %v129
    %v538 = vunpack.c.h.b16 %v129
    %v539 = vunpack.c.l.b16 %v130
    %v540 = vunpack.c.h.b16 %v130
    %v541 = vunpack.c.l.b16 %v131
    %v542 = vunpack.c.h.b16 %v131
    %v543 = vunpack.c.l.b16 %v132
    %v544 = vunpack.c.h.b16 %v132
    %v545 = vunpack.c.l.b16 %v133
    %v546 = vunpack.c.h.b16 %v133
    %v547 = vunpack.c.l.b16 %v134
    %v548 = vunpack.c.h.b16 %v134
    %v549 = vunpack.c.l.b16 %v135
    %v550 = vunpack.c.h.b16 %v135
    %v551 = vunpack.c.l.b16 %v136
    %v552 = vunpack.c.h.b16 %v136
    %v553 = vunpack.c.l.b16 %v137
    %v554 = vunpack.c.h.b16 %v137
    %v555 = vunpack.c.l.b16 %v138
    %v556 = vunpack.c.h.b16 %v138
    %v557 = vunpack.c.l.b16 %v139
    %v558 = vunpack.c.h.b16 %v139
    %v559 = vunpack.c.l.b16 %v140
    %v560 = vunpack.c.h.b16 %v140
    %v561 = vunpack.c.l.b16 %v141
    %v562 = vunpack.c.h.b16 %v141
    %v563 = vunpack.c.l.b16 %v142
    %v564 = vunpack.c.h.b16 %v142
    %v565 = vunpack.c.l.b16 %v143
    %v566 = vunpack.c.h.b16 %v143
    %v567 = vunpack.c.l.b16 %v144
    %v568 = vunpack.c.h.b16 %v144
    %v569 = vunpack.c.l.b16 %v145
    %v570 = vunpack.c.h.b16 %v145
    %v571 = vunpack.c.l.b16 %v146
    %v572 = vunpack.c.h.b16 %v146
    %v573 = vunpack.c.l.b16 %v147
    %v574 = vunpack.c.h.b16 %v147
    %v575 = vunpack.c.l.b16 %v148
    %v576 = vunpack.c.h.b16 %v148
    %v577 = vunpack.c.l.b16 %v149
    %v578 = vunpack.c.h.b16 %v149
    %v579 = vunpack.c.l.b16 %v150
    %v580 = vunpack.c.h.b16 %v150
    %v581 = vunpack.c.l.b16 %v151
    %v582 = vunpack.c.h.b16 %v151
    %v583 = vunpack.c.l.b16 %v152
    %v584 = vunpack.c.h.b16 %v152
    %v585 = vunpack.c.l.b16 %v153
    %v586 = vunpack.c.h.b16 %v153
    %v587 = vunpack.c.l.b16 %v154
    %v588 = vunpack.c.h.b16 %v154
    %v589 = vunpack.c.l.b16 %v155
    %v590 = vunpack.c.h.b16 %v155
    %v591 = vunpack.c.l.b16 %v156
    %v592 = vunpack.c.h.b16 %v156
    %v593 = vunpack.c.l.b16 %v157
    %v594 = vunpack.c.h.b16 %v157
    %v595 = vunpack.c.l.b16 %v158
    %v596 = vunpack.c.h.b16 %v158
    %v597 = vunpack.c.l.b16 %v159
    %v598 = vunpack.c.h.b16 %v159
    %v599 = vunpack.c.l.b16 %v160
    %v600 = vunpack.c.h.b16 %v160
    %v601 = vunpack.c.l.b16 %v161
    %v602 = vunpack.c.h.b16 %v161
    %v603 = vunpack.c.l.b16 %v162
    %v604 = vunpack.c.h.b16 %v162
    %v605 = vunpack.c.l.b16 %v163
    %v606 = vunpack.c.h.b16 %v163
    %v607 = vunpack.c.l.b16 %v164
    %v608 = vunpack.c.h.b16 %v164
    %v609 = vunpack.c.l.b16 %v165
    %v610 = vunpack.c.h.b16 %v165
    %v611 = vunpack.c.l.b16 %v166
    %v612 = vunpack.c.h.b16 %v166
    %v613 = vunpack.c.l.b16 %v167
    %v614 = vunpack.c.h.b16 %v167
    %v615 = vunpack.c.l.b16 %v168
    %v616 = vunpack.c.h.b16 %v168
    %v617 = vunpack.c.l.b16 %v169
    %v618 = vunpack.c.h.b16 %v169
    %v619 = vunpack.c.l.b16 %v170
    %v620 = vunpack.c.h.b16 %v170
    %v621 = vunpack.c.l.b16 %v171
    %v622 = vunpack.c.h.b16 %v171
    %v623 = vunpack.c.l.b16 %v172
    %v624 = vunpack.c.h.b16 %v172
    %v625 = vunpack.c.l.b16 %v173
    %v626 = vunpack.c.h.b16 %v173
    %v627 = vunpack.c.l.b16 %v174
    %v628 = vunpack.c.h.b16 %v174
    %v629 = vunpack.c.l.b16 %v175
    %v630 = vunpack.c.h.b16 %v175
    %v631 = vunpack.c.l.b16 %v176
    %v632 = vunpack.c.h.b16 %v176
    %v633 = vunpack.c.l.b16 %v177
    %v634 = vunpack.c.h.b16 %v177
    %v635 = vunpack.c.l.b16 %v178
    %v636 = vunpack.c.h.b16 %v178
    %v637 = vunpack.c.l.b16 %v179
    %v638 = vunpack.c.h.b16 %v179
    %v639 = vunpack.c.l.b16 %v180
    %v640 = vunpack.c.h.b16 %v180
    %v641 = vunpack.c.l.b16 %v181
    %v642 = vunpack.c.h.b16 %v181
    %v643 = vunpack.c.l.b16 %v182
    %v644 = vunpack.c.h.b16 %v182
    %v645 = vunpack.c.l.b16 %v183
    %v646 = vunpack.c.h.b16 %v183
    %v647 = vunpack.c.l.b16 %v184
    %v648 = vunpack.c.h.b16 %v184
    %v649 = vunpack.c.l.b16 %v185
    %v650 = vunpack.c.h.b16 %v185
    %v651 = vunpack.c.l.b16 %v186
    %v652 = vunpack.c.h.b16 %v186
    %v653 = vunpack.c.l.b16 %v187
    %v654 = vunpack.c.h.b16 %v187
    %v655 = vunpack.c.l.b16 %v188
    %v656 = vunpack.c.h.b16 %v188
    %v657 = vunpack.c.l.b16 %v189
    %v658 = vunpack.c.h.b16 %v189
    %v659 = vunpack.c.l.b16 %v190
    %v660 = vunpack.c.h.b16 %v190
    %v661 = vunpack.c.l.b16 %v191
    %v662 = vunpack.c.h.b16 %v191
    %v663 = vunpack.c.l.b16 %v192
    %v664 = vunpack.c.h.b16 %v192
    %v665 = vunpack.c.l.b16 %v193
    %v666 = vunpack.c.h.b16 %v193
    %v667 = vunpack.c.l.b16 %v194
    %v668 = vunpack.c.h.b16 %v194
    %v669 = vunpack.c.l.b16 %v195
    %v670 = vunpack.c.h.b16 %v195
    %v671 = vunpack.c.l.b16 %v196
    %v672 = vunpack.c.h.b16 %v196
    %v673 = vunpack.c.l.b16 %v197
    %v674 = vunpack.c.h.b16 %v197
    %v675 = vunpack.c.l.b16 %v198
    %v676 = vunpack.c.h.b16 %v198
    %v677 = vunpack.c.l.b16 %v199
    %v678 = vunpack.c.h.b16 %v199
    %v679 = vunpack.c.l.b16 %v200
    %v680 = vunpack.c.h.b16 %v200
    %v681 = vunpack.c.l.b16 %v201
    %v682 = vunpack.c.h.b16 %v201
    %v683 = vunpack.c.l.b16 %v202
    %v684 = vunpack.c.h.b16 %v202
    %v685 = vunpack.c.l.b16 %v203
    %v686 = vunpack.c.h.b16 %v203
    %v687 = vunpack.c.l.b16 %v204
    %v688 = vunpack.c.h.b16 %v204
    %v689 = vunpack.c.l.b16 %v205
    %v690 = vunpack.c.h.b16 %v205
    %v691 = vunpack.c.l.b16 %v206
    %v692 = vunpack.c.h.b16 %v206
    %v693 = vunpack.c.l.b16 %v207
    %v694 = vunpack.c.h.b16 %v207
    %v695 = vunpack.c.l.b16 %v208
    %v696 = vunpack.c.h.b16 %v208
    %v697 = vunpack.c.l.b16 %v209
    %v698 = vunpack.c.h.b16 %v209
    %v699 = vunpack.c.l.b16 %v210
    %v700 = vunpack.c.h.b16 %v210
    %v701 = vunpack.c.l.b16 %v211
    %v702 = vunpack.c.h.b16 %v211
    %v703 = vunpack.c.l.b16 %v212
    %v704 = vunpack.c.h.b16 %v212
    %v705 = vunpack.c.l.b16 %v213
    %v706 = vunpack.c.h.b16 %v213
    %v707 = vunpack.c.l.b16 %v214
    %v708 = vunpack.c.h.b16 %v214
    %v709 = vunpack.c.l.b16 %v215
    %v710 = vunpack.c.h.b16 %v215
    %v711 = vunpack.c.l.b16 %v216
    %v712 = vunpack.c.h.b16 %v216
    %v713 = vunpack.c.l.b16 %v217
    %v714 = vunpack.c.h.b16 %v217
    %v715 = vunpack.c.l.b16 %v218
    %v716 = vunpack.c.h.b16 %v218
    %v717 = vunpack.c.l.b16 %v219
    %v718 = vunpack.c.h.b16 %v219
    %v719 = vunpack.c.l.b16 %v220
    %v720 = vunpack.c.h.b16 %v220
    %v721 = vunpack.c.l.b16 %v221
    %v722 = vunpack.c.h.b16 %v221
    %v723 = vunpack.c.l.b16 %v222
    %v724 = vunpack.c.h.b16 %v222
    %v725 = vunpack.c.l.b16 %v223
    %v726 = vunpack.c.h.b16 %v223
    %v727 = vunpack.c.l.b16 %v224
    %v728 = vunpack.c.h.b16 %v224
    %v729 = vunpack.c.l.b16 %v225
    %v730 = vunpack.c.h.b16 %v225
    %v731 = vunpack.c.l.b16 %v226
    %v732 = vunpack.c.h.b16 %v226
    %v733 = vunpack.c.l.b16 %v227
    %v734 = vunpack.c.h.b16 %v227
    %v735 = vunpack.c.l.b16 %v228
    %v736 = vunpack.c.h.b16 %v228
    %v737 = vunpack.c.l.b16 %v229
    %v738 = vunpack.c.h.b16 %v229
    %v739 = vunpack.c.l.b16 %v230
    %v740 = vunpack.c.h.b16 %v230
    %v741 = vunpack.c.l.b16 %v231
    %v742 = vunpack.c.h.b16 %v231
    %v743 = vunpack.c.l.b16 %v232
    %v744 = vunpack.c.h.b16 %v232
    %v745 = vunpack.c.l.b16 %v233
    %v746 = vunpack.c.h.b16 %v233
    %v747 = vunpack.c.l.b16 %v234
    %v748 = vunpack.c.h.b16 %v234
    %v749 = vunpack.c.l.b16 %v235
    %v750 = vunpack.c.h.b16 %v235
    %v751 = vunpack.c.l.b16 %v236
    %v752 = vunpack.c.h.b16 %v236
    %v753 = vunpack.c.l.b16 %v237
    %v754 = vunpack.c.h.b16 %v237
    %v755 = vunpack.c.l.b16 %v238
    %v756 = vunpack.c.h.b16 %v238
    %v757 = vunpack.c.l.b16 %v239
    %v758 = vunpack.c.h.b16 %v239
    %v759 = vunpack.c.l.b16 %v240
    %v760 = vunpack.c.h.b16 %v240
    %v761 = vunpack.c.l.b16 %v241
    %v762 = vunpack.c.h.b16 %v241
    %v763 = vunpack.c.l.b16 %v242
    %v764 = vunpack.c.h.b16 %v242
    %v765 = vunpack.c.l.b16 %v243
    %v766 = vunpack.c.h.b16 %v243
    %v767 = vunpack.c.l.b16 %v244
    %v768 = vunpack.c.h.b16 %v244
    %v769 = vunpack.c.l.b16 %v245
    %v770 = vunpack.c.h.b16 %v245
    %v771 = vunpack.c.l.b16 %v246
    %v772 = vunpack.c.h.b16 %v246
    %v773 = vunpack.c.l.b16 %v247
    %v774 = vunpack.c.h.b16 %v247
    %v775 = vunpack.c.l.b16 %v248
    %v776 = vunpack.c.h.b16 %v248
    %v777 = vunpack.c.l.b16 %v249
    %v778 = vunpack.c.h.b16 %v249
    %v779 = vunpack.c.l.b16 %v250
    %v780 = vunpack.c.h.b16 %v250
    %v781 = vunpack.c.l.b16 %v251
    %v782 = vunpack.c.h.b16 %v251
    %v783 = vunpack.c.l.b16 %v252
    %v784 = vunpack.c.h.b16 %v252
    %v785 = vunpack.c.l.b16 %v253
    %v786 = vunpack.c.h.b16 %v253
    %v787 = vunpack.c.l.b16 %v254
    %v788 = vunpack.c.h.b16 %v254
    %v789 = vunpack.c.l.b16 %v255
    %v790 = vunpack.c.h.b16 %v255
    %v791 = vunpack.c.l.b16 %v256
    %v792 = vunpack.c.h.b16 %v256
    %v793 = vunpack.c.l.b16 %v257
    %v794 = vunpack.c.h.b16 %v257
    %v795 = vunpack.c.l.b16 %v258
    %v796 = vunpack.c.h.b16 %v258
    %v797 = vunpack.c.l.b16 %v259
    %v798 = vunpack.c.h.b16 %v259
    %v799 = vunpack.c.l.b16 %v260
    %v800 = vunpack.c.h.b16 %v260
    %v801 = vunpack.c.l.b16 %v261
    %v802 = vunpack.c.h.b16 %v261
    %v803 = vunpack.c.l.b16 %v262
    %v804 = vunpack.c.h.b16 %v262
    %v805 = vunpack.c.l.b16 %v263
    %v806 = vunpack.c.h.b16 %v263
    %v807 = vunpack.c.l.b16 %v264
    %v808 = vunpack.c.h.b16 %v264
    %v809 = vunpack.c.l.b16 %v265
    %v810 = vunpack.c.h.b16 %v265
    %v811 = vunpack.c.l.b16 %v266
    %v812 = vunpack.c.h.b16 %v266
    %v813 = vpack.c.b16 %v519, %v513
    %v814 = vpack.c.b16 %v520, %v514
    %v815 = vpack.c.b16 %v521, %v515
    %v816 = vpack.c.b16 %v522, %v516
    %v817 = vpack.c.b16 %v523, %v517
    %v818 = vpack.c.b16 %v524, %v518
    %v819 = vpack.c.b16 %v531, %v525
    %v820 = vpack.c.b16 %v532, %v526
    %v821 = vpack.c.b16 %v533, %v527
    %v822 = vpack.c.b16 %v534, %v528
    %v823 = vpack.c.b16 %v535, %v529
    %v824 = vpack.c.b16 %v536, %v530
    %v825 = vpack.c.b16 %v543, %v537
    %v826 = vpack.c.b16 %v544, %v538
    %v827 = vpack.c.b16 %v545, %v539
    %v828 = vpack.c.b16 %v546, %v540
    %v829 = vpack.c.b16 %v547, %v541
    %v830 = vpack.c.b16 %v548, %v542
    %v831 = vpack.c.b16 %v555, %v549
    %v832 = vpack.c.b16 %v556, %v550
    %v833 = vpack.c.b16 %v557, %v551
    %v834 = vpack.c.b16 %v558, %v552
    %v835 = vpack.c.b16 %v559, %v553
    %v836 = vpack.c.b16 %v560, %v554
    %v837 = vpack.c.b16 %v567, %v561
    %v838 = vpack.c.b16 %v568, %v562
    %v839 = vpack.c.b16 %v569, %v563
    %v840 = vpack.c.b16 %v570, %v564
    %v841 = vpack.c.b16 %v571, %v565
    %v842 = vpack.c.b16 %v572, %v566
    %v843 = vpack.c.b16 %v579, %v573
    %v844 = vpack.c.b16 %v580, %v574
    %v845 = vpack.c.b16 %v581, %v575
    %v846 = vpack.c.b16 %v582, %v576
    %v847 = vpack.c.b16 %v583, %v577
    %v848 = vpack.c.b16 %v584, %v578
    %v849 = vpack.c.b16 %v591, %v585
    %v850 = vpack.c.b16 %v592, %v586
    %v851 = vpack.c.b16 %v593, %v587
    %v852 = vpack.c.b16 %v594, %v588
    %v853 = vpack.c.b16 %v595, %v589
    %v854 = vpack.c.b16 %v596, %v590
    %v855 = vpack.c.b16 %v603, %v597
    %v856 = vpack.c.b16 %v604, %v598
    %v857 = vpack.c.b16 %v605, %v599
    %v858 = vpack.c.b16 %v606, %v600
    %v859 = vpack.c.b16 %v607, %v601
    %v860 = vpack.c.b16 %v608, %v602
    %v861 = vpack.c.b16 %v615, %v609
    %v862 = vpack.c.b16 %v616, %v610
    %v863 = vpack.c.b16 %v617, %v611
    %v864 = vpack.c.b16 %v618, %v612
    %v865 = vpack.c.b16 %v619, %v613
    %v866 = vpack.c.b16 %v620, %v614
    %v867 = vpack.c.b16 %v627, %v621
    %v868 = vpack.c.b16 %v628, %v622
    %v869 = vpack.c.b16 %v629, %v623
    %v870 = vpack.c.b16 %v630, %v624
    %v871 = vpack.c.b16 %v631, %v625
    %v872 = vpack.c.b16 %v632, %v626
    %v873 = vpack.c.b16 %v639, %v633
    %v874 = vpack.c.b16 %v640, %v634
    %v875 = vpack.c.b16 %v641, %v635
    %v876 = vpack.c.b16 %v642, %v636
    %v877 = vpack.c.b16 %v643, %v637
    %v878 = vpack.c.b16 %v644, %v638
    %v879 = vpack.c.b16 %v651, %v645
    %v880 = vpack.c.b16 %v652, %v646
    %v881 = vpack.c.b16 %v653, %v647
    %v882 = vpack.c.b16 %v654, %v648
    %v883 = vpack.c.b16 %v655, %v649
    %v884 = vpack.c.b16 %v656, %v650
    %v885 = vpack.c.b16 %v663, %v657
    %v886 = vpack.c.b16 %v664, %v658
    %v887 = vpack.c.b16 %v665, %v659
    %v888 = vpack.c.b16 %v666, %v660
    %v889 = vpack.c.b16 %v667, %v661
    %v890 = vpack.c.b16 %v668, %v662
    %v891 = vpack.c.b16 %v675, %v669
    %v892 = vpack.c.b16 %v676, %v670
    %v893 = vpack.c.b16 %v677, %v671
    %v894 = vpack.c.b16 %v678, %v672
    %v895 = vpack.c.b16 %v679, %v673
    %v896 = vpack.c.b16 %v680, %v674
    %v897 = vpack.c.b16 %v687, %v681
    %v898 = vpack.c.b16 %v688, %v682
    %v899 = vpack.c.b16 %v689, %v683
    %v900 = vpack.c.b16 %v690, %v684
    %v901 = vpack.c.b16 %v691, %v685
    %v902 = vpack.c.b16 %v692, %v686
    %v903 = vpack.c.b16 %v699, %v693
    %v904 = vpack.c.b16 %v700, %v694
    %v905 = vpack.c.b16 %v701, %v695
    %v906 = vpack.c.b16 %v702, %v696
    %v907 = vpack.c.b16 %v703, %v697
    %v908 = vpack.c.b16 %v704, %v698
    %v909 = vpack.c.b16 %v711, %v705
    %v910 = vpack.c.b16 %v712, %v706
    %v911 = vpack.c.b16 %v713, %v707
    %v912 = vpack.c.b16 %v714, %v708
    %v913 = vpack.c.b16 %v715, %v709
    %v914 = vpack.c.b16 %v716, %v710
    %v915 = vpack.c.b16 %v723, %v717
    %v916 = vpack.c.b16 %v724, %v718
    %v917 = vpack.c.b16 %v725, %v719
    %v918 = vpack.c.b16 %v726, %v720
    %v919 = vpack.c.b16 %v727, %v721
    %v920 = vpack.c.b16 %v728, %v722
    %v921 = vpack.c.b16 %v735, %v729
    %v922 = vpack.c.b16 %v736, %v730
    %v923 = vpack.c.b16 %v737, %v731
    %v924 = vpack.c.b16 %v738, %v732
    %v925 = vpack.c.b16 %v739, %v733
    %v926 = vpack.c.b16 %v740, %v734
    %v927 = vpack.c.b16 %v747, %v741
    %v928 = vpack.c.b16 %v748, %v742
    %v929 = vpack.c.b16 %v749, %v743
    %v930 = vpack.c.b16 %v750, %v744
    %v931 = vpack.c.b16 %v751, %v745
    %v932 = vpack.c.b16 %v752, %v746
    %v933 = vpack.c.b16 %v759, %v753
    %v934 = vpack.c.b16 %v760, %v754
    %v935 = vpack.c.b16 %v761, %v755
    %v936 = vpack.c.b16 %v762, %v756
    %v937 = vpack.c.b16 %v763, %v757
    %v938 = vpack.c.b16 %v764, %v758
    %v939 = vpack.c.b16 %v771, %v765
    %v940 = vpack.c.b16 %v772, %v766
    %v941 = vpack.c.b16 %v773, %v767
    %v942 = vpack.c.b16 %v774, %v768
    %v943 = vpack.c.b16 %v775, %v769
    %v944 = vpack.c.b16 %v776, %v770
    %v945 = vpack.c.b16 %v783, %v777
    %v946 = vpack.c.b16 %v784, %v778
    %v947 = vpack.c.b16 %v785, %v779
    %v948 = vpack.c.b16 %v786, %v780
    %v949 = vpack.c.b16 %v787, %v781
    %v950 = vpack.c.b16 %v788, %v782
    %v951 = vpack.c.b16 %v795, %v789
    %v952 = vpack.c.b16 %v796, %v790
    %v953 = vpack.c.b16 %v797, %v791
    %v954 = vpack.c.b16 %v798, %v792
    %v955 = vpack.c.b16 %v799, %v793
    %v956 = vpack.c.b16 %v800, %v794
    %v957 = vpack.c.b16 %v807, %v801
    %v958 = vpack.c.b16 %v808, %v802
    %v959 = vpack.c.b16 %v809, %v803
    %v960 = vpack.c.b16 %v810, %v804
    %v961 = vpack.c.b16 %v811, %v805
    %v962 = vpack.c.b16 %v812, %v806
    %v1209 = vunpack.c.l.b16 %v267
    %v1210 = vunpack.c.l.b16 %v268
    %v1211 = vunpack.c.l.b16 %v269
    %v1212 = vunpack.c.l.b16 %v270
    %v1213 = vunpack.c.l.b16 %v271
    %v1214 = vunpack.c.l.b16 %v272
    %v1215 = vunpack.c.l.b16 %v273
    %v1216 = vunpack.c.l.b16 %v274
    %v1217 = vunpack.c.l.b16 %v275
    %v1218 = vunpack.c.l.b16 %v276
    %v1219 = vunpack.c.l.b16 %v277
    %v1220 = vunpack.c.l.b16 %v278
    %v1221 = vunpack.c.l.b16 %v279
    %v1222 = vunpack.c.l.b16 %v280
    %v1223 = vunpack.c.l.b16 %v281
    %v1224 = vunpack.c.l.b16 %v282
    %v1225 = vunpack.c.l.b16 %v283
    %v1226 = vunpack.c.l.b16 %v284
    %v1227 = vunpack.c.l.b16 %v285
    %v1228 = vunpack.c.l.b16 %v286
    %v1229 = vunpack.c.l.b16 %v287
    %v1230 = vunpack.c.l.b16 %v288
    %v1231 = vunpack.c.l.b16 %v289
    %v1232 = vunpack.c.l.b16 %v290
    %v1233 = vunpack.c.l.b16 %v291
    %v1234 = vunpack.c.l.b16 %v292
    %v1235 = vunpack.c.l.b16 %v293
    %v1236 = vunpack.c.l.b16 %v294
    %v1237 = vunpack.c.l.b16 %v295
    %v1238 = vunpack.c.l.b16 %v296
    %v1239 = vunpack.c.l.b16 %v297
    %v1240 = vunpack.c.l.b16 %v298
    %v1241 = vunpack.c.l.b16 %v299
    %v1242 = vunpack.c.l.b16 %v300
    %v1243 = vunpack.c.l.b16 %v301
    %v1244 = vunpack.c.l.b16 %v302
    %v1245 = vunpack.c.l.b16 %v303
    %v1246 = vunpack.c.l.b16 %v304
    %v1247 = vunpack.c.l.b16 %v305
    %v1248 = vunpack.c.l.b16 %v306
    %v1249 = vunpack.c.l.b16 %v307
    %v1250 = vunpack.c.l.b16 %v308
    %v1251 = vunpack.c.l.b16 %v309
    %v1252 = vunpack.c.l.b16 %v310
    %v1253 = vunpack.c.l.b16 %v311
    %v1254 = vunpack.c.l.b16 %v312
    %v1255 = vunpack.c.l.b16 %v313
    %v1256 = vunpack.c.l.b16 %v314
    %v1257 = vunpack.c.l.b16 %v315
    %v1258 = vunpack.c.l.b16 %v316
    %v1259 = vunpack.c.l.b16 %v317
    %v1260 = vunpack.c.l.b16 %v318
    %v1261 = vunpack.c.l.b16 %v319
    %v1262 = vunpack.c.l.b16 %v320
    %v1263 = vunpack.c.l.b16 %v321
    %v1264 = vunpack.c.l.b16 %v322
    %v1265 = vunpack.c.l.b16 %v323
    %v1266 = vunpack.c.l.b16 %v324
    %v1267 = vunpack.c.l.b16 %v325
    %v1268 = vunpack.c.l.b16 %v326
    %v1269 = vunpack.c.l.b16 %v327
    %v1270 = vunpack.c.l.b16 %v328
    %v1271 = vunpack.c.l.b16 %v329
    %v1272 = vunpack.c.l.b16 %v330
    %v1273 = vunpack.c.l.b16 %v331
    %v1274 = vunpack.c.l.b16 %v332
    %v1275 = vunpack.c.l.b16 %v333
    %v1276 = vunpack.c.l.b16 %v334
    %v1277 = vunpack.c.l.b16 %v335
    %v1278 = vunpack.c.l.b16 %v336
    %v1279 = vunpack.c.l.b16 %v337
    %v1280 = vunpack.c.l.b16 %v338
    %v1281 = vunpack.c.l.b16 %v339
    %v1282 = vunpack.c.l.b16 %v340
    %v1283 = vunpack.c.l.b16 %v341
    %v1284 = vunpack.c.l.b16 %v342
    %v1285 = vunpack.c.l.b16 %v343
    %v1286 = vunpack.c.l.b16 %v344
    %v1287 = vunpack.c.l.b16 %v345
    %v1288 = vunpack.c.l.b16 %v346
    %v1289 = vunpack.c.l.b16 %v347
    %v1290 = vunpack.c.l.b16 %v348
    %v1291 = vunpack.c.l.b16 %v349
    %v1292 = vunpack.c.l.b16 %v350
    %v1293 = vunpack.c.l.b16 %v351
    %v1294 = vunpack.c.l.b16 %v352
    %v1295 = vunpack.c.l.b16 %v353
    %v1296 = vunpack.c.l.b16 %v354
    %v1297 = vunpack.c.l.b16 %v355
    %v1298 = vunpack.c.l.b16 %v356
    %v1299 = vunpack.c.l.b16 %v357
    %v1300 = vunpack.c.l.b16 %v358
    %v1301 = vunpack.c.l.b16 %v359
    %v1302 = vunpack.c.l.b16 %v360
    %v1303 = vunpack.c.l.b16 %v361
    %v1304 = vunpack.c.l.b16 %v362
    %v1305 = vpack.c.b16 %v1210, %v1209
    %v1306 = vpack.c.b16 %v1212, %v1211
    %v1307 = vpack.c.b16 %v1214, %v1213
    %v1308 = vpack.c.b16 %v1216, %v1215
    %v1309 = vpack.c.b16 %v1218, %v1217
    %v1310 = vpack.c.b16 %v1220, %v1219
    %v1311 = vpack.c.b16 %v1222, %v1221
    %v1312 = vpack.c.b16 %v1224, %v1223
    %v1313 = vpack.c.b16 %v1226, %v1225
    %v1314 = vpack.c.b16 %v1228, %v1227
    %v1315 = vpack.c.b16 %v1230, %v1229
    %v1316 = vpack.c.b16 %v1232, %v1231
    %v1317 = vpack.c.b16 %v1234, %v1233
    %v1318 = vpack.c.b16 %v1236, %v1235
    %v1319 = vpack.c.b16 %v1238, %v1237
    %v1320 = vpack.c.b16 %v1240, %v1239
    %v1321 = vpack.c.b16 %v1242, %v1241
    %v1322 = vpack.c.b16 %v1244, %v1243
    %v1323 = vpack.c.b16 %v1246, %v1245
    %v1324 = vpack.c.b16 %v1248, %v1247
    %v1325 = vpack.c.b16 %v1250, %v1249
    %v1326 = vpack.c.b16 %v1252, %v1251
    %v1327 = vpack.c.b16 %v1254, %v1253
    %v1328 = vpack.c.b16 %v1256, %v1255
    %v1329 = vpack.c.b16 %v1258, %v1257
    %v1330 = vpack.c.b16 %v1260, %v1259
    %v1331 = vpack.c.b16 %v1262, %v1261
    %v1332 = vpack.c.b16 %v1264, %v1263
    %v1333 = vpack.c.b16 %v1266, %v1265
    %v1334 = vpack.c.b16 %v1268, %v1267
    %v1335 = vpack.c.b16 %v1270, %v1269
    %v1336 = vpack.c.b16 %v1272, %v1271
    %v1337 = vpack.c.b16 %v1274, %v1273
    %v1338 = vpack.c.b16 %v1276, %v1275
    %v1339 = vpack.c.b16 %v1278, %v1277
    %v1340 = vpack.c.b16 %v1280, %v1279
    %v1341 = vpack.c.b16 %v1282, %v1281
    %v1342 = vpack.c.b16 %v1284, %v1283
    %v1343 = vpack.c.b16 %v1286, %v1285
    %v1344 = vpack.c.b16 %v1288, %v1287
    %v1345 = vpack.c.b16 %v1290, %v1289
    %v1346 = vpack.c.b16 %v1292, %v1291
    %v1347 = vpack.c.b16 %v1294, %v1293
    %v1348 = vpack.c.b16 %v1296, %v1295
    %v1349 = vpack.c.b16 %v1298, %v1297
    %v1350 = vpack.c.b16 %v1300, %v1299
    %v1351 = vpack.c.b16 %v1302, %v1301
    %v1352 = vpack.c.b16 %v1304, %v1303
    %1401 = vmatprep.subr.bf16.mxu0 0
    %1402 = vmatpush1.bf16.msra.mxu0 %v1305
    %1403 = vmatprep.subr.bf16.mxu0 0
    %1404 = vmatpush1.bf16.msra.mxu0 %v1306
    %1405 = vmatprep.subr.bf16.mxu0 0
    %1406 = vmatpush1.bf16.msra.mxu0 %v1307
    %1407 = vmatprep.subr.bf16.mxu0 0
    %1408 = vmatpush1.bf16.msra.mxu0 %v1308
    %1409 = vmatprep.subr.bf16.mxu0 0
    %1410 = vmatpush1.bf16.msra.mxu0 %v1309
    %1411 = vmatprep.subr.bf16.mxu0 0
    %1412 = vmatpush1.bf16.msra.mxu0 %v1310
    %1413 = vmatprep.subr.bf16.mxu0 0
    %1414 = vmatpush1.bf16.msra.mxu0 %v1311
    %1415 = vmatprep.subr.bf16.mxu0 0
    %1416 = vmatpush1.bf16.msra.mxu0 %v1312
    %1417 = vmatprep.subr.bf16.mxu0 0
    %1418 = vmatpush1.bf16.msra.mxu0 %v1313
    %1419 = vmatprep.subr.bf16.mxu0 0
    %1420 = vmatpush1.bf16.msra.mxu0 %v1314
    %1421 = vmatprep.subr.bf16.mxu0 0
    %1422 = vmatpush1.bf16.msra.mxu0 %v1315
    %1423 = vmatprep.subr.bf16.mxu0 0
    %1424 = vmatpush1.bf16.msra.mxu0 %v1316
    %1425 = vmatprep.subr.bf16.mxu0 0
    %1426 = vmatpush1.bf16.msra.mxu0 %v1317
    %1427 = vmatprep.subr.bf16.mxu0 0
    %1428 = vmatpush1.bf16.msra.mxu0 %v1318
    %1429 = vmatprep.subr.bf16.mxu0 0
    %1430 = vmatpush1.bf16.msra.mxu0 %v1319
    %1431 = vmatprep.subr.bf16.mxu0 0
    %1432 = vmatpush1.bf16.msra.mxu0 %v1320
    %1433 = vmatprep.mubr.bf16.mxu0 %v814
    %1434 = vmatmul.mubr.bf16.gmra.mrb[0].mxu0 %v813
    %v1435 = vpop.f32.mrb[0].mxu0
    %v1436 = vadd.f32 0.0, %v1435
    %v1437 = vpop.f32.mrb[0].mxu0
    %v1438 = vpop.f32.mrb[0].mxu0
    %v1439 = vadd.f32 0.0, %v1438
    %v1440 = vpop.f32.mrb[0].mxu0
    %1441 = vmatprep.mubr.bf16.mxu0 %v820
    %1442 = vmatmul.mubr.bf16.gmra.mrb[0].mxu0 %v819
    %v1443 = vpop.f32.mrb[0].mxu0
    %v1444 = vadd.f32 0.0, %v1443
    %v1445 = vpop.f32.mrb[0].mxu0
    %v1446 = vpop.f32.mrb[0].mxu0
    %v1447 = vadd.f32 0.0, %v1446
    %v1448 = vpop.f32.mrb[0].mxu0
    %1449 = vmatprep.mubr.bf16.mxu0 %v826
    %1450 = vmatmul.mubr.bf16.gmra.mrb[0].mxu0 %v825
    %v1451 = vpop.f32.mrb[0].mxu0
    %v1452 = vadd.f32 0.0, %v1451
    %v1453 = vpop.f32.mrb[0].mxu0
    %v1454 = vpop.f32.mrb[0].mxu0
    %v1455 = vadd.f32 0.0, %v1454
    %v1456 = vpop.f32.mrb[0].mxu0
    %1457 = vmatprep.mubr.bf16.mxu0 %v832
    %1458 = vmatmul.mubr.bf16.gmra.mrb[0].mxu0 %v831
    %v1459 = vpop.f32.mrb[0].mxu0
    %v1460 = vadd.f32 0.0, %v1459
    %v1461 = vpop.f32.mrb[0].mxu0
    %v1462 = vpop.f32.mrb[0].mxu0
    %v1463 = vadd.f32 0.0, %v1462
    %v1464 = vpop.f32.mrb[0].mxu0
    %1465 = vmatprep.mubr.bf16.mxu0 %v838
    %1466 = vmatmul.mubr.bf16.gmra.mrb[0].mxu0 %v837
    %v1467 = vpop.f32.mrb[0].mxu0
    %v1468 = vadd.f32 0.0, %v1467
    %v1469 = vpop.f32.mrb[0].mxu0
    %v1470 = vpop.f32.mrb[0].mxu0
    %v1471 = vadd.f32 0.0, %v1470
    %v1472 = vpop.f32.mrb[0].mxu0
    %1473 = vmatprep.mubr.bf16.mxu0 %v844
    %1474 = vmatmul.mubr.bf16.gmra.mrb[0].mxu0 %v843
    %v1475 = vpop.f32.mrb[0].mxu0
    %v1476 = vadd.f32 0.0, %v1475
    %v1477 = vpop.f32.mrb[0].mxu0
    %v1478 = vpop.f32.mrb[0].mxu0
    %v1479 = vadd.f32 0.0, %v1478
    %v1480 = vpop.f32.mrb[0].mxu0
    %1481 = vmatprep.mubr.bf16.mxu0 %v850
    %1482 = vmatmul.mubr.bf16.gmra.mrb[0].mxu0 %v849
    %v1483 = vpop.f32.mrb[0].mxu0
    %v1484 = vadd.f32 0.0, %v1483
    %v1485 = vpop.f32.mrb[0].mxu0
    %v1486 = vpop.f32.mrb[0].mxu0
    %v1487 = vadd.f32 0.0, %v1486
    %v1488 = vpop.f32.mrb[0].mxu0
    %1489 = vmatprep.mubr.bf16.mxu0 %v856
    %1490 = vmatmul.mubr.bf16.gmra.mrb[0].mxu0 %v855
    %v1491 = vpop.f32.mrb[0].mxu0
    %v1492 = vadd.f32 0.0, %v1491
    %v1493 = vpop.f32.mrb[0].mxu0
    %v1494 = vpop.f32.mrb[0].mxu0
    %v1495 = vadd.f32 0.0, %v1494
    %v1496 = vpop.f32.mrb[0].mxu0
    %1497 = vmatprep.mubr.bf16.mxu0 %v862
    %1498 = vmatmul.mubr.bf16.gmra.mrb[0].mxu0 %v861
    %v1499 = vpop.f32.mrb[0].mxu0
    %v1500 = vadd.f32 0.0, %v1499
    %v1501 = vpop.f32.mrb[0].mxu0
    %v1502 = vpop.f32.mrb[0].mxu0
    %v1503 = vadd.f32 0.0, %v1502
    %v1504 = vpop.f32.mrb[0].mxu0
    %1505 = vmatprep.mubr.bf16.mxu0 %v868
    %1506 = vmatmul.mubr.bf16.gmra.mrb[0].mxu0 %v867
    %v1507 = vpop.f32.mrb[0].mxu0
    %v1508 = vadd.f32 0.0, %v1507
    %v1509 = vpop.f32.mrb[0].mxu0
    %v1510 = vpop.f32.mrb[0].mxu0
    %v1511 = vadd.f32 0.0, %v1510
    %v1512 = vpop.f32.mrb[0].mxu0
    %1513 = vmatprep.mubr.bf16.mxu0 %v874
    %1514 = vmatmul.mubr.bf16.gmra.mrb[0].mxu0 %v873
    %v1515 = vpop.f32.mrb[0].mxu0
    %v1516 = vadd.f32 0.0, %v1515
    %v1517 = vpop.f32.mrb[0].mxu0
    %v1518 = vpop.f32.mrb[0].mxu0
    %v1519 = vadd.f32 0.0, %v1518
    %v1520 = vpop.f32.mrb[0].mxu0
    %1521 = vmatprep.mubr.bf16.mxu0 %v880
    %1522 = vmatmul.mubr.bf16.gmra.mrb[0].mxu0 %v879
    %v1523 = vpop.f32.mrb[0].mxu0
    %v1524 = vadd.f32 0.0, %v1523
    %v1525 = vpop.f32.mrb[0].mxu0
    %v1526 = vpop.f32.mrb[0].mxu0
    %v1527 = vadd.f32 0.0, %v1526
    %v1528 = vpop.f32.mrb[0].mxu0
    %1529 = vmatprep.mubr.bf16.mxu0 %v886
    %1530 = vmatmul.mubr.bf16.gmra.mrb[0].mxu0 %v885
    %v1531 = vpop.f32.mrb[0].mxu0
    %v1532 = vadd.f32 0.0, %v1531
    %v1533 = vpop.f32.mrb[0].mxu0
    %v1534 = vpop.f32.mrb[0].mxu0
    %v1535 = vadd.f32 0.0, %v1534
    %v1536 = vpop.f32.mrb[0].mxu0
    %1537 = vmatprep.mubr.bf16.mxu0 %v892
    %1538 = vmatmul.mubr.bf16.gmra.mrb[0].mxu0 %v891
    %v1539 = vpop.f32.mrb[0].mxu0
    %v1540 = vadd.f32 0.0, %v1539
    %v1541 = vpop.f32.mrb[0].mxu0
    %v1542 = vpop.f32.mrb[0].mxu0
    %v1543 = vadd.f32 0.0, %v1542
    %v1544 = vpop.f32.mrb[0].mxu0
    %1545 = vmatprep.mubr.bf16.mxu0 %v898
    %1546 = vmatmul.mubr.bf16.gmra.mrb[0].mxu0 %v897
    %v1547 = vpop.f32.mrb[0].mxu0
    %v1548 = vadd.f32 0.0, %v1547
    %v1549 = vpop.f32.mrb[0].mxu0
    %v1550 = vpop.f32.mrb[0].mxu0
    %v1551 = vadd.f32 0.0, %v1550
    %v1552 = vpop.f32.mrb[0].mxu0
    %1553 = vmatprep.mubr.bf16.mxu0 %v904
    %1554 = vmatmul.mubr.bf16.gmra.mrb[0].mxu0 %v903
    %v1555 = vpop.f32.mrb[0].mxu0
    %v1556 = vadd.f32 0.0, %v1555
    %v1557 = vpop.f32.mrb[0].mxu0
    %v1558 = vpop.f32.mrb[0].mxu0
    %v1559 = vadd.f32 0.0, %v1558
    %v1560 = vpop.f32.mrb[0].mxu0
    %1561 = vmatprep.mubr.bf16.mxu0 %v910
    %1562 = vmatmul.mubr.bf16.gmra.mrb[0].mxu0 %v909
    %v1563 = vpop.f32.mrb[0].mxu0
    %v1564 = vadd.f32 0.0, %v1563
    %v1565 = vpop.f32.mrb[0].mxu0
    %v1566 = vpop.f32.mrb[0].mxu0
    %v1567 = vadd.f32 0.0, %v1566
    %v1568 = vpop.f32.mrb[0].mxu0
    %1569 = vmatprep.mubr.bf16.mxu0 %v916
    %1570 = vmatmul.mubr.bf16.gmra.mrb[0].mxu0 %v915
    %v1571 = vpop.f32.mrb[0].mxu0
    %v1572 = vadd.f32 0.0, %v1571
    %v1573 = vpop.f32.mrb[0].mxu0
    %v1574 = vpop.f32.mrb[0].mxu0
    %v1575 = vadd.f32 0.0, %v1574
    %v1576 = vpop.f32.mrb[0].mxu0
    %1577 = vmatprep.mubr.bf16.mxu0 %v922
    %1578 = vmatmul.mubr.bf16.gmra.mrb[0].mxu0 %v921
    %v1579 = vpop.f32.mrb[0].mxu0
    %v1580 = vadd.f32 0.0, %v1579
    %v1581 = vpop.f32.mrb[0].mxu0
    %v1582 = vpop.f32.mrb[0].mxu0
    %v1583 = vadd.f32 0.0, %v1582
    %v1584 = vpop.f32.mrb[0].mxu0
    %1585 = vmatprep.mubr.bf16.mxu0 %v928
    %1586 = vmatmul.mubr.bf16.gmra.mrb[0].mxu0 %v927
    %v1587 = vpop.f32.mrb[0].mxu0
    %v1588 = vadd.f32 0.0, %v1587
    %v1589 = vpop.f32.mrb[0].mxu0
    %v1590 = vpop.f32.mrb[0].mxu0
    %v1591 = vadd.f32 0.0, %v1590
    %v1592 = vpop.f32.mrb[0].mxu0
    %1593 = vmatprep.mubr.bf16.mxu0 %v934
    %1594 = vmatmul.mubr.bf16.gmra.mrb[0].mxu0 %v933
    %v1595 = vpop.f32.mrb[0].mxu0
    %v1596 = vadd.f32 0.0, %v1595
    %v1597 = vpop.f32.mrb[0].mxu0
    %v1598 = vpop.f32.mrb[0].mxu0
    %v1599 = vadd.f32 0.0, %v1598
    %v1600 = vpop.f32.mrb[0].mxu0
    %1601 = vmatprep.mubr.bf16.mxu0 %v940
    %1602 = vmatmul.mubr.bf16.gmra.mrb[0].mxu0 %v939
    %v1603 = vpop.f32.mrb[0].mxu0
    %v1604 = vadd.f32 0.0, %v1603
    %v1605 = vpop.f32.mrb[0].mxu0
    %v1606 = vpop.f32.mrb[0].mxu0
    %v1607 = vadd.f32 0.0, %v1606
    %v1608 = vpop.f32.mrb[0].mxu0
    %1609 = vmatprep.mubr.bf16.mxu0 %v946
    %1610 = vmatmul.mubr.bf16.gmra.mrb[0].mxu0 %v945
    %v1611 = vpop.f32.mrb[0].mxu0
    %v1612 = vadd.f32 0.0, %v1611
    %v1613 = vpop.f32.mrb[0].mxu0
    %v1614 = vpop.f32.mrb[0].mxu0
    %v1615 = vadd.f32 0.0, %v1614
    %v1616 = vpop.f32.mrb[0].mxu0
    %1617 = vmatprep.mubr.bf16.mxu0 %v952
    %1618 = vmatmul.mubr.bf16.gmra.mrb[0].mxu0 %v951
    %v1619 = vpop.f32.mrb[0].mxu0
    %v1620 = vadd.f32 0.0, %v1619
    %v1621 = vpop.f32.mrb[0].mxu0
    %v1622 = vpop.f32.mrb[0].mxu0
    %v1623 = vadd.f32 0.0, %v1622
    %v1624 = vpop.f32.mrb[0].mxu0
    %1625 = vmatprep.mubr.bf16.mxu0 %v958
    %1626 = vmatmul.mubr.bf16.gmra.mrb[0].mxu0 %v957
    %v1627 = vpop.f32.mrb[0].mxu0
    %v1628 = vadd.f32 0.0, %v1627
    %v1629 = vpop.f32.mrb[0].mxu0
    %v1630 = vpop.f32.mrb[0].mxu0
    %v1631 = vadd.f32 0.0, %v1630
    %v1632 = vpop.f32.mrb[0].mxu0
    %1633 = vdwg.mxu0
    %1634 = vmatprep.subr.bf16.mxu0 0
    %1635 = vmatpush1.bf16.msra.mxu0 %v1321
    %1636 = vmatprep.subr.bf16.mxu0 0
    %1637 = vmatpush1.bf16.msra.mxu0 %v1322
    %1638 = vmatprep.subr.bf16.mxu0 0
    %1639 = vmatpush1.bf16.msra.mxu0 %v1323
    %1640 = vmatprep.subr.bf16.mxu0 0
    %1641 = vmatpush1.bf16.msra.mxu0 %v1324
    %1642 = vmatprep.subr.bf16.mxu0 0
    %1643 = vmatpush1.bf16.msra.mxu0 %v1325
    %1644 = vmatprep.subr.bf16.mxu0 0
    %1645 = vmatpush1.bf16.msra.mxu0 %v1326
    %1646 = vmatprep.subr.bf16.mxu0 0
    %1647 = vmatpush1.bf16.msra.mxu0 %v1327
    %1648 = vmatprep.subr.bf16.mxu0 0
    %1649 = vmatpush1.bf16.msra.mxu0 %v1328
    %1650 = vmatprep.subr.bf16.mxu0 0
    %1651 = vmatpush1.bf16.msra.mxu0 %v1329
    %1652 = vmatprep.subr.bf16.mxu0 0
    %1653 = vmatpush1.bf16.msra.mxu0 %v1330
    %1654 = vmatprep.subr.bf16.mxu0 0
    %1655 = vmatpush1.bf16.msra.mxu0 %v1331
    %1656 = vmatprep.subr.bf16.mxu0 0
    %1657 = vmatpush1.bf16.msra.mxu0 %v1332
    %1658 = vmatprep.subr.bf16.mxu0 0
    %1659 = vmatpush1.bf16.msra.mxu0 %v1333
    %1660 = vmatprep.subr.bf16.mxu0 0
    %1661 = vmatpush1.bf16.msra.mxu0 %v1334
    %1662 = vmatprep.subr.bf16.mxu0 0
    %1663 = vmatpush1.bf16.msra.mxu0 %v1335
    %1664 = vmatprep.subr.bf16.mxu0 0
    %1665 = vmatpush1.bf16.msra.mxu0 %v1336
    %1666 = vmatprep.mubr.bf16.mxu0 %v816
    %1667 = vmatmul.mubr.bf16.gmra.mrb[0].mxu0 %v815
    %v1668 = vpop.f32.mrb[0].mxu0
    %v1669 = vadd.f32 %v1436, %v1668
    %v1670 = vpop.f32.mrb[0].mxu0
    %v1671 = vpop.f32.mrb[0].mxu0
    %v1672 = vadd.f32 %v1439, %v1671
    %v1673 = vpop.f32.mrb[0].mxu0
    %1674 = vmatprep.mubr.bf16.mxu0 %v822
    %1675 = vmatmul.mubr.bf16.gmra.mrb[0].mxu0 %v821
    %v1676 = vpop.f32.mrb[0].mxu0
    %v1677 = vadd.f32 %v1444, %v1676
    %v1678 = vpop.f32.mrb[0].mxu0
    %v1679 = vpop.f32.mrb[0].mxu0
    %v1680 = vadd.f32 %v1447, %v1679
    %v1681 = vpop.f32.mrb[0].mxu0
    %1682 = vmatprep.mubr.bf16.mxu0 %v828
    %1683 = vmatmul.mubr.bf16.gmra.mrb[0].mxu0 %v827
    %v1684 = vpop.f32.mrb[0].mxu0
    %v1685 = vadd.f32 %v1452, %v1684
    %v1686 = vpop.f32.mrb[0].mxu0
    %v1687 = vpop.f32.mrb[0].mxu0
    %v1688 = vadd.f32 %v1455, %v1687
    %v1689 = vpop.f32.mrb[0].mxu0
    %1690 = vmatprep.mubr.bf16.mxu0 %v834
    %1691 = vmatmul.mubr.bf16.gmra.mrb[0].mxu0 %v833
    %v1692 = vpop.f32.mrb[0].mxu0
    %v1693 = vadd.f32 %v1460, %v1692
    %v1694 = vpop.f32.mrb[0].mxu0
    %v1695 = vpop.f32.mrb[0].mxu0
    %v1696 = vadd.f32 %v1463, %v1695
    %v1697 = vpop.f32.mrb[0].mxu0
    %1698 = vmatprep.mubr.bf16.mxu0 %v840
    %1699 = vmatmul.mubr.bf16.gmra.mrb[0].mxu0 %v839
    %v1700 = vpop.f32.mrb[0].mxu0
    %v1701 = vadd.f32 %v1468, %v1700
    %v1702 = vpop.f32.mrb[0].mxu0
    %v1703 = vpop.f32.mrb[0].mxu0
    %v1704 = vadd.f32 %v1471, %v1703
    %v1705 = vpop.f32.mrb[0].mxu0
    %1706 = vmatprep.mubr.bf16.mxu0 %v846
    %1707 = vmatmul.mubr.bf16.gmra.mrb[0].mxu0 %v845
    %v1708 = vpop.f32.mrb[0].mxu0
    %v1709 = vadd.f32 %v1476, %v1708
    %v1710 = vpop.f32.mrb[0].mxu0
    %v1711 = vpop.f32.mrb[0].mxu0
    %v1712 = vadd.f32 %v1479, %v1711
    %v1713 = vpop.f32.mrb[0].mxu0
    %1714 = vmatprep.mubr.bf16.mxu0 %v852
    %1715 = vmatmul.mubr.bf16.gmra.mrb[0].mxu0 %v851
    %v1716 = vpop.f32.mrb[0].mxu0
    %v1717 = vadd.f32 %v1484, %v1716
    %v1718 = vpop.f32.mrb[0].mxu0
    %v1719 = vpop.f32.mrb[0].mxu0
    %v1720 = vadd.f32 %v1487, %v1719
    %v1721 = vpop.f32.mrb[0].mxu0
    %1722 = vmatprep.mubr.bf16.mxu0 %v858
    %1723 = vmatmul.mubr.bf16.gmra.mrb[0].mxu0 %v857
    %v1724 = vpop.f32.mrb[0].mxu0
    %v1725 = vadd.f32 %v1492, %v1724
    %v1726 = vpop.f32.mrb[0].mxu0
    %v1727 = vpop.f32.mrb[0].mxu0
    %v1728 = vadd.f32 %v1495, %v1727
    %v1729 = vpop.f32.mrb[0].mxu0
    %1730 = vmatprep.mubr.bf16.mxu0 %v864
    %1731 = vmatmul.mubr.bf16.gmra.mrb[0].mxu0 %v863
    %v1732 = vpop.f32.mrb[0].mxu0
    %v1733 = vadd.f32 %v1500, %v1732
    %v1734 = vpop.f32.mrb[0].mxu0
    %v1735 = vpop.f32.mrb[0].mxu0
    %v1736 = vadd.f32 %v1503, %v1735
    %v1737 = vpop.f32.mrb[0].mxu0
    %1738 = vmatprep.mubr.bf16.mxu0 %v870
    %1739 = vmatmul.mubr.bf16.gmra.mrb[0].mxu0 %v869
    %v1740 = vpop.f32.mrb[0].mxu0
    %v1741 = vadd.f32 %v1508, %v1740
    %v1742 = vpop.f32.mrb[0].mxu0
    %v1743 = vpop.f32.mrb[0].mxu0
    %v1744 = vadd.f32 %v1511, %v1743
    %v1745 = vpop.f32.mrb[0].mxu0
    %1746 = vmatprep.mubr.bf16.mxu0 %v876
    %1747 = vmatmul.mubr.bf16.gmra.mrb[0].mxu0 %v875
    %v1748 = vpop.f32.mrb[0].mxu0
    %v1749 = vadd.f32 %v1516, %v1748
    %v1750 = vpop.f32.mrb[0].mxu0
    %v1751 = vpop.f32.mrb[0].mxu0
    %v1752 = vadd.f32 %v1519, %v1751
    %v1753 = vpop.f32.mrb[0].mxu0
    %1754 = vmatprep.mubr.bf16.mxu0 %v882
    %1755 = vmatmul.mubr.bf16.gmra.mrb[0].mxu0 %v881
    %v1756 = vpop.f32.mrb[0].mxu0
    %v1757 = vadd.f32 %v1524, %v1756
    %v1758 = vpop.f32.mrb[0].mxu0
    %v1759 = vpop.f32.mrb[0].mxu0
    %v1760 = vadd.f32 %v1527, %v1759
    %v1761 = vpop.f32.mrb[0].mxu0
    %1762 = vmatprep.mubr.bf16.mxu0 %v888
    %1763 = vmatmul.mubr.bf16.gmra.mrb[0].mxu0 %v887
    %v1764 = vpop.f32.mrb[0].mxu0
    %v1765 = vadd.f32 %v1532, %v1764
    %v1766 = vpop.f32.mrb[0].mxu0
    %v1767 = vpop.f32.mrb[0].mxu0
    %v1768 = vadd.f32 %v1535, %v1767
    %v1769 = vpop.f32.mrb[0].mxu0
    %1770 = vmatprep.mubr.bf16.mxu0 %v894
    %1771 = vmatmul.mubr.bf16.gmra.mrb[0].mxu0 %v893
    %v1772 = vpop.f32.mrb[0].mxu0
    %v1773 = vadd.f32 %v1540, %v1772
    %v1774 = vpop.f32.mrb[0].mxu0
    %v1775 = vpop.f32.mrb[0].mxu0
    %v1776 = vadd.f32 %v1543, %v1775
    %v1777 = vpop.f32.mrb[0].mxu0
    %1778 = vmatprep.mubr.bf16.mxu0 %v900
    %1779 = vmatmul.mubr.bf16.gmra.mrb[0].mxu0 %v899
    %v1780 = vpop.f32.mrb[0].mxu0
    %v1781 = vadd.f32 %v1548, %v1780
    %v1782 = vpop.f32.mrb[0].mxu0
    %v1783 = vpop.f32.mrb[0].mxu0
    %v1784 = vadd.f32 %v1551, %v1783
    %v1785 = vpop.f32.mrb[0].mxu0
    %1786 = vmatprep.mubr.bf16.mxu0 %v906
    %1787 = vmatmul.mubr.bf16.gmra.mrb[0].mxu0 %v905
    %v1788 = vpop.f32.mrb[0].mxu0
    %v1789 = vadd.f32 %v1556, %v1788
    %v1790 = vpop.f32.mrb[0].mxu0
    %v1791 = vpop.f32.mrb[0].mxu0
    %v1792 = vadd.f32 %v1559, %v1791
    %v1793 = vpop.f32.mrb[0].mxu0
    %1794 = vmatprep.mubr.bf16.mxu0 %v912
    %1795 = vmatmul.mubr.bf16.gmra.mrb[0].mxu0 %v911
    %v1796 = vpop.f32.mrb[0].mxu0
    %v1797 = vadd.f32 %v1564, %v1796
    %v1798 = vpop.f32.mrb[0].mxu0
    %v1799 = vpop.f32.mrb[0].mxu0
    %v1800 = vadd.f32 %v1567, %v1799
    %v1801 = vpop.f32.mrb[0].mxu0
    %1802 = vmatprep.mubr.bf16.mxu0 %v918
    %1803 = vmatmul.mubr.bf16.gmra.mrb[0].mxu0 %v917
    %v1804 = vpop.f32.mrb[0].mxu0
    %v1805 = vadd.f32 %v1572, %v1804
    %v1806 = vpop.f32.mrb[0].mxu0
    %v1807 = vpop.f32.mrb[0].mxu0
    %v1808 = vadd.f32 %v1575, %v1807
    %v1809 = vpop.f32.mrb[0].mxu0
    %1810 = vmatprep.mubr.bf16.mxu0 %v924
    %1811 = vmatmul.mubr.bf16.gmra.mrb[0].mxu0 %v923
    %v1812 = vpop.f32.mrb[0].mxu0
    %v1813 = vadd.f32 %v1580, %v1812
    %v1814 = vpop.f32.mrb[0].mxu0
    %v1815 = vpop.f32.mrb[0].mxu0
    %v1816 = vadd.f32 %v1583, %v1815
    %v1817 = vpop.f32.mrb[0].mxu0
    %1818 = vmatprep.mubr.bf16.mxu0 %v930
    %1819 = vmatmul.mubr.bf16.gmra.mrb[0].mxu0 %v929
    %v1820 = vpop.f32.mrb[0].mxu0
    %v1821 = vadd.f32 %v1588, %v1820
    %v1822 = vpop.f32.mrb[0].mxu0
    %v1823 = vpop.f32.mrb[0].mxu0
    %v1824 = vadd.f32 %v1591, %v1823
    %v1825 = vpop.f32.mrb[0].mxu0
    %1826 = vmatprep.mubr.bf16.mxu0 %v936
    %1827 = vmatmul.mubr.bf16.gmra.mrb[0].mxu0 %v935
    %v1828 = vpop.f32.mrb[0].mxu0
    %v1829 = vadd.f32 %v1596, %v1828
    %v1830 = vpop.f32.mrb[0].mxu0
    %v1831 = vpop.f32.mrb[0].mxu0
    %v1832 = vadd.f32 %v1599, %v1831
    %v1833 = vpop.f32.mrb[0].mxu0
    %1834 = vmatprep.mubr.bf16.mxu0 %v942
    %1835 = vmatmul.mubr.bf16.gmra.mrb[0].mxu0 %v941
    %v1836 = vpop.f32.mrb[0].mxu0
    %v1837 = vadd.f32 %v1604, %v1836
    %v1838 = vpop.f32.mrb[0].mxu0
    %v1839 = vpop.f32.mrb[0].mxu0
    %v1840 = vadd.f32 %v1607, %v1839
    %v1841 = vpop.f32.mrb[0].mxu0
    %1842 = vmatprep.mubr.bf16.mxu0 %v948
    %1843 = vmatmul.mubr.bf16.gmra.mrb[0].mxu0 %v947
    %v1844 = vpop.f32.mrb[0].mxu0
    %v1845 = vadd.f32 %v1612, %v1844
    %v1846 = vpop.f32.mrb[0].mxu0
    %v1847 = vpop.f32.mrb[0].mxu0
    %v1848 = vadd.f32 %v1615, %v1847
    %v1849 = vpop.f32.mrb[0].mxu0
    %1850 = vmatprep.mubr.bf16.mxu0 %v954
    %1851 = vmatmul.mubr.bf16.gmra.mrb[0].mxu0 %v953
    %v1852 = vpop.f32.mrb[0].mxu0
    %v1853 = vadd.f32 %v1620, %v1852
    %v1854 = vpop.f32.mrb[0].mxu0
    %v1855 = vpop.f32.mrb[0].mxu0
    %v1856 = vadd.f32 %v1623, %v1855
    %v1857 = vpop.f32.mrb[0].mxu0
    %1858 = vmatprep.mubr.bf16.mxu0 %v960
    %1859 = vmatmul.mubr.bf16.gmra.mrb[0].mxu0 %v959
    %v1860 = vpop.f32.mrb[0].mxu0
    %v1861 = vadd.f32 %v1628, %v1860
    %v1862 = vpop.f32.mrb[0].mxu0
    %v1863 = vpop.f32.mrb[0].mxu0
    %v1864 = vadd.f32 %v1631, %v1863
    %v1865 = vpop.f32.mrb[0].mxu0
    %1866 = vdwg.mxu0
    %1867 = vmatprep.subr.bf16.mxu0 0
    %1868 = vmatpush1.bf16.msra.mxu0 %v1337
    %1869 = vmatprep.subr.bf16.mxu0 0
    %1870 = vmatpush1.bf16.msra.mxu0 %v1338
    %1871 = vmatprep.subr.bf16.mxu0 0
    %1872 = vmatpush1.bf16.msra.mxu0 %v1339
    %1873 = vmatprep.subr.bf16.mxu0 0
    %1874 = vmatpush1.bf16.msra.mxu0 %v1340
    %1875 = vmatprep.subr.bf16.mxu0 0
    %1876 = vmatpush1.bf16.msra.mxu0 %v1341
    %1877 = vmatprep.subr.bf16.mxu0 0
    %1878 = vmatpush1.bf16.msra.mxu0 %v1342
    %1879 = vmatprep.subr.bf16.mxu0 0
    %1880 = vmatpush1.bf16.msra.mxu0 %v1343
    %1881 = vmatprep.subr.bf16.mxu0 0
    %1882 = vmatpush1.bf16.msra.mxu0 %v1344
    %1883 = vmatprep.subr.bf16.mxu0 0
    %1884 = vmatpush1.bf16.msra.mxu0 %v1345
    %1885 = vmatprep.subr.bf16.mxu0 0
    %1886 = vmatpush1.bf16.msra.mxu0 %v1346
    %1887 = vmatprep.subr.bf16.mxu0 0
    %1888 = vmatpush1.bf16.msra.mxu0 %v1347
    %1889 = vmatprep.subr.bf16.mxu0 0
    %1890 = vmatpush1.bf16.msra.mxu0 %v1348
    %1891 = vmatprep.subr.bf16.mxu0 0
    %1892 = vmatpush1.bf16.msra.mxu0 %v1349
    %1893 = vmatprep.subr.bf16.mxu0 0
    %1894 = vmatpush1.bf16.msra.mxu0 %v1350
    %1895 = vmatprep.subr.bf16.mxu0 0
    %1896 = vmatpush1.bf16.msra.mxu0 %v1351
    %1897 = vmatprep.subr.bf16.mxu0 0
    %1898 = vmatpush1.bf16.msra.mxu0 %v1352
    %1899 = vmatprep.mubr.bf16.mxu0 %v818
    %1900 = vmatmul.mubr.bf16.gmra.mrb[0].mxu0 %v817
    %v1901 = vpop.f32.mrb[0].mxu0
    %v1902 = vadd.f32 %v1669, %v1901
    %v1903 = vpop.f32.mrb[0].mxu0
    %v1904 = vpop.f32.mrb[0].mxu0
    %v1905 = vadd.f32 %v1672, %v1904
    %v1906 = vpop.f32.mrb[0].mxu0
    %1907 = vmatprep.mubr.bf16.mxu0 %v824
    %1908 = vmatmul.mubr.bf16.gmra.mrb[0].mxu0 %v823
    %v1909 = vpop.f32.mrb[0].mxu0
    %v1910 = vadd.f32 %v1677, %v1909
    %v1911 = vpop.f32.mrb[0].mxu0
    %v1912 = vpop.f32.mrb[0].mxu0
    %v1913 = vadd.f32 %v1680, %v1912
    %v1914 = vpop.f32.mrb[0].mxu0
    %1915 = vmatprep.mubr.bf16.mxu0 %v830
    %1916 = vmatmul.mubr.bf16.gmra.mrb[0].mxu0 %v829
    %v1917 = vpop.f32.mrb[0].mxu0
    %v1918 = vadd.f32 %v1685, %v1917
    %v1919 = vpop.f32.mrb[0].mxu0
    %v1920 = vpop.f32.mrb[0].mxu0
    %v1921 = vadd.f32 %v1688, %v1920
    %v1922 = vpop.f32.mrb[0].mxu0
    %1923 = vmatprep.mubr.bf16.mxu0 %v836
    %1924 = vmatmul.mubr.bf16.gmra.mrb[0].mxu0 %v835
    %v1925 = vpop.f32.mrb[0].mxu0
    %v1926 = vadd.f32 %v1693, %v1925
    %v1927 = vpop.f32.mrb[0].mxu0
    %v1928 = vpop.f32.mrb[0].mxu0
    %v1929 = vadd.f32 %v1696, %v1928
    %v1930 = vpop.f32.mrb[0].mxu0
    %1931 = vmatprep.mubr.bf16.mxu0 %v842
    %1932 = vmatmul.mubr.bf16.gmra.mrb[0].mxu0 %v841
    %v1933 = vpop.f32.mrb[0].mxu0
    %v1934 = vadd.f32 %v1701, %v1933
    %v1935 = vpop.f32.mrb[0].mxu0
    %v1936 = vpop.f32.mrb[0].mxu0
    %v1937 = vadd.f32 %v1704, %v1936
    %v1938 = vpop.f32.mrb[0].mxu0
    %1939 = vmatprep.mubr.bf16.mxu0 %v848
    %1940 = vmatmul.mubr.bf16.gmra.mrb[0].mxu0 %v847
    %v1941 = vpop.f32.mrb[0].mxu0
    %v1942 = vadd.f32 %v1709, %v1941
    %v1943 = vpop.f32.mrb[0].mxu0
    %v1944 = vpop.f32.mrb[0].mxu0
    %v1945 = vadd.f32 %v1712, %v1944
    %v1946 = vpop.f32.mrb[0].mxu0
    %1947 = vmatprep.mubr.bf16.mxu0 %v854
    %1948 = vmatmul.mubr.bf16.gmra.mrb[0].mxu0 %v853
    %v1949 = vpop.f32.mrb[0].mxu0
    %v1950 = vadd.f32 %v1717, %v1949
    %v1951 = vpop.f32.mrb[0].mxu0
    %v1952 = vpop.f32.mrb[0].mxu0
    %v1953 = vadd.f32 %v1720, %v1952
    %v1954 = vpop.f32.mrb[0].mxu0
    %1955 = vmatprep.mubr.bf16.mxu0 %v860
    %1956 = vmatmul.mubr.bf16.gmra.mrb[0].mxu0 %v859
    %v1957 = vpop.f32.mrb[0].mxu0
    %v1958 = vadd.f32 %v1725, %v1957
    %v1959 = vpop.f32.mrb[0].mxu0
    %v1960 = vpop.f32.mrb[0].mxu0
    %v1961 = vadd.f32 %v1728, %v1960
    %v1962 = vpop.f32.mrb[0].mxu0
    %1963 = vmatprep.mubr.bf16.mxu0 %v866
    %1964 = vmatmul.mubr.bf16.gmra.mrb[0].mxu0 %v865
    %v1965 = vpop.f32.mrb[0].mxu0
    %v1966 = vadd.f32 %v1733, %v1965
    %v1967 = vpop.f32.mrb[0].mxu0
    %v1968 = vpop.f32.mrb[0].mxu0
    %v1969 = vadd.f32 %v1736, %v1968
    %v1970 = vpop.f32.mrb[0].mxu0
    %1971 = vmatprep.mubr.bf16.mxu0 %v872
    %1972 = vmatmul.mubr.bf16.gmra.mrb[0].mxu0 %v871
    %v1973 = vpop.f32.mrb[0].mxu0
    %v1974 = vadd.f32 %v1741, %v1973
    %v1975 = vpop.f32.mrb[0].mxu0
    %v1976 = vpop.f32.mrb[0].mxu0
    %v1977 = vadd.f32 %v1744, %v1976
    %v1978 = vpop.f32.mrb[0].mxu0
    %1979 = vmatprep.mubr.bf16.mxu0 %v878
    %1980 = vmatmul.mubr.bf16.gmra.mrb[0].mxu0 %v877
    %v1981 = vpop.f32.mrb[0].mxu0
    %v1982 = vadd.f32 %v1749, %v1981
    %v1983 = vpop.f32.mrb[0].mxu0
    %v1984 = vpop.f32.mrb[0].mxu0
    %v1985 = vadd.f32 %v1752, %v1984
    %v1986 = vpop.f32.mrb[0].mxu0
    %1987 = vmatprep.mubr.bf16.mxu0 %v884
    %1988 = vmatmul.mubr.bf16.gmra.mrb[0].mxu0 %v883
    %v1989 = vpop.f32.mrb[0].mxu0
    %v1990 = vadd.f32 %v1757, %v1989
    %v1991 = vpop.f32.mrb[0].mxu0
    %v1992 = vpop.f32.mrb[0].mxu0
    %v1993 = vadd.f32 %v1760, %v1992
    %v1994 = vpop.f32.mrb[0].mxu0
    %1995 = vmatprep.mubr.bf16.mxu0 %v890
    %1996 = vmatmul.mubr.bf16.gmra.mrb[0].mxu0 %v889
    %v1997 = vpop.f32.mrb[0].mxu0
    %v1998 = vadd.f32 %v1765, %v1997
    %v1999 = vpop.f32.mrb[0].mxu0
    %v2000 = vpop.f32.mrb[0].mxu0
    %v2001 = vadd.f32 %v1768, %v2000
    %v2002 = vpop.f32.mrb[0].mxu0
    %2003 = vmatprep.mubr.bf16.mxu0 %v896
    %2004 = vmatmul.mubr.bf16.gmra.mrb[0].mxu0 %v895
    %v2005 = vpop.f32.mrb[0].mxu0
    %v2006 = vadd.f32 %v1773, %v2005
    %v2007 = vpop.f32.mrb[0].mxu0
    %v2008 = vpop.f32.mrb[0].mxu0
    %v2009 = vadd.f32 %v1776, %v2008
    %v2010 = vpop.f32.mrb[0].mxu0
    %2011 = vmatprep.mubr.bf16.mxu0 %v902
    %2012 = vmatmul.mubr.bf16.gmra.mrb[0].mxu0 %v901
    %v2013 = vpop.f32.mrb[0].mxu0
    %v2014 = vadd.f32 %v1781, %v2013
    %v2015 = vpop.f32.mrb[0].mxu0
    %v2016 = vpop.f32.mrb[0].mxu0
    %v2017 = vadd.f32 %v1784, %v2016
    %v2018 = vpop.f32.mrb[0].mxu0
    %2019 = vmatprep.mubr.bf16.mxu0 %v908
    %2020 = vmatmul.mubr.bf16.gmra.mrb[0].mxu0 %v907
    %v2021 = vpop.f32.mrb[0].mxu0
    %v2022 = vadd.f32 %v1789, %v2021
    %v2023 = vpop.f32.mrb[0].mxu0
    %v2024 = vpop.f32.mrb[0].mxu0
    %v2025 = vadd.f32 %v1792, %v2024
    %v2026 = vpop.f32.mrb[0].mxu0
    %2027 = vmatprep.mubr.bf16.mxu0 %v914
    %2028 = vmatmul.mubr.bf16.gmra.mrb[0].mxu0 %v913
    %v2029 = vpop.f32.mrb[0].mxu0
    %v2030 = vadd.f32 %v1797, %v2029
    %v2031 = vpop.f32.mrb[0].mxu0
    %v2032 = vpop.f32.mrb[0].mxu0
    %v2033 = vadd.f32 %v1800, %v2032
    %v2034 = vpop.f32.mrb[0].mxu0
    %2035 = vmatprep.mubr.bf16.mxu0 %v920
    %2036 = vmatmul.mubr.bf16.gmra.mrb[0].mxu0 %v919
    %v2037 = vpop.f32.mrb[0].mxu0
    %v2038 = vadd.f32 %v1805, %v2037
    %v2039 = vpop.f32.mrb[0].mxu0
    %v2040 = vpop.f32.mrb[0].mxu0
    %v2041 = vadd.f32 %v1808, %v2040
    %v2042 = vpop.f32.mrb[0].mxu0
    %2043 = vmatprep.mubr.bf16.mxu0 %v926
    %2044 = vmatmul.mubr.bf16.gmra.mrb[0].mxu0 %v925
    %v2045 = vpop.f32.mrb[0].mxu0
    %v2046 = vadd.f32 %v1813, %v2045
    %v2047 = vpop.f32.mrb[0].mxu0
    %v2048 = vpop.f32.mrb[0].mxu0
    %v2049 = vadd.f32 %v1816, %v2048
    %v2050 = vpop.f32.mrb[0].mxu0
    %2051 = vmatprep.mubr.bf16.mxu0 %v932
    %2052 = vmatmul.mubr.bf16.gmra.mrb[0].mxu0 %v931
    %v2053 = vpop.f32.mrb[0].mxu0
    %v2054 = vadd.f32 %v1821, %v2053
    %v2055 = vpop.f32.mrb[0].mxu0
    %v2056 = vpop.f32.mrb[0].mxu0
    %v2057 = vadd.f32 %v1824, %v2056
    %v2058 = vpop.f32.mrb[0].mxu0
    %2059 = vmatprep.mubr.bf16.mxu0 %v938
    %2060 = vmatmul.mubr.bf16.gmra.mrb[0].mxu0 %v937
    %v2061 = vpop.f32.mrb[0].mxu0
    %v2062 = vadd.f32 %v1829, %v2061
    %v2063 = vpop.f32.mrb[0].mxu0
    %v2064 = vpop.f32.mrb[0].mxu0
    %v2065 = vadd.f32 %v1832, %v2064
    %v2066 = vpop.f32.mrb[0].mxu0
    %2067 = vmatprep.mubr.bf16.mxu0 %v944
    %2068 = vmatmul.mubr.bf16.gmra.mrb[0].mxu0 %v943
    %v2069 = vpop.f32.mrb[0].mxu0
    %v2070 = vadd.f32 %v1837, %v2069
    %v2071 = vpop.f32.mrb[0].mxu0
    %v2072 = vpop.f32.mrb[0].mxu0
    %v2073 = vadd.f32 %v1840, %v2072
    %v2074 = vpop.f32.mrb[0].mxu0
    %2075 = vmatprep.mubr.bf16.mxu0 %v950
    %2076 = vmatmul.mubr.bf16.gmra.mrb[0].mxu0 %v949
    %v2077 = vpop.f32.mrb[0].mxu0
    %v2078 = vadd.f32 %v1845, %v2077
    %v2079 = vpop.f32.mrb[0].mxu0
    %v2080 = vpop.f32.mrb[0].mxu0
    %v2081 = vadd.f32 %v1848, %v2080
    %v2082 = vpop.f32.mrb[0].mxu0
    %2083 = vmatprep.mubr.bf16.mxu0 %v956
    %2084 = vmatmul.mubr.bf16.gmra.mrb[0].mxu0 %v955
    %v2085 = vpop.f32.mrb[0].mxu0
    %v2086 = vadd.f32 %v1853, %v2085
    %v2087 = vpop.f32.mrb[0].mxu0
    %v2088 = vpop.f32.mrb[0].mxu0
    %v2089 = vadd.f32 %v1856, %v2088
    %v2090 = vpop.f32.mrb[0].mxu0
    %2091 = vmatprep.mubr.bf16.mxu0 %v962
    %2092 = vmatmul.mubr.bf16.gmra.mrb[0].mxu0 %v961
    %v2093 = vpop.f32.mrb[0].mxu0
    %v2094 = vadd.f32 %v1861, %v2093
    %v2095 = vpop.f32.mrb[0].mxu0
    %v2096 = vpop.f32.mrb[0].mxu0
    %v2097 = vadd.f32 %v1864, %v2096
    %v2098 = vpop.f32.mrb[0].mxu0
    %2099 = vdwg.mxu0
    %v2100 = vld [vmem:[#allocation8] sm:$0x1]
    %v2102 = vlaneseq
    %v2103 = vshrl.u32 %v2102, 7
    %v2104 = vsub.s32 0, %v2103
    %v2105 = vrot.slane %v2100, %v2104
    %v2107 = vadd.f32 %v1902, %v2105
    %v2108 = vadd.f32 %v1905, %v2105
    %v2109 = vmax.f32 %v2107, 0.0
    %v2110 = vmax.f32 %v2108, 0.0
    %v2111 = vpack.c.bf16 %v2110, %v2109
    %2112 = vst [vmem:[#allocation2] sm:$0xff] %v2111
    %v2113 = vadd.f32 %v1910, %v2105
    %v2114 = vadd.f32 %v1913, %v2105
    %v2115 = vmax.f32 %v2113, 0.0
    %v2116 = vmax.f32 %v2114, 0.0
    %v2117 = vpack.c.bf16 %v2116, %v2115
    %2118 = vst [vmem:[#allocation2 + $0x8] sm:$0xff] %v2117
    %v2119 = vadd.f32 %v1918, %v2105
    %v2120 = vadd.f32 %v1921, %v2105
    %v2121 = vmax.f32 %v2119, 0.0
    %v2122 = vmax.f32 %v2120, 0.0
    %v2123 = vpack.c.bf16 %v2122, %v2121
    %2124 = vst [vmem:[#allocation2 + $0x10] sm:$0xff] %v2123
    %v2125 = vadd.f32 %v1926, %v2105
    %v2126 = vadd.f32 %v1929, %v2105
    %v2127 = vmax.f32 %v2125, 0.0
    %v2128 = vmax.f32 %v2126, 0.0
    %v2129 = vpack.c.bf16 %v2128, %v2127
    %2130 = vst [vmem:[#allocation2 + $0x18] sm:$0xff] %v2129
    %v2131 = vadd.f32 %v1934, %v2105
    %v2132 = vadd.f32 %v1937, %v2105
    %v2133 = vmax.f32 %v2131, 0.0
    %v2134 = vmax.f32 %v2132, 0.0
    %v2135 = vpack.c.bf16 %v2134, %v2133
    %2136 = vst [vmem:[#allocation2 + $0x20] sm:$0xff] %v2135
    %v2137 = vadd.f32 %v1942, %v2105
    %v2138 = vadd.f32 %v1945, %v2105
    %v2139 = vmax.f32 %v2137, 0.0
    %v2140 = vmax.f32 %v2138, 0.0
    %v2141 = vpack.c.bf16 %v2140, %v2139
    %2142 = vst [vmem:[#allocation2 + $0x28] sm:$0xff] %v2141
    %v2143 = vadd.f32 %v1950, %v2105
    %v2144 = vadd.f32 %v1953, %v2105
    %v2145 = vmax.f32 %v2143, 0.0
    %v2146 = vmax.f32 %v2144, 0.0
    %v2147 = vpack.c.bf16 %v2146, %v2145
    %2148 = vst [vmem:[#allocation2 + $0x30] sm:$0xff] %v2147
    %v2149 = vadd.f32 %v1958, %v2105
    %v2150 = vadd.f32 %v1961, %v2105
    %v2151 = vmax.f32 %v2149, 0.0
    %v2152 = vmax.f32 %v2150, 0.0
    %v2153 = vpack.c.bf16 %v2152, %v2151
    %2154 = vst [vmem:[#allocation2 + $0x38] sm:$0xff] %v2153
    %v2155 = vadd.f32 %v1966, %v2105
    %v2156 = vadd.f32 %v1969, %v2105
    %v2157 = vmax.f32 %v2155, 0.0
    %v2158 = vmax.f32 %v2156, 0.0
    %v2159 = vpack.c.bf16 %v2158, %v2157
    %2160 = vst [vmem:[#allocation2 + $0x40] sm:$0xff] %v2159
    %v2161 = vadd.f32 %v1974, %v2105
    %v2162 = vadd.f32 %v1977, %v2105
    %v2163 = vmax.f32 %v2161, 0.0
    %v2164 = vmax.f32 %v2162, 0.0
    %v2165 = vpack.c.bf16 %v2164, %v2163
    %2166 = vst [vmem:[#allocation2 + $0x48] sm:$0xff] %v2165
    %v2167 = vadd.f32 %v1982, %v2105
    %v2168 = vadd.f32 %v1985, %v2105
    %v2169 = vmax.f32 %v2167, 0.0
    %v2170 = vmax.f32 %v2168, 0.0
    %v2171 = vpack.c.bf16 %v2170, %v2169
    %2172 = vst [vmem:[#allocation2 + $0x50] sm:$0xff] %v2171
    %v2173 = vadd.f32 %v1990, %v2105
    %v2174 = vadd.f32 %v1993, %v2105
    %v2175 = vmax.f32 %v2173, 0.0
    %v2176 = vmax.f32 %v2174, 0.0
    %v2177 = vpack.c.bf16 %v2176, %v2175
    %2178 = vst [vmem:[#allocation2 + $0x58] sm:$0xff] %v2177
    %v2179 = vadd.f32 %v1998, %v2105
    %v2180 = vadd.f32 %v2001, %v2105
    %v2181 = vmax.f32 %v2179, 0.0
    %v2182 = vmax.f32 %v2180, 0.0
    %v2183 = vpack.c.bf16 %v2182, %v2181
    %2184 = vst [vmem:[#allocation2 + $0x60] sm:$0xff] %v2183
    %v2185 = vadd.f32 %v2006, %v2105
    %v2186 = vadd.f32 %v2009, %v2105
    %v2187 = vmax.f32 %v2185, 0.0
    %v2188 = vmax.f32 %v2186, 0.0
    %v2189 = vpack.c.bf16 %v2188, %v2187
    %2190 = vst [vmem:[#allocation2 + $0x68] sm:$0xff] %v2189
    %v2191 = vadd.f32 %v2014, %v2105
    %v2192 = vadd.f32 %v2017, %v2105
    %v2193 = vmax.f32 %v2191, 0.0
    %v2194 = vmax.f32 %v2192, 0.0
    %v2195 = vpack.c.bf16 %v2194, %v2193
    %2196 = vst [vmem:[#allocation2 + $0x70] sm:$0xff] %v2195
    %v2197 = vadd.f32 %v2022, %v2105
    %v2198 = vadd.f32 %v2025, %v2105
    %v2199 = vmax.f32 %v2197, 0.0
    %v2200 = vmax.f32 %v2198, 0.0
    %v2201 = vpack.c.bf16 %v2200, %v2199
    %2202 = vst [vmem:[#allocation2 + $0x78] sm:$0xff] %v2201
    %v2203 = vadd.f32 %v2030, %v2105
    %v2204 = vadd.f32 %v2033, %v2105
    %v2205 = vmax.f32 %v2203, 0.0
    %v2206 = vmax.f32 %v2204, 0.0
    %v2207 = vpack.c.bf16 %v2206, %v2205
    %2208 = vst [vmem:[#allocation2 + $0x80] sm:$0xff] %v2207
    %v2209 = vadd.f32 %v2038, %v2105
    %v2210 = vadd.f32 %v2041, %v2105
    %v2211 = vmax.f32 %v2209, 0.0
    %v2212 = vmax.f32 %v2210, 0.0
    %v2213 = vpack.c.bf16 %v2212, %v2211
    %2214 = vst [vmem:[#allocation2 + $0x88] sm:$0xff] %v2213
    %v2215 = vadd.f32 %v2046, %v2105
    %v2216 = vadd.f32 %v2049, %v2105
    %v2217 = vmax.f32 %v2215, 0.0
    %v2218 = vmax.f32 %v2216, 0.0
    %v2219 = vpack.c.bf16 %v2218, %v2217
    %2220 = vst [vmem:[#allocation2 + $0x90] sm:$0xff] %v2219
    %v2221 = vadd.f32 %v2054, %v2105
    %v2222 = vadd.f32 %v2057, %v2105
    %v2223 = vmax.f32 %v2221, 0.0
    %v2224 = vmax.f32 %v2222, 0.0
    %v2225 = vpack.c.bf16 %v2224, %v2223
    %2226 = vst [vmem:[#allocation2 + $0x98] sm:$0xff] %v2225
    %v2227 = vadd.f32 %v2062, %v2105
    %v2228 = vadd.f32 %v2065, %v2105
    %v2229 = vmax.f32 %v2227, 0.0
    %v2230 = vmax.f32 %v2228, 0.0
    %v2231 = vpack.c.bf16 %v2230, %v2229
    %2232 = vst [vmem:[#allocation2 + $0xa0] sm:$0xff] %v2231
    %v2233 = vadd.f32 %v2070, %v2105
    %v2234 = vadd.f32 %v2073, %v2105
    %v2235 = vmax.f32 %v2233, 0.0
    %v2236 = vmax.f32 %v2234, 0.0
    %v2237 = vpack.c.bf16 %v2236, %v2235
    %2238 = vst [vmem:[#allocation2 + $0xa8] sm:$0xff] %v2237
    %v2239 = vadd.f32 %v2078, %v2105
    %v2240 = vadd.f32 %v2081, %v2105
    %v2241 = vmax.f32 %v2239, 0.0
    %v2242 = vmax.f32 %v2240, 0.0
    %v2243 = vpack.c.bf16 %v2242, %v2241
    %2244 = vst [vmem:[#allocation2 + $0xb0] sm:$0xff] %v2243
    %v2245 = vadd.f32 %v2086, %v2105
    %v2246 = vadd.f32 %v2089, %v2105
    %v2247 = vmax.f32 %v2245, 0.0
    %v2248 = vmax.f32 %v2246, 0.0
    %v2249 = vpack.c.bf16 %v2248, %v2247
    %2250 = vst [vmem:[#allocation2 + $0xb8] sm:$0xff] %v2249
    %v2251 = vadd.f32 %v2094, %v2105
    %v2252 = vadd.f32 %v2097, %v2105
    %v2253 = vmax.f32 %v2251, 0.0
    %v2254 = vmax.f32 %v2252, 0.0
    %v2255 = vpack.c.bf16 %v2254, %v2253
    %2256 = vst [vmem:[#allocation2 + $0xc0] sm:$0xff] %v2255
    %v2257 = vld [vmem:[#allocation2] sm:$0xff]
    %v2258 = vld [vmem:[#allocation2 + $0x8] sm:$0xff]
    %v2259 = vld [vmem:[#allocation2 + $0x10] sm:$0xff]
    %v2260 = vld [vmem:[#allocation2 + $0x18] sm:$0xff]
    %v2261 = vld [vmem:[#allocation2 + $0x20] sm:$0xff]
    %v2262 = vld [vmem:[#allocation2 + $0x28] sm:$0xff]
    %v2263 = vld [vmem:[#allocation2 + $0x30] sm:$0xff]
    %v2264 = vld [vmem:[#allocation2 + $0x38] sm:$0xff]
    %v2265 = vld [vmem:[#allocation2 + $0x40] sm:$0xff]
    %v2266 = vld [vmem:[#allocation2 + $0x48] sm:$0xff]
    %v2267 = vld [vmem:[#allocation2 + $0x50] sm:$0xff]
    %v2268 = vld [vmem:[#allocation2 + $0x58] sm:$0xff]
    %v2269 = vld [vmem:[#allocation2 + $0x60] sm:$0xff]
    %v2270 = vld [vmem:[#allocation2 + $0x68] sm:$0xff]
    %v2271 = vld [vmem:[#allocation2 + $0x70] sm:$0xff]
    %v2272 = vld [vmem:[#allocation2 + $0x78] sm:$0xff]
    %v2273 = vld [vmem:[#allocation2 + $0x80] sm:$0xff]
    %v2274 = vld [vmem:[#allocation2 + $0x88] sm:$0xff]
    %v2275 = vld [vmem:[#allocation2 + $0x90] sm:$0xff]
    %v2276 = vld [vmem:[#allocation2 + $0x98] sm:$0xff]
    %v2277 = vld [vmem:[#allocation2 + $0xa0] sm:$0xff]
    %v2278 = vld [vmem:[#allocation2 + $0xa8] sm:$0xff]
    %v2279 = vld [vmem:[#allocation2 + $0xb0] sm:$0xff]
    %v2280 = vld [vmem:[#allocation2 + $0xb8] sm:$0xff]
    %v2281 = vld [vmem:[#allocation2 + $0xc0] sm:$0xff]
    %v2282 = vld [vmem:[#allocation9] sm:$0xff]
    %v2283 = vld [vmem:[#allocation9 + $0x8] sm:$0xff]
    %v2284 = vld [vmem:[#allocation9 + $0x10] sm:$0xff]
    %v2285 = vld [vmem:[#allocation9 + $0x18] sm:$0xff]
    %v2286 = vld [vmem:[#allocation9 + $0x20] sm:$0xff]
    %v2287 = vld [vmem:[#allocation9 + $0x28] sm:$0xff]
    %v2288 = vld [vmem:[#allocation9 + $0x30] sm:$0xff]
    %v2289 = vld [vmem:[#allocation9 + $0x38] sm:$0xff]
    %v2290 = vld [vmem:[#allocation9 + $0x40] sm:$0xff]
    %v2291 = vld [vmem:[#allocation9 + $0x48] sm:$0xff]
    %v2292 = vld [vmem:[#allocation9 + $0x50] sm:$0xff]
    %v2293 = vld [vmem:[#allocation9 + $0x58] sm:$0xff]
    %v2294 = vld [vmem:[#allocation9 + $0x60] sm:$0xff]
    %v2295 = vld [vmem:[#allocation9 + $0x68] sm:$0xff]
    %v2296 = vld [vmem:[#allocation9 + $0x70] sm:$0xff]
    %v2297 = vld [vmem:[#allocation9 + $0x78] sm:$0xff]
    %v2298 = vld [vmem:[#allocation9 + $0x80] sm:$0xff]
    %v2299 = vld [vmem:[#allocation9 + $0x88] sm:$0xff]
    %v2300 = vld [vmem:[#allocation9 + $0x90] sm:$0xff]
    %v2301 = vld [vmem:[#allocation9 + $0x98] sm:$0xff]
    %v2302 = vld [vmem:[#allocation9 + $0xa0] sm:$0xff]
    %v2303 = vld [vmem:[#allocation9 + $0xa8] sm:$0xff]
    %v2304 = vld [vmem:[#allocation9 + $0xb0] sm:$0xff]
    %v2305 = vld [vmem:[#allocation9 + $0xb8] sm:$0xff]
    %v2306 = vld [vmem:[#allocation9 + $0xc0] sm:$0xff]
    %v2307 = vld [vmem:[#allocation9 + $0xc8] sm:$0xff]
    %v2308 = vld [vmem:[#allocation9 + $0xd0] sm:$0xff]
    %v2309 = vld [vmem:[#allocation9 + $0xd8] sm:$0xff]
    %v2310 = vld [vmem:[#allocation9 + $0xe0] sm:$0xff]
    %v2311 = vld [vmem:[#allocation9 + $0xe8] sm:$0xff]
    %v2312 = vld [vmem:[#allocation9 + $0xf0] sm:$0xff]
    %v2313 = vld [vmem:[#allocation9 + $0xf8] sm:$0xff]
    %v2314 = vld [vmem:[#allocation9 + $0x100] sm:$0xff]
    %v2315 = vld [vmem:[#allocation9 + $0x108] sm:$0xff]
    %v2316 = vld [vmem:[#allocation9 + $0x110] sm:$0xff]
    %v2317 = vld [vmem:[#allocation9 + $0x118] sm:$0xff]
    %v2318 = vld [vmem:[#allocation9 + $0x120] sm:$0xff]
    %v2319 = vld [vmem:[#allocation9 + $0x128] sm:$0xff]
    %v2320 = vld [vmem:[#allocation9 + $0x130] sm:$0xff]
    %v2321 = vld [vmem:[#allocation9 + $0x138] sm:$0xff]
    %v2322 = vld [vmem:[#allocation9 + $0x140] sm:$0xff]
    %v2323 = vld [vmem:[#allocation9 + $0x148] sm:$0xff]
    %v2324 = vld [vmem:[#allocation9 + $0x150] sm:$0xff]
    %v2325 = vld [vmem:[#allocation9 + $0x158] sm:$0xff]
    %v2326 = vld [vmem:[#allocation9 + $0x160] sm:$0xff]
    %v2327 = vld [vmem:[#allocation9 + $0x168] sm:$0xff]
    %v2328 = vld [vmem:[#allocation9 + $0x170] sm:$0xff]
    %v2329 = vld [vmem:[#allocation9 + $0x178] sm:$0xff]
    %v2330 = vld [vmem:[#allocation9 + $0x180] sm:$0xff]
    %v2331 = vld [vmem:[#allocation9 + $0x188] sm:$0xff]
    %v2332 = vld [vmem:[#allocation9 + $0x190] sm:$0xff]
    %v2333 = vld [vmem:[#allocation9 + $0x198] sm:$0xff]
    %v2334 = vld [vmem:[#allocation9 + $0x1a0] sm:$0xff]
    %v2335 = vld [vmem:[#allocation9 + $0x1a8] sm:$0xff]
    %v2336 = vld [vmem:[#allocation9 + $0x1b0] sm:$0xff]
    %v2337 = vld [vmem:[#allocation9 + $0x1b8] sm:$0xff]
    %v2338 = vld [vmem:[#allocation9 + $0x1c0] sm:$0xff]
    %v2339 = vld [vmem:[#allocation9 + $0x1c8] sm:$0xff]
    %v2340 = vld [vmem:[#allocation9 + $0x1d0] sm:$0xff]
    %v2341 = vld [vmem:[#allocation9 + $0x1d8] sm:$0xff]
    %v2342 = vld [vmem:[#allocation9 + $0x1e0] sm:$0xff]
    %v2343 = vld [vmem:[#allocation9 + $0x1e8] sm:$0xff]
    %v2344 = vld [vmem:[#allocation9 + $0x1f0] sm:$0xff]
    %v2345 = vld [vmem:[#allocation9 + $0x1f8] sm:$0xff]
    %v2346 = vld [vmem:[#allocation9 + $0x200] sm:$0xff]
    %v2347 = vld [vmem:[#allocation9 + $0x208] sm:$0xff]
    %v2348 = vld [vmem:[#allocation9 + $0x210] sm:$0xff]
    %v2349 = vld [vmem:[#allocation9 + $0x218] sm:$0xff]
    %v2350 = vld [vmem:[#allocation9 + $0x220] sm:$0xff]
    %v2351 = vld [vmem:[#allocation9 + $0x228] sm:$0xff]
    %v2352 = vld [vmem:[#allocation9 + $0x230] sm:$0xff]
    %v2353 = vld [vmem:[#allocation9 + $0x238] sm:$0xff]
    %v2354 = vld [vmem:[#allocation9 + $0x240] sm:$0xff]
    %v2355 = vld [vmem:[#allocation9 + $0x248] sm:$0xff]
    %v2356 = vld [vmem:[#allocation9 + $0x250] sm:$0xff]
    %v2357 = vld [vmem:[#allocation9 + $0x258] sm:$0xff]
    %v2358 = vld [vmem:[#allocation9 + $0x260] sm:$0xff]
    %v2359 = vld [vmem:[#allocation9 + $0x268] sm:$0xff]
    %v2360 = vld [vmem:[#allocation9 + $0x270] sm:$0xff]
    %v2361 = vld [vmem:[#allocation9 + $0x278] sm:$0xff]
    %v2362 = vld [vmem:[#allocation9 + $0x280] sm:$0xff]
    %v2363 = vld [vmem:[#allocation9 + $0x288] sm:$0xff]
    %v2364 = vld [vmem:[#allocation9 + $0x290] sm:$0xff]
    %v2365 = vld [vmem:[#allocation9 + $0x298] sm:$0xff]
    %v2366 = vld [vmem:[#allocation9 + $0x2a0] sm:$0xff]
    %v2367 = vld [vmem:[#allocation9 + $0x2a8] sm:$0xff]
    %v2368 = vld [vmem:[#allocation9 + $0x2b0] sm:$0xff]
    %v2369 = vld [vmem:[#allocation9 + $0x2b8] sm:$0xff]
    %v2370 = vld [vmem:[#allocation9 + $0x2c0] sm:$0xff]
    %v2371 = vld [vmem:[#allocation9 + $0x2c8] sm:$0xff]
    %v2372 = vld [vmem:[#allocation9 + $0x2d0] sm:$0xff]
    %v2373 = vld [vmem:[#allocation9 + $0x2d8] sm:$0xff]
    %v2374 = vld [vmem:[#allocation9 + $0x2e0] sm:$0xff]
    %v2375 = vld [vmem:[#allocation9 + $0x2e8] sm:$0xff]
    %v2376 = vld [vmem:[#allocation9 + $0x2f0] sm:$0xff]
    %v2377 = vld [vmem:[#allocation9 + $0x2f8] sm:$0xff]
    %v2378 = vld [vmem:[#allocation9 + $0x300] sm:$0xff]
    %v2379 = vld [vmem:[#allocation9 + $0x308] sm:$0xff]
    %v2380 = vld [vmem:[#allocation9 + $0x310] sm:$0xff]
    %v2381 = vld [vmem:[#allocation9 + $0x318] sm:$0xff]
    %v2382 = vld [vmem:[#allocation9 + $0x320] sm:$0xff]
    %v2383 = vld [vmem:[#allocation9 + $0x328] sm:$0xff]
    %v2384 = vld [vmem:[#allocation9 + $0x330] sm:$0xff]
    %v2385 = vld [vmem:[#allocation9 + $0x338] sm:$0xff]
    %v2386 = vld [vmem:[#allocation9 + $0x340] sm:$0xff]
    %v2387 = vld [vmem:[#allocation9 + $0x348] sm:$0xff]
    %v2388 = vld [vmem:[#allocation9 + $0x350] sm:$0xff]
    %v2389 = vld [vmem:[#allocation9 + $0x358] sm:$0xff]
    %v2390 = vld [vmem:[#allocation9 + $0x360] sm:$0xff]
    %v2391 = vld [vmem:[#allocation9 + $0x368] sm:$0xff]
    %v2392 = vld [vmem:[#allocation9 + $0x370] sm:$0xff]
    %v2393 = vld [vmem:[#allocation9 + $0x378] sm:$0xff]
    %v2394 = vld [vmem:[#allocation9 + $0x380] sm:$0xff]
    %v2395 = vld [vmem:[#allocation9 + $0x388] sm:$0xff]
    %v2396 = vld [vmem:[#allocation9 + $0x390] sm:$0xff]
    %v2397 = vld [vmem:[#allocation9 + $0x398] sm:$0xff]
    %v2398 = vld [vmem:[#allocation9 + $0x3a0] sm:$0xff]
    %v2399 = vld [vmem:[#allocation9 + $0x3a8] sm:$0xff]
    %v2400 = vld [vmem:[#allocation9 + $0x3b0] sm:$0xff]
    %v2401 = vld [vmem:[#allocation9 + $0x3b8] sm:$0xff]
    %v2402 = vld [vmem:[#allocation9 + $0x3c0] sm:$0xff]
    %v2403 = vld [vmem:[#allocation9 + $0x3c8] sm:$0xff]
    %v2404 = vld [vmem:[#allocation9 + $0x3d0] sm:$0xff]
    %v2405 = vld [vmem:[#allocation9 + $0x3d8] sm:$0xff]
    %v2406 = vld [vmem:[#allocation9 + $0x3e0] sm:$0xff]
    %v2407 = vld [vmem:[#allocation9 + $0x3e8] sm:$0xff]
    %v2408 = vld [vmem:[#allocation9 + $0x3f0] sm:$0xff]
    %v2409 = vld [vmem:[#allocation9 + $0x3f8] sm:$0xff]
    %v2410 = vld [vmem:[#allocation9 + $0x400] sm:$0xff]
    %v2411 = vld [vmem:[#allocation9 + $0x408] sm:$0xff]
    %v2412 = vld [vmem:[#allocation9 + $0x410] sm:$0xff]
    %v2413 = vld [vmem:[#allocation9 + $0x418] sm:$0xff]
    %v2414 = vld [vmem:[#allocation9 + $0x420] sm:$0xff]
    %v2415 = vld [vmem:[#allocation9 + $0x428] sm:$0xff]
    %v2416 = vld [vmem:[#allocation9 + $0x430] sm:$0xff]
    %v2417 = vld [vmem:[#allocation9 + $0x438] sm:$0xff]
    %v2418 = vld [vmem:[#allocation9 + $0x440] sm:$0xff]
    %v2419 = vld [vmem:[#allocation9 + $0x448] sm:$0xff]
    %v2420 = vld [vmem:[#allocation9 + $0x450] sm:$0xff]
    %v2421 = vld [vmem:[#allocation9 + $0x458] sm:$0xff]
    %v2422 = vld [vmem:[#allocation9 + $0x460] sm:$0xff]
    %v2423 = vld [vmem:[#allocation9 + $0x468] sm:$0xff]
    %v2424 = vld [vmem:[#allocation9 + $0x470] sm:$0xff]
    %v2425 = vld [vmem:[#allocation9 + $0x478] sm:$0xff]
    %v2426 = vld [vmem:[#allocation9 + $0x480] sm:$0xff]
    %v2427 = vld [vmem:[#allocation9 + $0x488] sm:$0xff]
    %v2428 = vld [vmem:[#allocation9 + $0x490] sm:$0xff]
    %v2429 = vld [vmem:[#allocation9 + $0x498] sm:$0xff]
    %v2430 = vld [vmem:[#allocation9 + $0x4a0] sm:$0xff]
    %v2431 = vld [vmem:[#allocation9 + $0x4a8] sm:$0xff]
    %v2432 = vld [vmem:[#allocation9 + $0x4b0] sm:$0xff]
    %v2433 = vld [vmem:[#allocation9 + $0x4b8] sm:$0xff]
    %v2434 = vld [vmem:[#allocation9 + $0x4c0] sm:$0xff]
    %v2435 = vld [vmem:[#allocation9 + $0x4c8] sm:$0xff]
    %v2436 = vld [vmem:[#allocation9 + $0x4d0] sm:$0xff]
    %v2437 = vld [vmem:[#allocation9 + $0x4d8] sm:$0xff]
    %v2438 = vld [vmem:[#allocation9 + $0x4e0] sm:$0xff]
    %v2439 = vld [vmem:[#allocation9 + $0x4e8] sm:$0xff]
    %v2440 = vld [vmem:[#allocation9 + $0x4f0] sm:$0xff]
    %v2441 = vld [vmem:[#allocation9 + $0x4f8] sm:$0xff]
    %v2442 = vld [vmem:[#allocation9 + $0x500] sm:$0xff]
    %v2443 = vld [vmem:[#allocation9 + $0x508] sm:$0xff]
    %v2444 = vld [vmem:[#allocation9 + $0x510] sm:$0xff]
    %v2445 = vld [vmem:[#allocation9 + $0x518] sm:$0xff]
    %v2446 = vld [vmem:[#allocation9 + $0x520] sm:$0xff]
    %v2447 = vld [vmem:[#allocation9 + $0x528] sm:$0xff]
    %v2448 = vld [vmem:[#allocation9 + $0x530] sm:$0xff]
    %v2449 = vld [vmem:[#allocation9 + $0x538] sm:$0xff]
    %v2450 = vld [vmem:[#allocation9 + $0x540] sm:$0xff]
    %v2451 = vld [vmem:[#allocation9 + $0x548] sm:$0xff]
    %v2452 = vld [vmem:[#allocation9 + $0x550] sm:$0xff]
    %v2453 = vld [vmem:[#allocation9 + $0x558] sm:$0xff]
    %v2454 = vld [vmem:[#allocation9 + $0x560] sm:$0xff]
    %v2455 = vld [vmem:[#allocation9 + $0x568] sm:$0xff]
    %v2456 = vld [vmem:[#allocation9 + $0x570] sm:$0xff]
    %v2457 = vld [vmem:[#allocation9 + $0x578] sm:$0xff]
    %v2458 = vld [vmem:[#allocation9 + $0x580] sm:$0xff]
    %v2459 = vld [vmem:[#allocation9 + $0x588] sm:$0xff]
    %v2460 = vld [vmem:[#allocation9 + $0x590] sm:$0xff]
    %v2461 = vld [vmem:[#allocation9 + $0x598] sm:$0xff]
    %v2462 = vld [vmem:[#allocation9 + $0x5a0] sm:$0xff]
    %v2463 = vld [vmem:[#allocation9 + $0x5a8] sm:$0xff]
    %v2464 = vld [vmem:[#allocation9 + $0x5b0] sm:$0xff]
    %v2465 = vld [vmem:[#allocation9 + $0x5b8] sm:$0xff]
    %v2466 = vld [vmem:[#allocation9 + $0x5c0] sm:$0xff]
    %v2467 = vld [vmem:[#allocation9 + $0x5c8] sm:$0xff]
    %v2468 = vld [vmem:[#allocation9 + $0x5d0] sm:$0xff]
    %v2469 = vld [vmem:[#allocation9 + $0x5d8] sm:$0xff]
    %v2470 = vld [vmem:[#allocation9 + $0x5e0] sm:$0xff]
    %v2471 = vld [vmem:[#allocation9 + $0x5e8] sm:$0xff]
    %v2472 = vld [vmem:[#allocation9 + $0x5f0] sm:$0xff]
    %v2473 = vld [vmem:[#allocation9 + $0x5f8] sm:$0xff]
    %v2474 = vld [vmem:[#allocation9 + $0x600] sm:$0xff]
    %v2475 = vld [vmem:[#allocation9 + $0x608] sm:$0xff]
    %v2476 = vld [vmem:[#allocation9 + $0x610] sm:$0xff]
    %v2477 = vld [vmem:[#allocation9 + $0x618] sm:$0xff]
    %v2478 = vld [vmem:[#allocation9 + $0x620] sm:$0xff]
    %v2479 = vld [vmem:[#allocation9 + $0x628] sm:$0xff]
    %v2480 = vld [vmem:[#allocation9 + $0x630] sm:$0xff]
    %v2481 = vld [vmem:[#allocation9 + $0x638] sm:$0xff]
    %v2482 = vld [vmem:[#allocation9 + $0x640] sm:$0xff]
    %v2483 = vld [vmem:[#allocation9 + $0x648] sm:$0xff]
    %v2484 = vld [vmem:[#allocation9 + $0x650] sm:$0xff]
    %v2485 = vld [vmem:[#allocation9 + $0x658] sm:$0xff]
    %v2486 = vld [vmem:[#allocation9 + $0x660] sm:$0xff]
    %v2487 = vld [vmem:[#allocation9 + $0x668] sm:$0xff]
    %v2488 = vld [vmem:[#allocation9 + $0x670] sm:$0xff]
    %v2489 = vld [vmem:[#allocation9 + $0x678] sm:$0xff]
    %v2490 = vld [vmem:[#allocation9 + $0x680] sm:$0xff]
    %v2491 = vld [vmem:[#allocation9 + $0x688] sm:$0xff]
    %v2492 = vld [vmem:[#allocation9 + $0x690] sm:$0xff]
    %v2493 = vld [vmem:[#allocation9 + $0x698] sm:$0xff]
    %v2494 = vld [vmem:[#allocation9 + $0x6a0] sm:$0xff]
    %v2495 = vld [vmem:[#allocation9 + $0x6a8] sm:$0xff]
    %v2496 = vld [vmem:[#allocation9 + $0x6b0] sm:$0xff]
    %v2497 = vld [vmem:[#allocation9 + $0x6b8] sm:$0xff]
    %v2498 = vld [vmem:[#allocation9 + $0x6c0] sm:$0xff]
    %v2499 = vld [vmem:[#allocation9 + $0x6c8] sm:$0xff]
    %v2500 = vld [vmem:[#allocation9 + $0x6d0] sm:$0xff]
    %v2501 = vld [vmem:[#allocation9 + $0x6d8] sm:$0xff]
    %v2502 = vld [vmem:[#allocation9 + $0x6e0] sm:$0xff]
    %v2503 = vld [vmem:[#allocation9 + $0x6e8] sm:$0xff]
    %v2504 = vld [vmem:[#allocation9 + $0x6f0] sm:$0xff]
    %v2505 = vld [vmem:[#allocation9 + $0x6f8] sm:$0xff]
    %v2506 = vld [vmem:[#allocation9 + $0x700] sm:$0xff]
    %v2507 = vld [vmem:[#allocation9 + $0x708] sm:$0xff]
    %v2508 = vld [vmem:[#allocation9 + $0x710] sm:$0xff]
    %v2509 = vld [vmem:[#allocation9 + $0x718] sm:$0xff]
    %v2510 = vld [vmem:[#allocation9 + $0x720] sm:$0xff]
    %v2511 = vld [vmem:[#allocation9 + $0x728] sm:$0xff]
    %v2512 = vld [vmem:[#allocation9 + $0x730] sm:$0xff]
    %v2513 = vld [vmem:[#allocation9 + $0x738] sm:$0xff]
    %v2514 = vld [vmem:[#allocation9 + $0x740] sm:$0xff]
    %v2515 = vld [vmem:[#allocation9 + $0x748] sm:$0xff]
    %v2516 = vld [vmem:[#allocation9 + $0x750] sm:$0xff]
    %v2517 = vld [vmem:[#allocation9 + $0x758] sm:$0xff]
    %v2518 = vld [vmem:[#allocation9 + $0x760] sm:$0xff]
    %v2519 = vld [vmem:[#allocation9 + $0x768] sm:$0xff]
    %v2520 = vld [vmem:[#allocation9 + $0x770] sm:$0xff]
    %v2521 = vld [vmem:[#allocation9 + $0x778] sm:$0xff]
    %v2522 = vld [vmem:[#allocation9 + $0x780] sm:$0xff]
    %v2523 = vld [vmem:[#allocation9 + $0x788] sm:$0xff]
    %v2524 = vld [vmem:[#allocation9 + $0x790] sm:$0xff]
    %v2525 = vld [vmem:[#allocation9 + $0x798] sm:$0xff]
    %v2526 = vld [vmem:[#allocation9 + $0x7a0] sm:$0xff]
    %v2527 = vld [vmem:[#allocation9 + $0x7a8] sm:$0xff]
    %v2528 = vld [vmem:[#allocation9 + $0x7b0] sm:$0xff]
    %v2529 = vld [vmem:[#allocation9 + $0x7b8] sm:$0xff]
    %v2530 = vld [vmem:[#allocation9 + $0x7c0] sm:$0xff]
    %v2531 = vld [vmem:[#allocation9 + $0x7c8] sm:$0xff]
    %v2532 = vld [vmem:[#allocation9 + $0x7d0] sm:$0xff]
    %v2533 = vld [vmem:[#allocation9 + $0x7d8] sm:$0xff]
    %v2534 = vld [vmem:[#allocation9 + $0x7e0] sm:$0xff]
    %v2535 = vld [vmem:[#allocation9 + $0x7e8] sm:$0xff]
    %v2536 = vld [vmem:[#allocation9 + $0x7f0] sm:$0xff]
    %v2537 = vld [vmem:[#allocation9 + $0x7f8] sm:$0xff]
    %v2538 = vld [vmem:[#allocation9 + $0x800] sm:$0xff]
    %v2539 = vld [vmem:[#allocation9 + $0x808] sm:$0xff]
    %v2540 = vld [vmem:[#allocation9 + $0x810] sm:$0xff]
    %v2541 = vld [vmem:[#allocation9 + $0x818] sm:$0xff]
    %v2542 = vld [vmem:[#allocation9 + $0x820] sm:$0xff]
    %v2543 = vld [vmem:[#allocation9 + $0x828] sm:$0xff]
    %v2544 = vld [vmem:[#allocation9 + $0x830] sm:$0xff]
    %v2545 = vld [vmem:[#allocation9 + $0x838] sm:$0xff]
    %v2546 = vld [vmem:[#allocation9 + $0x840] sm:$0xff]
    %v2547 = vld [vmem:[#allocation9 + $0x848] sm:$0xff]
    %v2548 = vld [vmem:[#allocation9 + $0x850] sm:$0xff]
    %v2549 = vld [vmem:[#allocation9 + $0x858] sm:$0xff]
    %v2550 = vld [vmem:[#allocation9 + $0x860] sm:$0xff]
    %v2551 = vld [vmem:[#allocation9 + $0x868] sm:$0xff]
    %v2552 = vld [vmem:[#allocation9 + $0x870] sm:$0xff]
    %v2553 = vld [vmem:[#allocation9 + $0x878] sm:$0xff]
    %v2554 = vld [vmem:[#allocation9 + $0x880] sm:$0xff]
    %v2555 = vld [vmem:[#allocation9 + $0x888] sm:$0xff]
    %v2556 = vld [vmem:[#allocation9 + $0x890] sm:$0xff]
    %v2557 = vld [vmem:[#allocation9 + $0x898] sm:$0xff]
    %v2558 = vld [vmem:[#allocation9 + $0x8a0] sm:$0xff]
    %v2559 = vld [vmem:[#allocation9 + $0x8a8] sm:$0xff]
    %v2560 = vld [vmem:[#allocation9 + $0x8b0] sm:$0xff]
    %v2561 = vld [vmem:[#allocation9 + $0x8b8] sm:$0xff]
    %v2562 = vld [vmem:[#allocation9 + $0x8c0] sm:$0xff]
    %v2563 = vld [vmem:[#allocation9 + $0x8c8] sm:$0xff]
    %v2564 = vld [vmem:[#allocation9 + $0x8d0] sm:$0xff]
    %v2565 = vld [vmem:[#allocation9 + $0x8d8] sm:$0xff]
    %v2566 = vld [vmem:[#allocation9 + $0x8e0] sm:$0xff]
    %v2567 = vld [vmem:[#allocation9 + $0x8e8] sm:$0xff]
    %v2568 = vld [vmem:[#allocation9 + $0x8f0] sm:$0xff]
    %v2569 = vld [vmem:[#allocation9 + $0x8f8] sm:$0xff]
    %v2570 = vld [vmem:[#allocation9 + $0x900] sm:$0xff]
    %v2571 = vld [vmem:[#allocation9 + $0x908] sm:$0xff]
    %v2572 = vld [vmem:[#allocation9 + $0x910] sm:$0xff]
    %v2573 = vld [vmem:[#allocation9 + $0x918] sm:$0xff]
    %v2574 = vld [vmem:[#allocation9 + $0x920] sm:$0xff]
    %v2575 = vld [vmem:[#allocation9 + $0x928] sm:$0xff]
    %v2576 = vld [vmem:[#allocation9 + $0x930] sm:$0xff]
    %v2577 = vld [vmem:[#allocation9 + $0x938] sm:$0xff]
    %v2578 = vld [vmem:[#allocation9 + $0x940] sm:$0xff]
    %v2579 = vld [vmem:[#allocation9 + $0x948] sm:$0xff]
    %v2580 = vld [vmem:[#allocation9 + $0x950] sm:$0xff]
    %v2581 = vld [vmem:[#allocation9 + $0x958] sm:$0xff]
    %v2582 = vld [vmem:[#allocation9 + $0x960] sm:$0xff]
    %v2583 = vld [vmem:[#allocation9 + $0x968] sm:$0xff]
    %v2584 = vld [vmem:[#allocation9 + $0x970] sm:$0xff]
    %v2585 = vld [vmem:[#allocation9 + $0x978] sm:$0xff]
    %v2586 = vld [vmem:[#allocation9 + $0x980] sm:$0xff]
    %v2587 = vld [vmem:[#allocation9 + $0x988] sm:$0xff]
    %v2588 = vld [vmem:[#allocation9 + $0x990] sm:$0xff]
    %v2589 = vld [vmem:[#allocation9 + $0x998] sm:$0xff]
    %v2590 = vld [vmem:[#allocation9 + $0x9a0] sm:$0xff]
    %v2591 = vld [vmem:[#allocation9 + $0x9a8] sm:$0xff]
    %v2592 = vld [vmem:[#allocation9 + $0x9b0] sm:$0xff]
    %v2593 = vld [vmem:[#allocation9 + $0x9b8] sm:$0xff]
    %v2594 = vld [vmem:[#allocation9 + $0x9c0] sm:$0xff]
    %v2595 = vld [vmem:[#allocation9 + $0x9c8] sm:$0xff]
    %v2596 = vld [vmem:[#allocation9 + $0x9d0] sm:$0xff]
    %v2597 = vld [vmem:[#allocation9 + $0x9d8] sm:$0xff]
    %v2598 = vld [vmem:[#allocation9 + $0x9e0] sm:$0xff]
    %v2599 = vld [vmem:[#allocation9 + $0x9e8] sm:$0xff]
    %v2600 = vld [vmem:[#allocation9 + $0x9f0] sm:$0xff]
    %v2601 = vld [vmem:[#allocation9 + $0x9f8] sm:$0xff]
    %v2602 = vld [vmem:[#allocation9 + $0xa00] sm:$0xff]
    %v2603 = vld [vmem:[#allocation9 + $0xa08] sm:$0xff]
    %v2604 = vld [vmem:[#allocation9 + $0xa10] sm:$0xff]
    %v2605 = vld [vmem:[#allocation9 + $0xa18] sm:$0xff]
    %v2606 = vld [vmem:[#allocation9 + $0xa20] sm:$0xff]
    %v2607 = vld [vmem:[#allocation9 + $0xa28] sm:$0xff]
    %v2608 = vld [vmem:[#allocation9 + $0xa30] sm:$0xff]
    %v2609 = vld [vmem:[#allocation9 + $0xa38] sm:$0xff]
    %v2610 = vld [vmem:[#allocation9 + $0xa40] sm:$0xff]
    %v2611 = vld [vmem:[#allocation9 + $0xa48] sm:$0xff]
    %v2612 = vld [vmem:[#allocation9 + $0xa50] sm:$0xff]
    %v2613 = vld [vmem:[#allocation9 + $0xa58] sm:$0xff]
    %v2614 = vld [vmem:[#allocation9 + $0xa60] sm:$0xff]
    %v2615 = vld [vmem:[#allocation9 + $0xa68] sm:$0xff]
    %v2616 = vld [vmem:[#allocation9 + $0xa70] sm:$0xff]
    %v2617 = vld [vmem:[#allocation9 + $0xa78] sm:$0xff]
    %v2618 = vld [vmem:[#allocation9 + $0xa80] sm:$0xff]
    %v2619 = vld [vmem:[#allocation9 + $0xa88] sm:$0xff]
    %v2620 = vld [vmem:[#allocation9 + $0xa90] sm:$0xff]
    %v2621 = vld [vmem:[#allocation9 + $0xa98] sm:$0xff]
    %v2622 = vld [vmem:[#allocation9 + $0xaa0] sm:$0xff]
    %v2623 = vld [vmem:[#allocation9 + $0xaa8] sm:$0xff]
    %v2624 = vld [vmem:[#allocation9 + $0xab0] sm:$0xff]
    %v2625 = vld [vmem:[#allocation9 + $0xab8] sm:$0xff]
    %v2626 = vld [vmem:[#allocation9 + $0xac0] sm:$0xff]
    %v2627 = vld [vmem:[#allocation9 + $0xac8] sm:$0xff]
    %v2628 = vld [vmem:[#allocation9 + $0xad0] sm:$0xff]
    %v2629 = vld [vmem:[#allocation9 + $0xad8] sm:$0xff]
    %v2630 = vld [vmem:[#allocation9 + $0xae0] sm:$0xff]
    %v2631 = vld [vmem:[#allocation9 + $0xae8] sm:$0xff]
    %v2632 = vld [vmem:[#allocation9 + $0xaf0] sm:$0xff]
    %v2633 = vld [vmem:[#allocation9 + $0xaf8] sm:$0xff]
    %v2634 = vld [vmem:[#allocation9 + $0xb00] sm:$0xff]
    %v2635 = vld [vmem:[#allocation9 + $0xb08] sm:$0xff]
    %v2636 = vld [vmem:[#allocation9 + $0xb10] sm:$0xff]
    %v2637 = vld [vmem:[#allocation9 + $0xb18] sm:$0xff]
    %v2638 = vld [vmem:[#allocation9 + $0xb20] sm:$0xff]
    %v2639 = vld [vmem:[#allocation9 + $0xb28] sm:$0xff]
    %v2640 = vld [vmem:[#allocation9 + $0xb30] sm:$0xff]
    %v2641 = vld [vmem:[#allocation9 + $0xb38] sm:$0xff]
    %v2642 = vld [vmem:[#allocation9 + $0xb40] sm:$0xff]
    %v2643 = vld [vmem:[#allocation9 + $0xb48] sm:$0xff]
    %v2644 = vld [vmem:[#allocation9 + $0xb50] sm:$0xff]
    %v2645 = vld [vmem:[#allocation9 + $0xb58] sm:$0xff]
    %v2646 = vld [vmem:[#allocation9 + $0xb60] sm:$0xff]
    %v2647 = vld [vmem:[#allocation9 + $0xb68] sm:$0xff]
    %v2648 = vld [vmem:[#allocation9 + $0xb70] sm:$0xff]
    %v2649 = vld [vmem:[#allocation9 + $0xb78] sm:$0xff]
    %v2650 = vld [vmem:[#allocation9 + $0xb80] sm:$0xff]
    %v2651 = vld [vmem:[#allocation9 + $0xb88] sm:$0xff]
    %v2652 = vld [vmem:[#allocation9 + $0xb90] sm:$0xff]
    %v2653 = vld [vmem:[#allocation9 + $0xb98] sm:$0xff]
    %v2654 = vld [vmem:[#allocation9 + $0xba0] sm:$0xff]
    %v2655 = vld [vmem:[#allocation9 + $0xba8] sm:$0xff]
    %v2656 = vld [vmem:[#allocation9 + $0xbb0] sm:$0xff]
    %v2657 = vld [vmem:[#allocation9 + $0xbb8] sm:$0xff]
    %v2658 = vld [vmem:[#allocation9 + $0xbc0] sm:$0xff]
    %v2659 = vld [vmem:[#allocation9 + $0xbc8] sm:$0xff]
    %v2660 = vld [vmem:[#allocation9 + $0xbd0] sm:$0xff]
    %v2661 = vld [vmem:[#allocation9 + $0xbd8] sm:$0xff]
    %v2662 = vld [vmem:[#allocation9 + $0xbe0] sm:$0xff]
    %v2663 = vld [vmem:[#allocation9 + $0xbe8] sm:$0xff]
    %v2664 = vld [vmem:[#allocation9 + $0xbf0] sm:$0xff]
    %v2665 = vld [vmem:[#allocation9 + $0xbf8] sm:$0xff]
    %v2666 = vld [vmem:[#allocation9 + $0xc00] sm:$0xff]
    %v2667 = vld [vmem:[#allocation9 + $0xc08] sm:$0xff]
    %v2668 = vld [vmem:[#allocation9 + $0xc10] sm:$0xff]
    %v2669 = vld [vmem:[#allocation9 + $0xc18] sm:$0xff]
    %v2670 = vld [vmem:[#allocation9 + $0xc20] sm:$0xff]
    %v2671 = vld [vmem:[#allocation9 + $0xc28] sm:$0xff]
    %v2672 = vld [vmem:[#allocation9 + $0xc30] sm:$0xff]
    %v2673 = vld [vmem:[#allocation9 + $0xc38] sm:$0xff]
    %v2674 = vld [vmem:[#allocation9 + $0xc40] sm:$0xff]
    %v2675 = vld [vmem:[#allocation9 + $0xc48] sm:$0xff]
    %v2676 = vld [vmem:[#allocation9 + $0xc50] sm:$0xff]
    %v2677 = vld [vmem:[#allocation9 + $0xc58] sm:$0xff]
    %v2678 = vld [vmem:[#allocation9 + $0xc60] sm:$0xff]
    %v2679 = vld [vmem:[#allocation9 + $0xc68] sm:$0xff]
    %v2680 = vld [vmem:[#allocation9 + $0xc70] sm:$0xff]
    %v2681 = vld [vmem:[#allocation9 + $0xc78] sm:$0xff]
    %v2682 = vld [vmem:[#allocation9 + $0xc80] sm:$0xff]
    %v2683 = vld [vmem:[#allocation9 + $0xc88] sm:$0xff]
    %v2684 = vld [vmem:[#allocation9 + $0xc90] sm:$0xff]
    %v2685 = vld [vmem:[#allocation9 + $0xc98] sm:$0xff]
    %v2686 = vld [vmem:[#allocation9 + $0xca0] sm:$0xff]
    %v2687 = vld [vmem:[#allocation9 + $0xca8] sm:$0xff]
    %v2688 = vld [vmem:[#allocation9 + $0xcb0] sm:$0xff]
    %v2689 = vld [vmem:[#allocation9 + $0xcb8] sm:$0xff]
    %v2690 = vld [vmem:[#allocation9 + $0xcc0] sm:$0xff]
    %v2691 = vld [vmem:[#allocation9 + $0xcc8] sm:$0xff]
    %v2692 = vld [vmem:[#allocation9 + $0xcd0] sm:$0xff]
    %v2693 = vld [vmem:[#allocation9 + $0xcd8] sm:$0xff]
    %v2694 = vld [vmem:[#allocation9 + $0xce0] sm:$0xff]
    %v2695 = vld [vmem:[#allocation9 + $0xce8] sm:$0xff]
    %v2696 = vld [vmem:[#allocation9 + $0xcf0] sm:$0xff]
    %v2697 = vld [vmem:[#allocation9 + $0xcf8] sm:$0xff]
    %v2698 = vld [vmem:[#allocation9 + $0xd00] sm:$0xff]
    %v2699 = vld [vmem:[#allocation9 + $0xd08] sm:$0xff]
    %v2700 = vld [vmem:[#allocation9 + $0xd10] sm:$0xff]
    %v2701 = vld [vmem:[#allocation9 + $0xd18] sm:$0xff]
    %v2702 = vld [vmem:[#allocation9 + $0xd20] sm:$0xff]
    %v2703 = vld [vmem:[#allocation9 + $0xd28] sm:$0xff]
    %v2704 = vld [vmem:[#allocation9 + $0xd30] sm:$0xff]
    %v2705 = vld [vmem:[#allocation9 + $0xd38] sm:$0xff]
    %v2706 = vld [vmem:[#allocation9 + $0xd40] sm:$0xff]
    %v2707 = vld [vmem:[#allocation9 + $0xd48] sm:$0xff]
    %v2708 = vld [vmem:[#allocation9 + $0xd50] sm:$0xff]
    %v2709 = vld [vmem:[#allocation9 + $0xd58] sm:$0xff]
    %v2710 = vld [vmem:[#allocation9 + $0xd60] sm:$0xff]
    %v2711 = vld [vmem:[#allocation9 + $0xd68] sm:$0xff]
    %v2712 = vld [vmem:[#allocation9 + $0xd70] sm:$0xff]
    %v2713 = vld [vmem:[#allocation9 + $0xd78] sm:$0xff]
    %v2714 = vld [vmem:[#allocation9 + $0xd80] sm:$0xff]
    %v2715 = vld [vmem:[#allocation9 + $0xd88] sm:$0xff]
    %v2716 = vld [vmem:[#allocation9 + $0xd90] sm:$0xff]
    %v2717 = vld [vmem:[#allocation9 + $0xd98] sm:$0xff]
    %v2718 = vld [vmem:[#allocation9 + $0xda0] sm:$0xff]
    %v2719 = vld [vmem:[#allocation9 + $0xda8] sm:$0xff]
    %v2720 = vld [vmem:[#allocation9 + $0xdb0] sm:$0xff]
    %v2721 = vld [vmem:[#allocation9 + $0xdb8] sm:$0xff]
    %v2722 = vld [vmem:[#allocation9 + $0xdc0] sm:$0xff]
    %v2723 = vld [vmem:[#allocation9 + $0xdc8] sm:$0xff]
    %v2724 = vld [vmem:[#allocation9 + $0xdd0] sm:$0xff]
    %v2725 = vld [vmem:[#allocation9 + $0xdd8] sm:$0xff]
    %v2726 = vld [vmem:[#allocation9 + $0xde0] sm:$0xff]
    %v2727 = vld [vmem:[#allocation9 + $0xde8] sm:$0xff]
    %v2728 = vld [vmem:[#allocation9 + $0xdf0] sm:$0xff]
    %v2729 = vld [vmem:[#allocation9 + $0xdf8] sm:$0xff]
    %v2730 = vld [vmem:[#allocation9 + $0xe00] sm:$0xff]
    %v2731 = vld [vmem:[#allocation9 + $0xe08] sm:$0xff]
    %v2732 = vld [vmem:[#allocation9 + $0xe10] sm:$0xff]
    %v2733 = vld [vmem:[#allocation9 + $0xe18] sm:$0xff]
    %v2734 = vld [vmem:[#allocation9 + $0xe20] sm:$0xff]
    %v2735 = vld [vmem:[#allocation9 + $0xe28] sm:$0xff]
    %v2736 = vld [vmem:[#allocation9 + $0xe30] sm:$0xff]
    %v2737 = vld [vmem:[#allocation9 + $0xe38] sm:$0xff]
    %v2738 = vld [vmem:[#allocation9 + $0xe40] sm:$0xff]
    %v2739 = vld [vmem:[#allocation9 + $0xe48] sm:$0xff]
    %v2740 = vld [vmem:[#allocation9 + $0xe50] sm:$0xff]
    %v2741 = vld [vmem:[#allocation9 + $0xe58] sm:$0xff]
    %v2742 = vld [vmem:[#allocation9 + $0xe60] sm:$0xff]
    %v2743 = vld [vmem:[#allocation9 + $0xe68] sm:$0xff]
    %v2744 = vld [vmem:[#allocation9 + $0xe70] sm:$0xff]
    %v2745 = vld [vmem:[#allocation9 + $0xe78] sm:$0xff]
    %v2746 = vld [vmem:[#allocation9 + $0xe80] sm:$0xff]
    %v2747 = vld [vmem:[#allocation9 + $0xe88] sm:$0xff]
    %v2748 = vld [vmem:[#allocation9 + $0xe90] sm:$0xff]
    %v2749 = vld [vmem:[#allocation9 + $0xe98] sm:$0xff]
    %v2750 = vld [vmem:[#allocation9 + $0xea0] sm:$0xff]
    %v2751 = vld [vmem:[#allocation9 + $0xea8] sm:$0xff]
    %v2752 = vld [vmem:[#allocation9 + $0xeb0] sm:$0xff]
    %v2753 = vld [vmem:[#allocation9 + $0xeb8] sm:$0xff]
    %v2754 = vld [vmem:[#allocation9 + $0xec0] sm:$0xff]
    %v2755 = vld [vmem:[#allocation9 + $0xec8] sm:$0xff]
    %v2756 = vld [vmem:[#allocation9 + $0xed0] sm:$0xff]
    %v2757 = vld [vmem:[#allocation9 + $0xed8] sm:$0xff]
    %v2758 = vld [vmem:[#allocation9 + $0xee0] sm:$0xff]
    %v2759 = vld [vmem:[#allocation9 + $0xee8] sm:$0xff]
    %v2760 = vld [vmem:[#allocation9 + $0xef0] sm:$0xff]
    %v2761 = vld [vmem:[#allocation9 + $0xef8] sm:$0xff]
    %v2762 = vld [vmem:[#allocation9 + $0xf00] sm:$0xff]
    %v2763 = vld [vmem:[#allocation9 + $0xf08] sm:$0xff]
    %v2764 = vld [vmem:[#allocation9 + $0xf10] sm:$0xff]
    %v2765 = vld [vmem:[#allocation9 + $0xf18] sm:$0xff]
    %v2766 = vld [vmem:[#allocation9 + $0xf20] sm:$0xff]
    %v2767 = vld [vmem:[#allocation9 + $0xf28] sm:$0xff]
    %v2768 = vld [vmem:[#allocation9 + $0xf30] sm:$0xff]
    %v2769 = vld [vmem:[#allocation9 + $0xf38] sm:$0xff]
    %v2770 = vld [vmem:[#allocation9 + $0xf40] sm:$0xff]
    %v2771 = vld [vmem:[#allocation9 + $0xf48] sm:$0xff]
    %v2772 = vld [vmem:[#allocation9 + $0xf50] sm:$0xff]
    %v2773 = vld [vmem:[#allocation9 + $0xf58] sm:$0xff]
    %v2774 = vld [vmem:[#allocation9 + $0xf60] sm:$0xff]
    %v2775 = vld [vmem:[#allocation9 + $0xf68] sm:$0xff]
    %v2776 = vld [vmem:[#allocation9 + $0xf70] sm:$0xff]
    %v2777 = vld [vmem:[#allocation9 + $0xf78] sm:$0xff]
    %v2778 = vld [vmem:[#allocation9 + $0xf80] sm:$0xff]
    %v2779 = vld [vmem:[#allocation9 + $0xf88] sm:$0xff]
    %v2780 = vld [vmem:[#allocation9 + $0xf90] sm:$0xff]
    %v2781 = vld [vmem:[#allocation9 + $0xf98] sm:$0xff]
    %v2782 = vld [vmem:[#allocation9 + $0xfa0] sm:$0xff]
    %v2783 = vld [vmem:[#allocation9 + $0xfa8] sm:$0xff]
    %v2784 = vld [vmem:[#allocation9 + $0xfb0] sm:$0xff]
    %v2785 = vld [vmem:[#allocation9 + $0xfb8] sm:$0xff]
    %v2786 = vld [vmem:[#allocation9 + $0xfc0] sm:$0xff]
    %v2787 = vld [vmem:[#allocation9 + $0xfc8] sm:$0xff]
    %v2788 = vld [vmem:[#allocation9 + $0xfd0] sm:$0xff]
    %v2789 = vld [vmem:[#allocation9 + $0xfd8] sm:$0xff]
    %v2790 = vld [vmem:[#allocation9 + $0xfe0] sm:$0xff]
    %v2791 = vld [vmem:[#allocation9 + $0xfe8] sm:$0xff]
    %v2792 = vld [vmem:[#allocation9 + $0xff0] sm:$0xff]
    %v2793 = vld [vmem:[#allocation9 + $0xff8] sm:$0xff]
    %v2794 = vld [vmem:[#allocation9 + $0x1000] sm:$0xff]
    %v2795 = vld [vmem:[#allocation9 + $0x1008] sm:$0xff]
    %v2796 = vld [vmem:[#allocation9 + $0x1010] sm:$0xff]
    %v2797 = vld [vmem:[#allocation9 + $0x1018] sm:$0xff]
    %v2798 = vld [vmem:[#allocation9 + $0x1020] sm:$0xff]
    %v2799 = vld [vmem:[#allocation9 + $0x1028] sm:$0xff]
    %v2800 = vld [vmem:[#allocation9 + $0x1030] sm:$0xff]
    %v2801 = vld [vmem:[#allocation9 + $0x1038] sm:$0xff]
    %v2802 = vld [vmem:[#allocation9 + $0x1040] sm:$0xff]
    %v2803 = vld [vmem:[#allocation9 + $0x1048] sm:$0xff]
    %v2804 = vld [vmem:[#allocation9 + $0x1050] sm:$0xff]
    %v2805 = vld [vmem:[#allocation9 + $0x1058] sm:$0xff]
    %v2806 = vld [vmem:[#allocation9 + $0x1060] sm:$0xff]
    %v2807 = vld [vmem:[#allocation9 + $0x1068] sm:$0xff]
    %v2808 = vld [vmem:[#allocation9 + $0x1070] sm:$0xff]
    %v2809 = vld [vmem:[#allocation9 + $0x1078] sm:$0xff]
    %v2810 = vld [vmem:[#allocation9 + $0x1080] sm:$0xff]
    %v2811 = vld [vmem:[#allocation9 + $0x1088] sm:$0xff]
    %v2812 = vld [vmem:[#allocation9 + $0x1090] sm:$0xff]
    %v2813 = vld [vmem:[#allocation9 + $0x1098] sm:$0xff]
    %v2814 = vld [vmem:[#allocation9 + $0x10a0] sm:$0xff]
    %v2815 = vld [vmem:[#allocation9 + $0x10a8] sm:$0xff]
    %v2816 = vld [vmem:[#allocation9 + $0x10b0] sm:$0xff]
    %v2817 = vld [vmem:[#allocation9 + $0x10b8] sm:$0xff]
    %v2818 = vld [vmem:[#allocation9 + $0x10c0] sm:$0xff]
    %v2819 = vld [vmem:[#allocation9 + $0x10c8] sm:$0xff]
    %v2820 = vld [vmem:[#allocation9 + $0x10d0] sm:$0xff]
    %v2821 = vld [vmem:[#allocation9 + $0x10d8] sm:$0xff]
    %v2822 = vld [vmem:[#allocation9 + $0x10e0] sm:$0xff]
    %v2823 = vld [vmem:[#allocation9 + $0x10e8] sm:$0xff]
    %v2824 = vld [vmem:[#allocation9 + $0x10f0] sm:$0xff]
    %v2825 = vld [vmem:[#allocation9 + $0x10f8] sm:$0xff]
    %v2826 = vld [vmem:[#allocation9 + $0x1100] sm:$0xff]
    %v2827 = vld [vmem:[#allocation9 + $0x1108] sm:$0xff]
    %v2828 = vld [vmem:[#allocation9 + $0x1110] sm:$0xff]
    %v2829 = vld [vmem:[#allocation9 + $0x1118] sm:$0xff]
    %v2830 = vld [vmem:[#allocation9 + $0x1120] sm:$0xff]
    %v2831 = vld [vmem:[#allocation9 + $0x1128] sm:$0xff]
    %v2832 = vld [vmem:[#allocation9 + $0x1130] sm:$0xff]
    %v2833 = vld [vmem:[#allocation9 + $0x1138] sm:$0xff]
    %v2834 = vld [vmem:[#allocation9 + $0x1140] sm:$0xff]
    %v2835 = vld [vmem:[#allocation9 + $0x1148] sm:$0xff]
    %v2836 = vld [vmem:[#allocation9 + $0x1150] sm:$0xff]
    %v2837 = vld [vmem:[#allocation9 + $0x1158] sm:$0xff]
    %v2838 = vld [vmem:[#allocation9 + $0x1160] sm:$0xff]
    %v2839 = vld [vmem:[#allocation9 + $0x1168] sm:$0xff]
    %v2840 = vld [vmem:[#allocation9 + $0x1170] sm:$0xff]
    %v2841 = vld [vmem:[#allocation9 + $0x1178] sm:$0xff]
    %v2842 = vld [vmem:[#allocation9 + $0x1180] sm:$0xff]
    %v2843 = vld [vmem:[#allocation9 + $0x1188] sm:$0xff]
    %v2844 = vld [vmem:[#allocation9 + $0x1190] sm:$0xff]
    %v2845 = vld [vmem:[#allocation9 + $0x1198] sm:$0xff]
    %v2846 = vld [vmem:[#allocation9 + $0x11a0] sm:$0xff]
    %v2847 = vld [vmem:[#allocation9 + $0x11a8] sm:$0xff]
    %v2848 = vld [vmem:[#allocation9 + $0x11b0] sm:$0xff]
    %v2849 = vld [vmem:[#allocation9 + $0x11b8] sm:$0xff]
    %v2850 = vld [vmem:[#allocation9 + $0x11c0] sm:$0xff]
    %v2851 = vld [vmem:[#allocation9 + $0x11c8] sm:$0xff]
    %v2852 = vld [vmem:[#allocation9 + $0x11d0] sm:$0xff]
    %v2853 = vld [vmem:[#allocation9 + $0x11d8] sm:$0xff]
    %v2854 = vld [vmem:[#allocation9 + $0x11e0] sm:$0xff]
    %v2855 = vld [vmem:[#allocation9 + $0x11e8] sm:$0xff]
    %v2856 = vld [vmem:[#allocation9 + $0x11f0] sm:$0xff]
    %v2857 = vld [vmem:[#allocation9 + $0x11f8] sm:$0xff]
    %v2858 = vld [vmem:[#allocation9 + $0x1200] sm:$0xff]
    %v2859 = vld [vmem:[#allocation9 + $0x1208] sm:$0xff]
    %v2860 = vld [vmem:[#allocation9 + $0x1210] sm:$0xff]
    %v2861 = vld [vmem:[#allocation9 + $0x1218] sm:$0xff]
    %v2862 = vld [vmem:[#allocation9 + $0x1220] sm:$0xff]
    %v2863 = vld [vmem:[#allocation9 + $0x1228] sm:$0xff]
    %v2864 = vld [vmem:[#allocation9 + $0x1230] sm:$0xff]
    %v2865 = vld [vmem:[#allocation9 + $0x1238] sm:$0xff]
    %v2866 = vld [vmem:[#allocation9 + $0x1240] sm:$0xff]
    %v2867 = vld [vmem:[#allocation9 + $0x1248] sm:$0xff]
    %v2868 = vld [vmem:[#allocation9 + $0x1250] sm:$0xff]
    %v2869 = vld [vmem:[#allocation9 + $0x1258] sm:$0xff]
    %v2870 = vld [vmem:[#allocation9 + $0x1260] sm:$0xff]
    %v2871 = vld [vmem:[#allocation9 + $0x1268] sm:$0xff]
    %v2872 = vld [vmem:[#allocation9 + $0x1270] sm:$0xff]
    %v2873 = vld [vmem:[#allocation9 + $0x1278] sm:$0xff]
    %v2874 = vld [vmem:[#allocation9 + $0x1280] sm:$0xff]
    %v2875 = vld [vmem:[#allocation9 + $0x1288] sm:$0xff]
    %v2876 = vld [vmem:[#allocation9 + $0x1290] sm:$0xff]
    %v2877 = vld [vmem:[#allocation9 + $0x1298] sm:$0xff]
    %v2878 = vld [vmem:[#allocation9 + $0x12a0] sm:$0xff]
    %v2879 = vld [vmem:[#allocation9 + $0x12a8] sm:$0xff]
    %v2880 = vld [vmem:[#allocation9 + $0x12b0] sm:$0xff]
    %v2881 = vld [vmem:[#allocation9 + $0x12b8] sm:$0xff]
    %v2882 = vld [vmem:[#allocation9 + $0x12c0] sm:$0xff]
    %v2883 = vld [vmem:[#allocation9 + $0x12c8] sm:$0xff]
    %v2884 = vld [vmem:[#allocation9 + $0x12d0] sm:$0xff]
    %v2885 = vld [vmem:[#allocation9 + $0x12d8] sm:$0xff]
    %v2886 = vld [vmem:[#allocation9 + $0x12e0] sm:$0xff]
    %v2887 = vld [vmem:[#allocation9 + $0x12e8] sm:$0xff]
    %v2888 = vld [vmem:[#allocation9 + $0x12f0] sm:$0xff]
    %v2889 = vld [vmem:[#allocation9 + $0x12f8] sm:$0xff]
    %v2890 = vld [vmem:[#allocation9 + $0x1300] sm:$0xff]
    %v2891 = vld [vmem:[#allocation9 + $0x1308] sm:$0xff]
    %v2892 = vld [vmem:[#allocation9 + $0x1310] sm:$0xff]
    %v2893 = vld [vmem:[#allocation9 + $0x1318] sm:$0xff]
    %v2894 = vld [vmem:[#allocation9 + $0x1320] sm:$0xff]
    %v2895 = vld [vmem:[#allocation9 + $0x1328] sm:$0xff]
    %v2896 = vld [vmem:[#allocation9 + $0x1330] sm:$0xff]
    %v2897 = vld [vmem:[#allocation9 + $0x1338] sm:$0xff]
    %v2898 = vld [vmem:[#allocation9 + $0x1340] sm:$0xff]
    %v2899 = vld [vmem:[#allocation9 + $0x1348] sm:$0xff]
    %v2900 = vld [vmem:[#allocation9 + $0x1350] sm:$0xff]
    %v2901 = vld [vmem:[#allocation9 + $0x1358] sm:$0xff]
    %v2902 = vld [vmem:[#allocation9 + $0x1360] sm:$0xff]
    %v2903 = vld [vmem:[#allocation9 + $0x1368] sm:$0xff]
    %v2904 = vld [vmem:[#allocation9 + $0x1370] sm:$0xff]
    %v2905 = vld [vmem:[#allocation9 + $0x1378] sm:$0xff]
    %v2906 = vld [vmem:[#allocation9 + $0x1380] sm:$0xff]
    %v2907 = vld [vmem:[#allocation9 + $0x1388] sm:$0xff]
    %v2908 = vld [vmem:[#allocation9 + $0x1390] sm:$0xff]
    %v2909 = vld [vmem:[#allocation9 + $0x1398] sm:$0xff]
    %v2910 = vld [vmem:[#allocation9 + $0x13a0] sm:$0xff]
    %v2911 = vld [vmem:[#allocation9 + $0x13a8] sm:$0xff]
    %v2912 = vld [vmem:[#allocation9 + $0x13b0] sm:$0xff]
    %v2913 = vld [vmem:[#allocation9 + $0x13b8] sm:$0xff]
    %v2914 = vld [vmem:[#allocation9 + $0x13c0] sm:$0xff]
    %v2915 = vld [vmem:[#allocation9 + $0x13c8] sm:$0xff]
    %v2916 = vld [vmem:[#allocation9 + $0x13d0] sm:$0xff]
    %v2917 = vld [vmem:[#allocation9 + $0x13d8] sm:$0xff]
    %v2918 = vld [vmem:[#allocation9 + $0x13e0] sm:$0xff]
    %v2919 = vld [vmem:[#allocation9 + $0x13e8] sm:$0xff]
    %v2920 = vld [vmem:[#allocation9 + $0x13f0] sm:$0xff]
    %v2921 = vld [vmem:[#allocation9 + $0x13f8] sm:$0xff]
    %v2922 = vld [vmem:[#allocation9 + $0x1400] sm:$0xff]
    %v2923 = vld [vmem:[#allocation9 + $0x1408] sm:$0xff]
    %v2924 = vld [vmem:[#allocation9 + $0x1410] sm:$0xff]
    %v2925 = vld [vmem:[#allocation9 + $0x1418] sm:$0xff]
    %v2926 = vld [vmem:[#allocation9 + $0x1420] sm:$0xff]
    %v2927 = vld [vmem:[#allocation9 + $0x1428] sm:$0xff]
    %v2928 = vld [vmem:[#allocation9 + $0x1430] sm:$0xff]
    %v2929 = vld [vmem:[#allocation9 + $0x1438] sm:$0xff]
    %v2930 = vld [vmem:[#allocation9 + $0x1440] sm:$0xff]
    %v2931 = vld [vmem:[#allocation9 + $0x1448] sm:$0xff]
    %v2932 = vld [vmem:[#allocation9 + $0x1450] sm:$0xff]
    %v2933 = vld [vmem:[#allocation9 + $0x1458] sm:$0xff]
    %v2934 = vld [vmem:[#allocation9 + $0x1460] sm:$0xff]
    %v2935 = vld [vmem:[#allocation9 + $0x1468] sm:$0xff]
    %v2936 = vld [vmem:[#allocation9 + $0x1470] sm:$0xff]
    %v2937 = vld [vmem:[#allocation9 + $0x1478] sm:$0xff]
    %v2938 = vld [vmem:[#allocation9 + $0x1480] sm:$0xff]
    %v2939 = vld [vmem:[#allocation9 + $0x1488] sm:$0xff]
    %v2940 = vld [vmem:[#allocation9 + $0x1490] sm:$0xff]
    %v2941 = vld [vmem:[#allocation9 + $0x1498] sm:$0xff]
    %v2942 = vld [vmem:[#allocation9 + $0x14a0] sm:$0xff]
    %v2943 = vld [vmem:[#allocation9 + $0x14a8] sm:$0xff]
    %v2944 = vld [vmem:[#allocation9 + $0x14b0] sm:$0xff]
    %v2945 = vld [vmem:[#allocation9 + $0x14b8] sm:$0xff]
    %v2946 = vld [vmem:[#allocation9 + $0x14c0] sm:$0xff]
    %v2947 = vld [vmem:[#allocation9 + $0x14c8] sm:$0xff]
    %v2948 = vld [vmem:[#allocation9 + $0x14d0] sm:$0xff]
    %v2949 = vld [vmem:[#allocation9 + $0x14d8] sm:$0xff]
    %v2950 = vld [vmem:[#allocation9 + $0x14e0] sm:$0xff]
    %v2951 = vld [vmem:[#allocation9 + $0x14e8] sm:$0xff]
    %v2952 = vld [vmem:[#allocation9 + $0x14f0] sm:$0xff]
    %v2953 = vld [vmem:[#allocation9 + $0x14f8] sm:$0xff]
    %v2954 = vld [vmem:[#allocation9 + $0x1500] sm:$0xff]
    %v2955 = vld [vmem:[#allocation9 + $0x1508] sm:$0xff]
    %v2956 = vld [vmem:[#allocation9 + $0x1510] sm:$0xff]
    %v2957 = vld [vmem:[#allocation9 + $0x1518] sm:$0xff]
    %v2958 = vld [vmem:[#allocation9 + $0x1520] sm:$0xff]
    %v2959 = vld [vmem:[#allocation9 + $0x1528] sm:$0xff]
    %v2960 = vld [vmem:[#allocation9 + $0x1530] sm:$0xff]
    %v2961 = vld [vmem:[#allocation9 + $0x1538] sm:$0xff]
    %v2962 = vld [vmem:[#allocation9 + $0x1540] sm:$0xff]
    %v2963 = vld [vmem:[#allocation9 + $0x1548] sm:$0xff]
    %v2964 = vld [vmem:[#allocation9 + $0x1550] sm:$0xff]
    %v2965 = vld [vmem:[#allocation9 + $0x1558] sm:$0xff]
    %v2966 = vld [vmem:[#allocation9 + $0x1560] sm:$0xff]
    %v2967 = vld [vmem:[#allocation9 + $0x1568] sm:$0xff]
    %v2968 = vld [vmem:[#allocation9 + $0x1570] sm:$0xff]
    %v2969 = vld [vmem:[#allocation9 + $0x1578] sm:$0xff]
    %v2970 = vld [vmem:[#allocation9 + $0x1580] sm:$0xff]
    %v2971 = vld [vmem:[#allocation9 + $0x1588] sm:$0xff]
    %v2972 = vld [vmem:[#allocation9 + $0x1590] sm:$0xff]
    %v2973 = vld [vmem:[#allocation9 + $0x1598] sm:$0xff]
    %v2974 = vld [vmem:[#allocation9 + $0x15a0] sm:$0xff]
    %v2975 = vld [vmem:[#allocation9 + $0x15a8] sm:$0xff]
    %v2976 = vld [vmem:[#allocation9 + $0x15b0] sm:$0xff]
    %v2977 = vld [vmem:[#allocation9 + $0x15b8] sm:$0xff]
    %v2978 = vld [vmem:[#allocation9 + $0x15c0] sm:$0xff]
    %v2979 = vld [vmem:[#allocation9 + $0x15c8] sm:$0xff]
    %v2980 = vld [vmem:[#allocation9 + $0x15d0] sm:$0xff]
    %v2981 = vld [vmem:[#allocation9 + $0x15d8] sm:$0xff]
    %v2982 = vld [vmem:[#allocation9 + $0x15e0] sm:$0xff]
    %v2983 = vld [vmem:[#allocation9 + $0x15e8] sm:$0xff]
    %v2984 = vld [vmem:[#allocation9 + $0x15f0] sm:$0xff]
    %v2985 = vld [vmem:[#allocation9 + $0x15f8] sm:$0xff]
    %v2986 = vld [vmem:[#allocation9 + $0x1600] sm:$0xff]
    %v2987 = vld [vmem:[#allocation9 + $0x1608] sm:$0xff]
    %v2988 = vld [vmem:[#allocation9 + $0x1610] sm:$0xff]
    %v2989 = vld [vmem:[#allocation9 + $0x1618] sm:$0xff]
    %v2990 = vld [vmem:[#allocation9 + $0x1620] sm:$0xff]
    %v2991 = vld [vmem:[#allocation9 + $0x1628] sm:$0xff]
    %v2992 = vld [vmem:[#allocation9 + $0x1630] sm:$0xff]
    %v2993 = vld [vmem:[#allocation9 + $0x1638] sm:$0xff]
    %v2994 = vld [vmem:[#allocation9 + $0x1640] sm:$0xff]
    %v2995 = vld [vmem:[#allocation9 + $0x1648] sm:$0xff]
    %v2996 = vld [vmem:[#allocation9 + $0x1650] sm:$0xff]
    %v2997 = vld [vmem:[#allocation9 + $0x1658] sm:$0xff]
    %v2998 = vld [vmem:[#allocation9 + $0x1660] sm:$0xff]
    %v2999 = vld [vmem:[#allocation9 + $0x1668] sm:$0xff]
    %v3000 = vld [vmem:[#allocation9 + $0x1670] sm:$0xff]
    %v3001 = vld [vmem:[#allocation9 + $0x1678] sm:$0xff]
    %v3002 = vld [vmem:[#allocation9 + $0x1680] sm:$0xff]
    %v3003 = vld [vmem:[#allocation9 + $0x1688] sm:$0xff]
    %v3004 = vld [vmem:[#allocation9 + $0x1690] sm:$0xff]
    %v3005 = vld [vmem:[#allocation9 + $0x1698] sm:$0xff]
    %v3006 = vld [vmem:[#allocation9 + $0x16a0] sm:$0xff]
    %v3007 = vld [vmem:[#allocation9 + $0x16a8] sm:$0xff]
    %v3008 = vld [vmem:[#allocation9 + $0x16b0] sm:$0xff]
    %v3009 = vld [vmem:[#allocation9 + $0x16b8] sm:$0xff]
    %v3010 = vld [vmem:[#allocation9 + $0x16c0] sm:$0xff]
    %v3011 = vld [vmem:[#allocation9 + $0x16c8] sm:$0xff]
    %v3012 = vld [vmem:[#allocation9 + $0x16d0] sm:$0xff]
    %v3013 = vld [vmem:[#allocation9 + $0x16d8] sm:$0xff]
    %v3014 = vld [vmem:[#allocation9 + $0x16e0] sm:$0xff]
    %v3015 = vld [vmem:[#allocation9 + $0x16e8] sm:$0xff]
    %v3016 = vld [vmem:[#allocation9 + $0x16f0] sm:$0xff]
    %v3017 = vld [vmem:[#allocation9 + $0x16f8] sm:$0xff]
    %v3018 = vld [vmem:[#allocation9 + $0x1700] sm:$0xff]
    %v3019 = vld [vmem:[#allocation9 + $0x1708] sm:$0xff]
    %v3020 = vld [vmem:[#allocation9 + $0x1710] sm:$0xff]
    %v3021 = vld [vmem:[#allocation9 + $0x1718] sm:$0xff]
    %v3022 = vld [vmem:[#allocation9 + $0x1720] sm:$0xff]
    %v3023 = vld [vmem:[#allocation9 + $0x1728] sm:$0xff]
    %v3024 = vld [vmem:[#allocation9 + $0x1730] sm:$0xff]
    %v3025 = vld [vmem:[#allocation9 + $0x1738] sm:$0xff]
    %v3026 = vld [vmem:[#allocation9 + $0x1740] sm:$0xff]
    %v3027 = vld [vmem:[#allocation9 + $0x1748] sm:$0xff]
    %v3028 = vld [vmem:[#allocation9 + $0x1750] sm:$0xff]
    %v3029 = vld [vmem:[#allocation9 + $0x1758] sm:$0xff]
    %v3030 = vld [vmem:[#allocation9 + $0x1760] sm:$0xff]
    %v3031 = vld [vmem:[#allocation9 + $0x1768] sm:$0xff]
    %v3032 = vld [vmem:[#allocation9 + $0x1770] sm:$0xff]
    %v3033 = vld [vmem:[#allocation9 + $0x1778] sm:$0xff]
    %v3034 = vld [vmem:[#allocation9 + $0x1780] sm:$0xff]
    %v3035 = vld [vmem:[#allocation9 + $0x1788] sm:$0xff]
    %v3036 = vld [vmem:[#allocation9 + $0x1790] sm:$0xff]
    %v3037 = vld [vmem:[#allocation9 + $0x1798] sm:$0xff]
    %v3038 = vld [vmem:[#allocation9 + $0x17a0] sm:$0xff]
    %v3039 = vld [vmem:[#allocation9 + $0x17a8] sm:$0xff]
    %v3040 = vld [vmem:[#allocation9 + $0x17b0] sm:$0xff]
    %v3041 = vld [vmem:[#allocation9 + $0x17b8] sm:$0xff]
    %v3042 = vld [vmem:[#allocation9 + $0x17c0] sm:$0xff]
    %v3043 = vld [vmem:[#allocation9 + $0x17c8] sm:$0xff]
    %v3044 = vld [vmem:[#allocation9 + $0x17d0] sm:$0xff]
    %v3045 = vld [vmem:[#allocation9 + $0x17d8] sm:$0xff]
    %v3046 = vld [vmem:[#allocation9 + $0x17e0] sm:$0xff]
    %v3047 = vld [vmem:[#allocation9 + $0x17e8] sm:$0xff]
    %v3048 = vld [vmem:[#allocation9 + $0x17f0] sm:$0xff]
    %v3049 = vld [vmem:[#allocation9 + $0x17f8] sm:$0xff]
    %v3050 = vld [vmem:[#allocation9 + $0x1800] sm:$0xff]
    %v3051 = vld [vmem:[#allocation9 + $0x1808] sm:$0xff]
    %v3052 = vld [vmem:[#allocation9 + $0x1810] sm:$0xff]
    %v3053 = vld [vmem:[#allocation9 + $0x1818] sm:$0xff]
    %v3054 = vld [vmem:[#allocation9 + $0x1820] sm:$0xff]
    %v3055 = vld [vmem:[#allocation9 + $0x1828] sm:$0xff]
    %v3056 = vld [vmem:[#allocation9 + $0x1830] sm:$0xff]
    %v3057 = vld [vmem:[#allocation9 + $0x1838] sm:$0xff]
    %v3058 = vld [vmem:[#allocation9 + $0x1840] sm:$0xff]
    %v3059 = vld [vmem:[#allocation9 + $0x1848] sm:$0xff]
    %v3060 = vld [vmem:[#allocation9 + $0x1850] sm:$0xff]
    %v3061 = vld [vmem:[#allocation9 + $0x1858] sm:$0xff]
    %v3062 = vld [vmem:[#allocation9 + $0x1860] sm:$0xff]
    %v3063 = vld [vmem:[#allocation9 + $0x1868] sm:$0xff]
    %v3064 = vld [vmem:[#allocation9 + $0x1870] sm:$0xff]
    %v3065 = vld [vmem:[#allocation9 + $0x1878] sm:$0xff]
    %v3066 = vld [vmem:[#allocation9 + $0x1880] sm:$0xff]
    %v3067 = vld [vmem:[#allocation9 + $0x1888] sm:$0xff]
    %v3068 = vld [vmem:[#allocation9 + $0x1890] sm:$0xff]
    %v3069 = vld [vmem:[#allocation9 + $0x1898] sm:$0xff]
    %v3070 = vld [vmem:[#allocation9 + $0x18a0] sm:$0xff]
    %v3071 = vld [vmem:[#allocation9 + $0x18a8] sm:$0xff]
    %v3072 = vld [vmem:[#allocation9 + $0x18b0] sm:$0xff]
    %v3073 = vld [vmem:[#allocation9 + $0x18b8] sm:$0xff]
    %v3074 = vld [vmem:[#allocation9 + $0x18c0] sm:$0xff]
    %v3075 = vld [vmem:[#allocation9 + $0x18c8] sm:$0xff]
    %v3076 = vld [vmem:[#allocation9 + $0x18d0] sm:$0xff]
    %v3077 = vld [vmem:[#allocation9 + $0x18d8] sm:$0xff]
    %v3078 = vld [vmem:[#allocation9 + $0x18e0] sm:$0xff]
    %v3079 = vld [vmem:[#allocation9 + $0x18e8] sm:$0xff]
    %v3080 = vld [vmem:[#allocation9 + $0x18f0] sm:$0xff]
    %v3081 = vld [vmem:[#allocation9 + $0x18f8] sm:$0xff]
    %v3082 = vld [vmem:[#allocation9 + $0x1900] sm:$0xff]
    %v3083 = vld [vmem:[#allocation9 + $0x1908] sm:$0xff]
    %v3084 = vld [vmem:[#allocation9 + $0x1910] sm:$0xff]
    %v3085 = vld [vmem:[#allocation9 + $0x1918] sm:$0xff]
    %v3086 = vld [vmem:[#allocation9 + $0x1920] sm:$0xff]
    %v3087 = vld [vmem:[#allocation9 + $0x1928] sm:$0xff]
    %v3088 = vld [vmem:[#allocation9 + $0x1930] sm:$0xff]
    %v3089 = vld [vmem:[#allocation9 + $0x1938] sm:$0xff]
    %v3090 = vld [vmem:[#allocation9 + $0x1940] sm:$0xff]
    %v3091 = vld [vmem:[#allocation9 + $0x1948] sm:$0xff]
    %v3092 = vld [vmem:[#allocation9 + $0x1950] sm:$0xff]
    %v3093 = vld [vmem:[#allocation9 + $0x1958] sm:$0xff]
    %v3094 = vld [vmem:[#allocation9 + $0x1960] sm:$0xff]
    %v3095 = vld [vmem:[#allocation9 + $0x1968] sm:$0xff]
    %v3096 = vld [vmem:[#allocation9 + $0x1970] sm:$0xff]
    %v3097 = vld [vmem:[#allocation9 + $0x1978] sm:$0xff]
    %v3098 = vld [vmem:[#allocation9 + $0x1980] sm:$0xff]
    %v3099 = vld [vmem:[#allocation9 + $0x1988] sm:$0xff]
    %v3100 = vld [vmem:[#allocation9 + $0x1990] sm:$0xff]
    %v3101 = vld [vmem:[#allocation9 + $0x1998] sm:$0xff]
    %v3102 = vld [vmem:[#allocation9 + $0x19a0] sm:$0xff]
    %v3103 = vld [vmem:[#allocation9 + $0x19a8] sm:$0xff]
    %v3104 = vld [vmem:[#allocation9 + $0x19b0] sm:$0xff]
    %v3105 = vld [vmem:[#allocation9 + $0x19b8] sm:$0xff]
    %v3106 = vld [vmem:[#allocation9 + $0x19c0] sm:$0xff]
    %v3107 = vld [vmem:[#allocation9 + $0x19c8] sm:$0xff]
    %v3108 = vld [vmem:[#allocation9 + $0x19d0] sm:$0xff]
    %v3109 = vld [vmem:[#allocation9 + $0x19d8] sm:$0xff]
    %v3110 = vld [vmem:[#allocation9 + $0x19e0] sm:$0xff]
    %v3111 = vld [vmem:[#allocation9 + $0x19e8] sm:$0xff]
    %v3112 = vld [vmem:[#allocation9 + $0x19f0] sm:$0xff]
    %v3113 = vld [vmem:[#allocation9 + $0x19f8] sm:$0xff]
    %v3114 = vld [vmem:[#allocation9 + $0x1a00] sm:$0xff]
    %v3115 = vld [vmem:[#allocation9 + $0x1a08] sm:$0xff]
    %v3116 = vld [vmem:[#allocation9 + $0x1a10] sm:$0xff]
    %v3117 = vld [vmem:[#allocation9 + $0x1a18] sm:$0xff]
    %v3118 = vld [vmem:[#allocation9 + $0x1a20] sm:$0xff]
    %v3119 = vld [vmem:[#allocation9 + $0x1a28] sm:$0xff]
    %v3120 = vld [vmem:[#allocation9 + $0x1a30] sm:$0xff]
    %v3121 = vld [vmem:[#allocation9 + $0x1a38] sm:$0xff]
    %v3122 = vld [vmem:[#allocation9 + $0x1a40] sm:$0xff]
    %v3123 = vld [vmem:[#allocation9 + $0x1a48] sm:$0xff]
    %v3124 = vld [vmem:[#allocation9 + $0x1a50] sm:$0xff]
    %v3125 = vld [vmem:[#allocation9 + $0x1a58] sm:$0xff]
    %v3126 = vld [vmem:[#allocation9 + $0x1a60] sm:$0xff]
    %v3127 = vld [vmem:[#allocation9 + $0x1a68] sm:$0xff]
    %v3128 = vld [vmem:[#allocation9 + $0x1a70] sm:$0xff]
    %v3129 = vld [vmem:[#allocation9 + $0x1a78] sm:$0xff]
    %v3130 = vld [vmem:[#allocation9 + $0x1a80] sm:$0xff]
    %v3131 = vld [vmem:[#allocation9 + $0x1a88] sm:$0xff]
    %v3132 = vld [vmem:[#allocation9 + $0x1a90] sm:$0xff]
    %v3133 = vld [vmem:[#allocation9 + $0x1a98] sm:$0xff]
    %v3134 = vld [vmem:[#allocation9 + $0x1aa0] sm:$0xff]
    %v3135 = vld [vmem:[#allocation9 + $0x1aa8] sm:$0xff]
    %v3136 = vld [vmem:[#allocation9 + $0x1ab0] sm:$0xff]
    %v3137 = vld [vmem:[#allocation9 + $0x1ab8] sm:$0xff]
    %v3138 = vld [vmem:[#allocation9 + $0x1ac0] sm:$0xff]
    %v3139 = vld [vmem:[#allocation9 + $0x1ac8] sm:$0xff]
    %v3140 = vld [vmem:[#allocation9 + $0x1ad0] sm:$0xff]
    %v3141 = vld [vmem:[#allocation9 + $0x1ad8] sm:$0xff]
    %v3142 = vld [vmem:[#allocation9 + $0x1ae0] sm:$0xff]
    %v3143 = vld [vmem:[#allocation9 + $0x1ae8] sm:$0xff]
    %v3144 = vld [vmem:[#allocation9 + $0x1af0] sm:$0xff]
    %v3145 = vld [vmem:[#allocation9 + $0x1af8] sm:$0xff]
    %v3146 = vld [vmem:[#allocation9 + $0x1b00] sm:$0xff]
    %v3147 = vld [vmem:[#allocation9 + $0x1b08] sm:$0xff]
    %v3148 = vld [vmem:[#allocation9 + $0x1b10] sm:$0xff]
    %v3149 = vld [vmem:[#allocation9 + $0x1b18] sm:$0xff]
    %v3150 = vld [vmem:[#allocation9 + $0x1b20] sm:$0xff]
    %v3151 = vld [vmem:[#allocation9 + $0x1b28] sm:$0xff]
    %v3152 = vld [vmem:[#allocation9 + $0x1b30] sm:$0xff]
    %v3153 = vld [vmem:[#allocation9 + $0x1b38] sm:$0xff]
    %v3154 = vld [vmem:[#allocation9 + $0x1b40] sm:$0xff]
    %v3155 = vld [vmem:[#allocation9 + $0x1b48] sm:$0xff]
    %v3156 = vld [vmem:[#allocation9 + $0x1b50] sm:$0xff]
    %v3157 = vld [vmem:[#allocation9 + $0x1b58] sm:$0xff]
    %v3158 = vld [vmem:[#allocation9 + $0x1b60] sm:$0xff]
    %v3159 = vld [vmem:[#allocation9 + $0x1b68] sm:$0xff]
    %v3160 = vld [vmem:[#allocation9 + $0x1b70] sm:$0xff]
    %v3161 = vld [vmem:[#allocation9 + $0x1b78] sm:$0xff]
    %v3162 = vld [vmem:[#allocation9 + $0x1b80] sm:$0xff]
    %v3163 = vld [vmem:[#allocation9 + $0x1b88] sm:$0xff]
    %v3164 = vld [vmem:[#allocation9 + $0x1b90] sm:$0xff]
    %v3165 = vld [vmem:[#allocation9 + $0x1b98] sm:$0xff]
    %v3166 = vld [vmem:[#allocation9 + $0x1ba0] sm:$0xff]
    %v3167 = vld [vmem:[#allocation9 + $0x1ba8] sm:$0xff]
    %v3168 = vld [vmem:[#allocation9 + $0x1bb0] sm:$0xff]
    %v3169 = vld [vmem:[#allocation9 + $0x1bb8] sm:$0xff]
    %v3170 = vld [vmem:[#allocation9 + $0x1bc0] sm:$0xff]
    %v3171 = vld [vmem:[#allocation9 + $0x1bc8] sm:$0xff]
    %v3172 = vld [vmem:[#allocation9 + $0x1bd0] sm:$0xff]
    %v3173 = vld [vmem:[#allocation9 + $0x1bd8] sm:$0xff]
    %v3174 = vld [vmem:[#allocation9 + $0x1be0] sm:$0xff]
    %v3175 = vld [vmem:[#allocation9 + $0x1be8] sm:$0xff]
    %v3176 = vld [vmem:[#allocation9 + $0x1bf0] sm:$0xff]
    %v3177 = vld [vmem:[#allocation9 + $0x1bf8] sm:$0xff]
    %v3178 = vld [vmem:[#allocation9 + $0x1c00] sm:$0xff]
    %v3179 = vld [vmem:[#allocation9 + $0x1c08] sm:$0xff]
    %v3180 = vld [vmem:[#allocation9 + $0x1c10] sm:$0xff]
    %v3181 = vld [vmem:[#allocation9 + $0x1c18] sm:$0xff]
    %v3182 = vld [vmem:[#allocation9 + $0x1c20] sm:$0xff]
    %v3183 = vld [vmem:[#allocation9 + $0x1c28] sm:$0xff]
    %v3184 = vld [vmem:[#allocation9 + $0x1c30] sm:$0xff]
    %v3185 = vld [vmem:[#allocation9 + $0x1c38] sm:$0xff]
    %v3186 = vld [vmem:[#allocation9 + $0x1c40] sm:$0xff]
    %v3187 = vld [vmem:[#allocation9 + $0x1c48] sm:$0xff]
    %v3188 = vld [vmem:[#allocation9 + $0x1c50] sm:$0xff]
    %v3189 = vld [vmem:[#allocation9 + $0x1c58] sm:$0xff]
    %v3190 = vld [vmem:[#allocation9 + $0x1c60] sm:$0xff]
    %v3191 = vld [vmem:[#allocation9 + $0x1c68] sm:$0xff]
    %v3192 = vld [vmem:[#allocation9 + $0x1c70] sm:$0xff]
    %v3193 = vld [vmem:[#allocation9 + $0x1c78] sm:$0xff]
    %v3194 = vld [vmem:[#allocation9 + $0x1c80] sm:$0xff]
    %v3195 = vld [vmem:[#allocation9 + $0x1c88] sm:$0xff]
    %v3196 = vld [vmem:[#allocation9 + $0x1c90] sm:$0xff]
    %v3197 = vld [vmem:[#allocation9 + $0x1c98] sm:$0xff]
    %v3198 = vld [vmem:[#allocation9 + $0x1ca0] sm:$0xff]
    %v3199 = vld [vmem:[#allocation9 + $0x1ca8] sm:$0xff]
    %v3200 = vld [vmem:[#allocation9 + $0x1cb0] sm:$0xff]
    %v3201 = vld [vmem:[#allocation9 + $0x1cb8] sm:$0xff]
    %v3202 = vld [vmem:[#allocation9 + $0x1cc0] sm:$0xff]
    %v3203 = vld [vmem:[#allocation9 + $0x1cc8] sm:$0xff]
    %v3204 = vld [vmem:[#allocation9 + $0x1cd0] sm:$0xff]
    %v3205 = vld [vmem:[#allocation9 + $0x1cd8] sm:$0xff]
    %v3206 = vld [vmem:[#allocation9 + $0x1ce0] sm:$0xff]
    %v3207 = vld [vmem:[#allocation9 + $0x1ce8] sm:$0xff]
    %v3208 = vld [vmem:[#allocation9 + $0x1cf0] sm:$0xff]
    %v3209 = vld [vmem:[#allocation9 + $0x1cf8] sm:$0xff]
    %v3210 = vld [vmem:[#allocation9 + $0x1d00] sm:$0xff]
    %v3211 = vld [vmem:[#allocation9 + $0x1d08] sm:$0xff]
    %v3212 = vld [vmem:[#allocation9 + $0x1d10] sm:$0xff]
    %v3213 = vld [vmem:[#allocation9 + $0x1d18] sm:$0xff]
    %v3214 = vld [vmem:[#allocation9 + $0x1d20] sm:$0xff]
    %v3215 = vld [vmem:[#allocation9 + $0x1d28] sm:$0xff]
    %v3216 = vld [vmem:[#allocation9 + $0x1d30] sm:$0xff]
    %v3217 = vld [vmem:[#allocation9 + $0x1d38] sm:$0xff]
    %v3218 = vld [vmem:[#allocation9 + $0x1d40] sm:$0xff]
    %v3219 = vld [vmem:[#allocation9 + $0x1d48] sm:$0xff]
    %v3220 = vld [vmem:[#allocation9 + $0x1d50] sm:$0xff]
    %v3221 = vld [vmem:[#allocation9 + $0x1d58] sm:$0xff]
    %v3222 = vld [vmem:[#allocation9 + $0x1d60] sm:$0xff]
    %v3223 = vld [vmem:[#allocation9 + $0x1d68] sm:$0xff]
    %v3224 = vld [vmem:[#allocation9 + $0x1d70] sm:$0xff]
    %v3225 = vld [vmem:[#allocation9 + $0x1d78] sm:$0xff]
    %v3226 = vld [vmem:[#allocation9 + $0x1d80] sm:$0xff]
    %v3227 = vld [vmem:[#allocation9 + $0x1d88] sm:$0xff]
    %v3228 = vld [vmem:[#allocation9 + $0x1d90] sm:$0xff]
    %v3229 = vld [vmem:[#allocation9 + $0x1d98] sm:$0xff]
    %v3230 = vld [vmem:[#allocation9 + $0x1da0] sm:$0xff]
    %v3231 = vld [vmem:[#allocation9 + $0x1da8] sm:$0xff]
    %v3232 = vld [vmem:[#allocation9 + $0x1db0] sm:$0xff]
    %v3233 = vld [vmem:[#allocation9 + $0x1db8] sm:$0xff]
    %v3234 = vld [vmem:[#allocation9 + $0x1dc0] sm:$0xff]
    %v3235 = vld [vmem:[#allocation9 + $0x1dc8] sm:$0xff]
    %v3236 = vld [vmem:[#allocation9 + $0x1dd0] sm:$0xff]
    %v3237 = vld [vmem:[#allocation9 + $0x1dd8] sm:$0xff]
    %v3238 = vld [vmem:[#allocation9 + $0x1de0] sm:$0xff]
    %v3239 = vld [vmem:[#allocation9 + $0x1de8] sm:$0xff]
    %v3240 = vld [vmem:[#allocation9 + $0x1df0] sm:$0xff]
    %v3241 = vld [vmem:[#allocation9 + $0x1df8] sm:$0xff]
    %v3242 = vld [vmem:[#allocation9 + $0x1e00] sm:$0xff]
    %v3243 = vld [vmem:[#allocation9 + $0x1e08] sm:$0xff]
    %v3244 = vld [vmem:[#allocation9 + $0x1e10] sm:$0xff]
    %v3245 = vld [vmem:[#allocation9 + $0x1e18] sm:$0xff]
    %v3246 = vld [vmem:[#allocation9 + $0x1e20] sm:$0xff]
    %v3247 = vld [vmem:[#allocation9 + $0x1e28] sm:$0xff]
    %v3248 = vld [vmem:[#allocation9 + $0x1e30] sm:$0xff]
    %v3249 = vld [vmem:[#allocation9 + $0x1e38] sm:$0xff]
    %v3250 = vld [vmem:[#allocation9 + $0x1e40] sm:$0xff]
    %v3251 = vld [vmem:[#allocation9 + $0x1e48] sm:$0xff]
    %v3252 = vld [vmem:[#allocation9 + $0x1e50] sm:$0xff]
    %v3253 = vld [vmem:[#allocation9 + $0x1e58] sm:$0xff]
    %v3254 = vld [vmem:[#allocation9 + $0x1e60] sm:$0xff]
    %v3255 = vld [vmem:[#allocation9 + $0x1e68] sm:$0xff]
    %v3256 = vld [vmem:[#allocation9 + $0x1e70] sm:$0xff]
    %v3257 = vld [vmem:[#allocation9 + $0x1e78] sm:$0xff]
    %v3258 = vld [vmem:[#allocation9 + $0x1e80] sm:$0xff]
    %v3259 = vld [vmem:[#allocation9 + $0x1e88] sm:$0xff]
    %v3260 = vld [vmem:[#allocation9 + $0x1e90] sm:$0xff]
    %v3261 = vld [vmem:[#allocation9 + $0x1e98] sm:$0xff]
    %v3262 = vld [vmem:[#allocation9 + $0x1ea0] sm:$0xff]
    %v3263 = vld [vmem:[#allocation9 + $0x1ea8] sm:$0xff]
    %v3264 = vld [vmem:[#allocation9 + $0x1eb0] sm:$0xff]
    %v3265 = vld [vmem:[#allocation9 + $0x1eb8] sm:$0xff]
    %v3266 = vld [vmem:[#allocation9 + $0x1ec0] sm:$0xff]
    %v3267 = vld [vmem:[#allocation9 + $0x1ec8] sm:$0xff]
    %v3268 = vld [vmem:[#allocation9 + $0x1ed0] sm:$0xff]
    %v3269 = vld [vmem:[#allocation9 + $0x1ed8] sm:$0xff]
    %v3270 = vld [vmem:[#allocation9 + $0x1ee0] sm:$0xff]
    %v3271 = vld [vmem:[#allocation9 + $0x1ee8] sm:$0xff]
    %v3272 = vld [vmem:[#allocation9 + $0x1ef0] sm:$0xff]
    %v3273 = vld [vmem:[#allocation9 + $0x1ef8] sm:$0xff]
    %v3274 = vld [vmem:[#allocation9 + $0x1f00] sm:$0xff]
    %v3275 = vld [vmem:[#allocation9 + $0x1f08] sm:$0xff]
    %v3276 = vld [vmem:[#allocation9 + $0x1f10] sm:$0xff]
    %v3277 = vld [vmem:[#allocation9 + $0x1f18] sm:$0xff]
    %v3278 = vld [vmem:[#allocation9 + $0x1f20] sm:$0xff]
    %v3279 = vld [vmem:[#allocation9 + $0x1f28] sm:$0xff]
    %v3280 = vld [vmem:[#allocation9 + $0x1f30] sm:$0xff]
    %v3281 = vld [vmem:[#allocation9 + $0x1f38] sm:$0xff]
    %v3282 = vld [vmem:[#allocation9 + $0x1f40] sm:$0xff]
    %v3283 = vld [vmem:[#allocation9 + $0x1f48] sm:$0xff]
    %v3284 = vld [vmem:[#allocation9 + $0x1f50] sm:$0xff]
    %v3285 = vld [vmem:[#allocation9 + $0x1f58] sm:$0xff]
    %v3286 = vld [vmem:[#allocation9 + $0x1f60] sm:$0xff]
    %v3287 = vld [vmem:[#allocation9 + $0x1f68] sm:$0xff]
    %v3288 = vld [vmem:[#allocation9 + $0x1f70] sm:$0xff]
    %v3289 = vld [vmem:[#allocation9 + $0x1f78] sm:$0xff]
    %v3290 = vld [vmem:[#allocation9 + $0x1f80] sm:$0xff]
    %v3291 = vld [vmem:[#allocation9 + $0x1f88] sm:$0xff]
    %v3292 = vld [vmem:[#allocation9 + $0x1f90] sm:$0xff]
    %v3293 = vld [vmem:[#allocation9 + $0x1f98] sm:$0xff]
    %v3294 = vld [vmem:[#allocation9 + $0x1fa0] sm:$0xff]
    %v3295 = vld [vmem:[#allocation9 + $0x1fa8] sm:$0xff]
    %v3296 = vld [vmem:[#allocation9 + $0x1fb0] sm:$0xff]
    %v3297 = vld [vmem:[#allocation9 + $0x1fb8] sm:$0xff]
    %v3298 = vld [vmem:[#allocation9 + $0x1fc0] sm:$0xff]
    %v3299 = vld [vmem:[#allocation9 + $0x1fc8] sm:$0xff]
    %v3300 = vld [vmem:[#allocation9 + $0x1fd0] sm:$0xff]
    %v3301 = vld [vmem:[#allocation9 + $0x1fd8] sm:$0xff]
    %v3302 = vld [vmem:[#allocation9 + $0x1fe0] sm:$0xff]
    %v3303 = vld [vmem:[#allocation9 + $0x1fe8] sm:$0xff]
    %v3304 = vld [vmem:[#allocation9 + $0x1ff0] sm:$0xff]
    %v3305 = vld [vmem:[#allocation9 + $0x1ff8] sm:$0xff]
    %v3306 = vld [vmem:[#allocation9 + $0x2000] sm:$0xff]
    %v3307 = vld [vmem:[#allocation9 + $0x2008] sm:$0xff]
    %v3308 = vld [vmem:[#allocation9 + $0x2010] sm:$0xff]
    %v3309 = vld [vmem:[#allocation9 + $0x2018] sm:$0xff]
    %v3310 = vld [vmem:[#allocation9 + $0x2020] sm:$0xff]
    %v3311 = vld [vmem:[#allocation9 + $0x2028] sm:$0xff]
    %v3312 = vld [vmem:[#allocation9 + $0x2030] sm:$0xff]
    %v3313 = vld [vmem:[#allocation9 + $0x2038] sm:$0xff]
    %v3314 = vld [vmem:[#allocation9 + $0x2040] sm:$0xff]
    %v3315 = vld [vmem:[#allocation9 + $0x2048] sm:$0xff]
    %v3316 = vld [vmem:[#allocation9 + $0x2050] sm:$0xff]
    %v3317 = vld [vmem:[#allocation9 + $0x2058] sm:$0xff]
    %v3318 = vld [vmem:[#allocation9 + $0x2060] sm:$0xff]
    %v3319 = vld [vmem:[#allocation9 + $0x2068] sm:$0xff]
    %v3320 = vld [vmem:[#allocation9 + $0x2070] sm:$0xff]
    %v3321 = vld [vmem:[#allocation9 + $0x2078] sm:$0xff]
    %v3322 = vld [vmem:[#allocation9 + $0x2080] sm:$0xff]
    %v3323 = vld [vmem:[#allocation9 + $0x2088] sm:$0xff]
    %v3324 = vld [vmem:[#allocation9 + $0x2090] sm:$0xff]
    %v3325 = vld [vmem:[#allocation9 + $0x2098] sm:$0xff]
    %v3326 = vld [vmem:[#allocation9 + $0x20a0] sm:$0xff]
    %v3327 = vld [vmem:[#allocation9 + $0x20a8] sm:$0xff]
    %v3328 = vld [vmem:[#allocation9 + $0x20b0] sm:$0xff]
    %v3329 = vld [vmem:[#allocation9 + $0x20b8] sm:$0xff]
    %v3330 = vld [vmem:[#allocation9 + $0x20c0] sm:$0xff]
    %v3331 = vld [vmem:[#allocation9 + $0x20c8] sm:$0xff]
    %v3332 = vld [vmem:[#allocation9 + $0x20d0] sm:$0xff]
    %v3333 = vld [vmem:[#allocation9 + $0x20d8] sm:$0xff]
    %v3334 = vld [vmem:[#allocation9 + $0x20e0] sm:$0xff]
    %v3335 = vld [vmem:[#allocation9 + $0x20e8] sm:$0xff]
    %v3336 = vld [vmem:[#allocation9 + $0x20f0] sm:$0xff]
    %v3337 = vld [vmem:[#allocation9 + $0x20f8] sm:$0xff]
    %v3338 = vld [vmem:[#allocation9 + $0x2100] sm:$0xff]
    %v3339 = vld [vmem:[#allocation9 + $0x2108] sm:$0xff]
    %v3340 = vld [vmem:[#allocation9 + $0x2110] sm:$0xff]
    %v3341 = vld [vmem:[#allocation9 + $0x2118] sm:$0xff]
    %v3342 = vld [vmem:[#allocation9 + $0x2120] sm:$0xff]
    %v3343 = vld [vmem:[#allocation9 + $0x2128] sm:$0xff]
    %v3344 = vld [vmem:[#allocation9 + $0x2130] sm:$0xff]
    %v3345 = vld [vmem:[#allocation9 + $0x2138] sm:$0xff]
    %v3346 = vld [vmem:[#allocation9 + $0x2140] sm:$0xff]
    %v3347 = vld [vmem:[#allocation9 + $0x2148] sm:$0xff]
    %v3348 = vld [vmem:[#allocation9 + $0x2150] sm:$0xff]
    %v3349 = vld [vmem:[#allocation9 + $0x2158] sm:$0xff]
    %v3350 = vld [vmem:[#allocation9 + $0x2160] sm:$0xff]
    %v3351 = vld [vmem:[#allocation9 + $0x2168] sm:$0xff]
    %v3352 = vld [vmem:[#allocation9 + $0x2170] sm:$0xff]
    %v3353 = vld [vmem:[#allocation9 + $0x2178] sm:$0xff]
    %v3354 = vld [vmem:[#allocation9 + $0x2180] sm:$0xff]
    %v3355 = vld [vmem:[#allocation9 + $0x2188] sm:$0xff]
    %v3356 = vld [vmem:[#allocation9 + $0x2190] sm:$0xff]
    %v3357 = vld [vmem:[#allocation9 + $0x2198] sm:$0xff]
    %v3358 = vld [vmem:[#allocation9 + $0x21a0] sm:$0xff]
    %v3359 = vld [vmem:[#allocation9 + $0x21a8] sm:$0xff]
    %v3360 = vld [vmem:[#allocation9 + $0x21b0] sm:$0xff]
    %v3361 = vld [vmem:[#allocation9 + $0x21b8] sm:$0xff]
    %v3362 = vld [vmem:[#allocation9 + $0x21c0] sm:$0xff]
    %v3363 = vld [vmem:[#allocation9 + $0x21c8] sm:$0xff]
    %v3364 = vld [vmem:[#allocation9 + $0x21d0] sm:$0xff]
    %v3365 = vld [vmem:[#allocation9 + $0x21d8] sm:$0xff]
    %v3366 = vld [vmem:[#allocation9 + $0x21e0] sm:$0xff]
    %v3367 = vld [vmem:[#allocation9 + $0x21e8] sm:$0xff]
    %v3368 = vld [vmem:[#allocation9 + $0x21f0] sm:$0xff]
    %v3369 = vld [vmem:[#allocation9 + $0x21f8] sm:$0xff]
    %v3370 = vld [vmem:[#allocation9 + $0x2200] sm:$0xff]
    %v3371 = vld [vmem:[#allocation9 + $0x2208] sm:$0xff]
    %v3372 = vld [vmem:[#allocation9 + $0x2210] sm:$0xff]
    %v3373 = vld [vmem:[#allocation9 + $0x2218] sm:$0xff]
    %v3374 = vld [vmem:[#allocation9 + $0x2220] sm:$0xff]
    %v3375 = vld [vmem:[#allocation9 + $0x2228] sm:$0xff]
    %v3376 = vld [vmem:[#allocation9 + $0x2230] sm:$0xff]
    %v3377 = vld [vmem:[#allocation9 + $0x2238] sm:$0xff]
    %v3378 = vld [vmem:[#allocation9 + $0x2240] sm:$0xff]
    %v3379 = vld [vmem:[#allocation9 + $0x2248] sm:$0xff]
    %v3380 = vld [vmem:[#allocation9 + $0x2250] sm:$0xff]
    %v3381 = vld [vmem:[#allocation9 + $0x2258] sm:$0xff]
    %v3382 = vld [vmem:[#allocation9 + $0x2260] sm:$0xff]
    %v3383 = vld [vmem:[#allocation9 + $0x2268] sm:$0xff]
    %v3384 = vld [vmem:[#allocation9 + $0x2270] sm:$0xff]
    %v3385 = vld [vmem:[#allocation9 + $0x2278] sm:$0xff]
    %v3386 = vld [vmem:[#allocation9 + $0x2280] sm:$0xff]
    %v3387 = vld [vmem:[#allocation9 + $0x2288] sm:$0xff]
    %v3388 = vld [vmem:[#allocation9 + $0x2290] sm:$0xff]
    %v3389 = vld [vmem:[#allocation9 + $0x2298] sm:$0xff]
    %v3390 = vld [vmem:[#allocation9 + $0x22a0] sm:$0xff]
    %v3391 = vld [vmem:[#allocation9 + $0x22a8] sm:$0xff]
    %v3392 = vld [vmem:[#allocation9 + $0x22b0] sm:$0xff]
    %v3393 = vld [vmem:[#allocation9 + $0x22b8] sm:$0xff]
    %v3394 = vld [vmem:[#allocation9 + $0x22c0] sm:$0xff]
    %v3395 = vld [vmem:[#allocation9 + $0x22c8] sm:$0xff]
    %v3396 = vld [vmem:[#allocation9 + $0x22d0] sm:$0xff]
    %v3397 = vld [vmem:[#allocation9 + $0x22d8] sm:$0xff]
    %v3398 = vld [vmem:[#allocation9 + $0x22e0] sm:$0xff]
    %v3399 = vld [vmem:[#allocation9 + $0x22e8] sm:$0xff]
    %v3400 = vld [vmem:[#allocation9 + $0x22f0] sm:$0xff]
    %v3401 = vld [vmem:[#allocation9 + $0x22f8] sm:$0xff]
    %v3402 = vld [vmem:[#allocation9 + $0x2300] sm:$0xff]
    %v3403 = vld [vmem:[#allocation9 + $0x2308] sm:$0xff]
    %v3404 = vld [vmem:[#allocation9 + $0x2310] sm:$0xff]
    %v3405 = vld [vmem:[#allocation9 + $0x2318] sm:$0xff]
    %v3406 = vld [vmem:[#allocation9 + $0x2320] sm:$0xff]
    %v3407 = vld [vmem:[#allocation9 + $0x2328] sm:$0xff]
    %v3408 = vld [vmem:[#allocation9 + $0x2330] sm:$0xff]
    %v3409 = vld [vmem:[#allocation9 + $0x2338] sm:$0xff]
    %v3410 = vld [vmem:[#allocation9 + $0x2340] sm:$0xff]
    %v3411 = vld [vmem:[#allocation9 + $0x2348] sm:$0xff]
    %v3412 = vld [vmem:[#allocation9 + $0x2350] sm:$0xff]
    %v3413 = vld [vmem:[#allocation9 + $0x2358] sm:$0xff]
    %v3414 = vld [vmem:[#allocation9 + $0x2360] sm:$0xff]
    %v3415 = vld [vmem:[#allocation9 + $0x2368] sm:$0xff]
    %v3416 = vld [vmem:[#allocation9 + $0x2370] sm:$0xff]
    %v3417 = vld [vmem:[#allocation9 + $0x2378] sm:$0xff]
    %v3418 = vld [vmem:[#allocation9 + $0x2380] sm:$0xff]
    %v3419 = vld [vmem:[#allocation9 + $0x2388] sm:$0xff]
    %v3420 = vld [vmem:[#allocation9 + $0x2390] sm:$0xff]
    %v3421 = vld [vmem:[#allocation9 + $0x2398] sm:$0xff]
    %v3422 = vld [vmem:[#allocation9 + $0x23a0] sm:$0xff]
    %v3423 = vld [vmem:[#allocation9 + $0x23a8] sm:$0xff]
    %v3424 = vld [vmem:[#allocation9 + $0x23b0] sm:$0xff]
    %v3425 = vld [vmem:[#allocation9 + $0x23b8] sm:$0xff]
    %v3426 = vld [vmem:[#allocation9 + $0x23c0] sm:$0xff]
    %v3427 = vld [vmem:[#allocation9 + $0x23c8] sm:$0xff]
    %v3428 = vld [vmem:[#allocation9 + $0x23d0] sm:$0xff]
    %v3429 = vld [vmem:[#allocation9 + $0x23d8] sm:$0xff]
    %v3430 = vld [vmem:[#allocation9 + $0x23e0] sm:$0xff]
    %v3431 = vld [vmem:[#allocation9 + $0x23e8] sm:$0xff]
    %v3432 = vld [vmem:[#allocation9 + $0x23f0] sm:$0xff]
    %v3433 = vld [vmem:[#allocation9 + $0x23f8] sm:$0xff]
    %v3434 = vld [vmem:[#allocation9 + $0x2400] sm:$0xff]
    %v3435 = vld [vmem:[#allocation9 + $0x2408] sm:$0xff]
    %v3436 = vld [vmem:[#allocation9 + $0x2410] sm:$0xff]
    %v3437 = vld [vmem:[#allocation9 + $0x2418] sm:$0xff]
    %v3438 = vld [vmem:[#allocation9 + $0x2420] sm:$0xff]
    %v3439 = vld [vmem:[#allocation9 + $0x2428] sm:$0xff]
    %v3440 = vld [vmem:[#allocation9 + $0x2430] sm:$0xff]
    %v3441 = vld [vmem:[#allocation9 + $0x2438] sm:$0xff]
    %v3442 = vld [vmem:[#allocation9 + $0x2440] sm:$0xff]
    %v3443 = vld [vmem:[#allocation9 + $0x2448] sm:$0xff]
    %v3444 = vld [vmem:[#allocation9 + $0x2450] sm:$0xff]
    %v3445 = vld [vmem:[#allocation9 + $0x2458] sm:$0xff]
    %v3446 = vld [vmem:[#allocation9 + $0x2460] sm:$0xff]
    %v3447 = vld [vmem:[#allocation9 + $0x2468] sm:$0xff]
    %v3448 = vld [vmem:[#allocation9 + $0x2470] sm:$0xff]
    %v3449 = vld [vmem:[#allocation9 + $0x2478] sm:$0xff]
    %v3450 = vld [vmem:[#allocation9 + $0x2480] sm:$0xff]
    %v3451 = vld [vmem:[#allocation9 + $0x2488] sm:$0xff]
    %v3452 = vld [vmem:[#allocation9 + $0x2490] sm:$0xff]
    %v3453 = vld [vmem:[#allocation9 + $0x2498] sm:$0xff]
    %v3454 = vld [vmem:[#allocation9 + $0x24a0] sm:$0xff]
    %v3455 = vld [vmem:[#allocation9 + $0x24a8] sm:$0xff]
    %v3456 = vld [vmem:[#allocation9 + $0x24b0] sm:$0xff]
    %v3457 = vld [vmem:[#allocation9 + $0x24b8] sm:$0xff]
    %v3458 = vld [vmem:[#allocation9 + $0x24c0] sm:$0xff]
    %v3459 = vld [vmem:[#allocation9 + $0x24c8] sm:$0xff]
    %v3460 = vld [vmem:[#allocation9 + $0x24d0] sm:$0xff]
    %v3461 = vld [vmem:[#allocation9 + $0x24d8] sm:$0xff]
    %v3462 = vld [vmem:[#allocation9 + $0x24e0] sm:$0xff]
    %v3463 = vld [vmem:[#allocation9 + $0x24e8] sm:$0xff]
    %v3464 = vld [vmem:[#allocation9 + $0x24f0] sm:$0xff]
    %v3465 = vld [vmem:[#allocation9 + $0x24f8] sm:$0xff]
    %v3466 = vld [vmem:[#allocation9 + $0x2500] sm:$0xff]
    %v3467 = vld [vmem:[#allocation9 + $0x2508] sm:$0xff]
    %v3468 = vld [vmem:[#allocation9 + $0x2510] sm:$0xff]
    %v3469 = vld [vmem:[#allocation9 + $0x2518] sm:$0xff]
    %v3470 = vld [vmem:[#allocation9 + $0x2520] sm:$0xff]
    %v3471 = vld [vmem:[#allocation9 + $0x2528] sm:$0xff]
    %v3472 = vld [vmem:[#allocation9 + $0x2530] sm:$0xff]
    %v3473 = vld [vmem:[#allocation9 + $0x2538] sm:$0xff]
    %v3474 = vld [vmem:[#allocation9 + $0x2540] sm:$0xff]
    %v3475 = vld [vmem:[#allocation9 + $0x2548] sm:$0xff]
    %v3476 = vld [vmem:[#allocation9 + $0x2550] sm:$0xff]
    %v3477 = vld [vmem:[#allocation9 + $0x2558] sm:$0xff]
    %v3478 = vld [vmem:[#allocation9 + $0x2560] sm:$0xff]
    %v3479 = vld [vmem:[#allocation9 + $0x2568] sm:$0xff]
    %v3480 = vld [vmem:[#allocation9 + $0x2570] sm:$0xff]
    %v3481 = vld [vmem:[#allocation9 + $0x2578] sm:$0xff]
    %v3482 = vld [vmem:[#allocation11] sm:$0x3f]
    %v3484 = vlaneseq
    %v3485 = vshrl.u32 %v3484, 7
    %v3486 = vsub.s32 0, %v3485
    %v3487 = vrot.slane %v3482, %v3486
    %v3488 = vlaneseq
    %v3489 = vshrl.u32 %v3488, 7
    %v3490 = vsub.s32 1, %v3489
    %v3491 = vrot.slane %v3482, %v3490
    %v3492 = vlaneseq
    %v3493 = vshrl.u32 %v3492, 7
    %v3494 = vsub.s32 2, %v3493
    %v3495 = vrot.slane %v3482, %v3494
    %v3496 = vlaneseq
    %v3497 = vshrl.u32 %v3496, 7
    %v3498 = vsub.s32 3, %v3497
    %v3499 = vrot.slane %v3482, %v3498
    %v3500 = vlaneseq
    %v3501 = vshrl.u32 %v3500, 7
    %v3502 = vsub.s32 4, %v3501
    %v3503 = vrot.slane %v3482, %v3502
    %v3504 = vlaneseq
    %v3505 = vshrl.u32 %v3504, 7
    %v3506 = vsub.s32 5, %v3505
    %v3507 = vrot.slane %v3482, %v3506
    %v4714 = vunpack.c.l.b16 %v2282
    %v4715 = vunpack.c.h.b16 %v2282
    %v4716 = vunpack.c.l.b16 %v2283
    %v4717 = vunpack.c.h.b16 %v2283
    %v4718 = vunpack.c.l.b16 %v2284
    %v4719 = vunpack.c.h.b16 %v2284
    %v4720 = vunpack.c.l.b16 %v2285
    %v4721 = vunpack.c.h.b16 %v2285
    %v4722 = vunpack.c.l.b16 %v2286
    %v4723 = vunpack.c.h.b16 %v2286
    %v4724 = vunpack.c.l.b16 %v2287
    %v4725 = vunpack.c.h.b16 %v2287
    %v4726 = vunpack.c.l.b16 %v2288
    %v4727 = vunpack.c.h.b16 %v2288
    %v4728 = vunpack.c.l.b16 %v2289
    %v4729 = vunpack.c.h.b16 %v2289
    %v4730 = vunpack.c.l.b16 %v2290
    %v4731 = vunpack.c.h.b16 %v2290
    %v4732 = vunpack.c.l.b16 %v2291
    %v4733 = vunpack.c.h.b16 %v2291
    %v4734 = vunpack.c.l.b16 %v2292
    %v4735 = vunpack.c.h.b16 %v2292
    %v4736 = vunpack.c.l.b16 %v2293
    %v4737 = vunpack.c.h.b16 %v2293
    %v4738 = vunpack.c.l.b16 %v2294
    %v4739 = vunpack.c.h.b16 %v2294
    %v4740 = vunpack.c.l.b16 %v2295
    %v4741 = vunpack.c.h.b16 %v2295
    %v4742 = vunpack.c.l.b16 %v2296
    %v4743 = vunpack.c.h.b16 %v2296
    %v4744 = vunpack.c.l.b16 %v2297
    %v4745 = vunpack.c.h.b16 %v2297
    %v4746 = vunpack.c.l.b16 %v2298
    %v4747 = vunpack.c.h.b16 %v2298
    %v4748 = vunpack.c.l.b16 %v2299
    %v4749 = vunpack.c.h.b16 %v2299
    %v4750 = vunpack.c.l.b16 %v2300
    %v4751 = vunpack.c.h.b16 %v2300
    %v4752 = vunpack.c.l.b16 %v2301
    %v4753 = vunpack.c.h.b16 %v2301
    %v4754 = vunpack.c.l.b16 %v2302
    %v4755 = vunpack.c.h.b16 %v2302
    %v4756 = vunpack.c.l.b16 %v2303
    %v4757 = vunpack.c.h.b16 %v2303
    %v4758 = vunpack.c.l.b16 %v2304
    %v4759 = vunpack.c.h.b16 %v2304
    %v4760 = vunpack.c.l.b16 %v2305
    %v4761 = vunpack.c.h.b16 %v2305
    %v4762 = vunpack.c.l.b16 %v2306
    %v4763 = vunpack.c.h.b16 %v2306
    %v4764 = vunpack.c.l.b16 %v2307
    %v4765 = vunpack.c.h.b16 %v2307
    %v4766 = vunpack.c.l.b16 %v2308
    %v4767 = vunpack.c.h.b16 %v2308
    %v4768 = vunpack.c.l.b16 %v2309
    %v4769 = vunpack.c.h.b16 %v2309
    %v4770 = vunpack.c.l.b16 %v2310
    %v4771 = vunpack.c.h.b16 %v2310
    %v4772 = vunpack.c.l.b16 %v2311
    %v4773 = vunpack.c.h.b16 %v2311
    %v4774 = vunpack.c.l.b16 %v2312
    %v4775 = vunpack.c.h.b16 %v2312
    %v4776 = vunpack.c.l.b16 %v2313
    %v4777 = vunpack.c.h.b16 %v2313
    %v4778 = vunpack.c.l.b16 %v2314
    %v4779 = vunpack.c.h.b16 %v2314
    %v4780 = vunpack.c.l.b16 %v2315
    %v4781 = vunpack.c.h.b16 %v2315
    %v4782 = vunpack.c.l.b16 %v2316
    %v4783 = vunpack.c.h.b16 %v2316
    %v4784 = vunpack.c.l.b16 %v2317
    %v4785 = vunpack.c.h.b16 %v2317
    %v4786 = vunpack.c.l.b16 %v2318
    %v4787 = vunpack.c.h.b16 %v2318
    %v4788 = vunpack.c.l.b16 %v2319
    %v4789 = vunpack.c.h.b16 %v2319
    %v4790 = vunpack.c.l.b16 %v2320
    %v4791 = vunpack.c.h.b16 %v2320
    %v4792 = vunpack.c.l.b16 %v2321
    %v4793 = vunpack.c.h.b16 %v2321
    %v4794 = vunpack.c.l.b16 %v2322
    %v4795 = vunpack.c.h.b16 %v2322
    %v4796 = vunpack.c.l.b16 %v2323
    %v4797 = vunpack.c.h.b16 %v2323
    %v4798 = vunpack.c.l.b16 %v2324
    %v4799 = vunpack.c.h.b16 %v2324
    %v4800 = vunpack.c.l.b16 %v2325
    %v4801 = vunpack.c.h.b16 %v2325
    %v4802 = vunpack.c.l.b16 %v2326
    %v4803 = vunpack.c.h.b16 %v2326
    %v4804 = vunpack.c.l.b16 %v2327
    %v4805 = vunpack.c.h.b16 %v2327
    %v4806 = vunpack.c.l.b16 %v2328
    %v4807 = vunpack.c.h.b16 %v2328
    %v4808 = vunpack.c.l.b16 %v2329
    %v4809 = vunpack.c.h.b16 %v2329
    %v4810 = vunpack.c.l.b16 %v2330
    %v4811 = vunpack.c.h.b16 %v2330
    %v4812 = vunpack.c.l.b16 %v2331
    %v4813 = vunpack.c.h.b16 %v2331
    %v4814 = vunpack.c.l.b16 %v2332
    %v4815 = vunpack.c.h.b16 %v2332
    %v4816 = vunpack.c.l.b16 %v2333
    %v4817 = vunpack.c.h.b16 %v2333
    %v4818 = vunpack.c.l.b16 %v2334
    %v4819 = vunpack.c.h.b16 %v2334
    %v4820 = vunpack.c.l.b16 %v2335
    %v4821 = vunpack.c.h.b16 %v2335
    %v4822 = vunpack.c.l.b16 %v2336
    %v4823 = vunpack.c.h.b16 %v2336
    %v4824 = vunpack.c.l.b16 %v2337
    %v4825 = vunpack.c.h.b16 %v2337
    %v4826 = vunpack.c.l.b16 %v2338
    %v4827 = vunpack.c.h.b16 %v2338
    %v4828 = vunpack.c.l.b16 %v2339
    %v4829 = vunpack.c.h.b16 %v2339
    %v4830 = vunpack.c.l.b16 %v2340
    %v4831 = vunpack.c.h.b16 %v2340
    %v4832 = vunpack.c.l.b16 %v2341
    %v4833 = vunpack.c.h.b16 %v2341
    %v4834 = vunpack.c.l.b16 %v2342
    %v4835 = vunpack.c.h.b16 %v2342
    %v4836 = vunpack.c.l.b16 %v2343
    %v4837 = vunpack.c.h.b16 %v2343
    %v4838 = vunpack.c.l.b16 %v2344
    %v4839 = vunpack.c.h.b16 %v2344
    %v4840 = vunpack.c.l.b16 %v2345
    %v4841 = vunpack.c.h.b16 %v2345
    %v4842 = vunpack.c.l.b16 %v2346
    %v4843 = vunpack.c.h.b16 %v2346
    %v4844 = vunpack.c.l.b16 %v2347
    %v4845 = vunpack.c.h.b16 %v2347
    %v4846 = vunpack.c.l.b16 %v2348
    %v4847 = vunpack.c.h.b16 %v2348
    %v4848 = vunpack.c.l.b16 %v2349
    %v4849 = vunpack.c.h.b16 %v2349
    %v4850 = vunpack.c.l.b16 %v2350
    %v4851 = vunpack.c.h.b16 %v2350
    %v4852 = vunpack.c.l.b16 %v2351
    %v4853 = vunpack.c.h.b16 %v2351
    %v4854 = vunpack.c.l.b16 %v2352
    %v4855 = vunpack.c.h.b16 %v2352
    %v4856 = vunpack.c.l.b16 %v2353
    %v4857 = vunpack.c.h.b16 %v2353
    %v4858 = vunpack.c.l.b16 %v2354
    %v4859 = vunpack.c.h.b16 %v2354
    %v4860 = vunpack.c.l.b16 %v2355
    %v4861 = vunpack.c.h.b16 %v2355
    %v4862 = vunpack.c.l.b16 %v2356
    %v4863 = vunpack.c.h.b16 %v2356
    %v4864 = vunpack.c.l.b16 %v2357
    %v4865 = vunpack.c.h.b16 %v2357
    %v4866 = vunpack.c.l.b16 %v2358
    %v4867 = vunpack.c.h.b16 %v2358
    %v4868 = vunpack.c.l.b16 %v2359
    %v4869 = vunpack.c.h.b16 %v2359
    %v4870 = vunpack.c.l.b16 %v2360
    %v4871 = vunpack.c.h.b16 %v2360
    %v4872 = vunpack.c.l.b16 %v2361
    %v4873 = vunpack.c.h.b16 %v2361
    %v4874 = vunpack.c.l.b16 %v2362
    %v4875 = vunpack.c.h.b16 %v2362
    %v4876 = vunpack.c.l.b16 %v2363
    %v4877 = vunpack.c.h.b16 %v2363
    %v4878 = vunpack.c.l.b16 %v2364
    %v4879 = vunpack.c.h.b16 %v2364
    %v4880 = vunpack.c.l.b16 %v2365
    %v4881 = vunpack.c.h.b16 %v2365
    %v4882 = vunpack.c.l.b16 %v2366
    %v4883 = vunpack.c.h.b16 %v2366
    %v4884 = vunpack.c.l.b16 %v2367
    %v4885 = vunpack.c.h.b16 %v2367
    %v4886 = vunpack.c.l.b16 %v2368
    %v4887 = vunpack.c.h.b16 %v2368
    %v4888 = vunpack.c.l.b16 %v2369
    %v4889 = vunpack.c.h.b16 %v2369
    %v4890 = vunpack.c.l.b16 %v2370
    %v4891 = vunpack.c.h.b16 %v2370
    %v4892 = vunpack.c.l.b16 %v2371
    %v4893 = vunpack.c.h.b16 %v2371
    %v4894 = vunpack.c.l.b16 %v2372
    %v4895 = vunpack.c.h.b16 %v2372
    %v4896 = vunpack.c.l.b16 %v2373
    %v4897 = vunpack.c.h.b16 %v2373
    %v4898 = vunpack.c.l.b16 %v2374
    %v4899 = vunpack.c.h.b16 %v2374
    %v4900 = vunpack.c.l.b16 %v2375
    %v4901 = vunpack.c.h.b16 %v2375
    %v4902 = vunpack.c.l.b16 %v2376
    %v4903 = vunpack.c.h.b16 %v2376
    %v4904 = vunpack.c.l.b16 %v2377
    %v4905 = vunpack.c.h.b16 %v2377
    %v4906 = vunpack.c.l.b16 %v2378
    %v4907 = vunpack.c.h.b16 %v2378
    %v4908 = vunpack.c.l.b16 %v2379
    %v4909 = vunpack.c.h.b16 %v2379
    %v4910 = vunpack.c.l.b16 %v2380
    %v4911 = vunpack.c.h.b16 %v2380
    %v4912 = vunpack.c.l.b16 %v2381
    %v4913 = vunpack.c.h.b16 %v2381
    %v4914 = vunpack.c.l.b16 %v2382
    %v4915 = vunpack.c.h.b16 %v2382
    %v4916 = vunpack.c.l.b16 %v2383
    %v4917 = vunpack.c.h.b16 %v2383
    %v4918 = vunpack.c.l.b16 %v2384
    %v4919 = vunpack.c.h.b16 %v2384
    %v4920 = vunpack.c.l.b16 %v2385
    %v4921 = vunpack.c.h.b16 %v2385
    %v4922 = vunpack.c.l.b16 %v2386
    %v4923 = vunpack.c.h.b16 %v2386
    %v4924 = vunpack.c.l.b16 %v2387
    %v4925 = vunpack.c.h.b16 %v2387
    %v4926 = vunpack.c.l.b16 %v2388
    %v4927 = vunpack.c.h.b16 %v2388
    %v4928 = vunpack.c.l.b16 %v2389
    %v4929 = vunpack.c.h.b16 %v2389
    %v4930 = vunpack.c.l.b16 %v2390
    %v4931 = vunpack.c.h.b16 %v2390
    %v4932 = vunpack.c.l.b16 %v2391
    %v4933 = vunpack.c.h.b16 %v2391
    %v4934 = vunpack.c.l.b16 %v2392
    %v4935 = vunpack.c.h.b16 %v2392
    %v4936 = vunpack.c.l.b16 %v2393
    %v4937 = vunpack.c.h.b16 %v2393
    %v4938 = vunpack.c.l.b16 %v2394
    %v4939 = vunpack.c.h.b16 %v2394
    %v4940 = vunpack.c.l.b16 %v2395
    %v4941 = vunpack.c.h.b16 %v2395
    %v4942 = vunpack.c.l.b16 %v2396
    %v4943 = vunpack.c.h.b16 %v2396
    %v4944 = vunpack.c.l.b16 %v2397
    %v4945 = vunpack.c.h.b16 %v2397
    %v4946 = vunpack.c.l.b16 %v2398
    %v4947 = vunpack.c.h.b16 %v2398
    %v4948 = vunpack.c.l.b16 %v2399
    %v4949 = vunpack.c.h.b16 %v2399
    %v4950 = vunpack.c.l.b16 %v2400
    %v4951 = vunpack.c.h.b16 %v2400
    %v4952 = vunpack.c.l.b16 %v2401
    %v4953 = vunpack.c.h.b16 %v2401
    %v4954 = vunpack.c.l.b16 %v2402
    %v4955 = vunpack.c.h.b16 %v2402
    %v4956 = vunpack.c.l.b16 %v2403
    %v4957 = vunpack.c.h.b16 %v2403
    %v4958 = vunpack.c.l.b16 %v2404
    %v4959 = vunpack.c.h.b16 %v2404
    %v4960 = vunpack.c.l.b16 %v2405
    %v4961 = vunpack.c.h.b16 %v2405
    %v4962 = vunpack.c.l.b16 %v2406
    %v4963 = vunpack.c.h.b16 %v2406
    %v4964 = vunpack.c.l.b16 %v2407
    %v4965 = vunpack.c.h.b16 %v2407
    %v4966 = vunpack.c.l.b16 %v2408
    %v4967 = vunpack.c.h.b16 %v2408
    %v4968 = vunpack.c.l.b16 %v2409
    %v4969 = vunpack.c.h.b16 %v2409
    %v4970 = vunpack.c.l.b16 %v2410
    %v4971 = vunpack.c.h.b16 %v2410
    %v4972 = vunpack.c.l.b16 %v2411
    %v4973 = vunpack.c.h.b16 %v2411
    %v4974 = vunpack.c.l.b16 %v2412
    %v4975 = vunpack.c.h.b16 %v2412
    %v4976 = vunpack.c.l.b16 %v2413
    %v4977 = vunpack.c.h.b16 %v2413
    %v4978 = vunpack.c.l.b16 %v2414
    %v4979 = vunpack.c.h.b16 %v2414
    %v4980 = vunpack.c.l.b16 %v2415
    %v4981 = vunpack.c.h.b16 %v2415
    %v4982 = vunpack.c.l.b16 %v2416
    %v4983 = vunpack.c.h.b16 %v2416
    %v4984 = vunpack.c.l.b16 %v2417
    %v4985 = vunpack.c.h.b16 %v2417
    %v4986 = vunpack.c.l.b16 %v2418
    %v4987 = vunpack.c.h.b16 %v2418
    %v4988 = vunpack.c.l.b16 %v2419
    %v4989 = vunpack.c.h.b16 %v2419
    %v4990 = vunpack.c.l.b16 %v2420
    %v4991 = vunpack.c.h.b16 %v2420
    %v4992 = vunpack.c.l.b16 %v2421
    %v4993 = vunpack.c.h.b16 %v2421
    %v4994 = vunpack.c.l.b16 %v2422
    %v4995 = vunpack.c.h.b16 %v2422
    %v4996 = vunpack.c.l.b16 %v2423
    %v4997 = vunpack.c.h.b16 %v2423
    %v4998 = vunpack.c.l.b16 %v2424
    %v4999 = vunpack.c.h.b16 %v2424
    %v5000 = vunpack.c.l.b16 %v2425
    %v5001 = vunpack.c.h.b16 %v2425
    %v5002 = vunpack.c.l.b16 %v2426
    %v5003 = vunpack.c.h.b16 %v2426
    %v5004 = vunpack.c.l.b16 %v2427
    %v5005 = vunpack.c.h.b16 %v2427
    %v5006 = vunpack.c.l.b16 %v2428
    %v5007 = vunpack.c.h.b16 %v2428
    %v5008 = vunpack.c.l.b16 %v2429
    %v5009 = vunpack.c.h.b16 %v2429
    %v5010 = vunpack.c.l.b16 %v2430
    %v5011 = vunpack.c.h.b16 %v2430
    %v5012 = vunpack.c.l.b16 %v2431
    %v5013 = vunpack.c.h.b16 %v2431
    %v5014 = vunpack.c.l.b16 %v2432
    %v5015 = vunpack.c.h.b16 %v2432
    %v5016 = vunpack.c.l.b16 %v2433
    %v5017 = vunpack.c.h.b16 %v2433
    %v5018 = vunpack.c.l.b16 %v2434
    %v5019 = vunpack.c.h.b16 %v2434
    %v5020 = vunpack.c.l.b16 %v2435
    %v5021 = vunpack.c.h.b16 %v2435
    %v5022 = vunpack.c.l.b16 %v2436
    %v5023 = vunpack.c.h.b16 %v2436
    %v5024 = vunpack.c.l.b16 %v2437
    %v5025 = vunpack.c.h.b16 %v2437
    %v5026 = vunpack.c.l.b16 %v2438
    %v5027 = vunpack.c.h.b16 %v2438
    %v5028 = vunpack.c.l.b16 %v2439
    %v5029 = vunpack.c.h.b16 %v2439
    %v5030 = vunpack.c.l.b16 %v2440
    %v5031 = vunpack.c.h.b16 %v2440
    %v5032 = vunpack.c.l.b16 %v2441
    %v5033 = vunpack.c.h.b16 %v2441
    %v5034 = vunpack.c.l.b16 %v2442
    %v5035 = vunpack.c.h.b16 %v2442
    %v5036 = vunpack.c.l.b16 %v2443
    %v5037 = vunpack.c.h.b16 %v2443
    %v5038 = vunpack.c.l.b16 %v2444
    %v5039 = vunpack.c.h.b16 %v2444
    %v5040 = vunpack.c.l.b16 %v2445
    %v5041 = vunpack.c.h.b16 %v2445
    %v5042 = vunpack.c.l.b16 %v2446
    %v5043 = vunpack.c.h.b16 %v2446
    %v5044 = vunpack.c.l.b16 %v2447
    %v5045 = vunpack.c.h.b16 %v2447
    %v5046 = vunpack.c.l.b16 %v2448
    %v5047 = vunpack.c.h.b16 %v2448
    %v5048 = vunpack.c.l.b16 %v2449
    %v5049 = vunpack.c.h.b16 %v2449
    %v5050 = vunpack.c.l.b16 %v2450
    %v5051 = vunpack.c.h.b16 %v2450
    %v5052 = vunpack.c.l.b16 %v2451
    %v5053 = vunpack.c.h.b16 %v2451
    %v5054 = vunpack.c.l.b16 %v2452
    %v5055 = vunpack.c.h.b16 %v2452
    %v5056 = vunpack.c.l.b16 %v2453
    %v5057 = vunpack.c.h.b16 %v2453
    %v5058 = vunpack.c.l.b16 %v2454
    %v5059 = vunpack.c.h.b16 %v2454
    %v5060 = vunpack.c.l.b16 %v2455
    %v5061 = vunpack.c.h.b16 %v2455
    %v5062 = vunpack.c.l.b16 %v2456
    %v5063 = vunpack.c.h.b16 %v2456
    %v5064 = vunpack.c.l.b16 %v2457
    %v5065 = vunpack.c.h.b16 %v2457
    %v5066 = vunpack.c.l.b16 %v2458
    %v5067 = vunpack.c.h.b16 %v2458
    %v5068 = vunpack.c.l.b16 %v2459
    %v5069 = vunpack.c.h.b16 %v2459
    %v5070 = vunpack.c.l.b16 %v2460
    %v5071 = vunpack.c.h.b16 %v2460
    %v5072 = vunpack.c.l.b16 %v2461
    %v5073 = vunpack.c.h.b16 %v2461
    %v5074 = vunpack.c.l.b16 %v2462
    %v5075 = vunpack.c.h.b16 %v2462
    %v5076 = vunpack.c.l.b16 %v2463
    %v5077 = vunpack.c.h.b16 %v2463
    %v5078 = vunpack.c.l.b16 %v2464
    %v5079 = vunpack.c.h.b16 %v2464
    %v5080 = vunpack.c.l.b16 %v2465
    %v5081 = vunpack.c.h.b16 %v2465
    %v5082 = vunpack.c.l.b16 %v2466
    %v5083 = vunpack.c.h.b16 %v2466
    %v5084 = vunpack.c.l.b16 %v2467
    %v5085 = vunpack.c.h.b16 %v2467
    %v5086 = vunpack.c.l.b16 %v2468
    %v5087 = vunpack.c.h.b16 %v2468
    %v5088 = vunpack.c.l.b16 %v2469
    %v5089 = vunpack.c.h.b16 %v2469
    %v5090 = vunpack.c.l.b16 %v2470
    %v5091 = vunpack.c.h.b16 %v2470
    %v5092 = vunpack.c.l.b16 %v2471
    %v5093 = vunpack.c.h.b16 %v2471
    %v5094 = vunpack.c.l.b16 %v2472
    %v5095 = vunpack.c.h.b16 %v2472
    %v5096 = vunpack.c.l.b16 %v2473
    %v5097 = vunpack.c.h.b16 %v2473
    %v5098 = vunpack.c.l.b16 %v2474
    %v5099 = vunpack.c.h.b16 %v2474
    %v5100 = vunpack.c.l.b16 %v2475
    %v5101 = vunpack.c.h.b16 %v2475
    %v5102 = vunpack.c.l.b16 %v2476
    %v5103 = vunpack.c.h.b16 %v2476
    %v5104 = vunpack.c.l.b16 %v2477
    %v5105 = vunpack.c.h.b16 %v2477
    %v5106 = vunpack.c.l.b16 %v2478
    %v5107 = vunpack.c.h.b16 %v2478
    %v5108 = vunpack.c.l.b16 %v2479
    %v5109 = vunpack.c.h.b16 %v2479
    %v5110 = vunpack.c.l.b16 %v2480
    %v5111 = vunpack.c.h.b16 %v2480
    %v5112 = vunpack.c.l.b16 %v2481
    %v5113 = vunpack.c.h.b16 %v2481
    %v5114 = vunpack.c.l.b16 %v2482
    %v5115 = vunpack.c.h.b16 %v2482
    %v5116 = vunpack.c.l.b16 %v2483
    %v5117 = vunpack.c.h.b16 %v2483
    %v5118 = vunpack.c.l.b16 %v2484
    %v5119 = vunpack.c.h.b16 %v2484
    %v5120 = vunpack.c.l.b16 %v2485
    %v5121 = vunpack.c.h.b16 %v2485
    %v5122 = vunpack.c.l.b16 %v2486
    %v5123 = vunpack.c.h.b16 %v2486
    %v5124 = vunpack.c.l.b16 %v2487
    %v5125 = vunpack.c.h.b16 %v2487
    %v5126 = vunpack.c.l.b16 %v2488
    %v5127 = vunpack.c.h.b16 %v2488
    %v5128 = vunpack.c.l.b16 %v2489
    %v5129 = vunpack.c.h.b16 %v2489
    %v5130 = vunpack.c.l.b16 %v2490
    %v5131 = vunpack.c.h.b16 %v2490
    %v5132 = vunpack.c.l.b16 %v2491
    %v5133 = vunpack.c.h.b16 %v2491
    %v5134 = vunpack.c.l.b16 %v2492
    %v5135 = vunpack.c.h.b16 %v2492
    %v5136 = vunpack.c.l.b16 %v2493
    %v5137 = vunpack.c.h.b16 %v2493
    %v5138 = vunpack.c.l.b16 %v2494
    %v5139 = vunpack.c.h.b16 %v2494
    %v5140 = vunpack.c.l.b16 %v2495
    %v5141 = vunpack.c.h.b16 %v2495
    %v5142 = vunpack.c.l.b16 %v2496
    %v5143 = vunpack.c.h.b16 %v2496
    %v5144 = vunpack.c.l.b16 %v2497
    %v5145 = vunpack.c.h.b16 %v2497
    %v5146 = vunpack.c.l.b16 %v2498
    %v5147 = vunpack.c.h.b16 %v2498
    %v5148 = vunpack.c.l.b16 %v2499
    %v5149 = vunpack.c.h.b16 %v2499
    %v5150 = vunpack.c.l.b16 %v2500
    %v5151 = vunpack.c.h.b16 %v2500
    %v5152 = vunpack.c.l.b16 %v2501
    %v5153 = vunpack.c.h.b16 %v2501
    %v5154 = vunpack.c.l.b16 %v2502
    %v5155 = vunpack.c.h.b16 %v2502
    %v5156 = vunpack.c.l.b16 %v2503
    %v5157 = vunpack.c.h.b16 %v2503
    %v5158 = vunpack.c.l.b16 %v2504
    %v5159 = vunpack.c.h.b16 %v2504
    %v5160 = vunpack.c.l.b16 %v2505
    %v5161 = vunpack.c.h.b16 %v2505
    %v5162 = vunpack.c.l.b16 %v2506
    %v5163 = vunpack.c.h.b16 %v2506
    %v5164 = vunpack.c.l.b16 %v2507
    %v5165 = vunpack.c.h.b16 %v2507
    %v5166 = vunpack.c.l.b16 %v2508
    %v5167 = vunpack.c.h.b16 %v2508
    %v5168 = vunpack.c.l.b16 %v2509
    %v5169 = vunpack.c.h.b16 %v2509
    %v5170 = vunpack.c.l.b16 %v2510
    %v5171 = vunpack.c.h.b16 %v2510
    %v5172 = vunpack.c.l.b16 %v2511
    %v5173 = vunpack.c.h.b16 %v2511
    %v5174 = vunpack.c.l.b16 %v2512
    %v5175 = vunpack.c.h.b16 %v2512
    %v5176 = vunpack.c.l.b16 %v2513
    %v5177 = vunpack.c.h.b16 %v2513
    %v5178 = vunpack.c.l.b16 %v2514
    %v5179 = vunpack.c.h.b16 %v2514
    %v5180 = vunpack.c.l.b16 %v2515
    %v5181 = vunpack.c.h.b16 %v2515
    %v5182 = vunpack.c.l.b16 %v2516
    %v5183 = vunpack.c.h.b16 %v2516
    %v5184 = vunpack.c.l.b16 %v2517
    %v5185 = vunpack.c.h.b16 %v2517
    %v5186 = vunpack.c.l.b16 %v2518
    %v5187 = vunpack.c.h.b16 %v2518
    %v5188 = vunpack.c.l.b16 %v2519
    %v5189 = vunpack.c.h.b16 %v2519
    %v5190 = vunpack.c.l.b16 %v2520
    %v5191 = vunpack.c.h.b16 %v2520
    %v5192 = vunpack.c.l.b16 %v2521
    %v5193 = vunpack.c.h.b16 %v2521
    %v5194 = vunpack.c.l.b16 %v2522
    %v5195 = vunpack.c.h.b16 %v2522
    %v5196 = vunpack.c.l.b16 %v2523
    %v5197 = vunpack.c.h.b16 %v2523
    %v5198 = vunpack.c.l.b16 %v2524
    %v5199 = vunpack.c.h.b16 %v2524
    %v5200 = vunpack.c.l.b16 %v2525
    %v5201 = vunpack.c.h.b16 %v2525
    %v5202 = vunpack.c.l.b16 %v2526
    %v5203 = vunpack.c.h.b16 %v2526
    %v5204 = vunpack.c.l.b16 %v2527
    %v5205 = vunpack.c.h.b16 %v2527
    %v5206 = vunpack.c.l.b16 %v2528
    %v5207 = vunpack.c.h.b16 %v2528
    %v5208 = vunpack.c.l.b16 %v2529
    %v5209 = vunpack.c.h.b16 %v2529
    %v5210 = vunpack.c.l.b16 %v2530
    %v5211 = vunpack.c.h.b16 %v2530
    %v5212 = vunpack.c.l.b16 %v2531
    %v5213 = vunpack.c.h.b16 %v2531
    %v5214 = vunpack.c.l.b16 %v2532
    %v5215 = vunpack.c.h.b16 %v2532
    %v5216 = vunpack.c.l.b16 %v2533
    %v5217 = vunpack.c.h.b16 %v2533
    %v5218 = vunpack.c.l.b16 %v2534
    %v5219 = vunpack.c.h.b16 %v2534
    %v5220 = vunpack.c.l.b16 %v2535
    %v5221 = vunpack.c.h.b16 %v2535
    %v5222 = vunpack.c.l.b16 %v2536
    %v5223 = vunpack.c.h.b16 %v2536
    %v5224 = vunpack.c.l.b16 %v2537
    %v5225 = vunpack.c.h.b16 %v2537
    %v5226 = vunpack.c.l.b16 %v2538
    %v5227 = vunpack.c.h.b16 %v2538
    %v5228 = vunpack.c.l.b16 %v2539
    %v5229 = vunpack.c.h.b16 %v2539
    %v5230 = vunpack.c.l.b16 %v2540
    %v5231 = vunpack.c.h.b16 %v2540
    %v5232 = vunpack.c.l.b16 %v2541
    %v5233 = vunpack.c.h.b16 %v2541
    %v5234 = vunpack.c.l.b16 %v2542
    %v5235 = vunpack.c.h.b16 %v2542
    %v5236 = vunpack.c.l.b16 %v2543
    %v5237 = vunpack.c.h.b16 %v2543
    %v5238 = vunpack.c.l.b16 %v2544
    %v5239 = vunpack.c.h.b16 %v2544
    %v5240 = vunpack.c.l.b16 %v2545
    %v5241 = vunpack.c.h.b16 %v2545
    %v5242 = vunpack.c.l.b16 %v2546
    %v5243 = vunpack.c.h.b16 %v2546
    %v5244 = vunpack.c.l.b16 %v2547
    %v5245 = vunpack.c.h.b16 %v2547
    %v5246 = vunpack.c.l.b16 %v2548
    %v5247 = vunpack.c.h.b16 %v2548
    %v5248 = vunpack.c.l.b16 %v2549
    %v5249 = vunpack.c.h.b16 %v2549
    %v5250 = vunpack.c.l.b16 %v2550
    %v5251 = vunpack.c.h.b16 %v2550
    %v5252 = vunpack.c.l.b16 %v2551
    %v5253 = vunpack.c.h.b16 %v2551
    %v5254 = vunpack.c.l.b16 %v2552
    %v5255 = vunpack.c.h.b16 %v2552
    %v5256 = vunpack.c.l.b16 %v2553
    %v5257 = vunpack.c.h.b16 %v2553
    %v5258 = vunpack.c.l.b16 %v2554
    %v5259 = vunpack.c.h.b16 %v2554
    %v5260 = vunpack.c.l.b16 %v2555
    %v5261 = vunpack.c.h.b16 %v2555
    %v5262 = vunpack.c.l.b16 %v2556
    %v5263 = vunpack.c.h.b16 %v2556
    %v5264 = vunpack.c.l.b16 %v2557
    %v5265 = vunpack.c.h.b16 %v2557
    %v5266 = vunpack.c.l.b16 %v2558
    %v5267 = vunpack.c.h.b16 %v2558
    %v5268 = vunpack.c.l.b16 %v2559
    %v5269 = vunpack.c.h.b16 %v2559
    %v5270 = vunpack.c.l.b16 %v2560
    %v5271 = vunpack.c.h.b16 %v2560
    %v5272 = vunpack.c.l.b16 %v2561
    %v5273 = vunpack.c.h.b16 %v2561
    %v5274 = vunpack.c.l.b16 %v2562
    %v5275 = vunpack.c.h.b16 %v2562
    %v5276 = vunpack.c.l.b16 %v2563
    %v5277 = vunpack.c.h.b16 %v2563
    %v5278 = vunpack.c.l.b16 %v2564
    %v5279 = vunpack.c.h.b16 %v2564
    %v5280 = vunpack.c.l.b16 %v2565
    %v5281 = vunpack.c.h.b16 %v2565
    %v5282 = vunpack.c.l.b16 %v2566
    %v5283 = vunpack.c.h.b16 %v2566
    %v5284 = vunpack.c.l.b16 %v2567
    %v5285 = vunpack.c.h.b16 %v2567
    %v5286 = vunpack.c.l.b16 %v2568
    %v5287 = vunpack.c.h.b16 %v2568
    %v5288 = vunpack.c.l.b16 %v2569
    %v5289 = vunpack.c.h.b16 %v2569
    %v5290 = vunpack.c.l.b16 %v2570
    %v5291 = vunpack.c.h.b16 %v2570
    %v5292 = vunpack.c.l.b16 %v2571
    %v5293 = vunpack.c.h.b16 %v2571
    %v5294 = vunpack.c.l.b16 %v2572
    %v5295 = vunpack.c.h.b16 %v2572
    %v5296 = vunpack.c.l.b16 %v2573
    %v5297 = vunpack.c.h.b16 %v2573
    %v5298 = vunpack.c.l.b16 %v2574
    %v5299 = vunpack.c.h.b16 %v2574
    %v5300 = vunpack.c.l.b16 %v2575
    %v5301 = vunpack.c.h.b16 %v2575
    %v5302 = vunpack.c.l.b16 %v2576
    %v5303 = vunpack.c.h.b16 %v2576
    %v5304 = vunpack.c.l.b16 %v2577
    %v5305 = vunpack.c.h.b16 %v2577
    %v5306 = vunpack.c.l.b16 %v2578
    %v5307 = vunpack.c.h.b16 %v2578
    %v5308 = vunpack.c.l.b16 %v2579
    %v5309 = vunpack.c.h.b16 %v2579
    %v5310 = vunpack.c.l.b16 %v2580
    %v5311 = vunpack.c.h.b16 %v2580
    %v5312 = vunpack.c.l.b16 %v2581
    %v5313 = vunpack.c.h.b16 %v2581
    %v5314 = vunpack.c.l.b16 %v2582
    %v5315 = vunpack.c.h.b16 %v2582
    %v5316 = vunpack.c.l.b16 %v2583
    %v5317 = vunpack.c.h.b16 %v2583
    %v5318 = vunpack.c.l.b16 %v2584
    %v5319 = vunpack.c.h.b16 %v2584
    %v5320 = vunpack.c.l.b16 %v2585
    %v5321 = vunpack.c.h.b16 %v2585
    %v5322 = vunpack.c.l.b16 %v2586
    %v5323 = vunpack.c.h.b16 %v2586
    %v5324 = vunpack.c.l.b16 %v2587
    %v5325 = vunpack.c.h.b16 %v2587
    %v5326 = vunpack.c.l.b16 %v2588
    %v5327 = vunpack.c.h.b16 %v2588
    %v5328 = vunpack.c.l.b16 %v2589
    %v5329 = vunpack.c.h.b16 %v2589
    %v5330 = vunpack.c.l.b16 %v2590
    %v5331 = vunpack.c.h.b16 %v2590
    %v5332 = vunpack.c.l.b16 %v2591
    %v5333 = vunpack.c.h.b16 %v2591
    %v5334 = vunpack.c.l.b16 %v2592
    %v5335 = vunpack.c.h.b16 %v2592
    %v5336 = vunpack.c.l.b16 %v2593
    %v5337 = vunpack.c.h.b16 %v2593
    %v5338 = vunpack.c.l.b16 %v2594
    %v5339 = vunpack.c.h.b16 %v2594
    %v5340 = vunpack.c.l.b16 %v2595
    %v5341 = vunpack.c.h.b16 %v2595
    %v5342 = vunpack.c.l.b16 %v2596
    %v5343 = vunpack.c.h.b16 %v2596
    %v5344 = vunpack.c.l.b16 %v2597
    %v5345 = vunpack.c.h.b16 %v2597
    %v5346 = vunpack.c.l.b16 %v2598
    %v5347 = vunpack.c.h.b16 %v2598
    %v5348 = vunpack.c.l.b16 %v2599
    %v5349 = vunpack.c.h.b16 %v2599
    %v5350 = vunpack.c.l.b16 %v2600
    %v5351 = vunpack.c.h.b16 %v2600
    %v5352 = vunpack.c.l.b16 %v2601
    %v5353 = vunpack.c.h.b16 %v2601
    %v5354 = vunpack.c.l.b16 %v2602
    %v5355 = vunpack.c.h.b16 %v2602
    %v5356 = vunpack.c.l.b16 %v2603
    %v5357 = vunpack.c.h.b16 %v2603
    %v5358 = vunpack.c.l.b16 %v2604
    %v5359 = vunpack.c.h.b16 %v2604
    %v5360 = vunpack.c.l.b16 %v2605
    %v5361 = vunpack.c.h.b16 %v2605
    %v5362 = vunpack.c.l.b16 %v2606
    %v5363 = vunpack.c.h.b16 %v2606
    %v5364 = vunpack.c.l.b16 %v2607
    %v5365 = vunpack.c.h.b16 %v2607
    %v5366 = vunpack.c.l.b16 %v2608
    %v5367 = vunpack.c.h.b16 %v2608
    %v5368 = vunpack.c.l.b16 %v2609
    %v5369 = vunpack.c.h.b16 %v2609
    %v5370 = vunpack.c.l.b16 %v2610
    %v5371 = vunpack.c.h.b16 %v2610
    %v5372 = vunpack.c.l.b16 %v2611
    %v5373 = vunpack.c.h.b16 %v2611
    %v5374 = vunpack.c.l.b16 %v2612
    %v5375 = vunpack.c.h.b16 %v2612
    %v5376 = vunpack.c.l.b16 %v2613
    %v5377 = vunpack.c.h.b16 %v2613
    %v5378 = vunpack.c.l.b16 %v2614
    %v5379 = vunpack.c.h.b16 %v2614
    %v5380 = vunpack.c.l.b16 %v2615
    %v5381 = vunpack.c.h.b16 %v2615
    %v5382 = vunpack.c.l.b16 %v2616
    %v5383 = vunpack.c.h.b16 %v2616
    %v5384 = vunpack.c.l.b16 %v2617
    %v5385 = vunpack.c.h.b16 %v2617
    %v5386 = vunpack.c.l.b16 %v2618
    %v5387 = vunpack.c.h.b16 %v2618
    %v5388 = vunpack.c.l.b16 %v2619
    %v5389 = vunpack.c.h.b16 %v2619
    %v5390 = vunpack.c.l.b16 %v2620
    %v5391 = vunpack.c.h.b16 %v2620
    %v5392 = vunpack.c.l.b16 %v2621
    %v5393 = vunpack.c.h.b16 %v2621
    %v5394 = vunpack.c.l.b16 %v2622
    %v5395 = vunpack.c.h.b16 %v2622
    %v5396 = vunpack.c.l.b16 %v2623
    %v5397 = vunpack.c.h.b16 %v2623
    %v5398 = vunpack.c.l.b16 %v2624
    %v5399 = vunpack.c.h.b16 %v2624
    %v5400 = vunpack.c.l.b16 %v2625
    %v5401 = vunpack.c.h.b16 %v2625
    %v5402 = vunpack.c.l.b16 %v2626
    %v5403 = vunpack.c.h.b16 %v2626
    %v5404 = vunpack.c.l.b16 %v2627
    %v5405 = vunpack.c.h.b16 %v2627
    %v5406 = vunpack.c.l.b16 %v2628
    %v5407 = vunpack.c.h.b16 %v2628
    %v5408 = vunpack.c.l.b16 %v2629
    %v5409 = vunpack.c.h.b16 %v2629
    %v5410 = vunpack.c.l.b16 %v2630
    %v5411 = vunpack.c.h.b16 %v2630
    %v5412 = vunpack.c.l.b16 %v2631
    %v5413 = vunpack.c.h.b16 %v2631
    %v5414 = vunpack.c.l.b16 %v2632
    %v5415 = vunpack.c.h.b16 %v2632
    %v5416 = vunpack.c.l.b16 %v2633
    %v5417 = vunpack.c.h.b16 %v2633
    %v5418 = vunpack.c.l.b16 %v2634
    %v5419 = vunpack.c.h.b16 %v2634
    %v5420 = vunpack.c.l.b16 %v2635
    %v5421 = vunpack.c.h.b16 %v2635
    %v5422 = vunpack.c.l.b16 %v2636
    %v5423 = vunpack.c.h.b16 %v2636
    %v5424 = vunpack.c.l.b16 %v2637
    %v5425 = vunpack.c.h.b16 %v2637
    %v5426 = vunpack.c.l.b16 %v2638
    %v5427 = vunpack.c.h.b16 %v2638
    %v5428 = vunpack.c.l.b16 %v2639
    %v5429 = vunpack.c.h.b16 %v2639
    %v5430 = vunpack.c.l.b16 %v2640
    %v5431 = vunpack.c.h.b16 %v2640
    %v5432 = vunpack.c.l.b16 %v2641
    %v5433 = vunpack.c.h.b16 %v2641
    %v5434 = vunpack.c.l.b16 %v2642
    %v5435 = vunpack.c.h.b16 %v2642
    %v5436 = vunpack.c.l.b16 %v2643
    %v5437 = vunpack.c.h.b16 %v2643
    %v5438 = vunpack.c.l.b16 %v2644
    %v5439 = vunpack.c.h.b16 %v2644
    %v5440 = vunpack.c.l.b16 %v2645
    %v5441 = vunpack.c.h.b16 %v2645
    %v5442 = vunpack.c.l.b16 %v2646
    %v5443 = vunpack.c.h.b16 %v2646
    %v5444 = vunpack.c.l.b16 %v2647
    %v5445 = vunpack.c.h.b16 %v2647
    %v5446 = vunpack.c.l.b16 %v2648
    %v5447 = vunpack.c.h.b16 %v2648
    %v5448 = vunpack.c.l.b16 %v2649
    %v5449 = vunpack.c.h.b16 %v2649
    %v5450 = vunpack.c.l.b16 %v2650
    %v5451 = vunpack.c.h.b16 %v2650
    %v5452 = vunpack.c.l.b16 %v2651
    %v5453 = vunpack.c.h.b16 %v2651
    %v5454 = vunpack.c.l.b16 %v2652
    %v5455 = vunpack.c.h.b16 %v2652
    %v5456 = vunpack.c.l.b16 %v2653
    %v5457 = vunpack.c.h.b16 %v2653
    %v5458 = vunpack.c.l.b16 %v2654
    %v5459 = vunpack.c.h.b16 %v2654
    %v5460 = vunpack.c.l.b16 %v2655
    %v5461 = vunpack.c.h.b16 %v2655
    %v5462 = vunpack.c.l.b16 %v2656
    %v5463 = vunpack.c.h.b16 %v2656
    %v5464 = vunpack.c.l.b16 %v2657
    %v5465 = vunpack.c.h.b16 %v2657
    %v5466 = vunpack.c.l.b16 %v2658
    %v5467 = vunpack.c.h.b16 %v2658
    %v5468 = vunpack.c.l.b16 %v2659
    %v5469 = vunpack.c.h.b16 %v2659
    %v5470 = vunpack.c.l.b16 %v2660
    %v5471 = vunpack.c.h.b16 %v2660
    %v5472 = vunpack.c.l.b16 %v2661
    %v5473 = vunpack.c.h.b16 %v2661
    %v5474 = vunpack.c.l.b16 %v2662
    %v5475 = vunpack.c.h.b16 %v2662
    %v5476 = vunpack.c.l.b16 %v2663
    %v5477 = vunpack.c.h.b16 %v2663
    %v5478 = vunpack.c.l.b16 %v2664
    %v5479 = vunpack.c.h.b16 %v2664
    %v5480 = vunpack.c.l.b16 %v2665
    %v5481 = vunpack.c.h.b16 %v2665
    %v5482 = vunpack.c.l.b16 %v2666
    %v5483 = vunpack.c.h.b16 %v2666
    %v5484 = vunpack.c.l.b16 %v2667
    %v5485 = vunpack.c.h.b16 %v2667
    %v5486 = vunpack.c.l.b16 %v2668
    %v5487 = vunpack.c.h.b16 %v2668
    %v5488 = vunpack.c.l.b16 %v2669
    %v5489 = vunpack.c.h.b16 %v2669
    %v5490 = vunpack.c.l.b16 %v2670
    %v5491 = vunpack.c.h.b16 %v2670
    %v5492 = vunpack.c.l.b16 %v2671
    %v5493 = vunpack.c.h.b16 %v2671
    %v5494 = vunpack.c.l.b16 %v2672
    %v5495 = vunpack.c.h.b16 %v2672
    %v5496 = vunpack.c.l.b16 %v2673
    %v5497 = vunpack.c.h.b16 %v2673
    %v5498 = vunpack.c.l.b16 %v2674
    %v5499 = vunpack.c.h.b16 %v2674
    %v5500 = vunpack.c.l.b16 %v2675
    %v5501 = vunpack.c.h.b16 %v2675
    %v5502 = vunpack.c.l.b16 %v2676
    %v5503 = vunpack.c.h.b16 %v2676
    %v5504 = vunpack.c.l.b16 %v2677
    %v5505 = vunpack.c.h.b16 %v2677
    %v5506 = vunpack.c.l.b16 %v2678
    %v5507 = vunpack.c.h.b16 %v2678
    %v5508 = vunpack.c.l.b16 %v2679
    %v5509 = vunpack.c.h.b16 %v2679
    %v5510 = vunpack.c.l.b16 %v2680
    %v5511 = vunpack.c.h.b16 %v2680
    %v5512 = vunpack.c.l.b16 %v2681
    %v5513 = vunpack.c.h.b16 %v2681
    %v5514 = vunpack.c.l.b16 %v2682
    %v5515 = vunpack.c.h.b16 %v2682
    %v5516 = vunpack.c.l.b16 %v2683
    %v5517 = vunpack.c.h.b16 %v2683
    %v5518 = vunpack.c.l.b16 %v2684
    %v5519 = vunpack.c.h.b16 %v2684
    %v5520 = vunpack.c.l.b16 %v2685
    %v5521 = vunpack.c.h.b16 %v2685
    %v5522 = vunpack.c.l.b16 %v2686
    %v5523 = vunpack.c.h.b16 %v2686
    %v5524 = vunpack.c.l.b16 %v2687
    %v5525 = vunpack.c.h.b16 %v2687
    %v5526 = vunpack.c.l.b16 %v2688
    %v5527 = vunpack.c.h.b16 %v2688
    %v5528 = vunpack.c.l.b16 %v2689
    %v5529 = vunpack.c.h.b16 %v2689
    %v5530 = vunpack.c.l.b16 %v2690
    %v5531 = vunpack.c.h.b16 %v2690
    %v5532 = vunpack.c.l.b16 %v2691
    %v5533 = vunpack.c.h.b16 %v2691
    %v5534 = vunpack.c.l.b16 %v2692
    %v5535 = vunpack.c.h.b16 %v2692
    %v5536 = vunpack.c.l.b16 %v2693
    %v5537 = vunpack.c.h.b16 %v2693
    %v5538 = vunpack.c.l.b16 %v2694
    %v5539 = vunpack.c.h.b16 %v2694
    %v5540 = vunpack.c.l.b16 %v2695
    %v5541 = vunpack.c.h.b16 %v2695
    %v5542 = vunpack.c.l.b16 %v2696
    %v5543 = vunpack.c.h.b16 %v2696
    %v5544 = vunpack.c.l.b16 %v2697
    %v5545 = vunpack.c.h.b16 %v2697
    %v5546 = vunpack.c.l.b16 %v2698
    %v5547 = vunpack.c.h.b16 %v2698
    %v5548 = vunpack.c.l.b16 %v2699
    %v5549 = vunpack.c.h.b16 %v2699
    %v5550 = vunpack.c.l.b16 %v2700
    %v5551 = vunpack.c.h.b16 %v2700
    %v5552 = vunpack.c.l.b16 %v2701
    %v5553 = vunpack.c.h.b16 %v2701
    %v5554 = vunpack.c.l.b16 %v2702
    %v5555 = vunpack.c.h.b16 %v2702
    %v5556 = vunpack.c.l.b16 %v2703
    %v5557 = vunpack.c.h.b16 %v2703
    %v5558 = vunpack.c.l.b16 %v2704
    %v5559 = vunpack.c.h.b16 %v2704
    %v5560 = vunpack.c.l.b16 %v2705
    %v5561 = vunpack.c.h.b16 %v2705
    %v5562 = vunpack.c.l.b16 %v2706
    %v5563 = vunpack.c.h.b16 %v2706
    %v5564 = vunpack.c.l.b16 %v2707
    %v5565 = vunpack.c.h.b16 %v2707
    %v5566 = vunpack.c.l.b16 %v2708
    %v5567 = vunpack.c.h.b16 %v2708
    %v5568 = vunpack.c.l.b16 %v2709
    %v5569 = vunpack.c.h.b16 %v2709
    %v5570 = vunpack.c.l.b16 %v2710
    %v5571 = vunpack.c.h.b16 %v2710
    %v5572 = vunpack.c.l.b16 %v2711
    %v5573 = vunpack.c.h.b16 %v2711
    %v5574 = vunpack.c.l.b16 %v2712
    %v5575 = vunpack.c.h.b16 %v2712
    %v5576 = vunpack.c.l.b16 %v2713
    %v5577 = vunpack.c.h.b16 %v2713
    %v5578 = vunpack.c.l.b16 %v2714
    %v5579 = vunpack.c.h.b16 %v2714
    %v5580 = vunpack.c.l.b16 %v2715
    %v5581 = vunpack.c.h.b16 %v2715
    %v5582 = vunpack.c.l.b16 %v2716
    %v5583 = vunpack.c.h.b16 %v2716
    %v5584 = vunpack.c.l.b16 %v2717
    %v5585 = vunpack.c.h.b16 %v2717
    %v5586 = vunpack.c.l.b16 %v2718
    %v5587 = vunpack.c.h.b16 %v2718
    %v5588 = vunpack.c.l.b16 %v2719
    %v5589 = vunpack.c.h.b16 %v2719
    %v5590 = vunpack.c.l.b16 %v2720
    %v5591 = vunpack.c.h.b16 %v2720
    %v5592 = vunpack.c.l.b16 %v2721
    %v5593 = vunpack.c.h.b16 %v2721
    %v5594 = vunpack.c.l.b16 %v2722
    %v5595 = vunpack.c.h.b16 %v2722
    %v5596 = vunpack.c.l.b16 %v2723
    %v5597 = vunpack.c.h.b16 %v2723
    %v5598 = vunpack.c.l.b16 %v2724
    %v5599 = vunpack.c.h.b16 %v2724
    %v5600 = vunpack.c.l.b16 %v2725
    %v5601 = vunpack.c.h.b16 %v2725
    %v5602 = vunpack.c.l.b16 %v2726
    %v5603 = vunpack.c.h.b16 %v2726
    %v5604 = vunpack.c.l.b16 %v2727
    %v5605 = vunpack.c.h.b16 %v2727
    %v5606 = vunpack.c.l.b16 %v2728
    %v5607 = vunpack.c.h.b16 %v2728
    %v5608 = vunpack.c.l.b16 %v2729
    %v5609 = vunpack.c.h.b16 %v2729
    %v5610 = vunpack.c.l.b16 %v2730
    %v5611 = vunpack.c.h.b16 %v2730
    %v5612 = vunpack.c.l.b16 %v2731
    %v5613 = vunpack.c.h.b16 %v2731
    %v5614 = vunpack.c.l.b16 %v2732
    %v5615 = vunpack.c.h.b16 %v2732
    %v5616 = vunpack.c.l.b16 %v2733
    %v5617 = vunpack.c.h.b16 %v2733
    %v5618 = vunpack.c.l.b16 %v2734
    %v5619 = vunpack.c.h.b16 %v2734
    %v5620 = vunpack.c.l.b16 %v2735
    %v5621 = vunpack.c.h.b16 %v2735
    %v5622 = vunpack.c.l.b16 %v2736
    %v5623 = vunpack.c.h.b16 %v2736
    %v5624 = vunpack.c.l.b16 %v2737
    %v5625 = vunpack.c.h.b16 %v2737
    %v5626 = vunpack.c.l.b16 %v2738
    %v5627 = vunpack.c.h.b16 %v2738
    %v5628 = vunpack.c.l.b16 %v2739
    %v5629 = vunpack.c.h.b16 %v2739
    %v5630 = vunpack.c.l.b16 %v2740
    %v5631 = vunpack.c.h.b16 %v2740
    %v5632 = vunpack.c.l.b16 %v2741
    %v5633 = vunpack.c.h.b16 %v2741
    %v5634 = vunpack.c.l.b16 %v2742
    %v5635 = vunpack.c.h.b16 %v2742
    %v5636 = vunpack.c.l.b16 %v2743
    %v5637 = vunpack.c.h.b16 %v2743
    %v5638 = vunpack.c.l.b16 %v2744
    %v5639 = vunpack.c.h.b16 %v2744
    %v5640 = vunpack.c.l.b16 %v2745
    %v5641 = vunpack.c.h.b16 %v2745
    %v5642 = vunpack.c.l.b16 %v2746
    %v5643 = vunpack.c.h.b16 %v2746
    %v5644 = vunpack.c.l.b16 %v2747
    %v5645 = vunpack.c.h.b16 %v2747
    %v5646 = vunpack.c.l.b16 %v2748
    %v5647 = vunpack.c.h.b16 %v2748
    %v5648 = vunpack.c.l.b16 %v2749
    %v5649 = vunpack.c.h.b16 %v2749
    %v5650 = vunpack.c.l.b16 %v2750
    %v5651 = vunpack.c.h.b16 %v2750
    %v5652 = vunpack.c.l.b16 %v2751
    %v5653 = vunpack.c.h.b16 %v2751
    %v5654 = vunpack.c.l.b16 %v2752
    %v5655 = vunpack.c.h.b16 %v2752
    %v5656 = vunpack.c.l.b16 %v2753
    %v5657 = vunpack.c.h.b16 %v2753
    %v5658 = vunpack.c.l.b16 %v2754
    %v5659 = vunpack.c.h.b16 %v2754
    %v5660 = vunpack.c.l.b16 %v2755
    %v5661 = vunpack.c.h.b16 %v2755
    %v5662 = vunpack.c.l.b16 %v2756
    %v5663 = vunpack.c.h.b16 %v2756
    %v5664 = vunpack.c.l.b16 %v2757
    %v5665 = vunpack.c.h.b16 %v2757
    %v5666 = vunpack.c.l.b16 %v2758
    %v5667 = vunpack.c.h.b16 %v2758
    %v5668 = vunpack.c.l.b16 %v2759
    %v5669 = vunpack.c.h.b16 %v2759
    %v5670 = vunpack.c.l.b16 %v2760
    %v5671 = vunpack.c.h.b16 %v2760
    %v5672 = vunpack.c.l.b16 %v2761
    %v5673 = vunpack.c.h.b16 %v2761
    %v5674 = vunpack.c.l.b16 %v2762
    %v5675 = vunpack.c.h.b16 %v2762
    %v5676 = vunpack.c.l.b16 %v2763
    %v5677 = vunpack.c.h.b16 %v2763
    %v5678 = vunpack.c.l.b16 %v2764
    %v5679 = vunpack.c.h.b16 %v2764
    %v5680 = vunpack.c.l.b16 %v2765
    %v5681 = vunpack.c.h.b16 %v2765
    %v5682 = vunpack.c.l.b16 %v2766
    %v5683 = vunpack.c.h.b16 %v2766
    %v5684 = vunpack.c.l.b16 %v2767
    %v5685 = vunpack.c.h.b16 %v2767
    %v5686 = vunpack.c.l.b16 %v2768
    %v5687 = vunpack.c.h.b16 %v2768
    %v5688 = vunpack.c.l.b16 %v2769
    %v5689 = vunpack.c.h.b16 %v2769
    %v5690 = vunpack.c.l.b16 %v2770
    %v5691 = vunpack.c.h.b16 %v2770
    %v5692 = vunpack.c.l.b16 %v2771
    %v5693 = vunpack.c.h.b16 %v2771
    %v5694 = vunpack.c.l.b16 %v2772
    %v5695 = vunpack.c.h.b16 %v2772
    %v5696 = vunpack.c.l.b16 %v2773
    %v5697 = vunpack.c.h.b16 %v2773
    %v5698 = vunpack.c.l.b16 %v2774
    %v5699 = vunpack.c.h.b16 %v2774
    %v5700 = vunpack.c.l.b16 %v2775
    %v5701 = vunpack.c.h.b16 %v2775
    %v5702 = vunpack.c.l.b16 %v2776
    %v5703 = vunpack.c.h.b16 %v2776
    %v5704 = vunpack.c.l.b16 %v2777
    %v5705 = vunpack.c.h.b16 %v2777
    %v5706 = vunpack.c.l.b16 %v2778
    %v5707 = vunpack.c.h.b16 %v2778
    %v5708 = vunpack.c.l.b16 %v2779
    %v5709 = vunpack.c.h.b16 %v2779
    %v5710 = vunpack.c.l.b16 %v2780
    %v5711 = vunpack.c.h.b16 %v2780
    %v5712 = vunpack.c.l.b16 %v2781
    %v5713 = vunpack.c.h.b16 %v2781
    %v5714 = vunpack.c.l.b16 %v2782
    %v5715 = vunpack.c.h.b16 %v2782
    %v5716 = vunpack.c.l.b16 %v2783
    %v5717 = vunpack.c.h.b16 %v2783
    %v5718 = vunpack.c.l.b16 %v2784
    %v5719 = vunpack.c.h.b16 %v2784
    %v5720 = vunpack.c.l.b16 %v2785
    %v5721 = vunpack.c.h.b16 %v2785
    %v5722 = vunpack.c.l.b16 %v2786
    %v5723 = vunpack.c.h.b16 %v2786
    %v5724 = vunpack.c.l.b16 %v2787
    %v5725 = vunpack.c.h.b16 %v2787
    %v5726 = vunpack.c.l.b16 %v2788
    %v5727 = vunpack.c.h.b16 %v2788
    %v5728 = vunpack.c.l.b16 %v2789
    %v5729 = vunpack.c.h.b16 %v2789
    %v5730 = vunpack.c.l.b16 %v2790
    %v5731 = vunpack.c.h.b16 %v2790
    %v5732 = vunpack.c.l.b16 %v2791
    %v5733 = vunpack.c.h.b16 %v2791
    %v5734 = vunpack.c.l.b16 %v2792
    %v5735 = vunpack.c.h.b16 %v2792
    %v5736 = vunpack.c.l.b16 %v2793
    %v5737 = vunpack.c.h.b16 %v2793
    %v5738 = vunpack.c.l.b16 %v2794
    %v5739 = vunpack.c.h.b16 %v2794
    %v5740 = vunpack.c.l.b16 %v2795
    %v5741 = vunpack.c.h.b16 %v2795
    %v5742 = vunpack.c.l.b16 %v2796
    %v5743 = vunpack.c.h.b16 %v2796
    %v5744 = vunpack.c.l.b16 %v2797
    %v5745 = vunpack.c.h.b16 %v2797
    %v5746 = vunpack.c.l.b16 %v2798
    %v5747 = vunpack.c.h.b16 %v2798
    %v5748 = vunpack.c.l.b16 %v2799
    %v5749 = vunpack.c.h.b16 %v2799
    %v5750 = vunpack.c.l.b16 %v2800
    %v5751 = vunpack.c.h.b16 %v2800
    %v5752 = vunpack.c.l.b16 %v2801
    %v5753 = vunpack.c.h.b16 %v2801
    %v5754 = vunpack.c.l.b16 %v2802
    %v5755 = vunpack.c.h.b16 %v2802
    %v5756 = vunpack.c.l.b16 %v2803
    %v5757 = vunpack.c.h.b16 %v2803
    %v5758 = vunpack.c.l.b16 %v2804
    %v5759 = vunpack.c.h.b16 %v2804
    %v5760 = vunpack.c.l.b16 %v2805
    %v5761 = vunpack.c.h.b16 %v2805
    %v5762 = vunpack.c.l.b16 %v2806
    %v5763 = vunpack.c.h.b16 %v2806
    %v5764 = vunpack.c.l.b16 %v2807
    %v5765 = vunpack.c.h.b16 %v2807
    %v5766 = vunpack.c.l.b16 %v2808
    %v5767 = vunpack.c.h.b16 %v2808
    %v5768 = vunpack.c.l.b16 %v2809
    %v5769 = vunpack.c.h.b16 %v2809
    %v5770 = vunpack.c.l.b16 %v2810
    %v5771 = vunpack.c.h.b16 %v2810
    %v5772 = vunpack.c.l.b16 %v2811
    %v5773 = vunpack.c.h.b16 %v2811
    %v5774 = vunpack.c.l.b16 %v2812
    %v5775 = vunpack.c.h.b16 %v2812
    %v5776 = vunpack.c.l.b16 %v2813
    %v5777 = vunpack.c.h.b16 %v2813
    %v5778 = vunpack.c.l.b16 %v2814
    %v5779 = vunpack.c.h.b16 %v2814
    %v5780 = vunpack.c.l.b16 %v2815
    %v5781 = vunpack.c.h.b16 %v2815
    %v5782 = vunpack.c.l.b16 %v2816
    %v5783 = vunpack.c.h.b16 %v2816
    %v5784 = vunpack.c.l.b16 %v2817
    %v5785 = vunpack.c.h.b16 %v2817
    %v5786 = vunpack.c.l.b16 %v2818
    %v5787 = vunpack.c.h.b16 %v2818
    %v5788 = vunpack.c.l.b16 %v2819
    %v5789 = vunpack.c.h.b16 %v2819
    %v5790 = vunpack.c.l.b16 %v2820
    %v5791 = vunpack.c.h.b16 %v2820
    %v5792 = vunpack.c.l.b16 %v2821
    %v5793 = vunpack.c.h.b16 %v2821
    %v5794 = vunpack.c.l.b16 %v2822
    %v5795 = vunpack.c.h.b16 %v2822
    %v5796 = vunpack.c.l.b16 %v2823
    %v5797 = vunpack.c.h.b16 %v2823
    %v5798 = vunpack.c.l.b16 %v2824
    %v5799 = vunpack.c.h.b16 %v2824
    %v5800 = vunpack.c.l.b16 %v2825
    %v5801 = vunpack.c.h.b16 %v2825
    %v5802 = vunpack.c.l.b16 %v2826
    %v5803 = vunpack.c.h.b16 %v2826
    %v5804 = vunpack.c.l.b16 %v2827
    %v5805 = vunpack.c.h.b16 %v2827
    %v5806 = vunpack.c.l.b16 %v2828
    %v5807 = vunpack.c.h.b16 %v2828
    %v5808 = vunpack.c.l.b16 %v2829
    %v5809 = vunpack.c.h.b16 %v2829
    %v5810 = vunpack.c.l.b16 %v2830
    %v5811 = vunpack.c.h.b16 %v2830
    %v5812 = vunpack.c.l.b16 %v2831
    %v5813 = vunpack.c.h.b16 %v2831
    %v5814 = vunpack.c.l.b16 %v2832
    %v5815 = vunpack.c.h.b16 %v2832
    %v5816 = vunpack.c.l.b16 %v2833
    %v5817 = vunpack.c.h.b16 %v2833
    %v5818 = vunpack.c.l.b16 %v2834
    %v5819 = vunpack.c.h.b16 %v2834
    %v5820 = vunpack.c.l.b16 %v2835
    %v5821 = vunpack.c.h.b16 %v2835
    %v5822 = vunpack.c.l.b16 %v2836
    %v5823 = vunpack.c.h.b16 %v2836
    %v5824 = vunpack.c.l.b16 %v2837
    %v5825 = vunpack.c.h.b16 %v2837
    %v5826 = vunpack.c.l.b16 %v2838
    %v5827 = vunpack.c.h.b16 %v2838
    %v5828 = vunpack.c.l.b16 %v2839
    %v5829 = vunpack.c.h.b16 %v2839
    %v5830 = vunpack.c.l.b16 %v2840
    %v5831 = vunpack.c.h.b16 %v2840
    %v5832 = vunpack.c.l.b16 %v2841
    %v5833 = vunpack.c.h.b16 %v2841
    %v5834 = vunpack.c.l.b16 %v2842
    %v5835 = vunpack.c.h.b16 %v2842
    %v5836 = vunpack.c.l.b16 %v2843
    %v5837 = vunpack.c.h.b16 %v2843
    %v5838 = vunpack.c.l.b16 %v2844
    %v5839 = vunpack.c.h.b16 %v2844
    %v5840 = vunpack.c.l.b16 %v2845
    %v5841 = vunpack.c.h.b16 %v2845
    %v5842 = vunpack.c.l.b16 %v2846
    %v5843 = vunpack.c.h.b16 %v2846
    %v5844 = vunpack.c.l.b16 %v2847
    %v5845 = vunpack.c.h.b16 %v2847
    %v5846 = vunpack.c.l.b16 %v2848
    %v5847 = vunpack.c.h.b16 %v2848
    %v5848 = vunpack.c.l.b16 %v2849
    %v5849 = vunpack.c.h.b16 %v2849
    %v5850 = vunpack.c.l.b16 %v2850
    %v5851 = vunpack.c.h.b16 %v2850
    %v5852 = vunpack.c.l.b16 %v2851
    %v5853 = vunpack.c.h.b16 %v2851
    %v5854 = vunpack.c.l.b16 %v2852
    %v5855 = vunpack.c.h.b16 %v2852
    %v5856 = vunpack.c.l.b16 %v2853
    %v5857 = vunpack.c.h.b16 %v2853
    %v5858 = vunpack.c.l.b16 %v2854
    %v5859 = vunpack.c.h.b16 %v2854
    %v5860 = vunpack.c.l.b16 %v2855
    %v5861 = vunpack.c.h.b16 %v2855
    %v5862 = vunpack.c.l.b16 %v2856
    %v5863 = vunpack.c.h.b16 %v2856
    %v5864 = vunpack.c.l.b16 %v2857
    %v5865 = vunpack.c.h.b16 %v2857
    %v5866 = vunpack.c.l.b16 %v2858
    %v5867 = vunpack.c.h.b16 %v2858
    %v5868 = vunpack.c.l.b16 %v2859
    %v5869 = vunpack.c.h.b16 %v2859
    %v5870 = vunpack.c.l.b16 %v2860
    %v5871 = vunpack.c.h.b16 %v2860
    %v5872 = vunpack.c.l.b16 %v2861
    %v5873 = vunpack.c.h.b16 %v2861
    %v5874 = vunpack.c.l.b16 %v2862
    %v5875 = vunpack.c.h.b16 %v2862
    %v5876 = vunpack.c.l.b16 %v2863
    %v5877 = vunpack.c.h.b16 %v2863
    %v5878 = vunpack.c.l.b16 %v2864
    %v5879 = vunpack.c.h.b16 %v2864
    %v5880 = vunpack.c.l.b16 %v2865
    %v5881 = vunpack.c.h.b16 %v2865
    %v5882 = vunpack.c.l.b16 %v2866
    %v5883 = vunpack.c.h.b16 %v2866
    %v5884 = vunpack.c.l.b16 %v2867
    %v5885 = vunpack.c.h.b16 %v2867
    %v5886 = vunpack.c.l.b16 %v2868
    %v5887 = vunpack.c.h.b16 %v2868
    %v5888 = vunpack.c.l.b16 %v2869
    %v5889 = vunpack.c.h.b16 %v2869
    %v5890 = vunpack.c.l.b16 %v2870
    %v5891 = vunpack.c.h.b16 %v2870
    %v5892 = vunpack.c.l.b16 %v2871
    %v5893 = vunpack.c.h.b16 %v2871
    %v5894 = vunpack.c.l.b16 %v2872
    %v5895 = vunpack.c.h.b16 %v2872
    %v5896 = vunpack.c.l.b16 %v2873
    %v5897 = vunpack.c.h.b16 %v2873
    %v5898 = vunpack.c.l.b16 %v2874
    %v5899 = vunpack.c.h.b16 %v2874
    %v5900 = vunpack.c.l.b16 %v2875
    %v5901 = vunpack.c.h.b16 %v2875
    %v5902 = vunpack.c.l.b16 %v2876
    %v5903 = vunpack.c.h.b16 %v2876
    %v5904 = vunpack.c.l.b16 %v2877
    %v5905 = vunpack.c.h.b16 %v2877
    %v5906 = vunpack.c.l.b16 %v2878
    %v5907 = vunpack.c.h.b16 %v2878
    %v5908 = vunpack.c.l.b16 %v2879
    %v5909 = vunpack.c.h.b16 %v2879
    %v5910 = vunpack.c.l.b16 %v2880
    %v5911 = vunpack.c.h.b16 %v2880
    %v5912 = vunpack.c.l.b16 %v2881
    %v5913 = vunpack.c.h.b16 %v2881
    %v5914 = vunpack.c.l.b16 %v2882
    %v5915 = vunpack.c.h.b16 %v2882
    %v5916 = vunpack.c.l.b16 %v2883
    %v5917 = vunpack.c.h.b16 %v2883
    %v5918 = vunpack.c.l.b16 %v2884
    %v5919 = vunpack.c.h.b16 %v2884
    %v5920 = vunpack.c.l.b16 %v2885
    %v5921 = vunpack.c.h.b16 %v2885
    %v5922 = vunpack.c.l.b16 %v2886
    %v5923 = vunpack.c.h.b16 %v2886
    %v5924 = vunpack.c.l.b16 %v2887
    %v5925 = vunpack.c.h.b16 %v2887
    %v5926 = vunpack.c.l.b16 %v2888
    %v5927 = vunpack.c.h.b16 %v2888
    %v5928 = vunpack.c.l.b16 %v2889
    %v5929 = vunpack.c.h.b16 %v2889
    %v5930 = vunpack.c.l.b16 %v2890
    %v5931 = vunpack.c.h.b16 %v2890
    %v5932 = vunpack.c.l.b16 %v2891
    %v5933 = vunpack.c.h.b16 %v2891
    %v5934 = vunpack.c.l.b16 %v2892
    %v5935 = vunpack.c.h.b16 %v2892
    %v5936 = vunpack.c.l.b16 %v2893
    %v5937 = vunpack.c.h.b16 %v2893
    %v5938 = vunpack.c.l.b16 %v2894
    %v5939 = vunpack.c.h.b16 %v2894
    %v5940 = vunpack.c.l.b16 %v2895
    %v5941 = vunpack.c.h.b16 %v2895
    %v5942 = vunpack.c.l.b16 %v2896
    %v5943 = vunpack.c.h.b16 %v2896
    %v5944 = vunpack.c.l.b16 %v2897
    %v5945 = vunpack.c.h.b16 %v2897
    %v5946 = vunpack.c.l.b16 %v2898
    %v5947 = vunpack.c.h.b16 %v2898
    %v5948 = vunpack.c.l.b16 %v2899
    %v5949 = vunpack.c.h.b16 %v2899
    %v5950 = vunpack.c.l.b16 %v2900
    %v5951 = vunpack.c.h.b16 %v2900
    %v5952 = vunpack.c.l.b16 %v2901
    %v5953 = vunpack.c.h.b16 %v2901
    %v5954 = vunpack.c.l.b16 %v2902
    %v5955 = vunpack.c.h.b16 %v2902
    %v5956 = vunpack.c.l.b16 %v2903
    %v5957 = vunpack.c.h.b16 %v2903
    %v5958 = vunpack.c.l.b16 %v2904
    %v5959 = vunpack.c.h.b16 %v2904
    %v5960 = vunpack.c.l.b16 %v2905
    %v5961 = vunpack.c.h.b16 %v2905
    %v5962 = vunpack.c.l.b16 %v2906
    %v5963 = vunpack.c.h.b16 %v2906
    %v5964 = vunpack.c.l.b16 %v2907
    %v5965 = vunpack.c.h.b16 %v2907
    %v5966 = vunpack.c.l.b16 %v2908
    %v5967 = vunpack.c.h.b16 %v2908
    %v5968 = vunpack.c.l.b16 %v2909
    %v5969 = vunpack.c.h.b16 %v2909
    %v5970 = vunpack.c.l.b16 %v2910
    %v5971 = vunpack.c.h.b16 %v2910
    %v5972 = vunpack.c.l.b16 %v2911
    %v5973 = vunpack.c.h.b16 %v2911
    %v5974 = vunpack.c.l.b16 %v2912
    %v5975 = vunpack.c.h.b16 %v2912
    %v5976 = vunpack.c.l.b16 %v2913
    %v5977 = vunpack.c.h.b16 %v2913
    %v5978 = vunpack.c.l.b16 %v2914
    %v5979 = vunpack.c.h.b16 %v2914
    %v5980 = vunpack.c.l.b16 %v2915
    %v5981 = vunpack.c.h.b16 %v2915
    %v5982 = vunpack.c.l.b16 %v2916
    %v5983 = vunpack.c.h.b16 %v2916
    %v5984 = vunpack.c.l.b16 %v2917
    %v5985 = vunpack.c.h.b16 %v2917
    %v5986 = vunpack.c.l.b16 %v2918
    %v5987 = vunpack.c.h.b16 %v2918
    %v5988 = vunpack.c.l.b16 %v2919
    %v5989 = vunpack.c.h.b16 %v2919
    %v5990 = vunpack.c.l.b16 %v2920
    %v5991 = vunpack.c.h.b16 %v2920
    %v5992 = vunpack.c.l.b16 %v2921
    %v5993 = vunpack.c.h.b16 %v2921
    %v5994 = vunpack.c.l.b16 %v2922
    %v5995 = vunpack.c.h.b16 %v2922
    %v5996 = vunpack.c.l.b16 %v2923
    %v5997 = vunpack.c.h.b16 %v2923
    %v5998 = vunpack.c.l.b16 %v2924
    %v5999 = vunpack.c.h.b16 %v2924
    %v6000 = vunpack.c.l.b16 %v2925
    %v6001 = vunpack.c.h.b16 %v2925
    %v6002 = vunpack.c.l.b16 %v2926
    %v6003 = vunpack.c.h.b16 %v2926
    %v6004 = vunpack.c.l.b16 %v2927
    %v6005 = vunpack.c.h.b16 %v2927
    %v6006 = vunpack.c.l.b16 %v2928
    %v6007 = vunpack.c.h.b16 %v2928
    %v6008 = vunpack.c.l.b16 %v2929
    %v6009 = vunpack.c.h.b16 %v2929
    %v6010 = vunpack.c.l.b16 %v2930
    %v6011 = vunpack.c.h.b16 %v2930
    %v6012 = vunpack.c.l.b16 %v2931
    %v6013 = vunpack.c.h.b16 %v2931
    %v6014 = vunpack.c.l.b16 %v2932
    %v6015 = vunpack.c.h.b16 %v2932
    %v6016 = vunpack.c.l.b16 %v2933
    %v6017 = vunpack.c.h.b16 %v2933
    %v6018 = vunpack.c.l.b16 %v2934
    %v6019 = vunpack.c.h.b16 %v2934
    %v6020 = vunpack.c.l.b16 %v2935
    %v6021 = vunpack.c.h.b16 %v2935
    %v6022 = vunpack.c.l.b16 %v2936
    %v6023 = vunpack.c.h.b16 %v2936
    %v6024 = vunpack.c.l.b16 %v2937
    %v6025 = vunpack.c.h.b16 %v2937
    %v6026 = vunpack.c.l.b16 %v2938
    %v6027 = vunpack.c.h.b16 %v2938
    %v6028 = vunpack.c.l.b16 %v2939
    %v6029 = vunpack.c.h.b16 %v2939
    %v6030 = vunpack.c.l.b16 %v2940
    %v6031 = vunpack.c.h.b16 %v2940
    %v6032 = vunpack.c.l.b16 %v2941
    %v6033 = vunpack.c.h.b16 %v2941
    %v6034 = vunpack.c.l.b16 %v2942
    %v6035 = vunpack.c.h.b16 %v2942
    %v6036 = vunpack.c.l.b16 %v2943
    %v6037 = vunpack.c.h.b16 %v2943
    %v6038 = vunpack.c.l.b16 %v2944
    %v6039 = vunpack.c.h.b16 %v2944
    %v6040 = vunpack.c.l.b16 %v2945
    %v6041 = vunpack.c.h.b16 %v2945
    %v6042 = vunpack.c.l.b16 %v2946
    %v6043 = vunpack.c.h.b16 %v2946
    %v6044 = vunpack.c.l.b16 %v2947
    %v6045 = vunpack.c.h.b16 %v2947
    %v6046 = vunpack.c.l.b16 %v2948
    %v6047 = vunpack.c.h.b16 %v2948
    %v6048 = vunpack.c.l.b16 %v2949
    %v6049 = vunpack.c.h.b16 %v2949
    %v6050 = vunpack.c.l.b16 %v2950
    %v6051 = vunpack.c.h.b16 %v2950
    %v6052 = vunpack.c.l.b16 %v2951
    %v6053 = vunpack.c.h.b16 %v2951
    %v6054 = vunpack.c.l.b16 %v2952
    %v6055 = vunpack.c.h.b16 %v2952
    %v6056 = vunpack.c.l.b16 %v2953
    %v6057 = vunpack.c.h.b16 %v2953
    %v6058 = vunpack.c.l.b16 %v2954
    %v6059 = vunpack.c.h.b16 %v2954
    %v6060 = vunpack.c.l.b16 %v2955
    %v6061 = vunpack.c.h.b16 %v2955
    %v6062 = vunpack.c.l.b16 %v2956
    %v6063 = vunpack.c.h.b16 %v2956
    %v6064 = vunpack.c.l.b16 %v2957
    %v6065 = vunpack.c.h.b16 %v2957
    %v6066 = vunpack.c.l.b16 %v2958
    %v6067 = vunpack.c.h.b16 %v2958
    %v6068 = vunpack.c.l.b16 %v2959
    %v6069 = vunpack.c.h.b16 %v2959
    %v6070 = vunpack.c.l.b16 %v2960
    %v6071 = vunpack.c.h.b16 %v2960
    %v6072 = vunpack.c.l.b16 %v2961
    %v6073 = vunpack.c.h.b16 %v2961
    %v6074 = vunpack.c.l.b16 %v2962
    %v6075 = vunpack.c.h.b16 %v2962
    %v6076 = vunpack.c.l.b16 %v2963
    %v6077 = vunpack.c.h.b16 %v2963
    %v6078 = vunpack.c.l.b16 %v2964
    %v6079 = vunpack.c.h.b16 %v2964
    %v6080 = vunpack.c.l.b16 %v2965
    %v6081 = vunpack.c.h.b16 %v2965
    %v6082 = vunpack.c.l.b16 %v2966
    %v6083 = vunpack.c.h.b16 %v2966
    %v6084 = vunpack.c.l.b16 %v2967
    %v6085 = vunpack.c.h.b16 %v2967
    %v6086 = vunpack.c.l.b16 %v2968
    %v6087 = vunpack.c.h.b16 %v2968
    %v6088 = vunpack.c.l.b16 %v2969
    %v6089 = vunpack.c.h.b16 %v2969
    %v6090 = vunpack.c.l.b16 %v2970
    %v6091 = vunpack.c.h.b16 %v2970
    %v6092 = vunpack.c.l.b16 %v2971
    %v6093 = vunpack.c.h.b16 %v2971
    %v6094 = vunpack.c.l.b16 %v2972
    %v6095 = vunpack.c.h.b16 %v2972
    %v6096 = vunpack.c.l.b16 %v2973
    %v6097 = vunpack.c.h.b16 %v2973
    %v6098 = vunpack.c.l.b16 %v2974
    %v6099 = vunpack.c.h.b16 %v2974
    %v6100 = vunpack.c.l.b16 %v2975
    %v6101 = vunpack.c.h.b16 %v2975
    %v6102 = vunpack.c.l.b16 %v2976
    %v6103 = vunpack.c.h.b16 %v2976
    %v6104 = vunpack.c.l.b16 %v2977
    %v6105 = vunpack.c.h.b16 %v2977
    %v6106 = vunpack.c.l.b16 %v2978
    %v6107 = vunpack.c.h.b16 %v2978
    %v6108 = vunpack.c.l.b16 %v2979
    %v6109 = vunpack.c.h.b16 %v2979
    %v6110 = vunpack.c.l.b16 %v2980
    %v6111 = vunpack.c.h.b16 %v2980
    %v6112 = vunpack.c.l.b16 %v2981
    %v6113 = vunpack.c.h.b16 %v2981
    %v6114 = vunpack.c.l.b16 %v2982
    %v6115 = vunpack.c.h.b16 %v2982
    %v6116 = vunpack.c.l.b16 %v2983
    %v6117 = vunpack.c.h.b16 %v2983
    %v6118 = vunpack.c.l.b16 %v2984
    %v6119 = vunpack.c.h.b16 %v2984
    %v6120 = vunpack.c.l.b16 %v2985
    %v6121 = vunpack.c.h.b16 %v2985
    %v6122 = vunpack.c.l.b16 %v2986
    %v6123 = vunpack.c.h.b16 %v2986
    %v6124 = vunpack.c.l.b16 %v2987
    %v6125 = vunpack.c.h.b16 %v2987
    %v6126 = vunpack.c.l.b16 %v2988
    %v6127 = vunpack.c.h.b16 %v2988
    %v6128 = vunpack.c.l.b16 %v2989
    %v6129 = vunpack.c.h.b16 %v2989
    %v6130 = vunpack.c.l.b16 %v2990
    %v6131 = vunpack.c.h.b16 %v2990
    %v6132 = vunpack.c.l.b16 %v2991
    %v6133 = vunpack.c.h.b16 %v2991
    %v6134 = vunpack.c.l.b16 %v2992
    %v6135 = vunpack.c.h.b16 %v2992
    %v6136 = vunpack.c.l.b16 %v2993
    %v6137 = vunpack.c.h.b16 %v2993
    %v6138 = vunpack.c.l.b16 %v2994
    %v6139 = vunpack.c.h.b16 %v2994
    %v6140 = vunpack.c.l.b16 %v2995
    %v6141 = vunpack.c.h.b16 %v2995
    %v6142 = vunpack.c.l.b16 %v2996
    %v6143 = vunpack.c.h.b16 %v2996
    %v6144 = vunpack.c.l.b16 %v2997
    %v6145 = vunpack.c.h.b16 %v2997
    %v6146 = vunpack.c.l.b16 %v2998
    %v6147 = vunpack.c.h.b16 %v2998
    %v6148 = vunpack.c.l.b16 %v2999
    %v6149 = vunpack.c.h.b16 %v2999
    %v6150 = vunpack.c.l.b16 %v3000
    %v6151 = vunpack.c.h.b16 %v3000
    %v6152 = vunpack.c.l.b16 %v3001
    %v6153 = vunpack.c.h.b16 %v3001
    %v6154 = vunpack.c.l.b16 %v3002
    %v6155 = vunpack.c.h.b16 %v3002
    %v6156 = vunpack.c.l.b16 %v3003
    %v6157 = vunpack.c.h.b16 %v3003
    %v6158 = vunpack.c.l.b16 %v3004
    %v6159 = vunpack.c.h.b16 %v3004
    %v6160 = vunpack.c.l.b16 %v3005
    %v6161 = vunpack.c.h.b16 %v3005
    %v6162 = vunpack.c.l.b16 %v3006
    %v6163 = vunpack.c.h.b16 %v3006
    %v6164 = vunpack.c.l.b16 %v3007
    %v6165 = vunpack.c.h.b16 %v3007
    %v6166 = vunpack.c.l.b16 %v3008
    %v6167 = vunpack.c.h.b16 %v3008
    %v6168 = vunpack.c.l.b16 %v3009
    %v6169 = vunpack.c.h.b16 %v3009
    %v6170 = vunpack.c.l.b16 %v3010
    %v6171 = vunpack.c.h.b16 %v3010
    %v6172 = vunpack.c.l.b16 %v3011
    %v6173 = vunpack.c.h.b16 %v3011
    %v6174 = vunpack.c.l.b16 %v3012
    %v6175 = vunpack.c.h.b16 %v3012
    %v6176 = vunpack.c.l.b16 %v3013
    %v6177 = vunpack.c.h.b16 %v3013
    %v6178 = vunpack.c.l.b16 %v3014
    %v6179 = vunpack.c.h.b16 %v3014
    %v6180 = vunpack.c.l.b16 %v3015
    %v6181 = vunpack.c.h.b16 %v3015
    %v6182 = vunpack.c.l.b16 %v3016
    %v6183 = vunpack.c.h.b16 %v3016
    %v6184 = vunpack.c.l.b16 %v3017
    %v6185 = vunpack.c.h.b16 %v3017
    %v6186 = vunpack.c.l.b16 %v3018
    %v6187 = vunpack.c.h.b16 %v3018
    %v6188 = vunpack.c.l.b16 %v3019
    %v6189 = vunpack.c.h.b16 %v3019
    %v6190 = vunpack.c.l.b16 %v3020
    %v6191 = vunpack.c.h.b16 %v3020
    %v6192 = vunpack.c.l.b16 %v3021
    %v6193 = vunpack.c.h.b16 %v3021
    %v6194 = vunpack.c.l.b16 %v3022
    %v6195 = vunpack.c.h.b16 %v3022
    %v6196 = vunpack.c.l.b16 %v3023
    %v6197 = vunpack.c.h.b16 %v3023
    %v6198 = vunpack.c.l.b16 %v3024
    %v6199 = vunpack.c.h.b16 %v3024
    %v6200 = vunpack.c.l.b16 %v3025
    %v6201 = vunpack.c.h.b16 %v3025
    %v6202 = vunpack.c.l.b16 %v3026
    %v6203 = vunpack.c.h.b16 %v3026
    %v6204 = vunpack.c.l.b16 %v3027
    %v6205 = vunpack.c.h.b16 %v3027
    %v6206 = vunpack.c.l.b16 %v3028
    %v6207 = vunpack.c.h.b16 %v3028
    %v6208 = vunpack.c.l.b16 %v3029
    %v6209 = vunpack.c.h.b16 %v3029
    %v6210 = vunpack.c.l.b16 %v3030
    %v6211 = vunpack.c.h.b16 %v3030
    %v6212 = vunpack.c.l.b16 %v3031
    %v6213 = vunpack.c.h.b16 %v3031
    %v6214 = vunpack.c.l.b16 %v3032
    %v6215 = vunpack.c.h.b16 %v3032
    %v6216 = vunpack.c.l.b16 %v3033
    %v6217 = vunpack.c.h.b16 %v3033
    %v6218 = vunpack.c.l.b16 %v3034
    %v6219 = vunpack.c.h.b16 %v3034
    %v6220 = vunpack.c.l.b16 %v3035
    %v6221 = vunpack.c.h.b16 %v3035
    %v6222 = vunpack.c.l.b16 %v3036
    %v6223 = vunpack.c.h.b16 %v3036
    %v6224 = vunpack.c.l.b16 %v3037
    %v6225 = vunpack.c.h.b16 %v3037
    %v6226 = vunpack.c.l.b16 %v3038
    %v6227 = vunpack.c.h.b16 %v3038
    %v6228 = vunpack.c.l.b16 %v3039
    %v6229 = vunpack.c.h.b16 %v3039
    %v6230 = vunpack.c.l.b16 %v3040
    %v6231 = vunpack.c.h.b16 %v3040
    %v6232 = vunpack.c.l.b16 %v3041
    %v6233 = vunpack.c.h.b16 %v3041
    %v6234 = vunpack.c.l.b16 %v3042
    %v6235 = vunpack.c.h.b16 %v3042
    %v6236 = vunpack.c.l.b16 %v3043
    %v6237 = vunpack.c.h.b16 %v3043
    %v6238 = vunpack.c.l.b16 %v3044
    %v6239 = vunpack.c.h.b16 %v3044
    %v6240 = vunpack.c.l.b16 %v3045
    %v6241 = vunpack.c.h.b16 %v3045
    %v6242 = vunpack.c.l.b16 %v3046
    %v6243 = vunpack.c.h.b16 %v3046
    %v6244 = vunpack.c.l.b16 %v3047
    %v6245 = vunpack.c.h.b16 %v3047
    %v6246 = vunpack.c.l.b16 %v3048
    %v6247 = vunpack.c.h.b16 %v3048
    %v6248 = vunpack.c.l.b16 %v3049
    %v6249 = vunpack.c.h.b16 %v3049
    %v6250 = vunpack.c.l.b16 %v3050
    %v6251 = vunpack.c.h.b16 %v3050
    %v6252 = vunpack.c.l.b16 %v3051
    %v6253 = vunpack.c.h.b16 %v3051
    %v6254 = vunpack.c.l.b16 %v3052
    %v6255 = vunpack.c.h.b16 %v3052
    %v6256 = vunpack.c.l.b16 %v3053
    %v6257 = vunpack.c.h.b16 %v3053
    %v6258 = vunpack.c.l.b16 %v3054
    %v6259 = vunpack.c.h.b16 %v3054
    %v6260 = vunpack.c.l.b16 %v3055
    %v6261 = vunpack.c.h.b16 %v3055
    %v6262 = vunpack.c.l.b16 %v3056
    %v6263 = vunpack.c.h.b16 %v3056
    %v6264 = vunpack.c.l.b16 %v3057
    %v6265 = vunpack.c.h.b16 %v3057
    %v6266 = vunpack.c.l.b16 %v3058
    %v6267 = vunpack.c.h.b16 %v3058
    %v6268 = vunpack.c.l.b16 %v3059
    %v6269 = vunpack.c.h.b16 %v3059
    %v6270 = vunpack.c.l.b16 %v3060
    %v6271 = vunpack.c.h.b16 %v3060
    %v6272 = vunpack.c.l.b16 %v3061
    %v6273 = vunpack.c.h.b16 %v3061
    %v6274 = vunpack.c.l.b16 %v3062
    %v6275 = vunpack.c.h.b16 %v3062
    %v6276 = vunpack.c.l.b16 %v3063
    %v6277 = vunpack.c.h.b16 %v3063
    %v6278 = vunpack.c.l.b16 %v3064
    %v6279 = vunpack.c.h.b16 %v3064
    %v6280 = vunpack.c.l.b16 %v3065
    %v6281 = vunpack.c.h.b16 %v3065
    %v6282 = vunpack.c.l.b16 %v3066
    %v6283 = vunpack.c.h.b16 %v3066
    %v6284 = vunpack.c.l.b16 %v3067
    %v6285 = vunpack.c.h.b16 %v3067
    %v6286 = vunpack.c.l.b16 %v3068
    %v6287 = vunpack.c.h.b16 %v3068
    %v6288 = vunpack.c.l.b16 %v3069
    %v6289 = vunpack.c.h.b16 %v3069
    %v6290 = vunpack.c.l.b16 %v3070
    %v6291 = vunpack.c.h.b16 %v3070
    %v6292 = vunpack.c.l.b16 %v3071
    %v6293 = vunpack.c.h.b16 %v3071
    %v6294 = vunpack.c.l.b16 %v3072
    %v6295 = vunpack.c.h.b16 %v3072
    %v6296 = vunpack.c.l.b16 %v3073
    %v6297 = vunpack.c.h.b16 %v3073
    %v6298 = vunpack.c.l.b16 %v3074
    %v6299 = vunpack.c.h.b16 %v3074
    %v6300 = vunpack.c.l.b16 %v3075
    %v6301 = vunpack.c.h.b16 %v3075
    %v6302 = vunpack.c.l.b16 %v3076
    %v6303 = vunpack.c.h.b16 %v3076
    %v6304 = vunpack.c.l.b16 %v3077
    %v6305 = vunpack.c.h.b16 %v3077
    %v6306 = vunpack.c.l.b16 %v3078
    %v6307 = vunpack.c.h.b16 %v3078
    %v6308 = vunpack.c.l.b16 %v3079
    %v6309 = vunpack.c.h.b16 %v3079
    %v6310 = vunpack.c.l.b16 %v3080
    %v6311 = vunpack.c.h.b16 %v3080
    %v6312 = vunpack.c.l.b16 %v3081
    %v6313 = vunpack.c.h.b16 %v3081
    %v6314 = vunpack.c.l.b16 %v3082
    %v6315 = vunpack.c.h.b16 %v3082
    %v6316 = vunpack.c.l.b16 %v3083
    %v6317 = vunpack.c.h.b16 %v3083
    %v6318 = vunpack.c.l.b16 %v3084
    %v6319 = vunpack.c.h.b16 %v3084
    %v6320 = vunpack.c.l.b16 %v3085
    %v6321 = vunpack.c.h.b16 %v3085
    %v6322 = vunpack.c.l.b16 %v3086
    %v6323 = vunpack.c.h.b16 %v3086
    %v6324 = vunpack.c.l.b16 %v3087
    %v6325 = vunpack.c.h.b16 %v3087
    %v6326 = vunpack.c.l.b16 %v3088
    %v6327 = vunpack.c.h.b16 %v3088
    %v6328 = vunpack.c.l.b16 %v3089
    %v6329 = vunpack.c.h.b16 %v3089
    %v6330 = vunpack.c.l.b16 %v3090
    %v6331 = vunpack.c.h.b16 %v3090
    %v6332 = vunpack.c.l.b16 %v3091
    %v6333 = vunpack.c.h.b16 %v3091
    %v6334 = vunpack.c.l.b16 %v3092
    %v6335 = vunpack.c.h.b16 %v3092
    %v6336 = vunpack.c.l.b16 %v3093
    %v6337 = vunpack.c.h.b16 %v3093
    %v6338 = vunpack.c.l.b16 %v3094
    %v6339 = vunpack.c.h.b16 %v3094
    %v6340 = vunpack.c.l.b16 %v3095
    %v6341 = vunpack.c.h.b16 %v3095
    %v6342 = vunpack.c.l.b16 %v3096
    %v6343 = vunpack.c.h.b16 %v3096
    %v6344 = vunpack.c.l.b16 %v3097
    %v6345 = vunpack.c.h.b16 %v3097
    %v6346 = vunpack.c.l.b16 %v3098
    %v6347 = vunpack.c.h.b16 %v3098
    %v6348 = vunpack.c.l.b16 %v3099
    %v6349 = vunpack.c.h.b16 %v3099
    %v6350 = vunpack.c.l.b16 %v3100
    %v6351 = vunpack.c.h.b16 %v3100
    %v6352 = vunpack.c.l.b16 %v3101
    %v6353 = vunpack.c.h.b16 %v3101
    %v6354 = vunpack.c.l.b16 %v3102
    %v6355 = vunpack.c.h.b16 %v3102
    %v6356 = vunpack.c.l.b16 %v3103
    %v6357 = vunpack.c.h.b16 %v3103
    %v6358 = vunpack.c.l.b16 %v3104
    %v6359 = vunpack.c.h.b16 %v3104
    %v6360 = vunpack.c.l.b16 %v3105
    %v6361 = vunpack.c.h.b16 %v3105
    %v6362 = vunpack.c.l.b16 %v3106
    %v6363 = vunpack.c.h.b16 %v3106
    %v6364 = vunpack.c.l.b16 %v3107
    %v6365 = vunpack.c.h.b16 %v3107
    %v6366 = vunpack.c.l.b16 %v3108
    %v6367 = vunpack.c.h.b16 %v3108
    %v6368 = vunpack.c.l.b16 %v3109
    %v6369 = vunpack.c.h.b16 %v3109
    %v6370 = vunpack.c.l.b16 %v3110
    %v6371 = vunpack.c.h.b16 %v3110
    %v6372 = vunpack.c.l.b16 %v3111
    %v6373 = vunpack.c.h.b16 %v3111
    %v6374 = vunpack.c.l.b16 %v3112
    %v6375 = vunpack.c.h.b16 %v3112
    %v6376 = vunpack.c.l.b16 %v3113
    %v6377 = vunpack.c.h.b16 %v3113
    %v6378 = vunpack.c.l.b16 %v3114
    %v6379 = vunpack.c.h.b16 %v3114
    %v6380 = vunpack.c.l.b16 %v3115
    %v6381 = vunpack.c.h.b16 %v3115
    %v6382 = vunpack.c.l.b16 %v3116
    %v6383 = vunpack.c.h.b16 %v3116
    %v6384 = vunpack.c.l.b16 %v3117
    %v6385 = vunpack.c.h.b16 %v3117
    %v6386 = vunpack.c.l.b16 %v3118
    %v6387 = vunpack.c.h.b16 %v3118
    %v6388 = vunpack.c.l.b16 %v3119
    %v6389 = vunpack.c.h.b16 %v3119
    %v6390 = vunpack.c.l.b16 %v3120
    %v6391 = vunpack.c.h.b16 %v3120
    %v6392 = vunpack.c.l.b16 %v3121
    %v6393 = vunpack.c.h.b16 %v3121
    %v6394 = vunpack.c.l.b16 %v3122
    %v6395 = vunpack.c.h.b16 %v3122
    %v6396 = vunpack.c.l.b16 %v3123
    %v6397 = vunpack.c.h.b16 %v3123
    %v6398 = vunpack.c.l.b16 %v3124
    %v6399 = vunpack.c.h.b16 %v3124
    %v6400 = vunpack.c.l.b16 %v3125
    %v6401 = vunpack.c.h.b16 %v3125
    %v6402 = vunpack.c.l.b16 %v3126
    %v6403 = vunpack.c.h.b16 %v3126
    %v6404 = vunpack.c.l.b16 %v3127
    %v6405 = vunpack.c.h.b16 %v3127
    %v6406 = vunpack.c.l.b16 %v3128
    %v6407 = vunpack.c.h.b16 %v3128
    %v6408 = vunpack.c.l.b16 %v3129
    %v6409 = vunpack.c.h.b16 %v3129
    %v6410 = vunpack.c.l.b16 %v3130
    %v6411 = vunpack.c.h.b16 %v3130
    %v6412 = vunpack.c.l.b16 %v3131
    %v6413 = vunpack.c.h.b16 %v3131
    %v6414 = vunpack.c.l.b16 %v3132
    %v6415 = vunpack.c.h.b16 %v3132
    %v6416 = vunpack.c.l.b16 %v3133
    %v6417 = vunpack.c.h.b16 %v3133
    %v6418 = vunpack.c.l.b16 %v3134
    %v6419 = vunpack.c.h.b16 %v3134
    %v6420 = vunpack.c.l.b16 %v3135
    %v6421 = vunpack.c.h.b16 %v3135
    %v6422 = vunpack.c.l.b16 %v3136
    %v6423 = vunpack.c.h.b16 %v3136
    %v6424 = vunpack.c.l.b16 %v3137
    %v6425 = vunpack.c.h.b16 %v3137
    %v6426 = vunpack.c.l.b16 %v3138
    %v6427 = vunpack.c.h.b16 %v3138
    %v6428 = vunpack.c.l.b16 %v3139
    %v6429 = vunpack.c.h.b16 %v3139
    %v6430 = vunpack.c.l.b16 %v3140
    %v6431 = vunpack.c.h.b16 %v3140
    %v6432 = vunpack.c.l.b16 %v3141
    %v6433 = vunpack.c.h.b16 %v3141
    %v6434 = vunpack.c.l.b16 %v3142
    %v6435 = vunpack.c.h.b16 %v3142
    %v6436 = vunpack.c.l.b16 %v3143
    %v6437 = vunpack.c.h.b16 %v3143
    %v6438 = vunpack.c.l.b16 %v3144
    %v6439 = vunpack.c.h.b16 %v3144
    %v6440 = vunpack.c.l.b16 %v3145
    %v6441 = vunpack.c.h.b16 %v3145
    %v6442 = vunpack.c.l.b16 %v3146
    %v6443 = vunpack.c.h.b16 %v3146
    %v6444 = vunpack.c.l.b16 %v3147
    %v6445 = vunpack.c.h.b16 %v3147
    %v6446 = vunpack.c.l.b16 %v3148
    %v6447 = vunpack.c.h.b16 %v3148
    %v6448 = vunpack.c.l.b16 %v3149
    %v6449 = vunpack.c.h.b16 %v3149
    %v6450 = vunpack.c.l.b16 %v3150
    %v6451 = vunpack.c.h.b16 %v3150
    %v6452 = vunpack.c.l.b16 %v3151
    %v6453 = vunpack.c.h.b16 %v3151
    %v6454 = vunpack.c.l.b16 %v3152
    %v6455 = vunpack.c.h.b16 %v3152
    %v6456 = vunpack.c.l.b16 %v3153
    %v6457 = vunpack.c.h.b16 %v3153
    %v6458 = vunpack.c.l.b16 %v3154
    %v6459 = vunpack.c.h.b16 %v3154
    %v6460 = vunpack.c.l.b16 %v3155
    %v6461 = vunpack.c.h.b16 %v3155
    %v6462 = vunpack.c.l.b16 %v3156
    %v6463 = vunpack.c.h.b16 %v3156
    %v6464 = vunpack.c.l.b16 %v3157
    %v6465 = vunpack.c.h.b16 %v3157
    %v6466 = vunpack.c.l.b16 %v3158
    %v6467 = vunpack.c.h.b16 %v3158
    %v6468 = vunpack.c.l.b16 %v3159
    %v6469 = vunpack.c.h.b16 %v3159
    %v6470 = vunpack.c.l.b16 %v3160
    %v6471 = vunpack.c.h.b16 %v3160
    %v6472 = vunpack.c.l.b16 %v3161
    %v6473 = vunpack.c.h.b16 %v3161
    %v6474 = vunpack.c.l.b16 %v3162
    %v6475 = vunpack.c.h.b16 %v3162
    %v6476 = vunpack.c.l.b16 %v3163
    %v6477 = vunpack.c.h.b16 %v3163
    %v6478 = vunpack.c.l.b16 %v3164
    %v6479 = vunpack.c.h.b16 %v3164
    %v6480 = vunpack.c.l.b16 %v3165
    %v6481 = vunpack.c.h.b16 %v3165
    %v6482 = vunpack.c.l.b16 %v3166
    %v6483 = vunpack.c.h.b16 %v3166
    %v6484 = vunpack.c.l.b16 %v3167
    %v6485 = vunpack.c.h.b16 %v3167
    %v6486 = vunpack.c.l.b16 %v3168
    %v6487 = vunpack.c.h.b16 %v3168
    %v6488 = vunpack.c.l.b16 %v3169
    %v6489 = vunpack.c.h.b16 %v3169
    %v6490 = vunpack.c.l.b16 %v3170
    %v6491 = vunpack.c.h.b16 %v3170
    %v6492 = vunpack.c.l.b16 %v3171
    %v6493 = vunpack.c.h.b16 %v3171
    %v6494 = vunpack.c.l.b16 %v3172
    %v6495 = vunpack.c.h.b16 %v3172
    %v6496 = vunpack.c.l.b16 %v3173
    %v6497 = vunpack.c.h.b16 %v3173
    %v6498 = vunpack.c.l.b16 %v3174
    %v6499 = vunpack.c.h.b16 %v3174
    %v6500 = vunpack.c.l.b16 %v3175
    %v6501 = vunpack.c.h.b16 %v3175
    %v6502 = vunpack.c.l.b16 %v3176
    %v6503 = vunpack.c.h.b16 %v3176
    %v6504 = vunpack.c.l.b16 %v3177
    %v6505 = vunpack.c.h.b16 %v3177
    %v6506 = vunpack.c.l.b16 %v3178
    %v6507 = vunpack.c.h.b16 %v3178
    %v6508 = vunpack.c.l.b16 %v3179
    %v6509 = vunpack.c.h.b16 %v3179
    %v6510 = vunpack.c.l.b16 %v3180
    %v6511 = vunpack.c.h.b16 %v3180
    %v6512 = vunpack.c.l.b16 %v3181
    %v6513 = vunpack.c.h.b16 %v3181
    %v6514 = vunpack.c.l.b16 %v3182
    %v6515 = vunpack.c.h.b16 %v3182
    %v6516 = vunpack.c.l.b16 %v3183
    %v6517 = vunpack.c.h.b16 %v3183
    %v6518 = vunpack.c.l.b16 %v3184
    %v6519 = vunpack.c.h.b16 %v3184
    %v6520 = vunpack.c.l.b16 %v3185
    %v6521 = vunpack.c.h.b16 %v3185
    %v6522 = vunpack.c.l.b16 %v3186
    %v6523 = vunpack.c.h.b16 %v3186
    %v6524 = vunpack.c.l.b16 %v3187
    %v6525 = vunpack.c.h.b16 %v3187
    %v6526 = vunpack.c.l.b16 %v3188
    %v6527 = vunpack.c.h.b16 %v3188
    %v6528 = vunpack.c.l.b16 %v3189
    %v6529 = vunpack.c.h.b16 %v3189
    %v6530 = vunpack.c.l.b16 %v3190
    %v6531 = vunpack.c.h.b16 %v3190
    %v6532 = vunpack.c.l.b16 %v3191
    %v6533 = vunpack.c.h.b16 %v3191
    %v6534 = vunpack.c.l.b16 %v3192
    %v6535 = vunpack.c.h.b16 %v3192
    %v6536 = vunpack.c.l.b16 %v3193
    %v6537 = vunpack.c.h.b16 %v3193
    %v6538 = vunpack.c.l.b16 %v3194
    %v6539 = vunpack.c.h.b16 %v3194
    %v6540 = vunpack.c.l.b16 %v3195
    %v6541 = vunpack.c.h.b16 %v3195
    %v6542 = vunpack.c.l.b16 %v3196
    %v6543 = vunpack.c.h.b16 %v3196
    %v6544 = vunpack.c.l.b16 %v3197
    %v6545 = vunpack.c.h.b16 %v3197
    %v6546 = vunpack.c.l.b16 %v3198
    %v6547 = vunpack.c.h.b16 %v3198
    %v6548 = vunpack.c.l.b16 %v3199
    %v6549 = vunpack.c.h.b16 %v3199
    %v6550 = vunpack.c.l.b16 %v3200
    %v6551 = vunpack.c.h.b16 %v3200
    %v6552 = vunpack.c.l.b16 %v3201
    %v6553 = vunpack.c.h.b16 %v3201
    %v6554 = vunpack.c.l.b16 %v3202
    %v6555 = vunpack.c.h.b16 %v3202
    %v6556 = vunpack.c.l.b16 %v3203
    %v6557 = vunpack.c.h.b16 %v3203
    %v6558 = vunpack.c.l.b16 %v3204
    %v6559 = vunpack.c.h.b16 %v3204
    %v6560 = vunpack.c.l.b16 %v3205
    %v6561 = vunpack.c.h.b16 %v3205
    %v6562 = vunpack.c.l.b16 %v3206
    %v6563 = vunpack.c.h.b16 %v3206
    %v6564 = vunpack.c.l.b16 %v3207
    %v6565 = vunpack.c.h.b16 %v3207
    %v6566 = vunpack.c.l.b16 %v3208
    %v6567 = vunpack.c.h.b16 %v3208
    %v6568 = vunpack.c.l.b16 %v3209
    %v6569 = vunpack.c.h.b16 %v3209
    %v6570 = vunpack.c.l.b16 %v3210
    %v6571 = vunpack.c.h.b16 %v3210
    %v6572 = vunpack.c.l.b16 %v3211
    %v6573 = vunpack.c.h.b16 %v3211
    %v6574 = vunpack.c.l.b16 %v3212
    %v6575 = vunpack.c.h.b16 %v3212
    %v6576 = vunpack.c.l.b16 %v3213
    %v6577 = vunpack.c.h.b16 %v3213
    %v6578 = vunpack.c.l.b16 %v3214
    %v6579 = vunpack.c.h.b16 %v3214
    %v6580 = vunpack.c.l.b16 %v3215
    %v6581 = vunpack.c.h.b16 %v3215
    %v6582 = vunpack.c.l.b16 %v3216
    %v6583 = vunpack.c.h.b16 %v3216
    %v6584 = vunpack.c.l.b16 %v3217
    %v6585 = vunpack.c.h.b16 %v3217
    %v6586 = vunpack.c.l.b16 %v3218
    %v6587 = vunpack.c.h.b16 %v3218
    %v6588 = vunpack.c.l.b16 %v3219
    %v6589 = vunpack.c.h.b16 %v3219
    %v6590 = vunpack.c.l.b16 %v3220
    %v6591 = vunpack.c.h.b16 %v3220
    %v6592 = vunpack.c.l.b16 %v3221
    %v6593 = vunpack.c.h.b16 %v3221
    %v6594 = vunpack.c.l.b16 %v3222
    %v6595 = vunpack.c.h.b16 %v3222
    %v6596 = vunpack.c.l.b16 %v3223
    %v6597 = vunpack.c.h.b16 %v3223
    %v6598 = vunpack.c.l.b16 %v3224
    %v6599 = vunpack.c.h.b16 %v3224
    %v6600 = vunpack.c.l.b16 %v3225
    %v6601 = vunpack.c.h.b16 %v3225
    %v6602 = vunpack.c.l.b16 %v3226
    %v6603 = vunpack.c.h.b16 %v3226
    %v6604 = vunpack.c.l.b16 %v3227
    %v6605 = vunpack.c.h.b16 %v3227
    %v6606 = vunpack.c.l.b16 %v3228
    %v6607 = vunpack.c.h.b16 %v3228
    %v6608 = vunpack.c.l.b16 %v3229
    %v6609 = vunpack.c.h.b16 %v3229
    %v6610 = vunpack.c.l.b16 %v3230
    %v6611 = vunpack.c.h.b16 %v3230
    %v6612 = vunpack.c.l.b16 %v3231
    %v6613 = vunpack.c.h.b16 %v3231
    %v6614 = vunpack.c.l.b16 %v3232
    %v6615 = vunpack.c.h.b16 %v3232
    %v6616 = vunpack.c.l.b16 %v3233
    %v6617 = vunpack.c.h.b16 %v3233
    %v6618 = vunpack.c.l.b16 %v3234
    %v6619 = vunpack.c.h.b16 %v3234
    %v6620 = vunpack.c.l.b16 %v3235
    %v6621 = vunpack.c.h.b16 %v3235
    %v6622 = vunpack.c.l.b16 %v3236
    %v6623 = vunpack.c.h.b16 %v3236
    %v6624 = vunpack.c.l.b16 %v3237
    %v6625 = vunpack.c.h.b16 %v3237
    %v6626 = vunpack.c.l.b16 %v3238
    %v6627 = vunpack.c.h.b16 %v3238
    %v6628 = vunpack.c.l.b16 %v3239
    %v6629 = vunpack.c.h.b16 %v3239
    %v6630 = vunpack.c.l.b16 %v3240
    %v6631 = vunpack.c.h.b16 %v3240
    %v6632 = vunpack.c.l.b16 %v3241
    %v6633 = vunpack.c.h.b16 %v3241
    %v6634 = vunpack.c.l.b16 %v3242
    %v6635 = vunpack.c.h.b16 %v3242
    %v6636 = vunpack.c.l.b16 %v3243
    %v6637 = vunpack.c.h.b16 %v3243
    %v6638 = vunpack.c.l.b16 %v3244
    %v6639 = vunpack.c.h.b16 %v3244
    %v6640 = vunpack.c.l.b16 %v3245
    %v6641 = vunpack.c.h.b16 %v3245
    %v6642 = vunpack.c.l.b16 %v3246
    %v6643 = vunpack.c.h.b16 %v3246
    %v6644 = vunpack.c.l.b16 %v3247
    %v6645 = vunpack.c.h.b16 %v3247
    %v6646 = vunpack.c.l.b16 %v3248
    %v6647 = vunpack.c.h.b16 %v3248
    %v6648 = vunpack.c.l.b16 %v3249
    %v6649 = vunpack.c.h.b16 %v3249
    %v6650 = vunpack.c.l.b16 %v3250
    %v6651 = vunpack.c.h.b16 %v3250
    %v6652 = vunpack.c.l.b16 %v3251
    %v6653 = vunpack.c.h.b16 %v3251
    %v6654 = vunpack.c.l.b16 %v3252
    %v6655 = vunpack.c.h.b16 %v3252
    %v6656 = vunpack.c.l.b16 %v3253
    %v6657 = vunpack.c.h.b16 %v3253
    %v6658 = vunpack.c.l.b16 %v3254
    %v6659 = vunpack.c.h.b16 %v3254
    %v6660 = vunpack.c.l.b16 %v3255
    %v6661 = vunpack.c.h.b16 %v3255
    %v6662 = vunpack.c.l.b16 %v3256
    %v6663 = vunpack.c.h.b16 %v3256
    %v6664 = vunpack.c.l.b16 %v3257
    %v6665 = vunpack.c.h.b16 %v3257
    %v6666 = vunpack.c.l.b16 %v3258
    %v6667 = vunpack.c.h.b16 %v3258
    %v6668 = vunpack.c.l.b16 %v3259
    %v6669 = vunpack.c.h.b16 %v3259
    %v6670 = vunpack.c.l.b16 %v3260
    %v6671 = vunpack.c.h.b16 %v3260
    %v6672 = vunpack.c.l.b16 %v3261
    %v6673 = vunpack.c.h.b16 %v3261
    %v6674 = vunpack.c.l.b16 %v3262
    %v6675 = vunpack.c.h.b16 %v3262
    %v6676 = vunpack.c.l.b16 %v3263
    %v6677 = vunpack.c.h.b16 %v3263
    %v6678 = vunpack.c.l.b16 %v3264
    %v6679 = vunpack.c.h.b16 %v3264
    %v6680 = vunpack.c.l.b16 %v3265
    %v6681 = vunpack.c.h.b16 %v3265
    %v6682 = vunpack.c.l.b16 %v3266
    %v6683 = vunpack.c.h.b16 %v3266
    %v6684 = vunpack.c.l.b16 %v3267
    %v6685 = vunpack.c.h.b16 %v3267
    %v6686 = vunpack.c.l.b16 %v3268
    %v6687 = vunpack.c.h.b16 %v3268
    %v6688 = vunpack.c.l.b16 %v3269
    %v6689 = vunpack.c.h.b16 %v3269
    %v6690 = vunpack.c.l.b16 %v3270
    %v6691 = vunpack.c.h.b16 %v3270
    %v6692 = vunpack.c.l.b16 %v3271
    %v6693 = vunpack.c.h.b16 %v3271
    %v6694 = vunpack.c.l.b16 %v3272
    %v6695 = vunpack.c.h.b16 %v3272
    %v6696 = vunpack.c.l.b16 %v3273
    %v6697 = vunpack.c.h.b16 %v3273
    %v6698 = vunpack.c.l.b16 %v3274
    %v6699 = vunpack.c.h.b16 %v3274
    %v6700 = vunpack.c.l.b16 %v3275
    %v6701 = vunpack.c.h.b16 %v3275
    %v6702 = vunpack.c.l.b16 %v3276
    %v6703 = vunpack.c.h.b16 %v3276
    %v6704 = vunpack.c.l.b16 %v3277
    %v6705 = vunpack.c.h.b16 %v3277
    %v6706 = vunpack.c.l.b16 %v3278
    %v6707 = vunpack.c.h.b16 %v3278
    %v6708 = vunpack.c.l.b16 %v3279
    %v6709 = vunpack.c.h.b16 %v3279
    %v6710 = vunpack.c.l.b16 %v3280
    %v6711 = vunpack.c.h.b16 %v3280
    %v6712 = vunpack.c.l.b16 %v3281
    %v6713 = vunpack.c.h.b16 %v3281
    %v6714 = vunpack.c.l.b16 %v3282
    %v6715 = vunpack.c.h.b16 %v3282
    %v6716 = vunpack.c.l.b16 %v3283
    %v6717 = vunpack.c.h.b16 %v3283
    %v6718 = vunpack.c.l.b16 %v3284
    %v6719 = vunpack.c.h.b16 %v3284
    %v6720 = vunpack.c.l.b16 %v3285
    %v6721 = vunpack.c.h.b16 %v3285
    %v6722 = vunpack.c.l.b16 %v3286
    %v6723 = vunpack.c.h.b16 %v3286
    %v6724 = vunpack.c.l.b16 %v3287
    %v6725 = vunpack.c.h.b16 %v3287
    %v6726 = vunpack.c.l.b16 %v3288
    %v6727 = vunpack.c.h.b16 %v3288
    %v6728 = vunpack.c.l.b16 %v3289
    %v6729 = vunpack.c.h.b16 %v3289
    %v6730 = vunpack.c.l.b16 %v3290
    %v6731 = vunpack.c.h.b16 %v3290
    %v6732 = vunpack.c.l.b16 %v3291
    %v6733 = vunpack.c.h.b16 %v3291
    %v6734 = vunpack.c.l.b16 %v3292
    %v6735 = vunpack.c.h.b16 %v3292
    %v6736 = vunpack.c.l.b16 %v3293
    %v6737 = vunpack.c.h.b16 %v3293
    %v6738 = vunpack.c.l.b16 %v3294
    %v6739 = vunpack.c.h.b16 %v3294
    %v6740 = vunpack.c.l.b16 %v3295
    %v6741 = vunpack.c.h.b16 %v3295
    %v6742 = vunpack.c.l.b16 %v3296
    %v6743 = vunpack.c.h.b16 %v3296
    %v6744 = vunpack.c.l.b16 %v3297
    %v6745 = vunpack.c.h.b16 %v3297
    %v6746 = vunpack.c.l.b16 %v3298
    %v6747 = vunpack.c.h.b16 %v3298
    %v6748 = vunpack.c.l.b16 %v3299
    %v6749 = vunpack.c.h.b16 %v3299
    %v6750 = vunpack.c.l.b16 %v3300
    %v6751 = vunpack.c.h.b16 %v3300
    %v6752 = vunpack.c.l.b16 %v3301
    %v6753 = vunpack.c.h.b16 %v3301
    %v6754 = vunpack.c.l.b16 %v3302
    %v6755 = vunpack.c.h.b16 %v3302
    %v6756 = vunpack.c.l.b16 %v3303
    %v6757 = vunpack.c.h.b16 %v3303
    %v6758 = vunpack.c.l.b16 %v3304
    %v6759 = vunpack.c.h.b16 %v3304
    %v6760 = vunpack.c.l.b16 %v3305
    %v6761 = vunpack.c.h.b16 %v3305
    %v6762 = vunpack.c.l.b16 %v3306
    %v6763 = vunpack.c.h.b16 %v3306
    %v6764 = vunpack.c.l.b16 %v3307
    %v6765 = vunpack.c.h.b16 %v3307
    %v6766 = vunpack.c.l.b16 %v3308
    %v6767 = vunpack.c.h.b16 %v3308
    %v6768 = vunpack.c.l.b16 %v3309
    %v6769 = vunpack.c.h.b16 %v3309
    %v6770 = vunpack.c.l.b16 %v3310
    %v6771 = vunpack.c.h.b16 %v3310
    %v6772 = vunpack.c.l.b16 %v3311
    %v6773 = vunpack.c.h.b16 %v3311
    %v6774 = vunpack.c.l.b16 %v3312
    %v6775 = vunpack.c.h.b16 %v3312
    %v6776 = vunpack.c.l.b16 %v3313
    %v6777 = vunpack.c.h.b16 %v3313
    %v6778 = vunpack.c.l.b16 %v3314
    %v6779 = vunpack.c.h.b16 %v3314
    %v6780 = vunpack.c.l.b16 %v3315
    %v6781 = vunpack.c.h.b16 %v3315
    %v6782 = vunpack.c.l.b16 %v3316
    %v6783 = vunpack.c.h.b16 %v3316
    %v6784 = vunpack.c.l.b16 %v3317
    %v6785 = vunpack.c.h.b16 %v3317
    %v6786 = vunpack.c.l.b16 %v3318
    %v6787 = vunpack.c.h.b16 %v3318
    %v6788 = vunpack.c.l.b16 %v3319
    %v6789 = vunpack.c.h.b16 %v3319
    %v6790 = vunpack.c.l.b16 %v3320
    %v6791 = vunpack.c.h.b16 %v3320
    %v6792 = vunpack.c.l.b16 %v3321
    %v6793 = vunpack.c.h.b16 %v3321
    %v6794 = vunpack.c.l.b16 %v3322
    %v6795 = vunpack.c.h.b16 %v3322
    %v6796 = vunpack.c.l.b16 %v3323
    %v6797 = vunpack.c.h.b16 %v3323
    %v6798 = vunpack.c.l.b16 %v3324
    %v6799 = vunpack.c.h.b16 %v3324
    %v6800 = vunpack.c.l.b16 %v3325
    %v6801 = vunpack.c.h.b16 %v3325
    %v6802 = vunpack.c.l.b16 %v3326
    %v6803 = vunpack.c.h.b16 %v3326
    %v6804 = vunpack.c.l.b16 %v3327
    %v6805 = vunpack.c.h.b16 %v3327
    %v6806 = vunpack.c.l.b16 %v3328
    %v6807 = vunpack.c.h.b16 %v3328
    %v6808 = vunpack.c.l.b16 %v3329
    %v6809 = vunpack.c.h.b16 %v3329
    %v6810 = vunpack.c.l.b16 %v3330
    %v6811 = vunpack.c.h.b16 %v3330
    %v6812 = vunpack.c.l.b16 %v3331
    %v6813 = vunpack.c.h.b16 %v3331
    %v6814 = vunpack.c.l.b16 %v3332
    %v6815 = vunpack.c.h.b16 %v3332
    %v6816 = vunpack.c.l.b16 %v3333
    %v6817 = vunpack.c.h.b16 %v3333
    %v6818 = vunpack.c.l.b16 %v3334
    %v6819 = vunpack.c.h.b16 %v3334
    %v6820 = vunpack.c.l.b16 %v3335
    %v6821 = vunpack.c.h.b16 %v3335
    %v6822 = vunpack.c.l.b16 %v3336
    %v6823 = vunpack.c.h.b16 %v3336
    %v6824 = vunpack.c.l.b16 %v3337
    %v6825 = vunpack.c.h.b16 %v3337
    %v6826 = vunpack.c.l.b16 %v3338
    %v6827 = vunpack.c.h.b16 %v3338
    %v6828 = vunpack.c.l.b16 %v3339
    %v6829 = vunpack.c.h.b16 %v3339
    %v6830 = vunpack.c.l.b16 %v3340
    %v6831 = vunpack.c.h.b16 %v3340
    %v6832 = vunpack.c.l.b16 %v3341
    %v6833 = vunpack.c.h.b16 %v3341
    %v6834 = vunpack.c.l.b16 %v3342
    %v6835 = vunpack.c.h.b16 %v3342
    %v6836 = vunpack.c.l.b16 %v3343
    %v6837 = vunpack.c.h.b16 %v3343
    %v6838 = vunpack.c.l.b16 %v3344
    %v6839 = vunpack.c.h.b16 %v3344
    %v6840 = vunpack.c.l.b16 %v3345
    %v6841 = vunpack.c.h.b16 %v3345
    %v6842 = vunpack.c.l.b16 %v3346
    %v6843 = vunpack.c.h.b16 %v3346
    %v6844 = vunpack.c.l.b16 %v3347
    %v6845 = vunpack.c.h.b16 %v3347
    %v6846 = vunpack.c.l.b16 %v3348
    %v6847 = vunpack.c.h.b16 %v3348
    %v6848 = vunpack.c.l.b16 %v3349
    %v6849 = vunpack.c.h.b16 %v3349
    %v6850 = vunpack.c.l.b16 %v3350
    %v6851 = vunpack.c.h.b16 %v3350
    %v6852 = vunpack.c.l.b16 %v3351
    %v6853 = vunpack.c.h.b16 %v3351
    %v6854 = vunpack.c.l.b16 %v3352
    %v6855 = vunpack.c.h.b16 %v3352
    %v6856 = vunpack.c.l.b16 %v3353
    %v6857 = vunpack.c.h.b16 %v3353
    %v6858 = vunpack.c.l.b16 %v3354
    %v6859 = vunpack.c.h.b16 %v3354
    %v6860 = vunpack.c.l.b16 %v3355
    %v6861 = vunpack.c.h.b16 %v3355
    %v6862 = vunpack.c.l.b16 %v3356
    %v6863 = vunpack.c.h.b16 %v3356
    %v6864 = vunpack.c.l.b16 %v3357
    %v6865 = vunpack.c.h.b16 %v3357
    %v6866 = vunpack.c.l.b16 %v3358
    %v6867 = vunpack.c.h.b16 %v3358
    %v6868 = vunpack.c.l.b16 %v3359
    %v6869 = vunpack.c.h.b16 %v3359
    %v6870 = vunpack.c.l.b16 %v3360
    %v6871 = vunpack.c.h.b16 %v3360
    %v6872 = vunpack.c.l.b16 %v3361
    %v6873 = vunpack.c.h.b16 %v3361
    %v6874 = vunpack.c.l.b16 %v3362
    %v6875 = vunpack.c.h.b16 %v3362
    %v6876 = vunpack.c.l.b16 %v3363
    %v6877 = vunpack.c.h.b16 %v3363
    %v6878 = vunpack.c.l.b16 %v3364
    %v6879 = vunpack.c.h.b16 %v3364
    %v6880 = vunpack.c.l.b16 %v3365
    %v6881 = vunpack.c.h.b16 %v3365
    %v6882 = vunpack.c.l.b16 %v3366
    %v6883 = vunpack.c.h.b16 %v3366
    %v6884 = vunpack.c.l.b16 %v3367
    %v6885 = vunpack.c.h.b16 %v3367
    %v6886 = vunpack.c.l.b16 %v3368
    %v6887 = vunpack.c.h.b16 %v3368
    %v6888 = vunpack.c.l.b16 %v3369
    %v6889 = vunpack.c.h.b16 %v3369
    %v6890 = vunpack.c.l.b16 %v3370
    %v6891 = vunpack.c.h.b16 %v3370
    %v6892 = vunpack.c.l.b16 %v3371
    %v6893 = vunpack.c.h.b16 %v3371
    %v6894 = vunpack.c.l.b16 %v3372
    %v6895 = vunpack.c.h.b16 %v3372
    %v6896 = vunpack.c.l.b16 %v3373
    %v6897 = vunpack.c.h.b16 %v3373
    %v6898 = vunpack.c.l.b16 %v3374
    %v6899 = vunpack.c.h.b16 %v3374
    %v6900 = vunpack.c.l.b16 %v3375
    %v6901 = vunpack.c.h.b16 %v3375
    %v6902 = vunpack.c.l.b16 %v3376
    %v6903 = vunpack.c.h.b16 %v3376
    %v6904 = vunpack.c.l.b16 %v3377
    %v6905 = vunpack.c.h.b16 %v3377
    %v6906 = vunpack.c.l.b16 %v3378
    %v6907 = vunpack.c.h.b16 %v3378
    %v6908 = vunpack.c.l.b16 %v3379
    %v6909 = vunpack.c.h.b16 %v3379
    %v6910 = vunpack.c.l.b16 %v3380
    %v6911 = vunpack.c.h.b16 %v3380
    %v6912 = vunpack.c.l.b16 %v3381
    %v6913 = vunpack.c.h.b16 %v3381
    %v6914 = vunpack.c.l.b16 %v3382
    %v6915 = vunpack.c.h.b16 %v3382
    %v6916 = vunpack.c.l.b16 %v3383
    %v6917 = vunpack.c.h.b16 %v3383
    %v6918 = vunpack.c.l.b16 %v3384
    %v6919 = vunpack.c.h.b16 %v3384
    %v6920 = vunpack.c.l.b16 %v3385
    %v6921 = vunpack.c.h.b16 %v3385
    %v6922 = vunpack.c.l.b16 %v3386
    %v6923 = vunpack.c.h.b16 %v3386
    %v6924 = vunpack.c.l.b16 %v3387
    %v6925 = vunpack.c.h.b16 %v3387
    %v6926 = vunpack.c.l.b16 %v3388
    %v6927 = vunpack.c.h.b16 %v3388
    %v6928 = vunpack.c.l.b16 %v3389
    %v6929 = vunpack.c.h.b16 %v3389
    %v6930 = vunpack.c.l.b16 %v3390
    %v6931 = vunpack.c.h.b16 %v3390
    %v6932 = vunpack.c.l.b16 %v3391
    %v6933 = vunpack.c.h.b16 %v3391
    %v6934 = vunpack.c.l.b16 %v3392
    %v6935 = vunpack.c.h.b16 %v3392
    %v6936 = vunpack.c.l.b16 %v3393
    %v6937 = vunpack.c.h.b16 %v3393
    %v6938 = vunpack.c.l.b16 %v3394
    %v6939 = vunpack.c.h.b16 %v3394
    %v6940 = vunpack.c.l.b16 %v3395
    %v6941 = vunpack.c.h.b16 %v3395
    %v6942 = vunpack.c.l.b16 %v3396
    %v6943 = vunpack.c.h.b16 %v3396
    %v6944 = vunpack.c.l.b16 %v3397
    %v6945 = vunpack.c.h.b16 %v3397
    %v6946 = vunpack.c.l.b16 %v3398
    %v6947 = vunpack.c.h.b16 %v3398
    %v6948 = vunpack.c.l.b16 %v3399
    %v6949 = vunpack.c.h.b16 %v3399
    %v6950 = vunpack.c.l.b16 %v3400
    %v6951 = vunpack.c.h.b16 %v3400
    %v6952 = vunpack.c.l.b16 %v3401
    %v6953 = vunpack.c.h.b16 %v3401
    %v6954 = vunpack.c.l.b16 %v3402
    %v6955 = vunpack.c.h.b16 %v3402
    %v6956 = vunpack.c.l.b16 %v3403
    %v6957 = vunpack.c.h.b16 %v3403
    %v6958 = vunpack.c.l.b16 %v3404
    %v6959 = vunpack.c.h.b16 %v3404
    %v6960 = vunpack.c.l.b16 %v3405
    %v6961 = vunpack.c.h.b16 %v3405
    %v6962 = vunpack.c.l.b16 %v3406
    %v6963 = vunpack.c.h.b16 %v3406
    %v6964 = vunpack.c.l.b16 %v3407
    %v6965 = vunpack.c.h.b16 %v3407
    %v6966 = vunpack.c.l.b16 %v3408
    %v6967 = vunpack.c.h.b16 %v3408
    %v6968 = vunpack.c.l.b16 %v3409
    %v6969 = vunpack.c.h.b16 %v3409
    %v6970 = vunpack.c.l.b16 %v3410
    %v6971 = vunpack.c.h.b16 %v3410
    %v6972 = vunpack.c.l.b16 %v3411
    %v6973 = vunpack.c.h.b16 %v3411
    %v6974 = vunpack.c.l.b16 %v3412
    %v6975 = vunpack.c.h.b16 %v3412
    %v6976 = vunpack.c.l.b16 %v3413
    %v6977 = vunpack.c.h.b16 %v3413
    %v6978 = vunpack.c.l.b16 %v3414
    %v6979 = vunpack.c.h.b16 %v3414
    %v6980 = vunpack.c.l.b16 %v3415
    %v6981 = vunpack.c.h.b16 %v3415
    %v6982 = vunpack.c.l.b16 %v3416
    %v6983 = vunpack.c.h.b16 %v3416
    %v6984 = vunpack.c.l.b16 %v3417
    %v6985 = vunpack.c.h.b16 %v3417
    %v6986 = vunpack.c.l.b16 %v3418
    %v6987 = vunpack.c.h.b16 %v3418
    %v6988 = vunpack.c.l.b16 %v3419
    %v6989 = vunpack.c.h.b16 %v3419
    %v6990 = vunpack.c.l.b16 %v3420
    %v6991 = vunpack.c.h.b16 %v3420
    %v6992 = vunpack.c.l.b16 %v3421
    %v6993 = vunpack.c.h.b16 %v3421
    %v6994 = vunpack.c.l.b16 %v3422
    %v6995 = vunpack.c.h.b16 %v3422
    %v6996 = vunpack.c.l.b16 %v3423
    %v6997 = vunpack.c.h.b16 %v3423
    %v6998 = vunpack.c.l.b16 %v3424
    %v6999 = vunpack.c.h.b16 %v3424
    %v7000 = vunpack.c.l.b16 %v3425
    %v7001 = vunpack.c.h.b16 %v3425
    %v7002 = vunpack.c.l.b16 %v3426
    %v7003 = vunpack.c.h.b16 %v3426
    %v7004 = vunpack.c.l.b16 %v3427
    %v7005 = vunpack.c.h.b16 %v3427
    %v7006 = vunpack.c.l.b16 %v3428
    %v7007 = vunpack.c.h.b16 %v3428
    %v7008 = vunpack.c.l.b16 %v3429
    %v7009 = vunpack.c.h.b16 %v3429
    %v7010 = vunpack.c.l.b16 %v3430
    %v7011 = vunpack.c.h.b16 %v3430
    %v7012 = vunpack.c.l.b16 %v3431
    %v7013 = vunpack.c.h.b16 %v3431
    %v7014 = vunpack.c.l.b16 %v3432
    %v7015 = vunpack.c.h.b16 %v3432
    %v7016 = vunpack.c.l.b16 %v3433
    %v7017 = vunpack.c.h.b16 %v3433
    %v7018 = vunpack.c.l.b16 %v3434
    %v7019 = vunpack.c.h.b16 %v3434
    %v7020 = vunpack.c.l.b16 %v3435
    %v7021 = vunpack.c.h.b16 %v3435
    %v7022 = vunpack.c.l.b16 %v3436
    %v7023 = vunpack.c.h.b16 %v3436
    %v7024 = vunpack.c.l.b16 %v3437
    %v7025 = vunpack.c.h.b16 %v3437
    %v7026 = vunpack.c.l.b16 %v3438
    %v7027 = vunpack.c.h.b16 %v3438
    %v7028 = vunpack.c.l.b16 %v3439
    %v7029 = vunpack.c.h.b16 %v3439
    %v7030 = vunpack.c.l.b16 %v3440
    %v7031 = vunpack.c.h.b16 %v3440
    %v7032 = vunpack.c.l.b16 %v3441
    %v7033 = vunpack.c.h.b16 %v3441
    %v7034 = vunpack.c.l.b16 %v3442
    %v7035 = vunpack.c.h.b16 %v3442
    %v7036 = vunpack.c.l.b16 %v3443
    %v7037 = vunpack.c.h.b16 %v3443
    %v7038 = vunpack.c.l.b16 %v3444
    %v7039 = vunpack.c.h.b16 %v3444
    %v7040 = vunpack.c.l.b16 %v3445
    %v7041 = vunpack.c.h.b16 %v3445
    %v7042 = vunpack.c.l.b16 %v3446
    %v7043 = vunpack.c.h.b16 %v3446
    %v7044 = vunpack.c.l.b16 %v3447
    %v7045 = vunpack.c.h.b16 %v3447
    %v7046 = vunpack.c.l.b16 %v3448
    %v7047 = vunpack.c.h.b16 %v3448
    %v7048 = vunpack.c.l.b16 %v3449
    %v7049 = vunpack.c.h.b16 %v3449
    %v7050 = vunpack.c.l.b16 %v3450
    %v7051 = vunpack.c.h.b16 %v3450
    %v7052 = vunpack.c.l.b16 %v3451
    %v7053 = vunpack.c.h.b16 %v3451
    %v7054 = vunpack.c.l.b16 %v3452
    %v7055 = vunpack.c.h.b16 %v3452
    %v7056 = vunpack.c.l.b16 %v3453
    %v7057 = vunpack.c.h.b16 %v3453
    %v7058 = vunpack.c.l.b16 %v3454
    %v7059 = vunpack.c.h.b16 %v3454
    %v7060 = vunpack.c.l.b16 %v3455
    %v7061 = vunpack.c.h.b16 %v3455
    %v7062 = vunpack.c.l.b16 %v3456
    %v7063 = vunpack.c.h.b16 %v3456
    %v7064 = vunpack.c.l.b16 %v3457
    %v7065 = vunpack.c.h.b16 %v3457
    %v7066 = vunpack.c.l.b16 %v3458
    %v7067 = vunpack.c.h.b16 %v3458
    %v7068 = vunpack.c.l.b16 %v3459
    %v7069 = vunpack.c.h.b16 %v3459
    %v7070 = vunpack.c.l.b16 %v3460
    %v7071 = vunpack.c.h.b16 %v3460
    %v7072 = vunpack.c.l.b16 %v3461
    %v7073 = vunpack.c.h.b16 %v3461
    %v7074 = vunpack.c.l.b16 %v3462
    %v7075 = vunpack.c.h.b16 %v3462
    %v7076 = vunpack.c.l.b16 %v3463
    %v7077 = vunpack.c.h.b16 %v3463
    %v7078 = vunpack.c.l.b16 %v3464
    %v7079 = vunpack.c.h.b16 %v3464
    %v7080 = vunpack.c.l.b16 %v3465
    %v7081 = vunpack.c.h.b16 %v3465
    %v7082 = vunpack.c.l.b16 %v3466
    %v7083 = vunpack.c.h.b16 %v3466
    %v7084 = vunpack.c.l.b16 %v3467
    %v7085 = vunpack.c.h.b16 %v3467
    %v7086 = vunpack.c.l.b16 %v3468
    %v7087 = vunpack.c.h.b16 %v3468
    %v7088 = vunpack.c.l.b16 %v3469
    %v7089 = vunpack.c.h.b16 %v3469
    %v7090 = vunpack.c.l.b16 %v3470
    %v7091 = vunpack.c.h.b16 %v3470
    %v7092 = vunpack.c.l.b16 %v3471
    %v7093 = vunpack.c.h.b16 %v3471
    %v7094 = vunpack.c.l.b16 %v3472
    %v7095 = vunpack.c.h.b16 %v3472
    %v7096 = vunpack.c.l.b16 %v3473
    %v7097 = vunpack.c.h.b16 %v3473
    %v7098 = vunpack.c.l.b16 %v3474
    %v7099 = vunpack.c.h.b16 %v3474
    %v7100 = vunpack.c.l.b16 %v3475
    %v7101 = vunpack.c.h.b16 %v3475
    %v7102 = vunpack.c.l.b16 %v3476
    %v7103 = vunpack.c.h.b16 %v3476
    %v7104 = vunpack.c.l.b16 %v3477
    %v7105 = vunpack.c.h.b16 %v3477
    %v7106 = vunpack.c.l.b16 %v3478
    %v7107 = vunpack.c.h.b16 %v3478
    %v7108 = vunpack.c.l.b16 %v3479
    %v7109 = vunpack.c.h.b16 %v3479
    %v7110 = vunpack.c.l.b16 %v3480
    %v7111 = vunpack.c.h.b16 %v3480
    %v7112 = vunpack.c.l.b16 %v3481
    %v7113 = vunpack.c.h.b16 %v3481
    %v7114 = vpack.c.b16 %v4720, %v4714
    %v7115 = vpack.c.b16 %v4721, %v4715
    %v7116 = vpack.c.b16 %v4722, %v4716
    %v7117 = vpack.c.b16 %v4723, %v4717
    %v7118 = vpack.c.b16 %v4724, %v4718
    %v7119 = vpack.c.b16 %v4725, %v4719
    %v7120 = vpack.c.b16 %v4732, %v4726
    %v7121 = vpack.c.b16 %v4733, %v4727
    %v7122 = vpack.c.b16 %v4734, %v4728
    %v7123 = vpack.c.b16 %v4735, %v4729
    %v7124 = vpack.c.b16 %v4736, %v4730
    %v7125 = vpack.c.b16 %v4737, %v4731
    %v7126 = vpack.c.b16 %v4744, %v4738
    %v7127 = vpack.c.b16 %v4745, %v4739
    %v7128 = vpack.c.b16 %v4746, %v4740
    %v7129 = vpack.c.b16 %v4747, %v4741
    %v7130 = vpack.c.b16 %v4748, %v4742
    %v7131 = vpack.c.b16 %v4749, %v4743
    %v7132 = vpack.c.b16 %v4756, %v4750
    %v7133 = vpack.c.b16 %v4757, %v4751
    %v7134 = vpack.c.b16 %v4758, %v4752
    %v7135 = vpack.c.b16 %v4759, %v4753
    %v7136 = vpack.c.b16 %v4760, %v4754
    %v7137 = vpack.c.b16 %v4761, %v4755
    %v7138 = vpack.c.b16 %v4768, %v4762
    %v7139 = vpack.c.b16 %v4769, %v4763
    %v7140 = vpack.c.b16 %v4770, %v4764
    %v7141 = vpack.c.b16 %v4771, %v4765
    %v7142 = vpack.c.b16 %v4772, %v4766
    %v7143 = vpack.c.b16 %v4773, %v4767
    %v7144 = vpack.c.b16 %v4780, %v4774
    %v7145 = vpack.c.b16 %v4781, %v4775
    %v7146 = vpack.c.b16 %v4782, %v4776
    %v7147 = vpack.c.b16 %v4783, %v4777
    %v7148 = vpack.c.b16 %v4784, %v4778
    %v7149 = vpack.c.b16 %v4785, %v4779
    %v7150 = vpack.c.b16 %v4792, %v4786
    %v7151 = vpack.c.b16 %v4793, %v4787
    %v7152 = vpack.c.b16 %v4794, %v4788
    %v7153 = vpack.c.b16 %v4795, %v4789
    %v7154 = vpack.c.b16 %v4796, %v4790
    %v7155 = vpack.c.b16 %v4797, %v4791
    %v7156 = vpack.c.b16 %v4804, %v4798
    %v7157 = vpack.c.b16 %v4805, %v4799
    %v7158 = vpack.c.b16 %v4806, %v4800
    %v7159 = vpack.c.b16 %v4807, %v4801
    %v7160 = vpack.c.b16 %v4808, %v4802
    %v7161 = vpack.c.b16 %v4809, %v4803
    %v7162 = vpack.c.b16 %v4816, %v4810
    %v7163 = vpack.c.b16 %v4817, %v4811
    %v7164 = vpack.c.b16 %v4818, %v4812
    %v7165 = vpack.c.b16 %v4819, %v4813
    %v7166 = vpack.c.b16 %v4820, %v4814
    %v7167 = vpack.c.b16 %v4821, %v4815
    %v7168 = vpack.c.b16 %v4828, %v4822
    %v7169 = vpack.c.b16 %v4829, %v4823
    %v7170 = vpack.c.b16 %v4830, %v4824
    %v7171 = vpack.c.b16 %v4831, %v4825
    %v7172 = vpack.c.b16 %v4832, %v4826
    %v7173 = vpack.c.b16 %v4833, %v4827
    %v7174 = vpack.c.b16 %v4840, %v4834
    %v7175 = vpack.c.b16 %v4841, %v4835
    %v7176 = vpack.c.b16 %v4842, %v4836
    %v7177 = vpack.c.b16 %v4843, %v4837
    %v7178 = vpack.c.b16 %v4844, %v4838
    %v7179 = vpack.c.b16 %v4845, %v4839
    %v7180 = vpack.c.b16 %v4852, %v4846
    %v7181 = vpack.c.b16 %v4853, %v4847
    %v7182 = vpack.c.b16 %v4854, %v4848
    %v7183 = vpack.c.b16 %v4855, %v4849
    %v7184 = vpack.c.b16 %v4856, %v4850
    %v7185 = vpack.c.b16 %v4857, %v4851
    %v7186 = vpack.c.b16 %v4864, %v4858
    %v7187 = vpack.c.b16 %v4865, %v4859
    %v7188 = vpack.c.b16 %v4866, %v4860
    %v7189 = vpack.c.b16 %v4867, %v4861
    %v7190 = vpack.c.b16 %v4868, %v4862
    %v7191 = vpack.c.b16 %v4869, %v4863
    %v7192 = vpack.c.b16 %v4876, %v4870
    %v7193 = vpack.c.b16 %v4877, %v4871
    %v7194 = vpack.c.b16 %v4878, %v4872
    %v7195 = vpack.c.b16 %v4879, %v4873
    %v7196 = vpack.c.b16 %v4880, %v4874
    %v7197 = vpack.c.b16 %v4881, %v4875
    %v7198 = vpack.c.b16 %v4888, %v4882
    %v7199 = vpack.c.b16 %v4889, %v4883
    %v7200 = vpack.c.b16 %v4890, %v4884
    %v7201 = vpack.c.b16 %v4891, %v4885
    %v7202 = vpack.c.b16 %v4892, %v4886
    %v7203 = vpack.c.b16 %v4893, %v4887
    %v7204 = vpack.c.b16 %v4900, %v4894
    %v7205 = vpack.c.b16 %v4901, %v4895
    %v7206 = vpack.c.b16 %v4902, %v4896
    %v7207 = vpack.c.b16 %v4903, %v4897
    %v7208 = vpack.c.b16 %v4904, %v4898
    %v7209 = vpack.c.b16 %v4905, %v4899
    %v7210 = vpack.c.b16 %v4912, %v4906
    %v7211 = vpack.c.b16 %v4913, %v4907
    %v7212 = vpack.c.b16 %v4914, %v4908
    %v7213 = vpack.c.b16 %v4915, %v4909
    %v7214 = vpack.c.b16 %v4916, %v4910
    %v7215 = vpack.c.b16 %v4917, %v4911
    %v7216 = vpack.c.b16 %v4924, %v4918
    %v7217 = vpack.c.b16 %v4925, %v4919
    %v7218 = vpack.c.b16 %v4926, %v4920
    %v7219 = vpack.c.b16 %v4927, %v4921
    %v7220 = vpack.c.b16 %v4928, %v4922
    %v7221 = vpack.c.b16 %v4929, %v4923
    %v7222 = vpack.c.b16 %v4936, %v4930
    %v7223 = vpack.c.b16 %v4937, %v4931
    %v7224 = vpack.c.b16 %v4938, %v4932
    %v7225 = vpack.c.b16 %v4939, %v4933
    %v7226 = vpack.c.b16 %v4940, %v4934
    %v7227 = vpack.c.b16 %v4941, %v4935
    %v7228 = vpack.c.b16 %v4948, %v4942
    %v7229 = vpack.c.b16 %v4949, %v4943
    %v7230 = vpack.c.b16 %v4950, %v4944
    %v7231 = vpack.c.b16 %v4951, %v4945
    %v7232 = vpack.c.b16 %v4952, %v4946
    %v7233 = vpack.c.b16 %v4953, %v4947
    %v7234 = vpack.c.b16 %v4960, %v4954
    %v7235 = vpack.c.b16 %v4961, %v4955
    %v7236 = vpack.c.b16 %v4962, %v4956
    %v7237 = vpack.c.b16 %v4963, %v4957
    %v7238 = vpack.c.b16 %v4964, %v4958
    %v7239 = vpack.c.b16 %v4965, %v4959
    %v7240 = vpack.c.b16 %v4972, %v4966
    %v7241 = vpack.c.b16 %v4973, %v4967
    %v7242 = vpack.c.b16 %v4974, %v4968
    %v7243 = vpack.c.b16 %v4975, %v4969
    %v7244 = vpack.c.b16 %v4976, %v4970
    %v7245 = vpack.c.b16 %v4977, %v4971
    %v7246 = vpack.c.b16 %v4984, %v4978
    %v7247 = vpack.c.b16 %v4985, %v4979
    %v7248 = vpack.c.b16 %v4986, %v4980
    %v7249 = vpack.c.b16 %v4987, %v4981
    %v7250 = vpack.c.b16 %v4988, %v4982
    %v7251 = vpack.c.b16 %v4989, %v4983
    %v7252 = vpack.c.b16 %v4996, %v4990
    %v7253 = vpack.c.b16 %v4997, %v4991
    %v7254 = vpack.c.b16 %v4998, %v4992
    %v7255 = vpack.c.b16 %v4999, %v4993
    %v7256 = vpack.c.b16 %v5000, %v4994
    %v7257 = vpack.c.b16 %v5001, %v4995
    %v7258 = vpack.c.b16 %v5008, %v5002
    %v7259 = vpack.c.b16 %v5009, %v5003
    %v7260 = vpack.c.b16 %v5010, %v5004
    %v7261 = vpack.c.b16 %v5011, %v5005
    %v7262 = vpack.c.b16 %v5012, %v5006
    %v7263 = vpack.c.b16 %v5013, %v5007
    %v7264 = vpack.c.b16 %v5020, %v5014
    %v7265 = vpack.c.b16 %v5021, %v5015
    %v7266 = vpack.c.b16 %v5022, %v5016
    %v7267 = vpack.c.b16 %v5023, %v5017
    %v7268 = vpack.c.b16 %v5024, %v5018
    %v7269 = vpack.c.b16 %v5025, %v5019
    %v7270 = vpack.c.b16 %v5032, %v5026
    %v7271 = vpack.c.b16 %v5033, %v5027
    %v7272 = vpack.c.b16 %v5034, %v5028
    %v7273 = vpack.c.b16 %v5035, %v5029
    %v7274 = vpack.c.b16 %v5036, %v5030
    %v7275 = vpack.c.b16 %v5037, %v5031
    %v7276 = vpack.c.b16 %v5044, %v5038
    %v7277 = vpack.c.b16 %v5045, %v5039
    %v7278 = vpack.c.b16 %v5046, %v5040
    %v7279 = vpack.c.b16 %v5047, %v5041
    %v7280 = vpack.c.b16 %v5048, %v5042
    %v7281 = vpack.c.b16 %v5049, %v5043
    %v7282 = vpack.c.b16 %v5056, %v5050
    %v7283 = vpack.c.b16 %v5057, %v5051
    %v7284 = vpack.c.b16 %v5058, %v5052
    %v7285 = vpack.c.b16 %v5059, %v5053
    %v7286 = vpack.c.b16 %v5060, %v5054
    %v7287 = vpack.c.b16 %v5061, %v5055
    %v7288 = vpack.c.b16 %v5068, %v5062
    %v7289 = vpack.c.b16 %v5069, %v5063
    %v7290 = vpack.c.b16 %v5070, %v5064
    %v7291 = vpack.c.b16 %v5071, %v5065
    %v7292 = vpack.c.b16 %v5072, %v5066
    %v7293 = vpack.c.b16 %v5073, %v5067
    %v7294 = vpack.c.b16 %v5080, %v5074
    %v7295 = vpack.c.b16 %v5081, %v5075
    %v7296 = vpack.c.b16 %v5082, %v5076
    %v7297 = vpack.c.b16 %v5083, %v5077
    %v7298 = vpack.c.b16 %v5084, %v5078
    %v7299 = vpack.c.b16 %v5085, %v5079
    %v7300 = vpack.c.b16 %v5092, %v5086
    %v7301 = vpack.c.b16 %v5093, %v5087
    %v7302 = vpack.c.b16 %v5094, %v5088
    %v7303 = vpack.c.b16 %v5095, %v5089
    %v7304 = vpack.c.b16 %v5096, %v5090
    %v7305 = vpack.c.b16 %v5097, %v5091
    %v7306 = vpack.c.b16 %v5104, %v5098
    %v7307 = vpack.c.b16 %v5105, %v5099
    %v7308 = vpack.c.b16 %v5106, %v5100
    %v7309 = vpack.c.b16 %v5107, %v5101
    %v7310 = vpack.c.b16 %v5108, %v5102
    %v7311 = vpack.c.b16 %v5109, %v5103
    %v7312 = vpack.c.b16 %v5116, %v5110
    %v7313 = vpack.c.b16 %v5117, %v5111
    %v7314 = vpack.c.b16 %v5118, %v5112
    %v7315 = vpack.c.b16 %v5119, %v5113
    %v7316 = vpack.c.b16 %v5120, %v5114
    %v7317 = vpack.c.b16 %v5121, %v5115
    %v7318 = vpack.c.b16 %v5128, %v5122
    %v7319 = vpack.c.b16 %v5129, %v5123
    %v7320 = vpack.c.b16 %v5130, %v5124
    %v7321 = vpack.c.b16 %v5131, %v5125
    %v7322 = vpack.c.b16 %v5132, %v5126
    %v7323 = vpack.c.b16 %v5133, %v5127
    %v7324 = vpack.c.b16 %v5140, %v5134
    %v7325 = vpack.c.b16 %v5141, %v5135
    %v7326 = vpack.c.b16 %v5142, %v5136
    %v7327 = vpack.c.b16 %v5143, %v5137
    %v7328 = vpack.c.b16 %v5144, %v5138
    %v7329 = vpack.c.b16 %v5145, %v5139
    %v7330 = vpack.c.b16 %v5152, %v5146
    %v7331 = vpack.c.b16 %v5153, %v5147
    %v7332 = vpack.c.b16 %v5154, %v5148
    %v7333 = vpack.c.b16 %v5155, %v5149
    %v7334 = vpack.c.b16 %v5156, %v5150
    %v7335 = vpack.c.b16 %v5157, %v5151
    %v7336 = vpack.c.b16 %v5164, %v5158
    %v7337 = vpack.c.b16 %v5165, %v5159
    %v7338 = vpack.c.b16 %v5166, %v5160
    %v7339 = vpack.c.b16 %v5167, %v5161
    %v7340 = vpack.c.b16 %v5168, %v5162
    %v7341 = vpack.c.b16 %v5169, %v5163
    %v7342 = vpack.c.b16 %v5176, %v5170
    %v7343 = vpack.c.b16 %v5177, %v5171
    %v7344 = vpack.c.b16 %v5178, %v5172
    %v7345 = vpack.c.b16 %v5179, %v5173
    %v7346 = vpack.c.b16 %v5180, %v5174
    %v7347 = vpack.c.b16 %v5181, %v5175
    %v7348 = vpack.c.b16 %v5188, %v5182
    %v7349 = vpack.c.b16 %v5189, %v5183
    %v7350 = vpack.c.b16 %v5190, %v5184
    %v7351 = vpack.c.b16 %v5191, %v5185
    %v7352 = vpack.c.b16 %v5192, %v5186
    %v7353 = vpack.c.b16 %v5193, %v5187
    %v7354 = vpack.c.b16 %v5200, %v5194
    %v7355 = vpack.c.b16 %v5201, %v5195
    %v7356 = vpack.c.b16 %v5202, %v5196
    %v7357 = vpack.c.b16 %v5203, %v5197
    %v7358 = vpack.c.b16 %v5204, %v5198
    %v7359 = vpack.c.b16 %v5205, %v5199
    %v7360 = vpack.c.b16 %v5212, %v5206
    %v7361 = vpack.c.b16 %v5213, %v5207
    %v7362 = vpack.c.b16 %v5214, %v5208
    %v7363 = vpack.c.b16 %v5215, %v5209
    %v7364 = vpack.c.b16 %v5216, %v5210
    %v7365 = vpack.c.b16 %v5217, %v5211
    %v7366 = vpack.c.b16 %v5224, %v5218
    %v7367 = vpack.c.b16 %v5225, %v5219
    %v7368 = vpack.c.b16 %v5226, %v5220
    %v7369 = vpack.c.b16 %v5227, %v5221
    %v7370 = vpack.c.b16 %v5228, %v5222
    %v7371 = vpack.c.b16 %v5229, %v5223
    %v7372 = vpack.c.b16 %v5236, %v5230
    %v7373 = vpack.c.b16 %v5237, %v5231
    %v7374 = vpack.c.b16 %v5238, %v5232
    %v7375 = vpack.c.b16 %v5239, %v5233
    %v7376 = vpack.c.b16 %v5240, %v5234
    %v7377 = vpack.c.b16 %v5241, %v5235
    %v7378 = vpack.c.b16 %v5248, %v5242
    %v7379 = vpack.c.b16 %v5249, %v5243
    %v7380 = vpack.c.b16 %v5250, %v5244
    %v7381 = vpack.c.b16 %v5251, %v5245
    %v7382 = vpack.c.b16 %v5252, %v5246
    %v7383 = vpack.c.b16 %v5253, %v5247
    %v7384 = vpack.c.b16 %v5260, %v5254
    %v7385 = vpack.c.b16 %v5261, %v5255
    %v7386 = vpack.c.b16 %v5262, %v5256
    %v7387 = vpack.c.b16 %v5263, %v5257
    %v7388 = vpack.c.b16 %v5264, %v5258
    %v7389 = vpack.c.b16 %v5265, %v5259
    %v7390 = vpack.c.b16 %v5272, %v5266
    %v7391 = vpack.c.b16 %v5273, %v5267
    %v7392 = vpack.c.b16 %v5274, %v5268
    %v7393 = vpack.c.b16 %v5275, %v5269
    %v7394 = vpack.c.b16 %v5276, %v5270
    %v7395 = vpack.c.b16 %v5277, %v5271
    %v7396 = vpack.c.b16 %v5284, %v5278
    %v7397 = vpack.c.b16 %v5285, %v5279
    %v7398 = vpack.c.b16 %v5286, %v5280
    %v7399 = vpack.c.b16 %v5287, %v5281
    %v7400 = vpack.c.b16 %v5288, %v5282
    %v7401 = vpack.c.b16 %v5289, %v5283
    %v7402 = vpack.c.b16 %v5296, %v5290
    %v7403 = vpack.c.b16 %v5297, %v5291
    %v7404 = vpack.c.b16 %v5298, %v5292
    %v7405 = vpack.c.b16 %v5299, %v5293
    %v7406 = vpack.c.b16 %v5300, %v5294
    %v7407 = vpack.c.b16 %v5301, %v5295
    %v7408 = vpack.c.b16 %v5308, %v5302
    %v7409 = vpack.c.b16 %v5309, %v5303
    %v7410 = vpack.c.b16 %v5310, %v5304
    %v7411 = vpack.c.b16 %v5311, %v5305
    %v7412 = vpack.c.b16 %v5312, %v5306
    %v7413 = vpack.c.b16 %v5313, %v5307
    %v7414 = vpack.c.b16 %v5320, %v5314
    %v7415 = vpack.c.b16 %v5321, %v5315
    %v7416 = vpack.c.b16 %v5322, %v5316
    %v7417 = vpack.c.b16 %v5323, %v5317
    %v7418 = vpack.c.b16 %v5324, %v5318
    %v7419 = vpack.c.b16 %v5325, %v5319
    %v7420 = vpack.c.b16 %v5332, %v5326
    %v7421 = vpack.c.b16 %v5333, %v5327
    %v7422 = vpack.c.b16 %v5334, %v5328
    %v7423 = vpack.c.b16 %v5335, %v5329
    %v7424 = vpack.c.b16 %v5336, %v5330
    %v7425 = vpack.c.b16 %v5337, %v5331
    %v7426 = vpack.c.b16 %v5344, %v5338
    %v7427 = vpack.c.b16 %v5345, %v5339
    %v7428 = vpack.c.b16 %v5346, %v5340
    %v7429 = vpack.c.b16 %v5347, %v5341
    %v7430 = vpack.c.b16 %v5348, %v5342
    %v7431 = vpack.c.b16 %v5349, %v5343
    %v7432 = vpack.c.b16 %v5356, %v5350
    %v7433 = vpack.c.b16 %v5357, %v5351
    %v7434 = vpack.c.b16 %v5358, %v5352
    %v7435 = vpack.c.b16 %v5359, %v5353
    %v7436 = vpack.c.b16 %v5360, %v5354
    %v7437 = vpack.c.b16 %v5361, %v5355
    %v7438 = vpack.c.b16 %v5368, %v5362
    %v7439 = vpack.c.b16 %v5369, %v5363
    %v7440 = vpack.c.b16 %v5370, %v5364
    %v7441 = vpack.c.b16 %v5371, %v5365
    %v7442 = vpack.c.b16 %v5372, %v5366
    %v7443 = vpack.c.b16 %v5373, %v5367
    %v7444 = vpack.c.b16 %v5380, %v5374
    %v7445 = vpack.c.b16 %v5381, %v5375
    %v7446 = vpack.c.b16 %v5382, %v5376
    %v7447 = vpack.c.b16 %v5383, %v5377
    %v7448 = vpack.c.b16 %v5384, %v5378
    %v7449 = vpack.c.b16 %v5385, %v5379
    %v7450 = vpack.c.b16 %v5392, %v5386
    %v7451 = vpack.c.b16 %v5393, %v5387
    %v7452 = vpack.c.b16 %v5394, %v5388
    %v7453 = vpack.c.b16 %v5395, %v5389
    %v7454 = vpack.c.b16 %v5396, %v5390
    %v7455 = vpack.c.b16 %v5397, %v5391
    %v7456 = vpack.c.b16 %v5404, %v5398
    %v7457 = vpack.c.b16 %v5405, %v5399
    %v7458 = vpack.c.b16 %v5406, %v5400
    %v7459 = vpack.c.b16 %v5407, %v5401
    %v7460 = vpack.c.b16 %v5408, %v5402
    %v7461 = vpack.c.b16 %v5409, %v5403
    %v7462 = vpack.c.b16 %v5416, %v5410
    %v7463 = vpack.c.b16 %v5417, %v5411
    %v7464 = vpack.c.b16 %v5418, %v5412
    %v7465 = vpack.c.b16 %v5419, %v5413
    %v7466 = vpack.c.b16 %v5420, %v5414
    %v7467 = vpack.c.b16 %v5421, %v5415
    %v7468 = vpack.c.b16 %v5428, %v5422
    %v7469 = vpack.c.b16 %v5429, %v5423
    %v7470 = vpack.c.b16 %v5430, %v5424
    %v7471 = vpack.c.b16 %v5431, %v5425
    %v7472 = vpack.c.b16 %v5432, %v5426
    %v7473 = vpack.c.b16 %v5433, %v5427
    %v7474 = vpack.c.b16 %v5440, %v5434
    %v7475 = vpack.c.b16 %v5441, %v5435
    %v7476 = vpack.c.b16 %v5442, %v5436
    %v7477 = vpack.c.b16 %v5443, %v5437
    %v7478 = vpack.c.b16 %v5444, %v5438
    %v7479 = vpack.c.b16 %v5445, %v5439
    %v7480 = vpack.c.b16 %v5452, %v5446
    %v7481 = vpack.c.b16 %v5453, %v5447
    %v7482 = vpack.c.b16 %v5454, %v5448
    %v7483 = vpack.c.b16 %v5455, %v5449
    %v7484 = vpack.c.b16 %v5456, %v5450
    %v7485 = vpack.c.b16 %v5457, %v5451
    %v7486 = vpack.c.b16 %v5464, %v5458
    %v7487 = vpack.c.b16 %v5465, %v5459
    %v7488 = vpack.c.b16 %v5466, %v5460
    %v7489 = vpack.c.b16 %v5467, %v5461
    %v7490 = vpack.c.b16 %v5468, %v5462
    %v7491 = vpack.c.b16 %v5469, %v5463
    %v7492 = vpack.c.b16 %v5476, %v5470
    %v7493 = vpack.c.b16 %v5477, %v5471
    %v7494 = vpack.c.b16 %v5478, %v5472
    %v7495 = vpack.c.b16 %v5479, %v5473
    %v7496 = vpack.c.b16 %v5480, %v5474
    %v7497 = vpack.c.b16 %v5481, %v5475
    %v7498 = vpack.c.b16 %v5488, %v5482
    %v7499 = vpack.c.b16 %v5489, %v5483
    %v7500 = vpack.c.b16 %v5490, %v5484
    %v7501 = vpack.c.b16 %v5491, %v5485
    %v7502 = vpack.c.b16 %v5492, %v5486
    %v7503 = vpack.c.b16 %v5493, %v5487
    %v7504 = vpack.c.b16 %v5500, %v5494
    %v7505 = vpack.c.b16 %v5501, %v5495
    %v7506 = vpack.c.b16 %v5502, %v5496
    %v7507 = vpack.c.b16 %v5503, %v5497
    %v7508 = vpack.c.b16 %v5504, %v5498
    %v7509 = vpack.c.b16 %v5505, %v5499
    %v7510 = vpack.c.b16 %v5512, %v5506
    %v7511 = vpack.c.b16 %v5513, %v5507
    %v7512 = vpack.c.b16 %v5514, %v5508
    %v7513 = vpack.c.b16 %v5515, %v5509
    %v7514 = vpack.c.b16 %v5516, %v5510
    %v7515 = vpack.c.b16 %v5517, %v5511
    %v7516 = vpack.c.b16 %v5524, %v5518
    %v7517 = vpack.c.b16 %v5525, %v5519
    %v7518 = vpack.c.b16 %v5526, %v5520
    %v7519 = vpack.c.b16 %v5527, %v5521
    %v7520 = vpack.c.b16 %v5528, %v5522
    %v7521 = vpack.c.b16 %v5529, %v5523
    %v7522 = vpack.c.b16 %v5536, %v5530
    %v7523 = vpack.c.b16 %v5537, %v5531
    %v7524 = vpack.c.b16 %v5538, %v5532
    %v7525 = vpack.c.b16 %v5539, %v5533
    %v7526 = vpack.c.b16 %v5540, %v5534
    %v7527 = vpack.c.b16 %v5541, %v5535
    %v7528 = vpack.c.b16 %v5548, %v5542
    %v7529 = vpack.c.b16 %v5549, %v5543
    %v7530 = vpack.c.b16 %v5550, %v5544
    %v7531 = vpack.c.b16 %v5551, %v5545
    %v7532 = vpack.c.b16 %v5552, %v5546
    %v7533 = vpack.c.b16 %v5553, %v5547
    %v7534 = vpack.c.b16 %v5560, %v5554
    %v7535 = vpack.c.b16 %v5561, %v5555
    %v7536 = vpack.c.b16 %v5562, %v5556
    %v7537 = vpack.c.b16 %v5563, %v5557
    %v7538 = vpack.c.b16 %v5564, %v5558
    %v7539 = vpack.c.b16 %v5565, %v5559
    %v7540 = vpack.c.b16 %v5572, %v5566
    %v7541 = vpack.c.b16 %v5573, %v5567
    %v7542 = vpack.c.b16 %v5574, %v5568
    %v7543 = vpack.c.b16 %v5575, %v5569
    %v7544 = vpack.c.b16 %v5576, %v5570
    %v7545 = vpack.c.b16 %v5577, %v5571
    %v7546 = vpack.c.b16 %v5584, %v5578
    %v7547 = vpack.c.b16 %v5585, %v5579
    %v7548 = vpack.c.b16 %v5586, %v5580
    %v7549 = vpack.c.b16 %v5587, %v5581
    %v7550 = vpack.c.b16 %v5588, %v5582
    %v7551 = vpack.c.b16 %v5589, %v5583
    %v7552 = vpack.c.b16 %v5596, %v5590
    %v7553 = vpack.c.b16 %v5597, %v5591
    %v7554 = vpack.c.b16 %v5598, %v5592
    %v7555 = vpack.c.b16 %v5599, %v5593
    %v7556 = vpack.c.b16 %v5600, %v5594
    %v7557 = vpack.c.b16 %v5601, %v5595
    %v7558 = vpack.c.b16 %v5608, %v5602
    %v7559 = vpack.c.b16 %v5609, %v5603
    %v7560 = vpack.c.b16 %v5610, %v5604
    %v7561 = vpack.c.b16 %v5611, %v5605
    %v7562 = vpack.c.b16 %v5612, %v5606
    %v7563 = vpack.c.b16 %v5613, %v5607
    %v7564 = vpack.c.b16 %v5620, %v5614
    %v7565 = vpack.c.b16 %v5621, %v5615
    %v7566 = vpack.c.b16 %v5622, %v5616
    %v7567 = vpack.c.b16 %v5623, %v5617
    %v7568 = vpack.c.b16 %v5624, %v5618
    %v7569 = vpack.c.b16 %v5625, %v5619
    %v7570 = vpack.c.b16 %v5632, %v5626
    %v7571 = vpack.c.b16 %v5633, %v5627
    %v7572 = vpack.c.b16 %v5634, %v5628
    %v7573 = vpack.c.b16 %v5635, %v5629
    %v7574 = vpack.c.b16 %v5636, %v5630
    %v7575 = vpack.c.b16 %v5637, %v5631
    %v7576 = vpack.c.b16 %v5644, %v5638
    %v7577 = vpack.c.b16 %v5645, %v5639
    %v7578 = vpack.c.b16 %v5646, %v5640
    %v7579 = vpack.c.b16 %v5647, %v5641
    %v7580 = vpack.c.b16 %v5648, %v5642
    %v7581 = vpack.c.b16 %v5649, %v5643
    %v7582 = vpack.c.b16 %v5656, %v5650
    %v7583 = vpack.c.b16 %v5657, %v5651
    %v7584 = vpack.c.b16 %v5658, %v5652
    %v7585 = vpack.c.b16 %v5659, %v5653
    %v7586 = vpack.c.b16 %v5660, %v5654
    %v7587 = vpack.c.b16 %v5661, %v5655
    %v7588 = vpack.c.b16 %v5668, %v5662
    %v7589 = vpack.c.b16 %v5669, %v5663
    %v7590 = vpack.c.b16 %v5670, %v5664
    %v7591 = vpack.c.b16 %v5671, %v5665
    %v7592 = vpack.c.b16 %v5672, %v5666
    %v7593 = vpack.c.b16 %v5673, %v5667
    %v7594 = vpack.c.b16 %v5680, %v5674
    %v7595 = vpack.c.b16 %v5681, %v5675
    %v7596 = vpack.c.b16 %v5682, %v5676
    %v7597 = vpack.c.b16 %v5683, %v5677
    %v7598 = vpack.c.b16 %v5684, %v5678
    %v7599 = vpack.c.b16 %v5685, %v5679
    %v7600 = vpack.c.b16 %v5692, %v5686
    %v7601 = vpack.c.b16 %v5693, %v5687
    %v7602 = vpack.c.b16 %v5694, %v5688
    %v7603 = vpack.c.b16 %v5695, %v5689
    %v7604 = vpack.c.b16 %v5696, %v5690
    %v7605 = vpack.c.b16 %v5697, %v5691
    %v7606 = vpack.c.b16 %v5704, %v5698
    %v7607 = vpack.c.b16 %v5705, %v5699
    %v7608 = vpack.c.b16 %v5706, %v5700
    %v7609 = vpack.c.b16 %v5707, %v5701
    %v7610 = vpack.c.b16 %v5708, %v5702
    %v7611 = vpack.c.b16 %v5709, %v5703
    %v7612 = vpack.c.b16 %v5716, %v5710
    %v7613 = vpack.c.b16 %v5717, %v5711
    %v7614 = vpack.c.b16 %v5718, %v5712
    %v7615 = vpack.c.b16 %v5719, %v5713
    %v7616 = vpack.c.b16 %v5720, %v5714
    %v7617 = vpack.c.b16 %v5721, %v5715
    %v7618 = vpack.c.b16 %v5728, %v5722
    %v7619 = vpack.c.b16 %v5729, %v5723
    %v7620 = vpack.c.b16 %v5730, %v5724
    %v7621 = vpack.c.b16 %v5731, %v5725
    %v7622 = vpack.c.b16 %v5732, %v5726
    %v7623 = vpack.c.b16 %v5733, %v5727
    %v7624 = vpack.c.b16 %v5740, %v5734
    %v7625 = vpack.c.b16 %v5741, %v5735
    %v7626 = vpack.c.b16 %v5742, %v5736
    %v7627 = vpack.c.b16 %v5743, %v5737
    %v7628 = vpack.c.b16 %v5744, %v5738
    %v7629 = vpack.c.b16 %v5745, %v5739
    %v7630 = vpack.c.b16 %v5752, %v5746
    %v7631 = vpack.c.b16 %v5753, %v5747
    %v7632 = vpack.c.b16 %v5754, %v5748
    %v7633 = vpack.c.b16 %v5755, %v5749
    %v7634 = vpack.c.b16 %v5756, %v5750
    %v7635 = vpack.c.b16 %v5757, %v5751
    %v7636 = vpack.c.b16 %v5764, %v5758
    %v7637 = vpack.c.b16 %v5765, %v5759
    %v7638 = vpack.c.b16 %v5766, %v5760
    %v7639 = vpack.c.b16 %v5767, %v5761
    %v7640 = vpack.c.b16 %v5768, %v5762
    %v7641 = vpack.c.b16 %v5769, %v5763
    %v7642 = vpack.c.b16 %v5776, %v5770
    %v7643 = vpack.c.b16 %v5777, %v5771
    %v7644 = vpack.c.b16 %v5778, %v5772
    %v7645 = vpack.c.b16 %v5779, %v5773
    %v7646 = vpack.c.b16 %v5780, %v5774
    %v7647 = vpack.c.b16 %v5781, %v5775
    %v7648 = vpack.c.b16 %v5788, %v5782
    %v7649 = vpack.c.b16 %v5789, %v5783
    %v7650 = vpack.c.b16 %v5790, %v5784
    %v7651 = vpack.c.b16 %v5791, %v5785
    %v7652 = vpack.c.b16 %v5792, %v5786
    %v7653 = vpack.c.b16 %v5793, %v5787
    %v7654 = vpack.c.b16 %v5800, %v5794
    %v7655 = vpack.c.b16 %v5801, %v5795
    %v7656 = vpack.c.b16 %v5802, %v5796
    %v7657 = vpack.c.b16 %v5803, %v5797
    %v7658 = vpack.c.b16 %v5804, %v5798
    %v7659 = vpack.c.b16 %v5805, %v5799
    %v7660 = vpack.c.b16 %v5812, %v5806
    %v7661 = vpack.c.b16 %v5813, %v5807
    %v7662 = vpack.c.b16 %v5814, %v5808
    %v7663 = vpack.c.b16 %v5815, %v5809
    %v7664 = vpack.c.b16 %v5816, %v5810
    %v7665 = vpack.c.b16 %v5817, %v5811
    %v7666 = vpack.c.b16 %v5824, %v5818
    %v7667 = vpack.c.b16 %v5825, %v5819
    %v7668 = vpack.c.b16 %v5826, %v5820
    %v7669 = vpack.c.b16 %v5827, %v5821
    %v7670 = vpack.c.b16 %v5828, %v5822
    %v7671 = vpack.c.b16 %v5829, %v5823
    %v7672 = vpack.c.b16 %v5836, %v5830
    %v7673 = vpack.c.b16 %v5837, %v5831
    %v7674 = vpack.c.b16 %v5838, %v5832
    %v7675 = vpack.c.b16 %v5839, %v5833
    %v7676 = vpack.c.b16 %v5840, %v5834
    %v7677 = vpack.c.b16 %v5841, %v5835
    %v7678 = vpack.c.b16 %v5848, %v5842
    %v7679 = vpack.c.b16 %v5849, %v5843
    %v7680 = vpack.c.b16 %v5850, %v5844
    %v7681 = vpack.c.b16 %v5851, %v5845
    %v7682 = vpack.c.b16 %v5852, %v5846
    %v7683 = vpack.c.b16 %v5853, %v5847
    %v7684 = vpack.c.b16 %v5860, %v5854
    %v7685 = vpack.c.b16 %v5861, %v5855
    %v7686 = vpack.c.b16 %v5862, %v5856
    %v7687 = vpack.c.b16 %v5863, %v5857
    %v7688 = vpack.c.b16 %v5864, %v5858
    %v7689 = vpack.c.b16 %v5865, %v5859
    %v7690 = vpack.c.b16 %v5872, %v5866
    %v7691 = vpack.c.b16 %v5873, %v5867
    %v7692 = vpack.c.b16 %v5874, %v5868
    %v7693 = vpack.c.b16 %v5875, %v5869
    %v7694 = vpack.c.b16 %v5876, %v5870
    %v7695 = vpack.c.b16 %v5877, %v5871
    %v7696 = vpack.c.b16 %v5884, %v5878
    %v7697 = vpack.c.b16 %v5885, %v5879
    %v7698 = vpack.c.b16 %v5886, %v5880
    %v7699 = vpack.c.b16 %v5887, %v5881
    %v7700 = vpack.c.b16 %v5888, %v5882
    %v7701 = vpack.c.b16 %v5889, %v5883
    %v7702 = vpack.c.b16 %v5896, %v5890
    %v7703 = vpack.c.b16 %v5897, %v5891
    %v7704 = vpack.c.b16 %v5898, %v5892
    %v7705 = vpack.c.b16 %v5899, %v5893
    %v7706 = vpack.c.b16 %v5900, %v5894
    %v7707 = vpack.c.b16 %v5901, %v5895
    %v7708 = vpack.c.b16 %v5908, %v5902
    %v7709 = vpack.c.b16 %v5909, %v5903
    %v7710 = vpack.c.b16 %v5910, %v5904
    %v7711 = vpack.c.b16 %v5911, %v5905
    %v7712 = vpack.c.b16 %v5912, %v5906
    %v7713 = vpack.c.b16 %v5913, %v5907
    %v7714 = vpack.c.b16 %v5920, %v5914
    %v7715 = vpack.c.b16 %v5921, %v5915
    %v7716 = vpack.c.b16 %v5922, %v5916
    %v7717 = vpack.c.b16 %v5923, %v5917
    %v7718 = vpack.c.b16 %v5924, %v5918
    %v7719 = vpack.c.b16 %v5925, %v5919
    %v7720 = vpack.c.b16 %v5932, %v5926
    %v7721 = vpack.c.b16 %v5933, %v5927
    %v7722 = vpack.c.b16 %v5934, %v5928
    %v7723 = vpack.c.b16 %v5935, %v5929
    %v7724 = vpack.c.b16 %v5936, %v5930
    %v7725 = vpack.c.b16 %v5937, %v5931
    %v7726 = vpack.c.b16 %v5944, %v5938
    %v7727 = vpack.c.b16 %v5945, %v5939
    %v7728 = vpack.c.b16 %v5946, %v5940
    %v7729 = vpack.c.b16 %v5947, %v5941
    %v7730 = vpack.c.b16 %v5948, %v5942
    %v7731 = vpack.c.b16 %v5949, %v5943
    %v7732 = vpack.c.b16 %v5956, %v5950
    %v7733 = vpack.c.b16 %v5957, %v5951
    %v7734 = vpack.c.b16 %v5958, %v5952
    %v7735 = vpack.c.b16 %v5959, %v5953
    %v7736 = vpack.c.b16 %v5960, %v5954
    %v7737 = vpack.c.b16 %v5961, %v5955
    %v7738 = vpack.c.b16 %v5968, %v5962
    %v7739 = vpack.c.b16 %v5969, %v5963
    %v7740 = vpack.c.b16 %v5970, %v5964
    %v7741 = vpack.c.b16 %v5971, %v5965
    %v7742 = vpack.c.b16 %v5972, %v5966
    %v7743 = vpack.c.b16 %v5973, %v5967
    %v7744 = vpack.c.b16 %v5980, %v5974
    %v7745 = vpack.c.b16 %v5981, %v5975
    %v7746 = vpack.c.b16 %v5982, %v5976
    %v7747 = vpack.c.b16 %v5983, %v5977
    %v7748 = vpack.c.b16 %v5984, %v5978
    %v7749 = vpack.c.b16 %v5985, %v5979
    %v7750 = vpack.c.b16 %v5992, %v5986
    %v7751 = vpack.c.b16 %v5993, %v5987
    %v7752 = vpack.c.b16 %v5994, %v5988
    %v7753 = vpack.c.b16 %v5995, %v5989
    %v7754 = vpack.c.b16 %v5996, %v5990
    %v7755 = vpack.c.b16 %v5997, %v5991
    %v7756 = vpack.c.b16 %v6004, %v5998
    %v7757 = vpack.c.b16 %v6005, %v5999
    %v7758 = vpack.c.b16 %v6006, %v6000
    %v7759 = vpack.c.b16 %v6007, %v6001
    %v7760 = vpack.c.b16 %v6008, %v6002
    %v7761 = vpack.c.b16 %v6009, %v6003
    %v7762 = vpack.c.b16 %v6016, %v6010
    %v7763 = vpack.c.b16 %v6017, %v6011
    %v7764 = vpack.c.b16 %v6018, %v6012
    %v7765 = vpack.c.b16 %v6019, %v6013
    %v7766 = vpack.c.b16 %v6020, %v6014
    %v7767 = vpack.c.b16 %v6021, %v6015
    %v7768 = vpack.c.b16 %v6028, %v6022
    %v7769 = vpack.c.b16 %v6029, %v6023
    %v7770 = vpack.c.b16 %v6030, %v6024
    %v7771 = vpack.c.b16 %v6031, %v6025
    %v7772 = vpack.c.b16 %v6032, %v6026
    %v7773 = vpack.c.b16 %v6033, %v6027
    %v7774 = vpack.c.b16 %v6040, %v6034
    %v7775 = vpack.c.b16 %v6041, %v6035
    %v7776 = vpack.c.b16 %v6042, %v6036
    %v7777 = vpack.c.b16 %v6043, %v6037
    %v7778 = vpack.c.b16 %v6044, %v6038
    %v7779 = vpack.c.b16 %v6045, %v6039
    %v7780 = vpack.c.b16 %v6052, %v6046
    %v7781 = vpack.c.b16 %v6053, %v6047
    %v7782 = vpack.c.b16 %v6054, %v6048
    %v7783 = vpack.c.b16 %v6055, %v6049
    %v7784 = vpack.c.b16 %v6056, %v6050
    %v7785 = vpack.c.b16 %v6057, %v6051
    %v7786 = vpack.c.b16 %v6064, %v6058
    %v7787 = vpack.c.b16 %v6065, %v6059
    %v7788 = vpack.c.b16 %v6066, %v6060
    %v7789 = vpack.c.b16 %v6067, %v6061
    %v7790 = vpack.c.b16 %v6068, %v6062
    %v7791 = vpack.c.b16 %v6069, %v6063
    %v7792 = vpack.c.b16 %v6076, %v6070
    %v7793 = vpack.c.b16 %v6077, %v6071
    %v7794 = vpack.c.b16 %v6078, %v6072
    %v7795 = vpack.c.b16 %v6079, %v6073
    %v7796 = vpack.c.b16 %v6080, %v6074
    %v7797 = vpack.c.b16 %v6081, %v6075
    %v7798 = vpack.c.b16 %v6088, %v6082
    %v7799 = vpack.c.b16 %v6089, %v6083
    %v7800 = vpack.c.b16 %v6090, %v6084
    %v7801 = vpack.c.b16 %v6091, %v6085
    %v7802 = vpack.c.b16 %v6092, %v6086
    %v7803 = vpack.c.b16 %v6093, %v6087
    %v7804 = vpack.c.b16 %v6100, %v6094
    %v7805 = vpack.c.b16 %v6101, %v6095
    %v7806 = vpack.c.b16 %v6102, %v6096
    %v7807 = vpack.c.b16 %v6103, %v6097
    %v7808 = vpack.c.b16 %v6104, %v6098
    %v7809 = vpack.c.b16 %v6105, %v6099
    %v7810 = vpack.c.b16 %v6112, %v6106
    %v7811 = vpack.c.b16 %v6113, %v6107
    %v7812 = vpack.c.b16 %v6114, %v6108
    %v7813 = vpack.c.b16 %v6115, %v6109
    %v7814 = vpack.c.b16 %v6116, %v6110
    %v7815 = vpack.c.b16 %v6117, %v6111
    %v7816 = vpack.c.b16 %v6124, %v6118
    %v7817 = vpack.c.b16 %v6125, %v6119
    %v7818 = vpack.c.b16 %v6126, %v6120
    %v7819 = vpack.c.b16 %v6127, %v6121
    %v7820 = vpack.c.b16 %v6128, %v6122
    %v7821 = vpack.c.b16 %v6129, %v6123
    %v7822 = vpack.c.b16 %v6136, %v6130
    %v7823 = vpack.c.b16 %v6137, %v6131
    %v7824 = vpack.c.b16 %v6138, %v6132
    %v7825 = vpack.c.b16 %v6139, %v6133
    %v7826 = vpack.c.b16 %v6140, %v6134
    %v7827 = vpack.c.b16 %v6141, %v6135
    %v7828 = vpack.c.b16 %v6148, %v6142
    %v7829 = vpack.c.b16 %v6149, %v6143
    %v7830 = vpack.c.b16 %v6150, %v6144
    %v7831 = vpack.c.b16 %v6151, %v6145
    %v7832 = vpack.c.b16 %v6152, %v6146
    %v7833 = vpack.c.b16 %v6153, %v6147
    %v7834 = vpack.c.b16 %v6160, %v6154
    %v7835 = vpack.c.b16 %v6161, %v6155
    %v7836 = vpack.c.b16 %v6162, %v6156
    %v7837 = vpack.c.b16 %v6163, %v6157
    %v7838 = vpack.c.b16 %v6164, %v6158
    %v7839 = vpack.c.b16 %v6165, %v6159
    %v7840 = vpack.c.b16 %v6172, %v6166
    %v7841 = vpack.c.b16 %v6173, %v6167
    %v7842 = vpack.c.b16 %v6174, %v6168
    %v7843 = vpack.c.b16 %v6175, %v6169
    %v7844 = vpack.c.b16 %v6176, %v6170
    %v7845 = vpack.c.b16 %v6177, %v6171
    %v7846 = vpack.c.b16 %v6184, %v6178
    %v7847 = vpack.c.b16 %v6185, %v6179
    %v7848 = vpack.c.b16 %v6186, %v6180
    %v7849 = vpack.c.b16 %v6187, %v6181
    %v7850 = vpack.c.b16 %v6188, %v6182
    %v7851 = vpack.c.b16 %v6189, %v6183
    %v7852 = vpack.c.b16 %v6196, %v6190
    %v7853 = vpack.c.b16 %v6197, %v6191
    %v7854 = vpack.c.b16 %v6198, %v6192
    %v7855 = vpack.c.b16 %v6199, %v6193
    %v7856 = vpack.c.b16 %v6200, %v6194
    %v7857 = vpack.c.b16 %v6201, %v6195
    %v7858 = vpack.c.b16 %v6208, %v6202
    %v7859 = vpack.c.b16 %v6209, %v6203
    %v7860 = vpack.c.b16 %v6210, %v6204
    %v7861 = vpack.c.b16 %v6211, %v6205
    %v7862 = vpack.c.b16 %v6212, %v6206
    %v7863 = vpack.c.b16 %v6213, %v6207
    %v7864 = vpack.c.b16 %v6220, %v6214
    %v7865 = vpack.c.b16 %v6221, %v6215
    %v7866 = vpack.c.b16 %v6222, %v6216
    %v7867 = vpack.c.b16 %v6223, %v6217
    %v7868 = vpack.c.b16 %v6224, %v6218
    %v7869 = vpack.c.b16 %v6225, %v6219
    %v7870 = vpack.c.b16 %v6232, %v6226
    %v7871 = vpack.c.b16 %v6233, %v6227
    %v7872 = vpack.c.b16 %v6234, %v6228
    %v7873 = vpack.c.b16 %v6235, %v6229
    %v7874 = vpack.c.b16 %v6236, %v6230
    %v7875 = vpack.c.b16 %v6237, %v6231
    %v7876 = vpack.c.b16 %v6244, %v6238
    %v7877 = vpack.c.b16 %v6245, %v6239
    %v7878 = vpack.c.b16 %v6246, %v6240
    %v7879 = vpack.c.b16 %v6247, %v6241
    %v7880 = vpack.c.b16 %v6248, %v6242
    %v7881 = vpack.c.b16 %v6249, %v6243
    %v7882 = vpack.c.b16 %v6256, %v6250
    %v7883 = vpack.c.b16 %v6257, %v6251
    %v7884 = vpack.c.b16 %v6258, %v6252
    %v7885 = vpack.c.b16 %v6259, %v6253
    %v7886 = vpack.c.b16 %v6260, %v6254
    %v7887 = vpack.c.b16 %v6261, %v6255
    %v7888 = vpack.c.b16 %v6268, %v6262
    %v7889 = vpack.c.b16 %v6269, %v6263
    %v7890 = vpack.c.b16 %v6270, %v6264
    %v7891 = vpack.c.b16 %v6271, %v6265
    %v7892 = vpack.c.b16 %v6272, %v6266
    %v7893 = vpack.c.b16 %v6273, %v6267
    %v7894 = vpack.c.b16 %v6280, %v6274
    %v7895 = vpack.c.b16 %v6281, %v6275
    %v7896 = vpack.c.b16 %v6282, %v6276
    %v7897 = vpack.c.b16 %v6283, %v6277
    %v7898 = vpack.c.b16 %v6284, %v6278
    %v7899 = vpack.c.b16 %v6285, %v6279
    %v7900 = vpack.c.b16 %v6292, %v6286
    %v7901 = vpack.c.b16 %v6293, %v6287
    %v7902 = vpack.c.b16 %v6294, %v6288
    %v7903 = vpack.c.b16 %v6295, %v6289
    %v7904 = vpack.c.b16 %v6296, %v6290
    %v7905 = vpack.c.b16 %v6297, %v6291
    %v7906 = vpack.c.b16 %v6304, %v6298
    %v7907 = vpack.c.b16 %v6305, %v6299
    %v7908 = vpack.c.b16 %v6306, %v6300
    %v7909 = vpack.c.b16 %v6307, %v6301
    %v7910 = vpack.c.b16 %v6308, %v6302
    %v7911 = vpack.c.b16 %v6309, %v6303
    %v7912 = vpack.c.b16 %v6316, %v6310
    %v7913 = vpack.c.b16 %v6317, %v6311
    %v7914 = vpack.c.b16 %v6318, %v6312
    %v7915 = vpack.c.b16 %v6319, %v6313
    %v7916 = vpack.c.b16 %v6320, %v6314
    %v7917 = vpack.c.b16 %v6321, %v6315
    %v7918 = vpack.c.b16 %v6328, %v6322
    %v7919 = vpack.c.b16 %v6329, %v6323
    %v7920 = vpack.c.b16 %v6330, %v6324
    %v7921 = vpack.c.b16 %v6331, %v6325
    %v7922 = vpack.c.b16 %v6332, %v6326
    %v7923 = vpack.c.b16 %v6333, %v6327
    %v7924 = vpack.c.b16 %v6340, %v6334
    %v7925 = vpack.c.b16 %v6341, %v6335
    %v7926 = vpack.c.b16 %v6342, %v6336
    %v7927 = vpack.c.b16 %v6343, %v6337
    %v7928 = vpack.c.b16 %v6344, %v6338
    %v7929 = vpack.c.b16 %v6345, %v6339
    %v7930 = vpack.c.b16 %v6352, %v6346
    %v7931 = vpack.c.b16 %v6353, %v6347
    %v7932 = vpack.c.b16 %v6354, %v6348
    %v7933 = vpack.c.b16 %v6355, %v6349
    %v7934 = vpack.c.b16 %v6356, %v6350
    %v7935 = vpack.c.b16 %v6357, %v6351
    %v7936 = vpack.c.b16 %v6364, %v6358
    %v7937 = vpack.c.b16 %v6365, %v6359
    %v7938 = vpack.c.b16 %v6366, %v6360
    %v7939 = vpack.c.b16 %v6367, %v6361
    %v7940 = vpack.c.b16 %v6368, %v6362
    %v7941 = vpack.c.b16 %v6369, %v6363
    %v7942 = vpack.c.b16 %v6376, %v6370
    %v7943 = vpack.c.b16 %v6377, %v6371
    %v7944 = vpack.c.b16 %v6378, %v6372
    %v7945 = vpack.c.b16 %v6379, %v6373
    %v7946 = vpack.c.b16 %v6380, %v6374
    %v7947 = vpack.c.b16 %v6381, %v6375
    %v7948 = vpack.c.b16 %v6388, %v6382
    %v7949 = vpack.c.b16 %v6389, %v6383
    %v7950 = vpack.c.b16 %v6390, %v6384
    %v7951 = vpack.c.b16 %v6391, %v6385
    %v7952 = vpack.c.b16 %v6392, %v6386
    %v7953 = vpack.c.b16 %v6393, %v6387
    %v7954 = vpack.c.b16 %v6400, %v6394
    %v7955 = vpack.c.b16 %v6401, %v6395
    %v7956 = vpack.c.b16 %v6402, %v6396
    %v7957 = vpack.c.b16 %v6403, %v6397
    %v7958 = vpack.c.b16 %v6404, %v6398
    %v7959 = vpack.c.b16 %v6405, %v6399
    %v7960 = vpack.c.b16 %v6412, %v6406
    %v7961 = vpack.c.b16 %v6413, %v6407
    %v7962 = vpack.c.b16 %v6414, %v6408
    %v7963 = vpack.c.b16 %v6415, %v6409
    %v7964 = vpack.c.b16 %v6416, %v6410
    %v7965 = vpack.c.b16 %v6417, %v6411
    %v7966 = vpack.c.b16 %v6424, %v6418
    %v7967 = vpack.c.b16 %v6425, %v6419
    %v7968 = vpack.c.b16 %v6426, %v6420
    %v7969 = vpack.c.b16 %v6427, %v6421
    %v7970 = vpack.c.b16 %v6428, %v6422
    %v7971 = vpack.c.b16 %v6429, %v6423
    %v7972 = vpack.c.b16 %v6436, %v6430
    %v7973 = vpack.c.b16 %v6437, %v6431
    %v7974 = vpack.c.b16 %v6438, %v6432
    %v7975 = vpack.c.b16 %v6439, %v6433
    %v7976 = vpack.c.b16 %v6440, %v6434
    %v7977 = vpack.c.b16 %v6441, %v6435
    %v7978 = vpack.c.b16 %v6448, %v6442
    %v7979 = vpack.c.b16 %v6449, %v6443
    %v7980 = vpack.c.b16 %v6450, %v6444
    %v7981 = vpack.c.b16 %v6451, %v6445
    %v7982 = vpack.c.b16 %v6452, %v6446
    %v7983 = vpack.c.b16 %v6453, %v6447
    %v7984 = vpack.c.b16 %v6460, %v6454
    %v7985 = vpack.c.b16 %v6461, %v6455
    %v7986 = vpack.c.b16 %v6462, %v6456
    %v7987 = vpack.c.b16 %v6463, %v6457
    %v7988 = vpack.c.b16 %v6464, %v6458
    %v7989 = vpack.c.b16 %v6465, %v6459
    %v7990 = vpack.c.b16 %v6472, %v6466
    %v7991 = vpack.c.b16 %v6473, %v6467
    %v7992 = vpack.c.b16 %v6474, %v6468
    %v7993 = vpack.c.b16 %v6475, %v6469
    %v7994 = vpack.c.b16 %v6476, %v6470
    %v7995 = vpack.c.b16 %v6477, %v6471
    %v7996 = vpack.c.b16 %v6484, %v6478
    %v7997 = vpack.c.b16 %v6485, %v6479
    %v7998 = vpack.c.b16 %v6486, %v6480
    %v7999 = vpack.c.b16 %v6487, %v6481
    %v8000 = vpack.c.b16 %v6488, %v6482
    %v8001 = vpack.c.b16 %v6489, %v6483
    %v8002 = vpack.c.b16 %v6496, %v6490
    %v8003 = vpack.c.b16 %v6497, %v6491
    %v8004 = vpack.c.b16 %v6498, %v6492
    %v8005 = vpack.c.b16 %v6499, %v6493
    %v8006 = vpack.c.b16 %v6500, %v6494
    %v8007 = vpack.c.b16 %v6501, %v6495
    %v8008 = vpack.c.b16 %v6508, %v6502
    %v8009 = vpack.c.b16 %v6509, %v6503
    %v8010 = vpack.c.b16 %v6510, %v6504
    %v8011 = vpack.c.b16 %v6511, %v6505
    %v8012 = vpack.c.b16 %v6512, %v6506
    %v8013 = vpack.c.b16 %v6513, %v6507
    %v8014 = vpack.c.b16 %v6520, %v6514
    %v8015 = vpack.c.b16 %v6521, %v6515
    %v8016 = vpack.c.b16 %v6522, %v6516
    %v8017 = vpack.c.b16 %v6523, %v6517
    %v8018 = vpack.c.b16 %v6524, %v6518
    %v8019 = vpack.c.b16 %v6525, %v6519
    %v8020 = vpack.c.b16 %v6532, %v6526
    %v8021 = vpack.c.b16 %v6533, %v6527
    %v8022 = vpack.c.b16 %v6534, %v6528
    %v8023 = vpack.c.b16 %v6535, %v6529
    %v8024 = vpack.c.b16 %v6536, %v6530
    %v8025 = vpack.c.b16 %v6537, %v6531
    %v8026 = vpack.c.b16 %v6544, %v6538
    %v8027 = vpack.c.b16 %v6545, %v6539
    %v8028 = vpack.c.b16 %v6546, %v6540
    %v8029 = vpack.c.b16 %v6547, %v6541
    %v8030 = vpack.c.b16 %v6548, %v6542
    %v8031 = vpack.c.b16 %v6549, %v6543
    %v8032 = vpack.c.b16 %v6556, %v6550
    %v8033 = vpack.c.b16 %v6557, %v6551
    %v8034 = vpack.c.b16 %v6558, %v6552
    %v8035 = vpack.c.b16 %v6559, %v6553
    %v8036 = vpack.c.b16 %v6560, %v6554
    %v8037 = vpack.c.b16 %v6561, %v6555
    %v8038 = vpack.c.b16 %v6568, %v6562
    %v8039 = vpack.c.b16 %v6569, %v6563
    %v8040 = vpack.c.b16 %v6570, %v6564
    %v8041 = vpack.c.b16 %v6571, %v6565
    %v8042 = vpack.c.b16 %v6572, %v6566
    %v8043 = vpack.c.b16 %v6573, %v6567
    %v8044 = vpack.c.b16 %v6580, %v6574
    %v8045 = vpack.c.b16 %v6581, %v6575
    %v8046 = vpack.c.b16 %v6582, %v6576
    %v8047 = vpack.c.b16 %v6583, %v6577
    %v8048 = vpack.c.b16 %v6584, %v6578
    %v8049 = vpack.c.b16 %v6585, %v6579
    %v8050 = vpack.c.b16 %v6592, %v6586
    %v8051 = vpack.c.b16 %v6593, %v6587
    %v8052 = vpack.c.b16 %v6594, %v6588
    %v8053 = vpack.c.b16 %v6595, %v6589
    %v8054 = vpack.c.b16 %v6596, %v6590
    %v8055 = vpack.c.b16 %v6597, %v6591
    %v8056 = vpack.c.b16 %v6604, %v6598
    %v8057 = vpack.c.b16 %v6605, %v6599
    %v8058 = vpack.c.b16 %v6606, %v6600
    %v8059 = vpack.c.b16 %v6607, %v6601
    %v8060 = vpack.c.b16 %v6608, %v6602
    %v8061 = vpack.c.b16 %v6609, %v6603
    %v8062 = vpack.c.b16 %v6616, %v6610
    %v8063 = vpack.c.b16 %v6617, %v6611
    %v8064 = vpack.c.b16 %v6618, %v6612
    %v8065 = vpack.c.b16 %v6619, %v6613
    %v8066 = vpack.c.b16 %v6620, %v6614
    %v8067 = vpack.c.b16 %v6621, %v6615
    %v8068 = vpack.c.b16 %v6628, %v6622
    %v8069 = vpack.c.b16 %v6629, %v6623
    %v8070 = vpack.c.b16 %v6630, %v6624
    %v8071 = vpack.c.b16 %v6631, %v6625
    %v8072 = vpack.c.b16 %v6632, %v6626
    %v8073 = vpack.c.b16 %v6633, %v6627
    %v8074 = vpack.c.b16 %v6640, %v6634
    %v8075 = vpack.c.b16 %v6641, %v6635
    %v8076 = vpack.c.b16 %v6642, %v6636
    %v8077 = vpack.c.b16 %v6643, %v6637
    %v8078 = vpack.c.b16 %v6644, %v6638
    %v8079 = vpack.c.b16 %v6645, %v6639
    %v8080 = vpack.c.b16 %v6652, %v6646
    %v8081 = vpack.c.b16 %v6653, %v6647
    %v8082 = vpack.c.b16 %v6654, %v6648
    %v8083 = vpack.c.b16 %v6655, %v6649
    %v8084 = vpack.c.b16 %v6656, %v6650
    %v8085 = vpack.c.b16 %v6657, %v6651
    %v8086 = vpack.c.b16 %v6664, %v6658
    %v8087 = vpack.c.b16 %v6665, %v6659
    %v8088 = vpack.c.b16 %v6666, %v6660
    %v8089 = vpack.c.b16 %v6667, %v6661
    %v8090 = vpack.c.b16 %v6668, %v6662
    %v8091 = vpack.c.b16 %v6669, %v6663
    %v8092 = vpack.c.b16 %v6676, %v6670
    %v8093 = vpack.c.b16 %v6677, %v6671
    %v8094 = vpack.c.b16 %v6678, %v6672
    %v8095 = vpack.c.b16 %v6679, %v6673
    %v8096 = vpack.c.b16 %v6680, %v6674
    %v8097 = vpack.c.b16 %v6681, %v6675
    %v8098 = vpack.c.b16 %v6688, %v6682
    %v8099 = vpack.c.b16 %v6689, %v6683
    %v8100 = vpack.c.b16 %v6690, %v6684
    %v8101 = vpack.c.b16 %v6691, %v6685
    %v8102 = vpack.c.b16 %v6692, %v6686
    %v8103 = vpack.c.b16 %v6693, %v6687
    %v8104 = vpack.c.b16 %v6700, %v6694
    %v8105 = vpack.c.b16 %v6701, %v6695
    %v8106 = vpack.c.b16 %v6702, %v6696
    %v8107 = vpack.c.b16 %v6703, %v6697
    %v8108 = vpack.c.b16 %v6704, %v6698
    %v8109 = vpack.c.b16 %v6705, %v6699
    %v8110 = vpack.c.b16 %v6712, %v6706
    %v8111 = vpack.c.b16 %v6713, %v6707
    %v8112 = vpack.c.b16 %v6714, %v6708
    %v8113 = vpack.c.b16 %v6715, %v6709
    %v8114 = vpack.c.b16 %v6716, %v6710
    %v8115 = vpack.c.b16 %v6717, %v6711
    %v8116 = vpack.c.b16 %v6724, %v6718
    %v8117 = vpack.c.b16 %v6725, %v6719
    %v8118 = vpack.c.b16 %v6726, %v6720
    %v8119 = vpack.c.b16 %v6727, %v6721
    %v8120 = vpack.c.b16 %v6728, %v6722
    %v8121 = vpack.c.b16 %v6729, %v6723
    %v8122 = vpack.c.b16 %v6736, %v6730
    %v8123 = vpack.c.b16 %v6737, %v6731
    %v8124 = vpack.c.b16 %v6738, %v6732
    %v8125 = vpack.c.b16 %v6739, %v6733
    %v8126 = vpack.c.b16 %v6740, %v6734
    %v8127 = vpack.c.b16 %v6741, %v6735
    %v8128 = vpack.c.b16 %v6748, %v6742
    %v8129 = vpack.c.b16 %v6749, %v6743
    %v8130 = vpack.c.b16 %v6750, %v6744
    %v8131 = vpack.c.b16 %v6751, %v6745
    %v8132 = vpack.c.b16 %v6752, %v6746
    %v8133 = vpack.c.b16 %v6753, %v6747
    %v8134 = vpack.c.b16 %v6760, %v6754
    %v8135 = vpack.c.b16 %v6761, %v6755
    %v8136 = vpack.c.b16 %v6762, %v6756
    %v8137 = vpack.c.b16 %v6763, %v6757
    %v8138 = vpack.c.b16 %v6764, %v6758
    %v8139 = vpack.c.b16 %v6765, %v6759
    %v8140 = vpack.c.b16 %v6772, %v6766
    %v8141 = vpack.c.b16 %v6773, %v6767
    %v8142 = vpack.c.b16 %v6774, %v6768
    %v8143 = vpack.c.b16 %v6775, %v6769
    %v8144 = vpack.c.b16 %v6776, %v6770
    %v8145 = vpack.c.b16 %v6777, %v6771
    %v8146 = vpack.c.b16 %v6784, %v6778
    %v8147 = vpack.c.b16 %v6785, %v6779
    %v8148 = vpack.c.b16 %v6786, %v6780
    %v8149 = vpack.c.b16 %v6787, %v6781
    %v8150 = vpack.c.b16 %v6788, %v6782
    %v8151 = vpack.c.b16 %v6789, %v6783
    %v8152 = vpack.c.b16 %v6796, %v6790
    %v8153 = vpack.c.b16 %v6797, %v6791
    %v8154 = vpack.c.b16 %v6798, %v6792
    %v8155 = vpack.c.b16 %v6799, %v6793
    %v8156 = vpack.c.b16 %v6800, %v6794
    %v8157 = vpack.c.b16 %v6801, %v6795
    %v8158 = vpack.c.b16 %v6808, %v6802
    %v8159 = vpack.c.b16 %v6809, %v6803
    %v8160 = vpack.c.b16 %v6810, %v6804
    %v8161 = vpack.c.b16 %v6811, %v6805
    %v8162 = vpack.c.b16 %v6812, %v6806
    %v8163 = vpack.c.b16 %v6813, %v6807
    %v8164 = vpack.c.b16 %v6820, %v6814
    %v8165 = vpack.c.b16 %v6821, %v6815
    %v8166 = vpack.c.b16 %v6822, %v6816
    %v8167 = vpack.c.b16 %v6823, %v6817
    %v8168 = vpack.c.b16 %v6824, %v6818
    %v8169 = vpack.c.b16 %v6825, %v6819
    %v8170 = vpack.c.b16 %v6832, %v6826
    %v8171 = vpack.c.b16 %v6833, %v6827
    %v8172 = vpack.c.b16 %v6834, %v6828
    %v8173 = vpack.c.b16 %v6835, %v6829
    %v8174 = vpack.c.b16 %v6836, %v6830
    %v8175 = vpack.c.b16 %v6837, %v6831
    %v8176 = vpack.c.b16 %v6844, %v6838
    %v8177 = vpack.c.b16 %v6845, %v6839
    %v8178 = vpack.c.b16 %v6846, %v6840
    %v8179 = vpack.c.b16 %v6847, %v6841
    %v8180 = vpack.c.b16 %v6848, %v6842
    %v8181 = vpack.c.b16 %v6849, %v6843
    %v8182 = vpack.c.b16 %v6856, %v6850
    %v8183 = vpack.c.b16 %v6857, %v6851
    %v8184 = vpack.c.b16 %v6858, %v6852
    %v8185 = vpack.c.b16 %v6859, %v6853
    %v8186 = vpack.c.b16 %v6860, %v6854
    %v8187 = vpack.c.b16 %v6861, %v6855
    %v8188 = vpack.c.b16 %v6868, %v6862
    %v8189 = vpack.c.b16 %v6869, %v6863
    %v8190 = vpack.c.b16 %v6870, %v6864
    %v8191 = vpack.c.b16 %v6871, %v6865
    %v8192 = vpack.c.b16 %v6872, %v6866
    %v8193 = vpack.c.b16 %v6873, %v6867
    %v8194 = vpack.c.b16 %v6880, %v6874
    %v8195 = vpack.c.b16 %v6881, %v6875
    %v8196 = vpack.c.b16 %v6882, %v6876
    %v8197 = vpack.c.b16 %v6883, %v6877
    %v8198 = vpack.c.b16 %v6884, %v6878
    %v8199 = vpack.c.b16 %v6885, %v6879
    %v8200 = vpack.c.b16 %v6892, %v6886
    %v8201 = vpack.c.b16 %v6893, %v6887
    %v8202 = vpack.c.b16 %v6894, %v6888
    %v8203 = vpack.c.b16 %v6895, %v6889
    %v8204 = vpack.c.b16 %v6896, %v6890
    %v8205 = vpack.c.b16 %v6897, %v6891
    %v8206 = vpack.c.b16 %v6904, %v6898
    %v8207 = vpack.c.b16 %v6905, %v6899
    %v8208 = vpack.c.b16 %v6906, %v6900
    %v8209 = vpack.c.b16 %v6907, %v6901
    %v8210 = vpack.c.b16 %v6908, %v6902
    %v8211 = vpack.c.b16 %v6909, %v6903
    %v8212 = vpack.c.b16 %v6916, %v6910
    %v8213 = vpack.c.b16 %v6917, %v6911
    %v8214 = vpack.c.b16 %v6918, %v6912
    %v8215 = vpack.c.b16 %v6919, %v6913
    %v8216 = vpack.c.b16 %v6920, %v6914
    %v8217 = vpack.c.b16 %v6921, %v6915
    %v8218 = vpack.c.b16 %v6928, %v6922
    %v8219 = vpack.c.b16 %v6929, %v6923
    %v8220 = vpack.c.b16 %v6930, %v6924
    %v8221 = vpack.c.b16 %v6931, %v6925
    %v8222 = vpack.c.b16 %v6932, %v6926
    %v8223 = vpack.c.b16 %v6933, %v6927
    %v8224 = vpack.c.b16 %v6940, %v6934
    %v8225 = vpack.c.b16 %v6941, %v6935
    %v8226 = vpack.c.b16 %v6942, %v6936
    %v8227 = vpack.c.b16 %v6943, %v6937
    %v8228 = vpack.c.b16 %v6944, %v6938
    %v8229 = vpack.c.b16 %v6945, %v6939
    %v8230 = vpack.c.b16 %v6952, %v6946
    %v8231 = vpack.c.b16 %v6953, %v6947
    %v8232 = vpack.c.b16 %v6954, %v6948
    %v8233 = vpack.c.b16 %v6955, %v6949
    %v8234 = vpack.c.b16 %v6956, %v6950
    %v8235 = vpack.c.b16 %v6957, %v6951
    %v8236 = vpack.c.b16 %v6964, %v6958
    %v8237 = vpack.c.b16 %v6965, %v6959
    %v8238 = vpack.c.b16 %v6966, %v6960
    %v8239 = vpack.c.b16 %v6967, %v6961
    %v8240 = vpack.c.b16 %v6968, %v6962
    %v8241 = vpack.c.b16 %v6969, %v6963
    %v8242 = vpack.c.b16 %v6976, %v6970
    %v8243 = vpack.c.b16 %v6977, %v6971
    %v8244 = vpack.c.b16 %v6978, %v6972
    %v8245 = vpack.c.b16 %v6979, %v6973
    %v8246 = vpack.c.b16 %v6980, %v6974
    %v8247 = vpack.c.b16 %v6981, %v6975
    %v8248 = vpack.c.b16 %v6988, %v6982
    %v8249 = vpack.c.b16 %v6989, %v6983
    %v8250 = vpack.c.b16 %v6990, %v6984
    %v8251 = vpack.c.b16 %v6991, %v6985
    %v8252 = vpack.c.b16 %v6992, %v6986
    %v8253 = vpack.c.b16 %v6993, %v6987
    %v8254 = vpack.c.b16 %v7000, %v6994
    %v8255 = vpack.c.b16 %v7001, %v6995
    %v8256 = vpack.c.b16 %v7002, %v6996
    %v8257 = vpack.c.b16 %v7003, %v6997
    %v8258 = vpack.c.b16 %v7004, %v6998
    %v8259 = vpack.c.b16 %v7005, %v6999
    %v8260 = vpack.c.b16 %v7012, %v7006
    %v8261 = vpack.c.b16 %v7013, %v7007
    %v8262 = vpack.c.b16 %v7014, %v7008
    %v8263 = vpack.c.b16 %v7015, %v7009
    %v8264 = vpack.c.b16 %v7016, %v7010
    %v8265 = vpack.c.b16 %v7017, %v7011
    %v8266 = vpack.c.b16 %v7024, %v7018
    %v8267 = vpack.c.b16 %v7025, %v7019
    %v8268 = vpack.c.b16 %v7026, %v7020
    %v8269 = vpack.c.b16 %v7027, %v7021
    %v8270 = vpack.c.b16 %v7028, %v7022
    %v8271 = vpack.c.b16 %v7029, %v7023
    %v8272 = vpack.c.b16 %v7036, %v7030
    %v8273 = vpack.c.b16 %v7037, %v7031
    %v8274 = vpack.c.b16 %v7038, %v7032
    %v8275 = vpack.c.b16 %v7039, %v7033
    %v8276 = vpack.c.b16 %v7040, %v7034
    %v8277 = vpack.c.b16 %v7041, %v7035
    %v8278 = vpack.c.b16 %v7048, %v7042
    %v8279 = vpack.c.b16 %v7049, %v7043
    %v8280 = vpack.c.b16 %v7050, %v7044
    %v8281 = vpack.c.b16 %v7051, %v7045
    %v8282 = vpack.c.b16 %v7052, %v7046
    %v8283 = vpack.c.b16 %v7053, %v7047
    %v8284 = vpack.c.b16 %v7060, %v7054
    %v8285 = vpack.c.b16 %v7061, %v7055
    %v8286 = vpack.c.b16 %v7062, %v7056
    %v8287 = vpack.c.b16 %v7063, %v7057
    %v8288 = vpack.c.b16 %v7064, %v7058
    %v8289 = vpack.c.b16 %v7065, %v7059
    %v8290 = vpack.c.b16 %v7072, %v7066
    %v8291 = vpack.c.b16 %v7073, %v7067
    %v8292 = vpack.c.b16 %v7074, %v7068
    %v8293 = vpack.c.b16 %v7075, %v7069
    %v8294 = vpack.c.b16 %v7076, %v7070
    %v8295 = vpack.c.b16 %v7077, %v7071
    %v8296 = vpack.c.b16 %v7084, %v7078
    %v8297 = vpack.c.b16 %v7085, %v7079
    %v8298 = vpack.c.b16 %v7086, %v7080
    %v8299 = vpack.c.b16 %v7087, %v7081
    %v8300 = vpack.c.b16 %v7088, %v7082
    %v8301 = vpack.c.b16 %v7089, %v7083
    %v8302 = vpack.c.b16 %v7096, %v7090
    %v8303 = vpack.c.b16 %v7097, %v7091
    %v8304 = vpack.c.b16 %v7098, %v7092
    %v8305 = vpack.c.b16 %v7099, %v7093
    %v8306 = vpack.c.b16 %v7100, %v7094
    %v8307 = vpack.c.b16 %v7101, %v7095
    %v8308 = vpack.c.b16 %v7108, %v7102
    %v8309 = vpack.c.b16 %v7109, %v7103
    %v8310 = vpack.c.b16 %v7110, %v7104
    %v8311 = vpack.c.b16 %v7111, %v7105
    %v8312 = vpack.c.b16 %v7112, %v7106
    %v8313 = vpack.c.b16 %v7113, %v7107
    %9514 = vmatprep.subr.bf16.mxu0 %v7115
    %9515 = vmatpush1.bf16.msra.mxu0 %v7114
    %9516 = vmatprep.subr.bf16.mxu0 %v7121
    %9517 = vmatpush1.bf16.msra.mxu0 %v7120
    %9518 = vmatprep.subr.bf16.mxu0 %v7127
    %9519 = vmatpush1.bf16.msra.mxu0 %v7126
    %9520 = vmatprep.subr.bf16.mxu0 %v7133
    %9521 = vmatpush1.bf16.msra.mxu0 %v7132
    %9522 = vmatprep.subr.bf16.mxu0 %v7139
    %9523 = vmatpush1.bf16.msra.mxu0 %v7138
    %9524 = vmatprep.subr.bf16.mxu0 %v7145
    %9525 = vmatpush1.bf16.msra.mxu0 %v7144
    %9526 = vmatprep.subr.bf16.mxu0 %v7151
    %9527 = vmatpush1.bf16.msra.mxu0 %v7150
    %9528 = vmatprep.subr.bf16.mxu0 %v7157
    %9529 = vmatpush1.bf16.msra.mxu0 %v7156
    %9530 = vmatprep.subr.bf16.mxu0 %v7163
    %9531 = vmatpush1.bf16.msra.mxu0 %v7162
    %9532 = vmatprep.subr.bf16.mxu0 %v7169
    %9533 = vmatpush1.bf16.msra.mxu0 %v7168
    %9534 = vmatprep.subr.bf16.mxu0 %v7175
    %9535 = vmatpush1.bf16.msra.mxu0 %v7174
    %9536 = vmatprep.subr.bf16.mxu0 %v7181
    %9537 = vmatpush1.bf16.msra.mxu0 %v7180
    %9538 = vmatprep.subr.bf16.mxu0 %v7187
    %9539 = vmatpush1.bf16.msra.mxu0 %v7186
    %9540 = vmatprep.subr.bf16.mxu0 %v7193
    %9541 = vmatpush1.bf16.msra.mxu0 %v7192
    %9542 = vmatprep.subr.bf16.mxu0 %v7199
    %9543 = vmatpush1.bf16.msra.mxu0 %v7198
    %9544 = vmatprep.subr.bf16.mxu0 %v7205
    %9545 = vmatpush1.bf16.msra.mxu0 %v7204
    %9546 = vmatprep.mubr.bf16.mxu0 %v2258
    %9547 = vmatmul.mubr.bf16.gmra.mrb[0].mxu0 %v2257
    %v9548 = vpop.f32.mrb[0].mxu0
    %v9549 = vadd.f32 %v3487, %v9548
    %v9550 = vpop.f32.mrb[0].mxu0
    %v9551 = vadd.f32 %v3491, %v9550
    %v9552 = vpop.f32.mrb[0].mxu0
    %v9553 = vadd.f32 %v3487, %v9552
    %v9554 = vpop.f32.mrb[0].mxu0
    %v9555 = vadd.f32 %v3491, %v9554
    %9556 = vdwg.mxu0
    %9557 = vmatprep.subr.bf16.mxu0 %v7211
    %9558 = vmatpush1.bf16.msra.mxu0 %v7210
    %9559 = vmatprep.subr.bf16.mxu0 %v7217
    %9560 = vmatpush1.bf16.msra.mxu0 %v7216
    %9561 = vmatprep.subr.bf16.mxu0 %v7223
    %9562 = vmatpush1.bf16.msra.mxu0 %v7222
    %9563 = vmatprep.subr.bf16.mxu0 %v7229
    %9564 = vmatpush1.bf16.msra.mxu0 %v7228
    %9565 = vmatprep.subr.bf16.mxu0 %v7235
    %9566 = vmatpush1.bf16.msra.mxu0 %v7234
    %9567 = vmatprep.subr.bf16.mxu0 %v7241
    %9568 = vmatpush1.bf16.msra.mxu0 %v7240
    %9569 = vmatprep.subr.bf16.mxu0 %v7247
    %9570 = vmatpush1.bf16.msra.mxu0 %v7246
    %9571 = vmatprep.subr.bf16.mxu0 %v7253
    %9572 = vmatpush1.bf16.msra.mxu0 %v7252
    %9573 = vmatprep.subr.bf16.mxu0 %v7259
    %9574 = vmatpush1.bf16.msra.mxu0 %v7258
    %9575 = vmatprep.subr.bf16.mxu0 %v7265
    %9576 = vmatpush1.bf16.msra.mxu0 %v7264
    %9577 = vmatprep.subr.bf16.mxu0 %v7271
    %9578 = vmatpush1.bf16.msra.mxu0 %v7270
    %9579 = vmatprep.subr.bf16.mxu0 %v7277
    %9580 = vmatpush1.bf16.msra.mxu0 %v7276
    %9581 = vmatprep.subr.bf16.mxu0 %v7283
    %9582 = vmatpush1.bf16.msra.mxu0 %v7282
    %9583 = vmatprep.subr.bf16.mxu0 %v7289
    %9584 = vmatpush1.bf16.msra.mxu0 %v7288
    %9585 = vmatprep.subr.bf16.mxu0 %v7295
    %9586 = vmatpush1.bf16.msra.mxu0 %v7294
    %9587 = vmatprep.subr.bf16.mxu0 %v7301
    %9588 = vmatpush1.bf16.msra.mxu0 %v7300
    %9589 = vmatprep.mubr.bf16.mxu0 %v2260
    %9590 = vmatmul.mubr.bf16.gmra.mrb[0].mxu0 %v2259
    %v9591 = vpop.f32.mrb[0].mxu0
    %v9592 = vadd.f32 %v9549, %v9591
    %v9593 = vpop.f32.mrb[0].mxu0
    %v9594 = vadd.f32 %v9551, %v9593
    %v9595 = vpop.f32.mrb[0].mxu0
    %v9596 = vadd.f32 %v9553, %v9595
    %v9597 = vpop.f32.mrb[0].mxu0
    %v9598 = vadd.f32 %v9555, %v9597
    %9599 = vdwg.mxu0
    %9600 = vmatprep.subr.bf16.mxu0 %v7307
    %9601 = vmatpush1.bf16.msra.mxu0 %v7306
    %9602 = vmatprep.subr.bf16.mxu0 %v7313
    %9603 = vmatpush1.bf16.msra.mxu0 %v7312
    %9604 = vmatprep.subr.bf16.mxu0 %v7319
    %9605 = vmatpush1.bf16.msra.mxu0 %v7318
    %9606 = vmatprep.subr.bf16.mxu0 %v7325
    %9607 = vmatpush1.bf16.msra.mxu0 %v7324
    %9608 = vmatprep.subr.bf16.mxu0 %v7331
    %9609 = vmatpush1.bf16.msra.mxu0 %v7330
    %9610 = vmatprep.subr.bf16.mxu0 %v7337
    %9611 = vmatpush1.bf16.msra.mxu0 %v7336
    %9612 = vmatprep.subr.bf16.mxu0 %v7343
    %9613 = vmatpush1.bf16.msra.mxu0 %v7342
    %9614 = vmatprep.subr.bf16.mxu0 %v7349
    %9615 = vmatpush1.bf16.msra.mxu0 %v7348
    %9616 = vmatprep.subr.bf16.mxu0 %v7355
    %9617 = vmatpush1.bf16.msra.mxu0 %v7354
    %9618 = vmatprep.subr.bf16.mxu0 %v7361
    %9619 = vmatpush1.bf16.msra.mxu0 %v7360
    %9620 = vmatprep.subr.bf16.mxu0 %v7367
    %9621 = vmatpush1.bf16.msra.mxu0 %v7366
    %9622 = vmatprep.subr.bf16.mxu0 %v7373
    %9623 = vmatpush1.bf16.msra.mxu0 %v7372
    %9624 = vmatprep.subr.bf16.mxu0 %v7379
    %9625 = vmatpush1.bf16.msra.mxu0 %v7378
    %9626 = vmatprep.subr.bf16.mxu0 %v7385
    %9627 = vmatpush1.bf16.msra.mxu0 %v7384
    %9628 = vmatprep.subr.bf16.mxu0 %v7391
    %9629 = vmatpush1.bf16.msra.mxu0 %v7390
    %9630 = vmatprep.subr.bf16.mxu0 %v7397
    %9631 = vmatpush1.bf16.msra.mxu0 %v7396
    %9632 = vmatprep.mubr.bf16.mxu0 %v2262
    %9633 = vmatmul.mubr.bf16.gmra.mrb[0].mxu0 %v2261
    %v9634 = vpop.f32.mrb[0].mxu0
    %v9635 = vadd.f32 %v9592, %v9634
    %v9636 = vpop.f32.mrb[0].mxu0
    %v9637 = vadd.f32 %v9594, %v9636
    %v9638 = vpop.f32.mrb[0].mxu0
    %v9639 = vadd.f32 %v9596, %v9638
    %v9640 = vpop.f32.mrb[0].mxu0
    %v9641 = vadd.f32 %v9598, %v9640
    %9642 = vdwg.mxu0
    %9643 = vmatprep.subr.bf16.mxu0 %v7403
    %9644 = vmatpush1.bf16.msra.mxu0 %v7402
    %9645 = vmatprep.subr.bf16.mxu0 %v7409
    %9646 = vmatpush1.bf16.msra.mxu0 %v7408
    %9647 = vmatprep.subr.bf16.mxu0 %v7415
    %9648 = vmatpush1.bf16.msra.mxu0 %v7414
    %9649 = vmatprep.subr.bf16.mxu0 %v7421
    %9650 = vmatpush1.bf16.msra.mxu0 %v7420
    %9651 = vmatprep.subr.bf16.mxu0 %v7427
    %9652 = vmatpush1.bf16.msra.mxu0 %v7426
    %9653 = vmatprep.subr.bf16.mxu0 %v7433
    %9654 = vmatpush1.bf16.msra.mxu0 %v7432
    %9655 = vmatprep.subr.bf16.mxu0 %v7439
    %9656 = vmatpush1.bf16.msra.mxu0 %v7438
    %9657 = vmatprep.subr.bf16.mxu0 %v7445
    %9658 = vmatpush1.bf16.msra.mxu0 %v7444
    %9659 = vmatprep.subr.bf16.mxu0 %v7451
    %9660 = vmatpush1.bf16.msra.mxu0 %v7450
    %9661 = vmatprep.subr.bf16.mxu0 %v7457
    %9662 = vmatpush1.bf16.msra.mxu0 %v7456
    %9663 = vmatprep.subr.bf16.mxu0 %v7463
    %9664 = vmatpush1.bf16.msra.mxu0 %v7462
    %9665 = vmatprep.subr.bf16.mxu0 %v7469
    %9666 = vmatpush1.bf16.msra.mxu0 %v7468
    %9667 = vmatprep.subr.bf16.mxu0 %v7475
    %9668 = vmatpush1.bf16.msra.mxu0 %v7474
    %9669 = vmatprep.subr.bf16.mxu0 %v7481
    %9670 = vmatpush1.bf16.msra.mxu0 %v7480
    %9671 = vmatprep.subr.bf16.mxu0 %v7487
    %9672 = vmatpush1.bf16.msra.mxu0 %v7486
    %9673 = vmatprep.subr.bf16.mxu0 %v7493
    %9674 = vmatpush1.bf16.msra.mxu0 %v7492
    %9675 = vmatprep.mubr.bf16.mxu0 %v2264
    %9676 = vmatmul.mubr.bf16.gmra.mrb[0].mxu0 %v2263
    %v9677 = vpop.f32.mrb[0].mxu0
    %v9678 = vadd.f32 %v9635, %v9677
    %v9679 = vpop.f32.mrb[0].mxu0
    %v9680 = vadd.f32 %v9637, %v9679
    %v9681 = vpop.f32.mrb[0].mxu0
    %v9682 = vadd.f32 %v9639, %v9681
    %v9683 = vpop.f32.mrb[0].mxu0
    %v9684 = vadd.f32 %v9641, %v9683
    %9685 = vdwg.mxu0
    %9686 = vmatprep.subr.bf16.mxu0 %v7499
    %9687 = vmatpush1.bf16.msra.mxu0 %v7498
    %9688 = vmatprep.subr.bf16.mxu0 %v7505
    %9689 = vmatpush1.bf16.msra.mxu0 %v7504
    %9690 = vmatprep.subr.bf16.mxu0 %v7511
    %9691 = vmatpush1.bf16.msra.mxu0 %v7510
    %9692 = vmatprep.subr.bf16.mxu0 %v7517
    %9693 = vmatpush1.bf16.msra.mxu0 %v7516
    %9694 = vmatprep.subr.bf16.mxu0 %v7523
    %9695 = vmatpush1.bf16.msra.mxu0 %v7522
    %9696 = vmatprep.subr.bf16.mxu0 %v7529
    %9697 = vmatpush1.bf16.msra.mxu0 %v7528
    %9698 = vmatprep.subr.bf16.mxu0 %v7535
    %9699 = vmatpush1.bf16.msra.mxu0 %v7534
    %9700 = vmatprep.subr.bf16.mxu0 %v7541
    %9701 = vmatpush1.bf16.msra.mxu0 %v7540
    %9702 = vmatprep.subr.bf16.mxu0 %v7547
    %9703 = vmatpush1.bf16.msra.mxu0 %v7546
    %9704 = vmatprep.subr.bf16.mxu0 %v7553
    %9705 = vmatpush1.bf16.msra.mxu0 %v7552
    %9706 = vmatprep.subr.bf16.mxu0 %v7559
    %9707 = vmatpush1.bf16.msra.mxu0 %v7558
    %9708 = vmatprep.subr.bf16.mxu0 %v7565
    %9709 = vmatpush1.bf16.msra.mxu0 %v7564
    %9710 = vmatprep.subr.bf16.mxu0 %v7571
    %9711 = vmatpush1.bf16.msra.mxu0 %v7570
    %9712 = vmatprep.subr.bf16.mxu0 %v7577
    %9713 = vmatpush1.bf16.msra.mxu0 %v7576
    %9714 = vmatprep.subr.bf16.mxu0 %v7583
    %9715 = vmatpush1.bf16.msra.mxu0 %v7582
    %9716 = vmatprep.subr.bf16.mxu0 %v7589
    %9717 = vmatpush1.bf16.msra.mxu0 %v7588
    %9718 = vmatprep.mubr.bf16.mxu0 %v2266
    %9719 = vmatmul.mubr.bf16.gmra.mrb[0].mxu0 %v2265
    %v9720 = vpop.f32.mrb[0].mxu0
    %v9721 = vadd.f32 %v9678, %v9720
    %v9722 = vpop.f32.mrb[0].mxu0
    %v9723 = vadd.f32 %v9680, %v9722
    %v9724 = vpop.f32.mrb[0].mxu0
    %v9725 = vadd.f32 %v9682, %v9724
    %v9726 = vpop.f32.mrb[0].mxu0
    %v9727 = vadd.f32 %v9684, %v9726
    %9728 = vdwg.mxu0
    %9729 = vmatprep.subr.bf16.mxu0 %v7595
    %9730 = vmatpush1.bf16.msra.mxu0 %v7594
    %9731 = vmatprep.subr.bf16.mxu0 %v7601
    %9732 = vmatpush1.bf16.msra.mxu0 %v7600
    %9733 = vmatprep.subr.bf16.mxu0 %v7607
    %9734 = vmatpush1.bf16.msra.mxu0 %v7606
    %9735 = vmatprep.subr.bf16.mxu0 %v7613
    %9736 = vmatpush1.bf16.msra.mxu0 %v7612
    %9737 = vmatprep.subr.bf16.mxu0 %v7619
    %9738 = vmatpush1.bf16.msra.mxu0 %v7618
    %9739 = vmatprep.subr.bf16.mxu0 %v7625
    %9740 = vmatpush1.bf16.msra.mxu0 %v7624
    %9741 = vmatprep.subr.bf16.mxu0 %v7631
    %9742 = vmatpush1.bf16.msra.mxu0 %v7630
    %9743 = vmatprep.subr.bf16.mxu0 %v7637
    %9744 = vmatpush1.bf16.msra.mxu0 %v7636
    %9745 = vmatprep.subr.bf16.mxu0 %v7643
    %9746 = vmatpush1.bf16.msra.mxu0 %v7642
    %9747 = vmatprep.subr.bf16.mxu0 %v7649
    %9748 = vmatpush1.bf16.msra.mxu0 %v7648
    %9749 = vmatprep.subr.bf16.mxu0 %v7655
    %9750 = vmatpush1.bf16.msra.mxu0 %v7654
    %9751 = vmatprep.subr.bf16.mxu0 %v7661
    %9752 = vmatpush1.bf16.msra.mxu0 %v7660
    %9753 = vmatprep.subr.bf16.mxu0 %v7667
    %9754 = vmatpush1.bf16.msra.mxu0 %v7666
    %9755 = vmatprep.subr.bf16.mxu0 %v7673
    %9756 = vmatpush1.bf16.msra.mxu0 %v7672
    %9757 = vmatprep.subr.bf16.mxu0 %v7679
    %9758 = vmatpush1.bf16.msra.mxu0 %v7678
    %9759 = vmatprep.subr.bf16.mxu0 %v7685
    %9760 = vmatpush1.bf16.msra.mxu0 %v7684
    %9761 = vmatprep.mubr.bf16.mxu0 %v2268
    %9762 = vmatmul.mubr.bf16.gmra.mrb[0].mxu0 %v2267
    %v9763 = vpop.f32.mrb[0].mxu0
    %v9764 = vadd.f32 %v9721, %v9763
    %v9765 = vpop.f32.mrb[0].mxu0
    %v9766 = vadd.f32 %v9723, %v9765
    %v9767 = vpop.f32.mrb[0].mxu0
    %v9768 = vadd.f32 %v9725, %v9767
    %v9769 = vpop.f32.mrb[0].mxu0
    %v9770 = vadd.f32 %v9727, %v9769
    %9771 = vdwg.mxu0
    %9772 = vmatprep.subr.bf16.mxu0 %v7691
    %9773 = vmatpush1.bf16.msra.mxu0 %v7690
    %9774 = vmatprep.subr.bf16.mxu0 %v7697
    %9775 = vmatpush1.bf16.msra.mxu0 %v7696
    %9776 = vmatprep.subr.bf16.mxu0 %v7703
    %9777 = vmatpush1.bf16.msra.mxu0 %v7702
    %9778 = vmatprep.subr.bf16.mxu0 %v7709
    %9779 = vmatpush1.bf16.msra.mxu0 %v7708
    %9780 = vmatprep.subr.bf16.mxu0 %v7715
    %9781 = vmatpush1.bf16.msra.mxu0 %v7714
    %9782 = vmatprep.subr.bf16.mxu0 %v7721
    %9783 = vmatpush1.bf16.msra.mxu0 %v7720
    %9784 = vmatprep.subr.bf16.mxu0 %v7727
    %9785 = vmatpush1.bf16.msra.mxu0 %v7726
    %9786 = vmatprep.subr.bf16.mxu0 %v7733
    %9787 = vmatpush1.bf16.msra.mxu0 %v7732
    %9788 = vmatprep.subr.bf16.mxu0 %v7739
    %9789 = vmatpush1.bf16.msra.mxu0 %v7738
    %9790 = vmatprep.subr.bf16.mxu0 %v7745
    %9791 = vmatpush1.bf16.msra.mxu0 %v7744
    %9792 = vmatprep.subr.bf16.mxu0 %v7751
    %9793 = vmatpush1.bf16.msra.mxu0 %v7750
    %9794 = vmatprep.subr.bf16.mxu0 %v7757
    %9795 = vmatpush1.bf16.msra.mxu0 %v7756
    %9796 = vmatprep.subr.bf16.mxu0 %v7763
    %9797 = vmatpush1.bf16.msra.mxu0 %v7762
    %9798 = vmatprep.subr.bf16.mxu0 %v7769
    %9799 = vmatpush1.bf16.msra.mxu0 %v7768
    %9800 = vmatprep.subr.bf16.mxu0 %v7775
    %9801 = vmatpush1.bf16.msra.mxu0 %v7774
    %9802 = vmatprep.subr.bf16.mxu0 %v7781
    %9803 = vmatpush1.bf16.msra.mxu0 %v7780
    %9804 = vmatprep.mubr.bf16.mxu0 %v2270
    %9805 = vmatmul.mubr.bf16.gmra.mrb[0].mxu0 %v2269
    %v9806 = vpop.f32.mrb[0].mxu0
    %v9807 = vadd.f32 %v9764, %v9806
    %v9808 = vpop.f32.mrb[0].mxu0
    %v9809 = vadd.f32 %v9766, %v9808
    %v9810 = vpop.f32.mrb[0].mxu0
    %v9811 = vadd.f32 %v9768, %v9810
    %v9812 = vpop.f32.mrb[0].mxu0
    %v9813 = vadd.f32 %v9770, %v9812
    %9814 = vdwg.mxu0
    %9815 = vmatprep.subr.bf16.mxu0 %v7787
    %9816 = vmatpush1.bf16.msra.mxu0 %v7786
    %9817 = vmatprep.subr.bf16.mxu0 %v7793
    %9818 = vmatpush1.bf16.msra.mxu0 %v7792
    %9819 = vmatprep.subr.bf16.mxu0 %v7799
    %9820 = vmatpush1.bf16.msra.mxu0 %v7798
    %9821 = vmatprep.subr.bf16.mxu0 %v7805
    %9822 = vmatpush1.bf16.msra.mxu0 %v7804
    %9823 = vmatprep.subr.bf16.mxu0 %v7811
    %9824 = vmatpush1.bf16.msra.mxu0 %v7810
    %9825 = vmatprep.subr.bf16.mxu0 %v7817
    %9826 = vmatpush1.bf16.msra.mxu0 %v7816
    %9827 = vmatprep.subr.bf16.mxu0 %v7823
    %9828 = vmatpush1.bf16.msra.mxu0 %v7822
    %9829 = vmatprep.subr.bf16.mxu0 %v7829
    %9830 = vmatpush1.bf16.msra.mxu0 %v7828
    %9831 = vmatprep.subr.bf16.mxu0 %v7835
    %9832 = vmatpush1.bf16.msra.mxu0 %v7834
    %9833 = vmatprep.subr.bf16.mxu0 %v7841
    %9834 = vmatpush1.bf16.msra.mxu0 %v7840
    %9835 = vmatprep.subr.bf16.mxu0 %v7847
    %9836 = vmatpush1.bf16.msra.mxu0 %v7846
    %9837 = vmatprep.subr.bf16.mxu0 %v7853
    %9838 = vmatpush1.bf16.msra.mxu0 %v7852
    %9839 = vmatprep.subr.bf16.mxu0 %v7859
    %9840 = vmatpush1.bf16.msra.mxu0 %v7858
    %9841 = vmatprep.subr.bf16.mxu0 %v7865
    %9842 = vmatpush1.bf16.msra.mxu0 %v7864
    %9843 = vmatprep.subr.bf16.mxu0 %v7871
    %9844 = vmatpush1.bf16.msra.mxu0 %v7870
    %9845 = vmatprep.subr.bf16.mxu0 %v7877
    %9846 = vmatpush1.bf16.msra.mxu0 %v7876
    %9847 = vmatprep.mubr.bf16.mxu0 %v2272
    %9848 = vmatmul.mubr.bf16.gmra.mrb[0].mxu0 %v2271
    %v9849 = vpop.f32.mrb[0].mxu0
    %v9850 = vadd.f32 %v9807, %v9849
    %v9851 = vpop.f32.mrb[0].mxu0
    %v9852 = vadd.f32 %v9809, %v9851
    %v9853 = vpop.f32.mrb[0].mxu0
    %v9854 = vadd.f32 %v9811, %v9853
    %v9855 = vpop.f32.mrb[0].mxu0
    %v9856 = vadd.f32 %v9813, %v9855
    %9857 = vdwg.mxu0
    %9858 = vmatprep.subr.bf16.mxu0 %v7883
    %9859 = vmatpush1.bf16.msra.mxu0 %v7882
    %9860 = vmatprep.subr.bf16.mxu0 %v7889
    %9861 = vmatpush1.bf16.msra.mxu0 %v7888
    %9862 = vmatprep.subr.bf16.mxu0 %v7895
    %9863 = vmatpush1.bf16.msra.mxu0 %v7894
    %9864 = vmatprep.subr.bf16.mxu0 %v7901
    %9865 = vmatpush1.bf16.msra.mxu0 %v7900
    %9866 = vmatprep.subr.bf16.mxu0 %v7907
    %9867 = vmatpush1.bf16.msra.mxu0 %v7906
    %9868 = vmatprep.subr.bf16.mxu0 %v7913
    %9869 = vmatpush1.bf16.msra.mxu0 %v7912
    %9870 = vmatprep.subr.bf16.mxu0 %v7919
    %9871 = vmatpush1.bf16.msra.mxu0 %v7918
    %9872 = vmatprep.subr.bf16.mxu0 %v7925
    %9873 = vmatpush1.bf16.msra.mxu0 %v7924
    %9874 = vmatprep.subr.bf16.mxu0 %v7931
    %9875 = vmatpush1.bf16.msra.mxu0 %v7930
    %9876 = vmatprep.subr.bf16.mxu0 %v7937
    %9877 = vmatpush1.bf16.msra.mxu0 %v7936
    %9878 = vmatprep.subr.bf16.mxu0 %v7943
    %9879 = vmatpush1.bf16.msra.mxu0 %v7942
    %9880 = vmatprep.subr.bf16.mxu0 %v7949
    %9881 = vmatpush1.bf16.msra.mxu0 %v7948
    %9882 = vmatprep.subr.bf16.mxu0 %v7955
    %9883 = vmatpush1.bf16.msra.mxu0 %v7954
    %9884 = vmatprep.subr.bf16.mxu0 %v7961
    %9885 = vmatpush1.bf16.msra.mxu0 %v7960
    %9886 = vmatprep.subr.bf16.mxu0 %v7967
    %9887 = vmatpush1.bf16.msra.mxu0 %v7966
    %9888 = vmatprep.subr.bf16.mxu0 %v7973
    %9889 = vmatpush1.bf16.msra.mxu0 %v7972
    %9890 = vmatprep.mubr.bf16.mxu0 %v2274
    %9891 = vmatmul.mubr.bf16.gmra.mrb[0].mxu0 %v2273
    %v9892 = vpop.f32.mrb[0].mxu0
    %v9893 = vadd.f32 %v9850, %v9892
    %v9894 = vpop.f32.mrb[0].mxu0
    %v9895 = vadd.f32 %v9852, %v9894
    %v9896 = vpop.f32.mrb[0].mxu0
    %v9897 = vadd.f32 %v9854, %v9896
    %v9898 = vpop.f32.mrb[0].mxu0
    %v9899 = vadd.f32 %v9856, %v9898
    %9900 = vdwg.mxu0
    %9901 = vmatprep.subr.bf16.mxu0 %v7979
    %9902 = vmatpush1.bf16.msra.mxu0 %v7978
    %9903 = vmatprep.subr.bf16.mxu0 %v7985
    %9904 = vmatpush1.bf16.msra.mxu0 %v7984
    %9905 = vmatprep.subr.bf16.mxu0 %v7991
    %9906 = vmatpush1.bf16.msra.mxu0 %v7990
    %9907 = vmatprep.subr.bf16.mxu0 %v7997
    %9908 = vmatpush1.bf16.msra.mxu0 %v7996
    %9909 = vmatprep.subr.bf16.mxu0 %v8003
    %9910 = vmatpush1.bf16.msra.mxu0 %v8002
    %9911 = vmatprep.subr.bf16.mxu0 %v8009
    %9912 = vmatpush1.bf16.msra.mxu0 %v8008
    %9913 = vmatprep.subr.bf16.mxu0 %v8015
    %9914 = vmatpush1.bf16.msra.mxu0 %v8014
    %9915 = vmatprep.subr.bf16.mxu0 %v8021
    %9916 = vmatpush1.bf16.msra.mxu0 %v8020
    %9917 = vmatprep.subr.bf16.mxu0 %v8027
    %9918 = vmatpush1.bf16.msra.mxu0 %v8026
    %9919 = vmatprep.subr.bf16.mxu0 %v8033
    %9920 = vmatpush1.bf16.msra.mxu0 %v8032
    %9921 = vmatprep.subr.bf16.mxu0 %v8039
    %9922 = vmatpush1.bf16.msra.mxu0 %v8038
    %9923 = vmatprep.subr.bf16.mxu0 %v8045
    %9924 = vmatpush1.bf16.msra.mxu0 %v8044
    %9925 = vmatprep.subr.bf16.mxu0 %v8051
    %9926 = vmatpush1.bf16.msra.mxu0 %v8050
    %9927 = vmatprep.subr.bf16.mxu0 %v8057
    %9928 = vmatpush1.bf16.msra.mxu0 %v8056
    %9929 = vmatprep.subr.bf16.mxu0 %v8063
    %9930 = vmatpush1.bf16.msra.mxu0 %v8062
    %9931 = vmatprep.subr.bf16.mxu0 %v8069
    %9932 = vmatpush1.bf16.msra.mxu0 %v8068
    %9933 = vmatprep.mubr.bf16.mxu0 %v2276
    %9934 = vmatmul.mubr.bf16.gmra.mrb[0].mxu0 %v2275
    %v9935 = vpop.f32.mrb[0].mxu0
    %v9936 = vadd.f32 %v9893, %v9935
    %v9937 = vpop.f32.mrb[0].mxu0
    %v9938 = vadd.f32 %v9895, %v9937
    %v9939 = vpop.f32.mrb[0].mxu0
    %v9940 = vadd.f32 %v9897, %v9939
    %v9941 = vpop.f32.mrb[0].mxu0
    %v9942 = vadd.f32 %v9899, %v9941
    %9943 = vdwg.mxu0
    %9944 = vmatprep.subr.bf16.mxu0 %v8075
    %9945 = vmatpush1.bf16.msra.mxu0 %v8074
    %9946 = vmatprep.subr.bf16.mxu0 %v8081
    %9947 = vmatpush1.bf16.msra.mxu0 %v8080
    %9948 = vmatprep.subr.bf16.mxu0 %v8087
    %9949 = vmatpush1.bf16.msra.mxu0 %v8086
    %9950 = vmatprep.subr.bf16.mxu0 %v8093
    %9951 = vmatpush1.bf16.msra.mxu0 %v8092
    %9952 = vmatprep.subr.bf16.mxu0 %v8099
    %9953 = vmatpush1.bf16.msra.mxu0 %v8098
    %9954 = vmatprep.subr.bf16.mxu0 %v8105
    %9955 = vmatpush1.bf16.msra.mxu0 %v8104
    %9956 = vmatprep.subr.bf16.mxu0 %v8111
    %9957 = vmatpush1.bf16.msra.mxu0 %v8110
    %9958 = vmatprep.subr.bf16.mxu0 %v8117
    %9959 = vmatpush1.bf16.msra.mxu0 %v8116
    %9960 = vmatprep.subr.bf16.mxu0 %v8123
    %9961 = vmatpush1.bf16.msra.mxu0 %v8122
    %9962 = vmatprep.subr.bf16.mxu0 %v8129
    %9963 = vmatpush1.bf16.msra.mxu0 %v8128
    %9964 = vmatprep.subr.bf16.mxu0 %v8135
    %9965 = vmatpush1.bf16.msra.mxu0 %v8134
    %9966 = vmatprep.subr.bf16.mxu0 %v8141
    %9967 = vmatpush1.bf16.msra.mxu0 %v8140
    %9968 = vmatprep.subr.bf16.mxu0 %v8147
    %9969 = vmatpush1.bf16.msra.mxu0 %v8146
    %9970 = vmatprep.subr.bf16.mxu0 %v8153
    %9971 = vmatpush1.bf16.msra.mxu0 %v8152
    %9972 = vmatprep.subr.bf16.mxu0 %v8159
    %9973 = vmatpush1.bf16.msra.mxu0 %v8158
    %9974 = vmatprep.subr.bf16.mxu0 %v8165
    %9975 = vmatpush1.bf16.msra.mxu0 %v8164
    %9976 = vmatprep.mubr.bf16.mxu0 %v2278
    %9977 = vmatmul.mubr.bf16.gmra.mrb[0].mxu0 %v2277
    %v9978 = vpop.f32.mrb[0].mxu0
    %v9979 = vadd.f32 %v9936, %v9978
    %v9980 = vpop.f32.mrb[0].mxu0
    %v9981 = vadd.f32 %v9938, %v9980
    %v9982 = vpop.f32.mrb[0].mxu0
    %v9983 = vadd.f32 %v9940, %v9982
    %v9984 = vpop.f32.mrb[0].mxu0
    %v9985 = vadd.f32 %v9942, %v9984
    %9986 = vdwg.mxu0
    %9987 = vmatprep.subr.bf16.mxu0 %v8171
    %9988 = vmatpush1.bf16.msra.mxu0 %v8170
    %9989 = vmatprep.subr.bf16.mxu0 %v8177
    %9990 = vmatpush1.bf16.msra.mxu0 %v8176
    %9991 = vmatprep.subr.bf16.mxu0 %v8183
    %9992 = vmatpush1.bf16.msra.mxu0 %v8182
    %9993 = vmatprep.subr.bf16.mxu0 %v8189
    %9994 = vmatpush1.bf16.msra.mxu0 %v8188
    %9995 = vmatprep.subr.bf16.mxu0 %v8195
    %9996 = vmatpush1.bf16.msra.mxu0 %v8194
    %9997 = vmatprep.subr.bf16.mxu0 %v8201
    %9998 = vmatpush1.bf16.msra.mxu0 %v8200
    %9999 = vmatprep.subr.bf16.mxu0 %v8207
    %10000 = vmatpush1.bf16.msra.mxu0 %v8206
    %10001 = vmatprep.subr.bf16.mxu0 %v8213
    %10002 = vmatpush1.bf16.msra.mxu0 %v8212
    %10003 = vmatprep.subr.bf16.mxu0 %v8219
    %10004 = vmatpush1.bf16.msra.mxu0 %v8218
    %10005 = vmatprep.subr.bf16.mxu0 %v8225
    %10006 = vmatpush1.bf16.msra.mxu0 %v8224
    %10007 = vmatprep.subr.bf16.mxu0 %v8231
    %10008 = vmatpush1.bf16.msra.mxu0 %v8230
    %10009 = vmatprep.subr.bf16.mxu0 %v8237
    %10010 = vmatpush1.bf16.msra.mxu0 %v8236
    %10011 = vmatprep.subr.bf16.mxu0 %v8243
    %10012 = vmatpush1.bf16.msra.mxu0 %v8242
    %10013 = vmatprep.subr.bf16.mxu0 %v8249
    %10014 = vmatpush1.bf16.msra.mxu0 %v8248
    %10015 = vmatprep.subr.bf16.mxu0 %v8255
    %10016 = vmatpush1.bf16.msra.mxu0 %v8254
    %10017 = vmatprep.subr.bf16.mxu0 %v8261
    %10018 = vmatpush1.bf16.msra.mxu0 %v8260
    %10019 = vmatprep.mubr.bf16.mxu0 %v2280
    %10020 = vmatmul.mubr.bf16.gmra.mrb[0].mxu0 %v2279
    %v10021 = vpop.f32.mrb[0].mxu0
    %v10022 = vadd.f32 %v9979, %v10021
    %v10023 = vpop.f32.mrb[0].mxu0
    %v10024 = vadd.f32 %v9981, %v10023
    %v10025 = vpop.f32.mrb[0].mxu0
    %v10026 = vadd.f32 %v9983, %v10025
    %v10027 = vpop.f32.mrb[0].mxu0
    %v10028 = vadd.f32 %v9985, %v10027
    %10029 = vdwg.mxu0
    %10030 = vmatprep.subr.bf16.mxu0 %v8267
    %10031 = vmatpush1.bf16.msra.mxu0 %v8266
    %10032 = vmatprep.subr.bf16.mxu0 %v8273
    %10033 = vmatpush1.bf16.msra.mxu0 %v8272
    %10034 = vmatprep.subr.bf16.mxu0 %v8279
    %10035 = vmatpush1.bf16.msra.mxu0 %v8278
    %10036 = vmatprep.subr.bf16.mxu0 %v8285
    %10037 = vmatpush1.bf16.msra.mxu0 %v8284
    %10038 = vmatprep.subr.bf16.mxu0 %v8291
    %10039 = vmatpush1.bf16.msra.mxu0 %v8290
    %10040 = vmatprep.subr.bf16.mxu0 %v8297
    %10041 = vmatpush1.bf16.msra.mxu0 %v8296
    %10042 = vmatprep.subr.bf16.mxu0 %v8303
    %10043 = vmatpush1.bf16.msra.mxu0 %v8302
    %10044 = vmatprep.subr.bf16.mxu0 %v8309
    %10045 = vmatpush1.bf16.msra.mxu0 %v8308
    %10046 = vmatprep.subr.bf16.mxu0 0
    %10047 = vmatpush1.bf16.msra.mxu0 0
    %10048 = vmatprep.subr.bf16.mxu0 0
    %10049 = vmatpush1.bf16.msra.mxu0 0
    %10050 = vmatprep.subr.bf16.mxu0 0
    %10051 = vmatpush1.bf16.msra.mxu0 0
    %10052 = vmatprep.subr.bf16.mxu0 0
    %10053 = vmatpush1.bf16.msra.mxu0 0
    %10054 = vmatprep.subr.bf16.mxu0 0
    %10055 = vmatpush1.bf16.msra.mxu0 0
    %10056 = vmatprep.subr.bf16.mxu0 0
    %10057 = vmatpush1.bf16.msra.mxu0 0
    %10058 = vmatprep.subr.bf16.mxu0 0
    %10059 = vmatpush1.bf16.msra.mxu0 0
    %10060 = vmatprep.subr.bf16.mxu0 0
    %10061 = vmatpush1.bf16.msra.mxu0 0
    %10062 = vmatprep.mubr.bf16.mxu0 0
    %10063 = vmatmul.mubr.bf16.gmra.mrb[0].mxu0 %v2281
    %v10064 = vpop.f32.mrb[0].mxu0
    %v10065 = vadd.f32 %v10022, %v10064
    %v10066 = vpop.f32.mrb[0].mxu0
    %v10067 = vadd.f32 %v10024, %v10066
    %v10068 = vpop.f32.mrb[0].mxu0
    %v10069 = vadd.f32 %v10026, %v10068
    %v10070 = vpop.f32.mrb[0].mxu0
    %v10071 = vadd.f32 %v10028, %v10070
    %10072 = vdwg.mxu0
    %10073 = vmatprep.subr.bf16.mxu0 %v7117
    %10074 = vmatpush1.bf16.msra.mxu0 %v7116
    %10075 = vmatprep.subr.bf16.mxu0 %v7123
    %10076 = vmatpush1.bf16.msra.mxu0 %v7122
    %10077 = vmatprep.subr.bf16.mxu0 %v7129
    %10078 = vmatpush1.bf16.msra.mxu0 %v7128
    %10079 = vmatprep.subr.bf16.mxu0 %v7135
    %10080 = vmatpush1.bf16.msra.mxu0 %v7134
    %10081 = vmatprep.subr.bf16.mxu0 %v7141
    %10082 = vmatpush1.bf16.msra.mxu0 %v7140
    %10083 = vmatprep.subr.bf16.mxu0 %v7147
    %10084 = vmatpush1.bf16.msra.mxu0 %v7146
    %10085 = vmatprep.subr.bf16.mxu0 %v7153
    %10086 = vmatpush1.bf16.msra.mxu0 %v7152
    %10087 = vmatprep.subr.bf16.mxu0 %v7159
    %10088 = vmatpush1.bf16.msra.mxu0 %v7158
    %10089 = vmatprep.subr.bf16.mxu0 %v7165
    %10090 = vmatpush1.bf16.msra.mxu0 %v7164
    %10091 = vmatprep.subr.bf16.mxu0 %v7171
    %10092 = vmatpush1.bf16.msra.mxu0 %v7170
    %10093 = vmatprep.subr.bf16.mxu0 %v7177
    %10094 = vmatpush1.bf16.msra.mxu0 %v7176
    %10095 = vmatprep.subr.bf16.mxu0 %v7183
    %10096 = vmatpush1.bf16.msra.mxu0 %v7182
    %10097 = vmatprep.subr.bf16.mxu0 %v7189
    %10098 = vmatpush1.bf16.msra.mxu0 %v7188
    %10099 = vmatprep.subr.bf16.mxu0 %v7195
    %10100 = vmatpush1.bf16.msra.mxu0 %v7194
    %10101 = vmatprep.subr.bf16.mxu0 %v7201
    %10102 = vmatpush1.bf16.msra.mxu0 %v7200
    %10103 = vmatprep.subr.bf16.mxu0 %v7207
    %10104 = vmatpush1.bf16.msra.mxu0 %v7206
    %10105 = vmatprep.mubr.bf16.mxu0 %v2258
    %10106 = vmatmul.mubr.bf16.gmra.mrb[0].mxu0 %v2257
    %v10107 = vpop.f32.mrb[0].mxu0
    %v10108 = vadd.f32 %v3495, %v10107
    %v10109 = vpop.f32.mrb[0].mxu0
    %v10110 = vadd.f32 %v3499, %v10109
    %v10111 = vpop.f32.mrb[0].mxu0
    %v10112 = vadd.f32 %v3495, %v10111
    %v10113 = vpop.f32.mrb[0].mxu0
    %v10114 = vadd.f32 %v3499, %v10113
    %10115 = vdwg.mxu0
    %10116 = vmatprep.subr.bf16.mxu0 %v7213
    %10117 = vmatpush1.bf16.msra.mxu0 %v7212
    %10118 = vmatprep.subr.bf16.mxu0 %v7219
    %10119 = vmatpush1.bf16.msra.mxu0 %v7218
    %10120 = vmatprep.subr.bf16.mxu0 %v7225
    %10121 = vmatpush1.bf16.msra.mxu0 %v7224
    %10122 = vmatprep.subr.bf16.mxu0 %v7231
    %10123 = vmatpush1.bf16.msra.mxu0 %v7230
    %10124 = vmatprep.subr.bf16.mxu0 %v7237
    %10125 = vmatpush1.bf16.msra.mxu0 %v7236
    %10126 = vmatprep.subr.bf16.mxu0 %v7243
    %10127 = vmatpush1.bf16.msra.mxu0 %v7242
    %10128 = vmatprep.subr.bf16.mxu0 %v7249
    %10129 = vmatpush1.bf16.msra.mxu0 %v7248
    %10130 = vmatprep.subr.bf16.mxu0 %v7255
    %10131 = vmatpush1.bf16.msra.mxu0 %v7254
    %10132 = vmatprep.subr.bf16.mxu0 %v7261
    %10133 = vmatpush1.bf16.msra.mxu0 %v7260
    %10134 = vmatprep.subr.bf16.mxu0 %v7267
    %10135 = vmatpush1.bf16.msra.mxu0 %v7266
    %10136 = vmatprep.subr.bf16.mxu0 %v7273
    %10137 = vmatpush1.bf16.msra.mxu0 %v7272
    %10138 = vmatprep.subr.bf16.mxu0 %v7279
    %10139 = vmatpush1.bf16.msra.mxu0 %v7278
    %10140 = vmatprep.subr.bf16.mxu0 %v7285
    %10141 = vmatpush1.bf16.msra.mxu0 %v7284
    %10142 = vmatprep.subr.bf16.mxu0 %v7291
    %10143 = vmatpush1.bf16.msra.mxu0 %v7290
    %10144 = vmatprep.subr.bf16.mxu0 %v7297
    %10145 = vmatpush1.bf16.msra.mxu0 %v7296
    %10146 = vmatprep.subr.bf16.mxu0 %v7303
    %10147 = vmatpush1.bf16.msra.mxu0 %v7302
    %10148 = vmatprep.mubr.bf16.mxu0 %v2260
    %10149 = vmatmul.mubr.bf16.gmra.mrb[0].mxu0 %v2259
    %v10150 = vpop.f32.mrb[0].mxu0
    %v10151 = vadd.f32 %v10108, %v10150
    %v10152 = vpop.f32.mrb[0].mxu0
    %v10153 = vadd.f32 %v10110, %v10152
    %v10154 = vpop.f32.mrb[0].mxu0
    %v10155 = vadd.f32 %v10112, %v10154
    %v10156 = vpop.f32.mrb[0].mxu0
    %v10157 = vadd.f32 %v10114, %v10156
    %10158 = vdwg.mxu0
    %10159 = vmatprep.subr.bf16.mxu0 %v7309
    %10160 = vmatpush1.bf16.msra.mxu0 %v7308
    %10161 = vmatprep.subr.bf16.mxu0 %v7315
    %10162 = vmatpush1.bf16.msra.mxu0 %v7314
    %10163 = vmatprep.subr.bf16.mxu0 %v7321
    %10164 = vmatpush1.bf16.msra.mxu0 %v7320
    %10165 = vmatprep.subr.bf16.mxu0 %v7327
    %10166 = vmatpush1.bf16.msra.mxu0 %v7326
    %10167 = vmatprep.subr.bf16.mxu0 %v7333
    %10168 = vmatpush1.bf16.msra.mxu0 %v7332
    %10169 = vmatprep.subr.bf16.mxu0 %v7339
    %10170 = vmatpush1.bf16.msra.mxu0 %v7338
    %10171 = vmatprep.subr.bf16.mxu0 %v7345
    %10172 = vmatpush1.bf16.msra.mxu0 %v7344
    %10173 = vmatprep.subr.bf16.mxu0 %v7351
    %10174 = vmatpush1.bf16.msra.mxu0 %v7350
    %10175 = vmatprep.subr.bf16.mxu0 %v7357
    %10176 = vmatpush1.bf16.msra.mxu0 %v7356
    %10177 = vmatprep.subr.bf16.mxu0 %v7363
    %10178 = vmatpush1.bf16.msra.mxu0 %v7362
    %10179 = vmatprep.subr.bf16.mxu0 %v7369
    %10180 = vmatpush1.bf16.msra.mxu0 %v7368
    %10181 = vmatprep.subr.bf16.mxu0 %v7375
    %10182 = vmatpush1.bf16.msra.mxu0 %v7374
    %10183 = vmatprep.subr.bf16.mxu0 %v7381
    %10184 = vmatpush1.bf16.msra.mxu0 %v7380
    %10185 = vmatprep.subr.bf16.mxu0 %v7387
    %10186 = vmatpush1.bf16.msra.mxu0 %v7386
    %10187 = vmatprep.subr.bf16.mxu0 %v7393
    %10188 = vmatpush1.bf16.msra.mxu0 %v7392
    %10189 = vmatprep.subr.bf16.mxu0 %v7399
    %10190 = vmatpush1.bf16.msra.mxu0 %v7398
    %10191 = vmatprep.mubr.bf16.mxu0 %v2262
    %10192 = vmatmul.mubr.bf16.gmra.mrb[0].mxu0 %v2261
    %v10193 = vpop.f32.mrb[0].mxu0
    %v10194 = vadd.f32 %v10151, %v10193
    %v10195 = vpop.f32.mrb[0].mxu0
    %v10196 = vadd.f32 %v10153, %v10195
    %v10197 = vpop.f32.mrb[0].mxu0
    %v10198 = vadd.f32 %v10155, %v10197
    %v10199 = vpop.f32.mrb[0].mxu0
    %v10200 = vadd.f32 %v10157, %v10199
    %10201 = vdwg.mxu0
    %10202 = vmatprep.subr.bf16.mxu0 %v7405
    %10203 = vmatpush1.bf16.msra.mxu0 %v7404
    %10204 = vmatprep.subr.bf16.mxu0 %v7411
    %10205 = vmatpush1.bf16.msra.mxu0 %v7410
    %10206 = vmatprep.subr.bf16.mxu0 %v7417
    %10207 = vmatpush1.bf16.msra.mxu0 %v7416
    %10208 = vmatprep.subr.bf16.mxu0 %v7423
    %10209 = vmatpush1.bf16.msra.mxu0 %v7422
    %10210 = vmatprep.subr.bf16.mxu0 %v7429
    %10211 = vmatpush1.bf16.msra.mxu0 %v7428
    %10212 = vmatprep.subr.bf16.mxu0 %v7435
    %10213 = vmatpush1.bf16.msra.mxu0 %v7434
    %10214 = vmatprep.subr.bf16.mxu0 %v7441
    %10215 = vmatpush1.bf16.msra.mxu0 %v7440
    %10216 = vmatprep.subr.bf16.mxu0 %v7447
    %10217 = vmatpush1.bf16.msra.mxu0 %v7446
    %10218 = vmatprep.subr.bf16.mxu0 %v7453
    %10219 = vmatpush1.bf16.msra.mxu0 %v7452
    %10220 = vmatprep.subr.bf16.mxu0 %v7459
    %10221 = vmatpush1.bf16.msra.mxu0 %v7458
    %10222 = vmatprep.subr.bf16.mxu0 %v7465
    %10223 = vmatpush1.bf16.msra.mxu0 %v7464
    %10224 = vmatprep.subr.bf16.mxu0 %v7471
    %10225 = vmatpush1.bf16.msra.mxu0 %v7470
    %10226 = vmatprep.subr.bf16.mxu0 %v7477
    %10227 = vmatpush1.bf16.msra.mxu0 %v7476
    %10228 = vmatprep.subr.bf16.mxu0 %v7483
    %10229 = vmatpush1.bf16.msra.mxu0 %v7482
    %10230 = vmatprep.subr.bf16.mxu0 %v7489
    %10231 = vmatpush1.bf16.msra.mxu0 %v7488
    %10232 = vmatprep.subr.bf16.mxu0 %v7495
    %10233 = vmatpush1.bf16.msra.mxu0 %v7494
    %10234 = vmatprep.mubr.bf16.mxu0 %v2264
    %10235 = vmatmul.mubr.bf16.gmra.mrb[0].mxu0 %v2263
    %v10236 = vpop.f32.mrb[0].mxu0
    %v10237 = vadd.f32 %v10194, %v10236
    %v10238 = vpop.f32.mrb[0].mxu0
    %v10239 = vadd.f32 %v10196, %v10238
    %v10240 = vpop.f32.mrb[0].mxu0
    %v10241 = vadd.f32 %v10198, %v10240
    %v10242 = vpop.f32.mrb[0].mxu0
    %v10243 = vadd.f32 %v10200, %v10242
    %10244 = vdwg.mxu0
    %10245 = vmatprep.subr.bf16.mxu0 %v7501
    %10246 = vmatpush1.bf16.msra.mxu0 %v7500
    %10247 = vmatprep.subr.bf16.mxu0 %v7507
    %10248 = vmatpush1.bf16.msra.mxu0 %v7506
    %10249 = vmatprep.subr.bf16.mxu0 %v7513
    %10250 = vmatpush1.bf16.msra.mxu0 %v7512
    %10251 = vmatprep.subr.bf16.mxu0 %v7519
    %10252 = vmatpush1.bf16.msra.mxu0 %v7518
    %10253 = vmatprep.subr.bf16.mxu0 %v7525
    %10254 = vmatpush1.bf16.msra.mxu0 %v7524
    %10255 = vmatprep.subr.bf16.mxu0 %v7531
    %10256 = vmatpush1.bf16.msra.mxu0 %v7530
    %10257 = vmatprep.subr.bf16.mxu0 %v7537
    %10258 = vmatpush1.bf16.msra.mxu0 %v7536
    %10259 = vmatprep.subr.bf16.mxu0 %v7543
    %10260 = vmatpush1.bf16.msra.mxu0 %v7542
    %10261 = vmatprep.subr.bf16.mxu0 %v7549
    %10262 = vmatpush1.bf16.msra.mxu0 %v7548
    %10263 = vmatprep.subr.bf16.mxu0 %v7555
    %10264 = vmatpush1.bf16.msra.mxu0 %v7554
    %10265 = vmatprep.subr.bf16.mxu0 %v7561
    %10266 = vmatpush1.bf16.msra.mxu0 %v7560
    %10267 = vmatprep.subr.bf16.mxu0 %v7567
    %10268 = vmatpush1.bf16.msra.mxu0 %v7566
    %10269 = vmatprep.subr.bf16.mxu0 %v7573
    %10270 = vmatpush1.bf16.msra.mxu0 %v7572
    %10271 = vmatprep.subr.bf16.mxu0 %v7579
    %10272 = vmatpush1.bf16.msra.mxu0 %v7578
    %10273 = vmatprep.subr.bf16.mxu0 %v7585
    %10274 = vmatpush1.bf16.msra.mxu0 %v7584
    %10275 = vmatprep.subr.bf16.mxu0 %v7591
    %10276 = vmatpush1.bf16.msra.mxu0 %v7590
    %10277 = vmatprep.mubr.bf16.mxu0 %v2266
    %10278 = vmatmul.mubr.bf16.gmra.mrb[0].mxu0 %v2265
    %v10279 = vpop.f32.mrb[0].mxu0
    %v10280 = vadd.f32 %v10237, %v10279
    %v10281 = vpop.f32.mrb[0].mxu0
    %v10282 = vadd.f32 %v10239, %v10281
    %v10283 = vpop.f32.mrb[0].mxu0
    %v10284 = vadd.f32 %v10241, %v10283
    %v10285 = vpop.f32.mrb[0].mxu0
    %v10286 = vadd.f32 %v10243, %v10285
    %10287 = vdwg.mxu0
    %10288 = vmatprep.subr.bf16.mxu0 %v7597
    %10289 = vmatpush1.bf16.msra.mxu0 %v7596
    %10290 = vmatprep.subr.bf16.mxu0 %v7603
    %10291 = vmatpush1.bf16.msra.mxu0 %v7602
    %10292 = vmatprep.subr.bf16.mxu0 %v7609
    %10293 = vmatpush1.bf16.msra.mxu0 %v7608
    %10294 = vmatprep.subr.bf16.mxu0 %v7615
    %10295 = vmatpush1.bf16.msra.mxu0 %v7614
    %10296 = vmatprep.subr.bf16.mxu0 %v7621
    %10297 = vmatpush1.bf16.msra.mxu0 %v7620
    %10298 = vmatprep.subr.bf16.mxu0 %v7627
    %10299 = vmatpush1.bf16.msra.mxu0 %v7626
    %10300 = vmatprep.subr.bf16.mxu0 %v7633
    %10301 = vmatpush1.bf16.msra.mxu0 %v7632
    %10302 = vmatprep.subr.bf16.mxu0 %v7639
    %10303 = vmatpush1.bf16.msra.mxu0 %v7638
    %10304 = vmatprep.subr.bf16.mxu0 %v7645
    %10305 = vmatpush1.bf16.msra.mxu0 %v7644
    %10306 = vmatprep.subr.bf16.mxu0 %v7651
    %10307 = vmatpush1.bf16.msra.mxu0 %v7650
    %10308 = vmatprep.subr.bf16.mxu0 %v7657
    %10309 = vmatpush1.bf16.msra.mxu0 %v7656
    %10310 = vmatprep.subr.bf16.mxu0 %v7663
    %10311 = vmatpush1.bf16.msra.mxu0 %v7662
    %10312 = vmatprep.subr.bf16.mxu0 %v7669
    %10313 = vmatpush1.bf16.msra.mxu0 %v7668
    %10314 = vmatprep.subr.bf16.mxu0 %v7675
    %10315 = vmatpush1.bf16.msra.mxu0 %v7674
    %10316 = vmatprep.subr.bf16.mxu0 %v7681
    %10317 = vmatpush1.bf16.msra.mxu0 %v7680
    %10318 = vmatprep.subr.bf16.mxu0 %v7687
    %10319 = vmatpush1.bf16.msra.mxu0 %v7686
    %10320 = vmatprep.mubr.bf16.mxu0 %v2268
    %10321 = vmatmul.mubr.bf16.gmra.mrb[0].mxu0 %v2267
    %v10322 = vpop.f32.mrb[0].mxu0
    %v10323 = vadd.f32 %v10280, %v10322
    %v10324 = vpop.f32.mrb[0].mxu0
    %v10325 = vadd.f32 %v10282, %v10324
    %v10326 = vpop.f32.mrb[0].mxu0
    %v10327 = vadd.f32 %v10284, %v10326
    %v10328 = vpop.f32.mrb[0].mxu0
    %v10329 = vadd.f32 %v10286, %v10328
    %10330 = vdwg.mxu0
    %10331 = vmatprep.subr.bf16.mxu0 %v7693
    %10332 = vmatpush1.bf16.msra.mxu0 %v7692
    %10333 = vmatprep.subr.bf16.mxu0 %v7699
    %10334 = vmatpush1.bf16.msra.mxu0 %v7698
    %10335 = vmatprep.subr.bf16.mxu0 %v7705
    %10336 = vmatpush1.bf16.msra.mxu0 %v7704
    %10337 = vmatprep.subr.bf16.mxu0 %v7711
    %10338 = vmatpush1.bf16.msra.mxu0 %v7710
    %10339 = vmatprep.subr.bf16.mxu0 %v7717
    %10340 = vmatpush1.bf16.msra.mxu0 %v7716
    %10341 = vmatprep.subr.bf16.mxu0 %v7723
    %10342 = vmatpush1.bf16.msra.mxu0 %v7722
    %10343 = vmatprep.subr.bf16.mxu0 %v7729
    %10344 = vmatpush1.bf16.msra.mxu0 %v7728
    %10345 = vmatprep.subr.bf16.mxu0 %v7735
    %10346 = vmatpush1.bf16.msra.mxu0 %v7734
    %10347 = vmatprep.subr.bf16.mxu0 %v7741
    %10348 = vmatpush1.bf16.msra.mxu0 %v7740
    %10349 = vmatprep.subr.bf16.mxu0 %v7747
    %10350 = vmatpush1.bf16.msra.mxu0 %v7746
    %10351 = vmatprep.subr.bf16.mxu0 %v7753
    %10352 = vmatpush1.bf16.msra.mxu0 %v7752
    %10353 = vmatprep.subr.bf16.mxu0 %v7759
    %10354 = vmatpush1.bf16.msra.mxu0 %v7758
    %10355 = vmatprep.subr.bf16.mxu0 %v7765
    %10356 = vmatpush1.bf16.msra.mxu0 %v7764
    %10357 = vmatprep.subr.bf16.mxu0 %v7771
    %10358 = vmatpush1.bf16.msra.mxu0 %v7770
    %10359 = vmatprep.subr.bf16.mxu0 %v7777
    %10360 = vmatpush1.bf16.msra.mxu0 %v7776
    %10361 = vmatprep.subr.bf16.mxu0 %v7783
    %10362 = vmatpush1.bf16.msra.mxu0 %v7782
    %10363 = vmatprep.mubr.bf16.mxu0 %v2270
    %10364 = vmatmul.mubr.bf16.gmra.mrb[0].mxu0 %v2269
    %v10365 = vpop.f32.mrb[0].mxu0
    %v10366 = vadd.f32 %v10323, %v10365
    %v10367 = vpop.f32.mrb[0].mxu0
    %v10368 = vadd.f32 %v10325, %v10367
    %v10369 = vpop.f32.mrb[0].mxu0
    %v10370 = vadd.f32 %v10327, %v10369
    %v10371 = vpop.f32.mrb[0].mxu0
    %v10372 = vadd.f32 %v10329, %v10371
    %10373 = vdwg.mxu0
    %10374 = vmatprep.subr.bf16.mxu0 %v7789
    %10375 = vmatpush1.bf16.msra.mxu0 %v7788
    %10376 = vmatprep.subr.bf16.mxu0 %v7795
    %10377 = vmatpush1.bf16.msra.mxu0 %v7794
    %10378 = vmatprep.subr.bf16.mxu0 %v7801
    %10379 = vmatpush1.bf16.msra.mxu0 %v7800
    %10380 = vmatprep.subr.bf16.mxu0 %v7807
    %10381 = vmatpush1.bf16.msra.mxu0 %v7806
    %10382 = vmatprep.subr.bf16.mxu0 %v7813
    %10383 = vmatpush1.bf16.msra.mxu0 %v7812
    %10384 = vmatprep.subr.bf16.mxu0 %v7819
    %10385 = vmatpush1.bf16.msra.mxu0 %v7818
    %10386 = vmatprep.subr.bf16.mxu0 %v7825
    %10387 = vmatpush1.bf16.msra.mxu0 %v7824
    %10388 = vmatprep.subr.bf16.mxu0 %v7831
    %10389 = vmatpush1.bf16.msra.mxu0 %v7830
    %10390 = vmatprep.subr.bf16.mxu0 %v7837
    %10391 = vmatpush1.bf16.msra.mxu0 %v7836
    %10392 = vmatprep.subr.bf16.mxu0 %v7843
    %10393 = vmatpush1.bf16.msra.mxu0 %v7842
    %10394 = vmatprep.subr.bf16.mxu0 %v7849
    %10395 = vmatpush1.bf16.msra.mxu0 %v7848
    %10396 = vmatprep.subr.bf16.mxu0 %v7855
    %10397 = vmatpush1.bf16.msra.mxu0 %v7854
    %10398 = vmatprep.subr.bf16.mxu0 %v7861
    %10399 = vmatpush1.bf16.msra.mxu0 %v7860
    %10400 = vmatprep.subr.bf16.mxu0 %v7867
    %10401 = vmatpush1.bf16.msra.mxu0 %v7866
    %10402 = vmatprep.subr.bf16.mxu0 %v7873
    %10403 = vmatpush1.bf16.msra.mxu0 %v7872
    %10404 = vmatprep.subr.bf16.mxu0 %v7879
    %10405 = vmatpush1.bf16.msra.mxu0 %v7878
    %10406 = vmatprep.mubr.bf16.mxu0 %v2272
    %10407 = vmatmul.mubr.bf16.gmra.mrb[0].mxu0 %v2271
    %v10408 = vpop.f32.mrb[0].mxu0
    %v10409 = vadd.f32 %v10366, %v10408
    %v10410 = vpop.f32.mrb[0].mxu0
    %v10411 = vadd.f32 %v10368, %v10410
    %v10412 = vpop.f32.mrb[0].mxu0
    %v10413 = vadd.f32 %v10370, %v10412
    %v10414 = vpop.f32.mrb[0].mxu0
    %v10415 = vadd.f32 %v10372, %v10414
    %10416 = vdwg.mxu0
    %10417 = vmatprep.subr.bf16.mxu0 %v7885
    %10418 = vmatpush1.bf16.msra.mxu0 %v7884
    %10419 = vmatprep.subr.bf16.mxu0 %v7891
    %10420 = vmatpush1.bf16.msra.mxu0 %v7890
    %10421 = vmatprep.subr.bf16.mxu0 %v7897
    %10422 = vmatpush1.bf16.msra.mxu0 %v7896
    %10423 = vmatprep.subr.bf16.mxu0 %v7903
    %10424 = vmatpush1.bf16.msra.mxu0 %v7902
    %10425 = vmatprep.subr.bf16.mxu0 %v7909
    %10426 = vmatpush1.bf16.msra.mxu0 %v7908
    %10427 = vmatprep.subr.bf16.mxu0 %v7915
    %10428 = vmatpush1.bf16.msra.mxu0 %v7914
    %10429 = vmatprep.subr.bf16.mxu0 %v7921
    %10430 = vmatpush1.bf16.msra.mxu0 %v7920
    %10431 = vmatprep.subr.bf16.mxu0 %v7927
    %10432 = vmatpush1.bf16.msra.mxu0 %v7926
    %10433 = vmatprep.subr.bf16.mxu0 %v7933
    %10434 = vmatpush1.bf16.msra.mxu0 %v7932
    %10435 = vmatprep.subr.bf16.mxu0 %v7939
    %10436 = vmatpush1.bf16.msra.mxu0 %v7938
    %10437 = vmatprep.subr.bf16.mxu0 %v7945
    %10438 = vmatpush1.bf16.msra.mxu0 %v7944
    %10439 = vmatprep.subr.bf16.mxu0 %v7951
    %10440 = vmatpush1.bf16.msra.mxu0 %v7950
    %10441 = vmatprep.subr.bf16.mxu0 %v7957
    %10442 = vmatpush1.bf16.msra.mxu0 %v7956
    %10443 = vmatprep.subr.bf16.mxu0 %v7963
    %10444 = vmatpush1.bf16.msra.mxu0 %v7962
    %10445 = vmatprep.subr.bf16.mxu0 %v7969
    %10446 = vmatpush1.bf16.msra.mxu0 %v7968
    %10447 = vmatprep.subr.bf16.mxu0 %v7975
    %10448 = vmatpush1.bf16.msra.mxu0 %v7974
    %10449 = vmatprep.mubr.bf16.mxu0 %v2274
    %10450 = vmatmul.mubr.bf16.gmra.mrb[0].mxu0 %v2273
    %v10451 = vpop.f32.mrb[0].mxu0
    %v10452 = vadd.f32 %v10409, %v10451
    %v10453 = vpop.f32.mrb[0].mxu0
    %v10454 = vadd.f32 %v10411, %v10453
    %v10455 = vpop.f32.mrb[0].mxu0
    %v10456 = vadd.f32 %v10413, %v10455
    %v10457 = vpop.f32.mrb[0].mxu0
    %v10458 = vadd.f32 %v10415, %v10457
    %10459 = vdwg.mxu0
    %10460 = vmatprep.subr.bf16.mxu0 %v7981
    %10461 = vmatpush1.bf16.msra.mxu0 %v7980
    %10462 = vmatprep.subr.bf16.mxu0 %v7987
    %10463 = vmatpush1.bf16.msra.mxu0 %v7986
    %10464 = vmatprep.subr.bf16.mxu0 %v7993
    %10465 = vmatpush1.bf16.msra.mxu0 %v7992
    %10466 = vmatprep.subr.bf16.mxu0 %v7999
    %10467 = vmatpush1.bf16.msra.mxu0 %v7998
    %10468 = vmatprep.subr.bf16.mxu0 %v8005
    %10469 = vmatpush1.bf16.msra.mxu0 %v8004
    %10470 = vmatprep.subr.bf16.mxu0 %v8011
    %10471 = vmatpush1.bf16.msra.mxu0 %v8010
    %10472 = vmatprep.subr.bf16.mxu0 %v8017
    %10473 = vmatpush1.bf16.msra.mxu0 %v8016
    %10474 = vmatprep.subr.bf16.mxu0 %v8023
    %10475 = vmatpush1.bf16.msra.mxu0 %v8022
    %10476 = vmatprep.subr.bf16.mxu0 %v8029
    %10477 = vmatpush1.bf16.msra.mxu0 %v8028
    %10478 = vmatprep.subr.bf16.mxu0 %v8035
    %10479 = vmatpush1.bf16.msra.mxu0 %v8034
    %10480 = vmatprep.subr.bf16.mxu0 %v8041
    %10481 = vmatpush1.bf16.msra.mxu0 %v8040
    %10482 = vmatprep.subr.bf16.mxu0 %v8047
    %10483 = vmatpush1.bf16.msra.mxu0 %v8046
    %10484 = vmatprep.subr.bf16.mxu0 %v8053
    %10485 = vmatpush1.bf16.msra.mxu0 %v8052
    %10486 = vmatprep.subr.bf16.mxu0 %v8059
    %10487 = vmatpush1.bf16.msra.mxu0 %v8058
    %10488 = vmatprep.subr.bf16.mxu0 %v8065
    %10489 = vmatpush1.bf16.msra.mxu0 %v8064
    %10490 = vmatprep.subr.bf16.mxu0 %v8071
    %10491 = vmatpush1.bf16.msra.mxu0 %v8070
    %10492 = vmatprep.mubr.bf16.mxu0 %v2276
    %10493 = vmatmul.mubr.bf16.gmra.mrb[0].mxu0 %v2275
    %v10494 = vpop.f32.mrb[0].mxu0
    %v10495 = vadd.f32 %v10452, %v10494
    %v10496 = vpop.f32.mrb[0].mxu0
    %v10497 = vadd.f32 %v10454, %v10496
    %v10498 = vpop.f32.mrb[0].mxu0
    %v10499 = vadd.f32 %v10456, %v10498
    %v10500 = vpop.f32.mrb[0].mxu0
    %v10501 = vadd.f32 %v10458, %v10500
    %10502 = vdwg.mxu0
    %10503 = vmatprep.subr.bf16.mxu0 %v8077
    %10504 = vmatpush1.bf16.msra.mxu0 %v8076
    %10505 = vmatprep.subr.bf16.mxu0 %v8083
    %10506 = vmatpush1.bf16.msra.mxu0 %v8082
    %10507 = vmatprep.subr.bf16.mxu0 %v8089
    %10508 = vmatpush1.bf16.msra.mxu0 %v8088
    %10509 = vmatprep.subr.bf16.mxu0 %v8095
    %10510 = vmatpush1.bf16.msra.mxu0 %v8094
    %10511 = vmatprep.subr.bf16.mxu0 %v8101
    %10512 = vmatpush1.bf16.msra.mxu0 %v8100
    %10513 = vmatprep.subr.bf16.mxu0 %v8107
    %10514 = vmatpush1.bf16.msra.mxu0 %v8106
    %10515 = vmatprep.subr.bf16.mxu0 %v8113
    %10516 = vmatpush1.bf16.msra.mxu0 %v8112
    %10517 = vmatprep.subr.bf16.mxu0 %v8119
    %10518 = vmatpush1.bf16.msra.mxu0 %v8118
    %10519 = vmatprep.subr.bf16.mxu0 %v8125
    %10520 = vmatpush1.bf16.msra.mxu0 %v8124
    %10521 = vmatprep.subr.bf16.mxu0 %v8131
    %10522 = vmatpush1.bf16.msra.mxu0 %v8130
    %10523 = vmatprep.subr.bf16.mxu0 %v8137
    %10524 = vmatpush1.bf16.msra.mxu0 %v8136
    %10525 = vmatprep.subr.bf16.mxu0 %v8143
    %10526 = vmatpush1.bf16.msra.mxu0 %v8142
    %10527 = vmatprep.subr.bf16.mxu0 %v8149
    %10528 = vmatpush1.bf16.msra.mxu0 %v8148
    %10529 = vmatprep.subr.bf16.mxu0 %v8155
    %10530 = vmatpush1.bf16.msra.mxu0 %v8154
    %10531 = vmatprep.subr.bf16.mxu0 %v8161
    %10532 = vmatpush1.bf16.msra.mxu0 %v8160
    %10533 = vmatprep.subr.bf16.mxu0 %v8167
    %10534 = vmatpush1.bf16.msra.mxu0 %v8166
    %10535 = vmatprep.mubr.bf16.mxu0 %v2278
    %10536 = vmatmul.mubr.bf16.gmra.mrb[0].mxu0 %v2277
    %v10537 = vpop.f32.mrb[0].mxu0
    %v10538 = vadd.f32 %v10495, %v10537
    %v10539 = vpop.f32.mrb[0].mxu0
    %v10540 = vadd.f32 %v10497, %v10539
    %v10541 = vpop.f32.mrb[0].mxu0
    %v10542 = vadd.f32 %v10499, %v10541
    %v10543 = vpop.f32.mrb[0].mxu0
    %v10544 = vadd.f32 %v10501, %v10543
    %10545 = vdwg.mxu0
    %10546 = vmatprep.subr.bf16.mxu0 %v8173
    %10547 = vmatpush1.bf16.msra.mxu0 %v8172
    %10548 = vmatprep.subr.bf16.mxu0 %v8179
    %10549 = vmatpush1.bf16.msra.mxu0 %v8178
    %10550 = vmatprep.subr.bf16.mxu0 %v8185
    %10551 = vmatpush1.bf16.msra.mxu0 %v8184
    %10552 = vmatprep.subr.bf16.mxu0 %v8191
    %10553 = vmatpush1.bf16.msra.mxu0 %v8190
    %10554 = vmatprep.subr.bf16.mxu0 %v8197
    %10555 = vmatpush1.bf16.msra.mxu0 %v8196
    %10556 = vmatprep.subr.bf16.mxu0 %v8203
    %10557 = vmatpush1.bf16.msra.mxu0 %v8202
    %10558 = vmatprep.subr.bf16.mxu0 %v8209
    %10559 = vmatpush1.bf16.msra.mxu0 %v8208
    %10560 = vmatprep.subr.bf16.mxu0 %v8215
    %10561 = vmatpush1.bf16.msra.mxu0 %v8214
    %10562 = vmatprep.subr.bf16.mxu0 %v8221
    %10563 = vmatpush1.bf16.msra.mxu0 %v8220
    %10564 = vmatprep.subr.bf16.mxu0 %v8227
    %10565 = vmatpush1.bf16.msra.mxu0 %v8226
    %10566 = vmatprep.subr.bf16.mxu0 %v8233
    %10567 = vmatpush1.bf16.msra.mxu0 %v8232
    %10568 = vmatprep.subr.bf16.mxu0 %v8239
    %10569 = vmatpush1.bf16.msra.mxu0 %v8238
    %10570 = vmatprep.subr.bf16.mxu0 %v8245
    %10571 = vmatpush1.bf16.msra.mxu0 %v8244
    %10572 = vmatprep.subr.bf16.mxu0 %v8251
    %10573 = vmatpush1.bf16.msra.mxu0 %v8250
    %10574 = vmatprep.subr.bf16.mxu0 %v8257
    %10575 = vmatpush1.bf16.msra.mxu0 %v8256
    %10576 = vmatprep.subr.bf16.mxu0 %v8263
    %10577 = vmatpush1.bf16.msra.mxu0 %v8262
    %10578 = vmatprep.mubr.bf16.mxu0 %v2280
    %10579 = vmatmul.mubr.bf16.gmra.mrb[0].mxu0 %v2279
    %v10580 = vpop.f32.mrb[0].mxu0
    %v10581 = vadd.f32 %v10538, %v10580
    %v10582 = vpop.f32.mrb[0].mxu0
    %v10583 = vadd.f32 %v10540, %v10582
    %v10584 = vpop.f32.mrb[0].mxu0
    %v10585 = vadd.f32 %v10542, %v10584
    %v10586 = vpop.f32.mrb[0].mxu0
    %v10587 = vadd.f32 %v10544, %v10586
    %10588 = vdwg.mxu0
    %10589 = vmatprep.subr.bf16.mxu0 %v8269
    %10590 = vmatpush1.bf16.msra.mxu0 %v8268
    %10591 = vmatprep.subr.bf16.mxu0 %v8275
    %10592 = vmatpush1.bf16.msra.mxu0 %v8274
    %10593 = vmatprep.subr.bf16.mxu0 %v8281
    %10594 = vmatpush1.bf16.msra.mxu0 %v8280
    %10595 = vmatprep.subr.bf16.mxu0 %v8287
    %10596 = vmatpush1.bf16.msra.mxu0 %v8286
    %10597 = vmatprep.subr.bf16.mxu0 %v8293
    %10598 = vmatpush1.bf16.msra.mxu0 %v8292
    %10599 = vmatprep.subr.bf16.mxu0 %v8299
    %10600 = vmatpush1.bf16.msra.mxu0 %v8298
    %10601 = vmatprep.subr.bf16.mxu0 %v8305
    %10602 = vmatpush1.bf16.msra.mxu0 %v8304
    %10603 = vmatprep.subr.bf16.mxu0 %v8311
    %10604 = vmatpush1.bf16.msra.mxu0 %v8310
    %10605 = vmatprep.subr.bf16.mxu0 0
    %10606 = vmatpush1.bf16.msra.mxu0 0
    %10607 = vmatprep.subr.bf16.mxu0 0
    %10608 = vmatpush1.bf16.msra.mxu0 0
    %10609 = vmatprep.subr.bf16.mxu0 0
    %10610 = vmatpush1.bf16.msra.mxu0 0
    %10611 = vmatprep.subr.bf16.mxu0 0
    %10612 = vmatpush1.bf16.msra.mxu0 0
    %10613 = vmatprep.subr.bf16.mxu0 0
    %10614 = vmatpush1.bf16.msra.mxu0 0
    %10615 = vmatprep.subr.bf16.mxu0 0
    %10616 = vmatpush1.bf16.msra.mxu0 0
    %10617 = vmatprep.subr.bf16.mxu0 0
    %10618 = vmatpush1.bf16.msra.mxu0 0
    %10619 = vmatprep.subr.bf16.mxu0 0
    %10620 = vmatpush1.bf16.msra.mxu0 0
    %10621 = vmatprep.mubr.bf16.mxu0 0
    %10622 = vmatmul.mubr.bf16.gmra.mrb[0].mxu0 %v2281
    %v10623 = vpop.f32.mrb[0].mxu0
    %v10624 = vadd.f32 %v10581, %v10623
    %v10625 = vpop.f32.mrb[0].mxu0
    %v10626 = vadd.f32 %v10583, %v10625
    %v10627 = vpop.f32.mrb[0].mxu0
    %v10628 = vadd.f32 %v10585, %v10627
    %v10629 = vpop.f32.mrb[0].mxu0
    %v10630 = vadd.f32 %v10587, %v10629
    %10631 = vdwg.mxu0
    %10632 = vmatprep.subr.bf16.mxu0 %v7119
    %10633 = vmatpush1.bf16.msra.mxu0 %v7118
    %10634 = vmatprep.subr.bf16.mxu0 %v7125
    %10635 = vmatpush1.bf16.msra.mxu0 %v7124
    %10636 = vmatprep.subr.bf16.mxu0 %v7131
    %10637 = vmatpush1.bf16.msra.mxu0 %v7130
    %10638 = vmatprep.subr.bf16.mxu0 %v7137
    %10639 = vmatpush1.bf16.msra.mxu0 %v7136
    %10640 = vmatprep.subr.bf16.mxu0 %v7143
    %10641 = vmatpush1.bf16.msra.mxu0 %v7142
    %10642 = vmatprep.subr.bf16.mxu0 %v7149
    %10643 = vmatpush1.bf16.msra.mxu0 %v7148
    %10644 = vmatprep.subr.bf16.mxu0 %v7155
    %10645 = vmatpush1.bf16.msra.mxu0 %v7154
    %10646 = vmatprep.subr.bf16.mxu0 %v7161
    %10647 = vmatpush1.bf16.msra.mxu0 %v7160
    %10648 = vmatprep.subr.bf16.mxu0 %v7167
    %10649 = vmatpush1.bf16.msra.mxu0 %v7166
    %10650 = vmatprep.subr.bf16.mxu0 %v7173
    %10651 = vmatpush1.bf16.msra.mxu0 %v7172
    %10652 = vmatprep.subr.bf16.mxu0 %v7179
    %10653 = vmatpush1.bf16.msra.mxu0 %v7178
    %10654 = vmatprep.subr.bf16.mxu0 %v7185
    %10655 = vmatpush1.bf16.msra.mxu0 %v7184
    %10656 = vmatprep.subr.bf16.mxu0 %v7191
    %10657 = vmatpush1.bf16.msra.mxu0 %v7190
    %10658 = vmatprep.subr.bf16.mxu0 %v7197
    %10659 = vmatpush1.bf16.msra.mxu0 %v7196
    %10660 = vmatprep.subr.bf16.mxu0 %v7203
    %10661 = vmatpush1.bf16.msra.mxu0 %v7202
    %10662 = vmatprep.subr.bf16.mxu0 %v7209
    %10663 = vmatpush1.bf16.msra.mxu0 %v7208
    %10664 = vmatprep.mubr.bf16.mxu0 %v2258
    %10665 = vmatmul.mubr.bf16.gmra.mrb[0].mxu0 %v2257
    %v10666 = vpop.f32.mrb[0].mxu0
    %v10667 = vadd.f32 %v3503, %v10666
    %v10668 = vpop.f32.mrb[0].mxu0
    %v10669 = vadd.f32 %v3507, %v10668
    %v10670 = vpop.f32.mrb[0].mxu0
    %v10671 = vadd.f32 %v3503, %v10670
    %v10672 = vpop.f32.mrb[0].mxu0
    %v10673 = vadd.f32 %v3507, %v10672
    %10674 = vdwg.mxu0
    %10675 = vmatprep.subr.bf16.mxu0 %v7215
    %10676 = vmatpush1.bf16.msra.mxu0 %v7214
    %10677 = vmatprep.subr.bf16.mxu0 %v7221
    %10678 = vmatpush1.bf16.msra.mxu0 %v7220
    %10679 = vmatprep.subr.bf16.mxu0 %v7227
    %10680 = vmatpush1.bf16.msra.mxu0 %v7226
    %10681 = vmatprep.subr.bf16.mxu0 %v7233
    %10682 = vmatpush1.bf16.msra.mxu0 %v7232
    %10683 = vmatprep.subr.bf16.mxu0 %v7239
    %10684 = vmatpush1.bf16.msra.mxu0 %v7238
    %10685 = vmatprep.subr.bf16.mxu0 %v7245
    %10686 = vmatpush1.bf16.msra.mxu0 %v7244
    %10687 = vmatprep.subr.bf16.mxu0 %v7251
    %10688 = vmatpush1.bf16.msra.mxu0 %v7250
    %10689 = vmatprep.subr.bf16.mxu0 %v7257
    %10690 = vmatpush1.bf16.msra.mxu0 %v7256
    %10691 = vmatprep.subr.bf16.mxu0 %v7263
    %10692 = vmatpush1.bf16.msra.mxu0 %v7262
    %10693 = vmatprep.subr.bf16.mxu0 %v7269
    %10694 = vmatpush1.bf16.msra.mxu0 %v7268
    %10695 = vmatprep.subr.bf16.mxu0 %v7275
    %10696 = vmatpush1.bf16.msra.mxu0 %v7274
    %10697 = vmatprep.subr.bf16.mxu0 %v7281
    %10698 = vmatpush1.bf16.msra.mxu0 %v7280
    %10699 = vmatprep.subr.bf16.mxu0 %v7287
    %10700 = vmatpush1.bf16.msra.mxu0 %v7286
    %10701 = vmatprep.subr.bf16.mxu0 %v7293
    %10702 = vmatpush1.bf16.msra.mxu0 %v7292
    %10703 = vmatprep.subr.bf16.mxu0 %v7299
    %10704 = vmatpush1.bf16.msra.mxu0 %v7298
    %10705 = vmatprep.subr.bf16.mxu0 %v7305
    %10706 = vmatpush1.bf16.msra.mxu0 %v7304
    %10707 = vmatprep.mubr.bf16.mxu0 %v2260
    %10708 = vmatmul.mubr.bf16.gmra.mrb[0].mxu0 %v2259
    %v10709 = vpop.f32.mrb[0].mxu0
    %v10710 = vadd.f32 %v10667, %v10709
    %v10711 = vpop.f32.mrb[0].mxu0
    %v10712 = vadd.f32 %v10669, %v10711
    %v10713 = vpop.f32.mrb[0].mxu0
    %v10714 = vadd.f32 %v10671, %v10713
    %v10715 = vpop.f32.mrb[0].mxu0
    %v10716 = vadd.f32 %v10673, %v10715
    %10717 = vdwg.mxu0
    %10718 = vmatprep.subr.bf16.mxu0 %v7311
    %10719 = vmatpush1.bf16.msra.mxu0 %v7310
    %10720 = vmatprep.subr.bf16.mxu0 %v7317
    %10721 = vmatpush1.bf16.msra.mxu0 %v7316
    %10722 = vmatprep.subr.bf16.mxu0 %v7323
    %10723 = vmatpush1.bf16.msra.mxu0 %v7322
    %10724 = vmatprep.subr.bf16.mxu0 %v7329
    %10725 = vmatpush1.bf16.msra.mxu0 %v7328
    %10726 = vmatprep.subr.bf16.mxu0 %v7335
    %10727 = vmatpush1.bf16.msra.mxu0 %v7334
    %10728 = vmatprep.subr.bf16.mxu0 %v7341
    %10729 = vmatpush1.bf16.msra.mxu0 %v7340
    %10730 = vmatprep.subr.bf16.mxu0 %v7347
    %10731 = vmatpush1.bf16.msra.mxu0 %v7346
    %10732 = vmatprep.subr.bf16.mxu0 %v7353
    %10733 = vmatpush1.bf16.msra.mxu0 %v7352
    %10734 = vmatprep.subr.bf16.mxu0 %v7359
    %10735 = vmatpush1.bf16.msra.mxu0 %v7358
    %10736 = vmatprep.subr.bf16.mxu0 %v7365
    %10737 = vmatpush1.bf16.msra.mxu0 %v7364
    %10738 = vmatprep.subr.bf16.mxu0 %v7371
    %10739 = vmatpush1.bf16.msra.mxu0 %v7370
    %10740 = vmatprep.subr.bf16.mxu0 %v7377
    %10741 = vmatpush1.bf16.msra.mxu0 %v7376
    %10742 = vmatprep.subr.bf16.mxu0 %v7383
    %10743 = vmatpush1.bf16.msra.mxu0 %v7382
    %10744 = vmatprep.subr.bf16.mxu0 %v7389
    %10745 = vmatpush1.bf16.msra.mxu0 %v7388
    %10746 = vmatprep.subr.bf16.mxu0 %v7395
    %10747 = vmatpush1.bf16.msra.mxu0 %v7394
    %10748 = vmatprep.subr.bf16.mxu0 %v7401
    %10749 = vmatpush1.bf16.msra.mxu0 %v7400
    %10750 = vmatprep.mubr.bf16.mxu0 %v2262
    %10751 = vmatmul.mubr.bf16.gmra.mrb[0].mxu0 %v2261
    %v10752 = vpop.f32.mrb[0].mxu0
    %v10753 = vadd.f32 %v10710, %v10752
    %v10754 = vpop.f32.mrb[0].mxu0
    %v10755 = vadd.f32 %v10712, %v10754
    %v10756 = vpop.f32.mrb[0].mxu0
    %v10757 = vadd.f32 %v10714, %v10756
    %v10758 = vpop.f32.mrb[0].mxu0
    %v10759 = vadd.f32 %v10716, %v10758
    %10760 = vdwg.mxu0
    %10761 = vmatprep.subr.bf16.mxu0 %v7407
    %10762 = vmatpush1.bf16.msra.mxu0 %v7406
    %10763 = vmatprep.subr.bf16.mxu0 %v7413
    %10764 = vmatpush1.bf16.msra.mxu0 %v7412
    %10765 = vmatprep.subr.bf16.mxu0 %v7419
    %10766 = vmatpush1.bf16.msra.mxu0 %v7418
    %10767 = vmatprep.subr.bf16.mxu0 %v7425
    %10768 = vmatpush1.bf16.msra.mxu0 %v7424
    %10769 = vmatprep.subr.bf16.mxu0 %v7431
    %10770 = vmatpush1.bf16.msra.mxu0 %v7430
    %10771 = vmatprep.subr.bf16.mxu0 %v7437
    %10772 = vmatpush1.bf16.msra.mxu0 %v7436
    %10773 = vmatprep.subr.bf16.mxu0 %v7443
    %10774 = vmatpush1.bf16.msra.mxu0 %v7442
    %10775 = vmatprep.subr.bf16.mxu0 %v7449
    %10776 = vmatpush1.bf16.msra.mxu0 %v7448
    %10777 = vmatprep.subr.bf16.mxu0 %v7455
    %10778 = vmatpush1.bf16.msra.mxu0 %v7454
    %10779 = vmatprep.subr.bf16.mxu0 %v7461
    %10780 = vmatpush1.bf16.msra.mxu0 %v7460
    %10781 = vmatprep.subr.bf16.mxu0 %v7467
    %10782 = vmatpush1.bf16.msra.mxu0 %v7466
    %10783 = vmatprep.subr.bf16.mxu0 %v7473
    %10784 = vmatpush1.bf16.msra.mxu0 %v7472
    %10785 = vmatprep.subr.bf16.mxu0 %v7479
    %10786 = vmatpush1.bf16.msra.mxu0 %v7478
    %10787 = vmatprep.subr.bf16.mxu0 %v7485
    %10788 = vmatpush1.bf16.msra.mxu0 %v7484
    %10789 = vmatprep.subr.bf16.mxu0 %v7491
    %10790 = vmatpush1.bf16.msra.mxu0 %v7490
    %10791 = vmatprep.subr.bf16.mxu0 %v7497
    %10792 = vmatpush1.bf16.msra.mxu0 %v7496
    %10793 = vmatprep.mubr.bf16.mxu0 %v2264
    %10794 = vmatmul.mubr.bf16.gmra.mrb[0].mxu0 %v2263
    %v10795 = vpop.f32.mrb[0].mxu0
    %v10796 = vadd.f32 %v10753, %v10795
    %v10797 = vpop.f32.mrb[0].mxu0
    %v10798 = vadd.f32 %v10755, %v10797
    %v10799 = vpop.f32.mrb[0].mxu0
    %v10800 = vadd.f32 %v10757, %v10799
    %v10801 = vpop.f32.mrb[0].mxu0
    %v10802 = vadd.f32 %v10759, %v10801
    %10803 = vdwg.mxu0
    %10804 = vmatprep.subr.bf16.mxu0 %v7503
    %10805 = vmatpush1.bf16.msra.mxu0 %v7502
    %10806 = vmatprep.subr.bf16.mxu0 %v7509
    %10807 = vmatpush1.bf16.msra.mxu0 %v7508
    %10808 = vmatprep.subr.bf16.mxu0 %v7515
    %10809 = vmatpush1.bf16.msra.mxu0 %v7514
    %10810 = vmatprep.subr.bf16.mxu0 %v7521
    %10811 = vmatpush1.bf16.msra.mxu0 %v7520
    %10812 = vmatprep.subr.bf16.mxu0 %v7527
    %10813 = vmatpush1.bf16.msra.mxu0 %v7526
    %10814 = vmatprep.subr.bf16.mxu0 %v7533
    %10815 = vmatpush1.bf16.msra.mxu0 %v7532
    %10816 = vmatprep.subr.bf16.mxu0 %v7539
    %10817 = vmatpush1.bf16.msra.mxu0 %v7538
    %10818 = vmatprep.subr.bf16.mxu0 %v7545
    %10819 = vmatpush1.bf16.msra.mxu0 %v7544
    %10820 = vmatprep.subr.bf16.mxu0 %v7551
    %10821 = vmatpush1.bf16.msra.mxu0 %v7550
    %10822 = vmatprep.subr.bf16.mxu0 %v7557
    %10823 = vmatpush1.bf16.msra.mxu0 %v7556
    %10824 = vmatprep.subr.bf16.mxu0 %v7563
    %10825 = vmatpush1.bf16.msra.mxu0 %v7562
    %10826 = vmatprep.subr.bf16.mxu0 %v7569
    %10827 = vmatpush1.bf16.msra.mxu0 %v7568
    %10828 = vmatprep.subr.bf16.mxu0 %v7575
    %10829 = vmatpush1.bf16.msra.mxu0 %v7574
    %10830 = vmatprep.subr.bf16.mxu0 %v7581
    %10831 = vmatpush1.bf16.msra.mxu0 %v7580
    %10832 = vmatprep.subr.bf16.mxu0 %v7587
    %10833 = vmatpush1.bf16.msra.mxu0 %v7586
    %10834 = vmatprep.subr.bf16.mxu0 %v7593
    %10835 = vmatpush1.bf16.msra.mxu0 %v7592
    %10836 = vmatprep.mubr.bf16.mxu0 %v2266
    %10837 = vmatmul.mubr.bf16.gmra.mrb[0].mxu0 %v2265
    %v10838 = vpop.f32.mrb[0].mxu0
    %v10839 = vadd.f32 %v10796, %v10838
    %v10840 = vpop.f32.mrb[0].mxu0
    %v10841 = vadd.f32 %v10798, %v10840
    %v10842 = vpop.f32.mrb[0].mxu0
    %v10843 = vadd.f32 %v10800, %v10842
    %v10844 = vpop.f32.mrb[0].mxu0
    %v10845 = vadd.f32 %v10802, %v10844
    %10846 = vdwg.mxu0
    %10847 = vmatprep.subr.bf16.mxu0 %v7599
    %10848 = vmatpush1.bf16.msra.mxu0 %v7598
    %10849 = vmatprep.subr.bf16.mxu0 %v7605
    %10850 = vmatpush1.bf16.msra.mxu0 %v7604
    %10851 = vmatprep.subr.bf16.mxu0 %v7611
    %10852 = vmatpush1.bf16.msra.mxu0 %v7610
    %10853 = vmatprep.subr.bf16.mxu0 %v7617
    %10854 = vmatpush1.bf16.msra.mxu0 %v7616
    %10855 = vmatprep.subr.bf16.mxu0 %v7623
    %10856 = vmatpush1.bf16.msra.mxu0 %v7622
    %10857 = vmatprep.subr.bf16.mxu0 %v7629
    %10858 = vmatpush1.bf16.msra.mxu0 %v7628
    %10859 = vmatprep.subr.bf16.mxu0 %v7635
    %10860 = vmatpush1.bf16.msra.mxu0 %v7634
    %10861 = vmatprep.subr.bf16.mxu0 %v7641
    %10862 = vmatpush1.bf16.msra.mxu0 %v7640
    %10863 = vmatprep.subr.bf16.mxu0 %v7647
    %10864 = vmatpush1.bf16.msra.mxu0 %v7646
    %10865 = vmatprep.subr.bf16.mxu0 %v7653
    %10866 = vmatpush1.bf16.msra.mxu0 %v7652
    %10867 = vmatprep.subr.bf16.mxu0 %v7659
    %10868 = vmatpush1.bf16.msra.mxu0 %v7658
    %10869 = vmatprep.subr.bf16.mxu0 %v7665
    %10870 = vmatpush1.bf16.msra.mxu0 %v7664
    %10871 = vmatprep.subr.bf16.mxu0 %v7671
    %10872 = vmatpush1.bf16.msra.mxu0 %v7670
    %10873 = vmatprep.subr.bf16.mxu0 %v7677
    %10874 = vmatpush1.bf16.msra.mxu0 %v7676
    %10875 = vmatprep.subr.bf16.mxu0 %v7683
    %10876 = vmatpush1.bf16.msra.mxu0 %v7682
    %10877 = vmatprep.subr.bf16.mxu0 %v7689
    %10878 = vmatpush1.bf16.msra.mxu0 %v7688
    %10879 = vmatprep.mubr.bf16.mxu0 %v2268
    %10880 = vmatmul.mubr.bf16.gmra.mrb[0].mxu0 %v2267
    %v10881 = vpop.f32.mrb[0].mxu0
    %v10882 = vadd.f32 %v10839, %v10881
    %v10883 = vpop.f32.mrb[0].mxu0
    %v10884 = vadd.f32 %v10841, %v10883
    %v10885 = vpop.f32.mrb[0].mxu0
    %v10886 = vadd.f32 %v10843, %v10885
    %v10887 = vpop.f32.mrb[0].mxu0
    %v10888 = vadd.f32 %v10845, %v10887
    %10889 = vdwg.mxu0
    %10890 = vmatprep.subr.bf16.mxu0 %v7695
    %10891 = vmatpush1.bf16.msra.mxu0 %v7694
    %10892 = vmatprep.subr.bf16.mxu0 %v7701
    %10893 = vmatpush1.bf16.msra.mxu0 %v7700
    %10894 = vmatprep.subr.bf16.mxu0 %v7707
    %10895 = vmatpush1.bf16.msra.mxu0 %v7706
    %10896 = vmatprep.subr.bf16.mxu0 %v7713
    %10897 = vmatpush1.bf16.msra.mxu0 %v7712
    %10898 = vmatprep.subr.bf16.mxu0 %v7719
    %10899 = vmatpush1.bf16.msra.mxu0 %v7718
    %10900 = vmatprep.subr.bf16.mxu0 %v7725
    %10901 = vmatpush1.bf16.msra.mxu0 %v7724
    %10902 = vmatprep.subr.bf16.mxu0 %v7731
    %10903 = vmatpush1.bf16.msra.mxu0 %v7730
    %10904 = vmatprep.subr.bf16.mxu0 %v7737
    %10905 = vmatpush1.bf16.msra.mxu0 %v7736
    %10906 = vmatprep.subr.bf16.mxu0 %v7743
    %10907 = vmatpush1.bf16.msra.mxu0 %v7742
    %10908 = vmatprep.subr.bf16.mxu0 %v7749
    %10909 = vmatpush1.bf16.msra.mxu0 %v7748
    %10910 = vmatprep.subr.bf16.mxu0 %v7755
    %10911 = vmatpush1.bf16.msra.mxu0 %v7754
    %10912 = vmatprep.subr.bf16.mxu0 %v7761
    %10913 = vmatpush1.bf16.msra.mxu0 %v7760
    %10914 = vmatprep.subr.bf16.mxu0 %v7767
    %10915 = vmatpush1.bf16.msra.mxu0 %v7766
    %10916 = vmatprep.subr.bf16.mxu0 %v7773
    %10917 = vmatpush1.bf16.msra.mxu0 %v7772
    %10918 = vmatprep.subr.bf16.mxu0 %v7779
    %10919 = vmatpush1.bf16.msra.mxu0 %v7778
    %10920 = vmatprep.subr.bf16.mxu0 %v7785
    %10921 = vmatpush1.bf16.msra.mxu0 %v7784
    %10922 = vmatprep.mubr.bf16.mxu0 %v2270
    %10923 = vmatmul.mubr.bf16.gmra.mrb[0].mxu0 %v2269
    %v10924 = vpop.f32.mrb[0].mxu0
    %v10925 = vadd.f32 %v10882, %v10924
    %v10926 = vpop.f32.mrb[0].mxu0
    %v10927 = vadd.f32 %v10884, %v10926
    %v10928 = vpop.f32.mrb[0].mxu0
    %v10929 = vadd.f32 %v10886, %v10928
    %v10930 = vpop.f32.mrb[0].mxu0
    %v10931 = vadd.f32 %v10888, %v10930
    %10932 = vdwg.mxu0
    %10933 = vmatprep.subr.bf16.mxu0 %v7791
    %10934 = vmatpush1.bf16.msra.mxu0 %v7790
    %10935 = vmatprep.subr.bf16.mxu0 %v7797
    %10936 = vmatpush1.bf16.msra.mxu0 %v7796
    %10937 = vmatprep.subr.bf16.mxu0 %v7803
    %10938 = vmatpush1.bf16.msra.mxu0 %v7802
    %10939 = vmatprep.subr.bf16.mxu0 %v7809
    %10940 = vmatpush1.bf16.msra.mxu0 %v7808
    %10941 = vmatprep.subr.bf16.mxu0 %v7815
    %10942 = vmatpush1.bf16.msra.mxu0 %v7814
    %10943 = vmatprep.subr.bf16.mxu0 %v7821
    %10944 = vmatpush1.bf16.msra.mxu0 %v7820
    %10945 = vmatprep.subr.bf16.mxu0 %v7827
    %10946 = vmatpush1.bf16.msra.mxu0 %v7826
    %10947 = vmatprep.subr.bf16.mxu0 %v7833
    %10948 = vmatpush1.bf16.msra.mxu0 %v7832
    %10949 = vmatprep.subr.bf16.mxu0 %v7839
    %10950 = vmatpush1.bf16.msra.mxu0 %v7838
    %10951 = vmatprep.subr.bf16.mxu0 %v7845
    %10952 = vmatpush1.bf16.msra.mxu0 %v7844
    %10953 = vmatprep.subr.bf16.mxu0 %v7851
    %10954 = vmatpush1.bf16.msra.mxu0 %v7850
    %10955 = vmatprep.subr.bf16.mxu0 %v7857
    %10956 = vmatpush1.bf16.msra.mxu0 %v7856
    %10957 = vmatprep.subr.bf16.mxu0 %v7863
    %10958 = vmatpush1.bf16.msra.mxu0 %v7862
    %10959 = vmatprep.subr.bf16.mxu0 %v7869
    %10960 = vmatpush1.bf16.msra.mxu0 %v7868
    %10961 = vmatprep.subr.bf16.mxu0 %v7875
    %10962 = vmatpush1.bf16.msra.mxu0 %v7874
    %10963 = vmatprep.subr.bf16.mxu0 %v7881
    %10964 = vmatpush1.bf16.msra.mxu0 %v7880
    %10965 = vmatprep.mubr.bf16.mxu0 %v2272
    %10966 = vmatmul.mubr.bf16.gmra.mrb[0].mxu0 %v2271
    %v10967 = vpop.f32.mrb[0].mxu0
    %v10968 = vadd.f32 %v10925, %v10967
    %v10969 = vpop.f32.mrb[0].mxu0
    %v10970 = vadd.f32 %v10927, %v10969
    %v10971 = vpop.f32.mrb[0].mxu0
    %v10972 = vadd.f32 %v10929, %v10971
    %v10973 = vpop.f32.mrb[0].mxu0
    %v10974 = vadd.f32 %v10931, %v10973
    %10975 = vdwg.mxu0
    %10976 = vmatprep.subr.bf16.mxu0 %v7887
    %10977 = vmatpush1.bf16.msra.mxu0 %v7886
    %10978 = vmatprep.subr.bf16.mxu0 %v7893
    %10979 = vmatpush1.bf16.msra.mxu0 %v7892
    %10980 = vmatprep.subr.bf16.mxu0 %v7899
    %10981 = vmatpush1.bf16.msra.mxu0 %v7898
    %10982 = vmatprep.subr.bf16.mxu0 %v7905
    %10983 = vmatpush1.bf16.msra.mxu0 %v7904
    %10984 = vmatprep.subr.bf16.mxu0 %v7911
    %10985 = vmatpush1.bf16.msra.mxu0 %v7910
    %10986 = vmatprep.subr.bf16.mxu0 %v7917
    %10987 = vmatpush1.bf16.msra.mxu0 %v7916
    %10988 = vmatprep.subr.bf16.mxu0 %v7923
    %10989 = vmatpush1.bf16.msra.mxu0 %v7922
    %10990 = vmatprep.subr.bf16.mxu0 %v7929
    %10991 = vmatpush1.bf16.msra.mxu0 %v7928
    %10992 = vmatprep.subr.bf16.mxu0 %v7935
    %10993 = vmatpush1.bf16.msra.mxu0 %v7934
    %10994 = vmatprep.subr.bf16.mxu0 %v7941
    %10995 = vmatpush1.bf16.msra.mxu0 %v7940
    %10996 = vmatprep.subr.bf16.mxu0 %v7947
    %10997 = vmatpush1.bf16.msra.mxu0 %v7946
    %10998 = vmatprep.subr.bf16.mxu0 %v7953
    %10999 = vmatpush1.bf16.msra.mxu0 %v7952
    %11000 = vmatprep.subr.bf16.mxu0 %v7959
    %11001 = vmatpush1.bf16.msra.mxu0 %v7958
    %11002 = vmatprep.subr.bf16.mxu0 %v7965
    %11003 = vmatpush1.bf16.msra.mxu0 %v7964
    %11004 = vmatprep.subr.bf16.mxu0 %v7971
    %11005 = vmatpush1.bf16.msra.mxu0 %v7970
    %11006 = vmatprep.subr.bf16.mxu0 %v7977
    %11007 = vmatpush1.bf16.msra.mxu0 %v7976
    %11008 = vmatprep.mubr.bf16.mxu0 %v2274
    %11009 = vmatmul.mubr.bf16.gmra.mrb[0].mxu0 %v2273
    %v11010 = vpop.f32.mrb[0].mxu0
    %v11011 = vadd.f32 %v10968, %v11010
    %v11012 = vpop.f32.mrb[0].mxu0
    %v11013 = vadd.f32 %v10970, %v11012
    %v11014 = vpop.f32.mrb[0].mxu0
    %v11015 = vadd.f32 %v10972, %v11014
    %v11016 = vpop.f32.mrb[0].mxu0
    %v11017 = vadd.f32 %v10974, %v11016
    %11018 = vdwg.mxu0
    %11019 = vmatprep.subr.bf16.mxu0 %v7983
    %11020 = vmatpush1.bf16.msra.mxu0 %v7982
    %11021 = vmatprep.subr.bf16.mxu0 %v7989
    %11022 = vmatpush1.bf16.msra.mxu0 %v7988
    %11023 = vmatprep.subr.bf16.mxu0 %v7995
    %11024 = vmatpush1.bf16.msra.mxu0 %v7994
    %11025 = vmatprep.subr.bf16.mxu0 %v8001
    %11026 = vmatpush1.bf16.msra.mxu0 %v8000
    %11027 = vmatprep.subr.bf16.mxu0 %v8007
    %11028 = vmatpush1.bf16.msra.mxu0 %v8006
    %11029 = vmatprep.subr.bf16.mxu0 %v8013
    %11030 = vmatpush1.bf16.msra.mxu0 %v8012
    %11031 = vmatprep.subr.bf16.mxu0 %v8019
    %11032 = vmatpush1.bf16.msra.mxu0 %v8018
    %11033 = vmatprep.subr.bf16.mxu0 %v8025
    %11034 = vmatpush1.bf16.msra.mxu0 %v8024
    %11035 = vmatprep.subr.bf16.mxu0 %v8031
    %11036 = vmatpush1.bf16.msra.mxu0 %v8030
    %11037 = vmatprep.subr.bf16.mxu0 %v8037
    %11038 = vmatpush1.bf16.msra.mxu0 %v8036
    %11039 = vmatprep.subr.bf16.mxu0 %v8043
    %11040 = vmatpush1.bf16.msra.mxu0 %v8042
    %11041 = vmatprep.subr.bf16.mxu0 %v8049
    %11042 = vmatpush1.bf16.msra.mxu0 %v8048
    %11043 = vmatprep.subr.bf16.mxu0 %v8055
    %11044 = vmatpush1.bf16.msra.mxu0 %v8054
    %11045 = vmatprep.subr.bf16.mxu0 %v8061
    %11046 = vmatpush1.bf16.msra.mxu0 %v8060
    %11047 = vmatprep.subr.bf16.mxu0 %v8067
    %11048 = vmatpush1.bf16.msra.mxu0 %v8066
    %11049 = vmatprep.subr.bf16.mxu0 %v8073
    %11050 = vmatpush1.bf16.msra.mxu0 %v8072
    %11051 = vmatprep.mubr.bf16.mxu0 %v2276
    %11052 = vmatmul.mubr.bf16.gmra.mrb[0].mxu0 %v2275
    %v11053 = vpop.f32.mrb[0].mxu0
    %v11054 = vadd.f32 %v11011, %v11053
    %v11055 = vpop.f32.mrb[0].mxu0
    %v11056 = vadd.f32 %v11013, %v11055
    %v11057 = vpop.f32.mrb[0].mxu0
    %v11058 = vadd.f32 %v11015, %v11057
    %v11059 = vpop.f32.mrb[0].mxu0
    %v11060 = vadd.f32 %v11017, %v11059
    %11061 = vdwg.mxu0
    %11062 = vmatprep.subr.bf16.mxu0 %v8079
    %11063 = vmatpush1.bf16.msra.mxu0 %v8078
    %11064 = vmatprep.subr.bf16.mxu0 %v8085
    %11065 = vmatpush1.bf16.msra.mxu0 %v8084
    %11066 = vmatprep.subr.bf16.mxu0 %v8091
    %11067 = vmatpush1.bf16.msra.mxu0 %v8090
    %11068 = vmatprep.subr.bf16.mxu0 %v8097
    %11069 = vmatpush1.bf16.msra.mxu0 %v8096
    %11070 = vmatprep.subr.bf16.mxu0 %v8103
    %11071 = vmatpush1.bf16.msra.mxu0 %v8102
    %11072 = vmatprep.subr.bf16.mxu0 %v8109
    %11073 = vmatpush1.bf16.msra.mxu0 %v8108
    %11074 = vmatprep.subr.bf16.mxu0 %v8115
    %11075 = vmatpush1.bf16.msra.mxu0 %v8114
    %11076 = vmatprep.subr.bf16.mxu0 %v8121
    %11077 = vmatpush1.bf16.msra.mxu0 %v8120
    %11078 = vmatprep.subr.bf16.mxu0 %v8127
    %11079 = vmatpush1.bf16.msra.mxu0 %v8126
    %11080 = vmatprep.subr.bf16.mxu0 %v8133
    %11081 = vmatpush1.bf16.msra.mxu0 %v8132
    %11082 = vmatprep.subr.bf16.mxu0 %v8139
    %11083 = vmatpush1.bf16.msra.mxu0 %v8138
    %11084 = vmatprep.subr.bf16.mxu0 %v8145
    %11085 = vmatpush1.bf16.msra.mxu0 %v8144
    %11086 = vmatprep.subr.bf16.mxu0 %v8151
    %11087 = vmatpush1.bf16.msra.mxu0 %v8150
    %11088 = vmatprep.subr.bf16.mxu0 %v8157
    %11089 = vmatpush1.bf16.msra.mxu0 %v8156
    %11090 = vmatprep.subr.bf16.mxu0 %v8163
    %11091 = vmatpush1.bf16.msra.mxu0 %v8162
    %11092 = vmatprep.subr.bf16.mxu0 %v8169
    %11093 = vmatpush1.bf16.msra.mxu0 %v8168
    %11094 = vmatprep.mubr.bf16.mxu0 %v2278
    %11095 = vmatmul.mubr.bf16.gmra.mrb[0].mxu0 %v2277
    %v11096 = vpop.f32.mrb[0].mxu0
    %v11097 = vadd.f32 %v11054, %v11096
    %v11098 = vpop.f32.mrb[0].mxu0
    %v11099 = vadd.f32 %v11056, %v11098
    %v11100 = vpop.f32.mrb[0].mxu0
    %v11101 = vadd.f32 %v11058, %v11100
    %v11102 = vpop.f32.mrb[0].mxu0
    %v11103 = vadd.f32 %v11060, %v11102
    %11104 = vdwg.mxu0
    %11105 = vmatprep.subr.bf16.mxu0 %v8175
    %11106 = vmatpush1.bf16.msra.mxu0 %v8174
    %11107 = vmatprep.subr.bf16.mxu0 %v8181
    %11108 = vmatpush1.bf16.msra.mxu0 %v8180
    %11109 = vmatprep.subr.bf16.mxu0 %v8187
    %11110 = vmatpush1.bf16.msra.mxu0 %v8186
    %11111 = vmatprep.subr.bf16.mxu0 %v8193
    %11112 = vmatpush1.bf16.msra.mxu0 %v8192
    %11113 = vmatprep.subr.bf16.mxu0 %v8199
    %11114 = vmatpush1.bf16.msra.mxu0 %v8198
    %11115 = vmatprep.subr.bf16.mxu0 %v8205
    %11116 = vmatpush1.bf16.msra.mxu0 %v8204
    %11117 = vmatprep.subr.bf16.mxu0 %v8211
    %11118 = vmatpush1.bf16.msra.mxu0 %v8210
    %11119 = vmatprep.subr.bf16.mxu0 %v8217
    %11120 = vmatpush1.bf16.msra.mxu0 %v8216
    %11121 = vmatprep.subr.bf16.mxu0 %v8223
    %11122 = vmatpush1.bf16.msra.mxu0 %v8222
    %11123 = vmatprep.subr.bf16.mxu0 %v8229
    %11124 = vmatpush1.bf16.msra.mxu0 %v8228
    %11125 = vmatprep.subr.bf16.mxu0 %v8235
    %11126 = vmatpush1.bf16.msra.mxu0 %v8234
    %11127 = vmatprep.subr.bf16.mxu0 %v8241
    %11128 = vmatpush1.bf16.msra.mxu0 %v8240
    %11129 = vmatprep.subr.bf16.mxu0 %v8247
    %11130 = vmatpush1.bf16.msra.mxu0 %v8246
    %11131 = vmatprep.subr.bf16.mxu0 %v8253
    %11132 = vmatpush1.bf16.msra.mxu0 %v8252
    %11133 = vmatprep.subr.bf16.mxu0 %v8259
    %11134 = vmatpush1.bf16.msra.mxu0 %v8258
    %11135 = vmatprep.subr.bf16.mxu0 %v8265
    %11136 = vmatpush1.bf16.msra.mxu0 %v8264
    %11137 = vmatprep.mubr.bf16.mxu0 %v2280
    %11138 = vmatmul.mubr.bf16.gmra.mrb[0].mxu0 %v2279
    %v11139 = vpop.f32.mrb[0].mxu0
    %v11140 = vadd.f32 %v11097, %v11139
    %v11141 = vpop.f32.mrb[0].mxu0
    %v11142 = vadd.f32 %v11099, %v11141
    %v11143 = vpop.f32.mrb[0].mxu0
    %v11144 = vadd.f32 %v11101, %v11143
    %v11145 = vpop.f32.mrb[0].mxu0
    %v11146 = vadd.f32 %v11103, %v11145
    %11147 = vdwg.mxu0
    %11148 = vmatprep.subr.bf16.mxu0 %v8271
    %11149 = vmatpush1.bf16.msra.mxu0 %v8270
    %11150 = vmatprep.subr.bf16.mxu0 %v8277
    %11151 = vmatpush1.bf16.msra.mxu0 %v8276
    %11152 = vmatprep.subr.bf16.mxu0 %v8283
    %11153 = vmatpush1.bf16.msra.mxu0 %v8282
    %11154 = vmatprep.subr.bf16.mxu0 %v8289
    %11155 = vmatpush1.bf16.msra.mxu0 %v8288
    %11156 = vmatprep.subr.bf16.mxu0 %v8295
    %11157 = vmatpush1.bf16.msra.mxu0 %v8294
    %11158 = vmatprep.subr.bf16.mxu0 %v8301
    %11159 = vmatpush1.bf16.msra.mxu0 %v8300
    %11160 = vmatprep.subr.bf16.mxu0 %v8307
    %11161 = vmatpush1.bf16.msra.mxu0 %v8306
    %11162 = vmatprep.subr.bf16.mxu0 %v8313
    %11163 = vmatpush1.bf16.msra.mxu0 %v8312
    %11164 = vmatprep.subr.bf16.mxu0 0
    %11165 = vmatpush1.bf16.msra.mxu0 0
    %11166 = vmatprep.subr.bf16.mxu0 0
    %11167 = vmatpush1.bf16.msra.mxu0 0
    %11168 = vmatprep.subr.bf16.mxu0 0
    %11169 = vmatpush1.bf16.msra.mxu0 0
    %11170 = vmatprep.subr.bf16.mxu0 0
    %11171 = vmatpush1.bf16.msra.mxu0 0
    %11172 = vmatprep.subr.bf16.mxu0 0
    %11173 = vmatpush1.bf16.msra.mxu0 0
    %11174 = vmatprep.subr.bf16.mxu0 0
    %11175 = vmatpush1.bf16.msra.mxu0 0
    %11176 = vmatprep.subr.bf16.mxu0 0
    %11177 = vmatpush1.bf16.msra.mxu0 0
    %11178 = vmatprep.subr.bf16.mxu0 0
    %11179 = vmatpush1.bf16.msra.mxu0 0
    %11180 = vmatprep.mubr.bf16.mxu0 0
    %11181 = vmatmul.mubr.bf16.gmra.mrb[0].mxu0 %v2281
    %v11182 = vpop.f32.mrb[0].mxu0
    %v11183 = vadd.f32 %v11140, %v11182
    %v11184 = vpop.f32.mrb[0].mxu0
    %v11185 = vadd.f32 %v11142, %v11184
    %v11186 = vpop.f32.mrb[0].mxu0
    %v11187 = vadd.f32 %v11144, %v11186
    %v11188 = vpop.f32.mrb[0].mxu0
    %v11189 = vadd.f32 %v11146, %v11188
    %11190 = vdwg.mxu0
    %v11191 = vmax.f32 %v10065, 0.0
    %v11192 = vmax.f32 %v10067, 0.0
    %v11193 = vmax.f32 %v10624, 0.0
    %v11194 = vmax.f32 %v10626, 0.0
    %v11195 = vmax.f32 %v11183, 0.0
    %v11196 = vmax.f32 %v11185, 0.0
    %v11197 = vmax.f32 %v10069, 0.0
    %v11198 = vmax.f32 %v10071, 0.0
    %v11199 = vmax.f32 %v10628, 0.0
    %v11200 = vmax.f32 %v10630, 0.0
    %v11201 = vmax.f32 %v11187, 0.0
    %v11202 = vmax.f32 %v11189, 0.0
    %v11203 = vpack.c.bf16 %v11197, %v11191
    %v11204 = vpack.c.bf16 %v11198, %v11192
    %v11205 = vpack.c.bf16 %v11199, %v11193
    %v11206 = vpack.c.bf16 %v11200, %v11194
    %v11207 = vpack.c.bf16 %v11201, %v11195
    %v11208 = vpack.c.bf16 %v11202, %v11196
    %v11209 = vld [vmem:[#allocation12] sm:$0xff]
    %v11210 = vld [vmem:[#allocation12 + $0x8] sm:$0xff]
    %v11211 = vld [vmem:[#allocation12 + $0x10] sm:$0xff]
    %v11212 = vld [vmem:[#allocation12 + $0x18] sm:$0xff]
    %v11213 = vld [vmem:[#allocation12 + $0x20] sm:$0xff]
    %v11214 = vld [vmem:[#allocation12 + $0x28] sm:$0xff]
    %v11215 = vld [vmem:[#allocation12 + $0x30] sm:$0xff]
    %v11216 = vld [vmem:[#allocation12 + $0x38] sm:$0xff]
    %v11217 = vld [vmem:[#allocation12 + $0x40] sm:$0xff]
    %v11218 = vld [vmem:[#allocation12 + $0x48] sm:$0xff]
    %v11219 = vld [vmem:[#allocation12 + $0x50] sm:$0xff]
    %v11220 = vld [vmem:[#allocation12 + $0x58] sm:$0xff]
    %v11221 = vld [vmem:[#allocation12 + $0x60] sm:$0xff]
    %v11222 = vld [vmem:[#allocation12 + $0x68] sm:$0xff]
    %v11223 = vld [vmem:[#allocation12 + $0x70] sm:$0xff]
    %v11224 = vld [vmem:[#allocation12 + $0x78] sm:$0xff]
    %v11225 = vld [vmem:[#allocation12 + $0x80] sm:$0xff]
    %v11226 = vld [vmem:[#allocation12 + $0x88] sm:$0xff]
    %v11227 = vld [vmem:[#allocation12 + $0x90] sm:$0xff]
    %v11228 = vld [vmem:[#allocation12 + $0x98] sm:$0xff]
    %v11229 = vld [vmem:[#allocation12 + $0xa0] sm:$0xff]
    %v11230 = vld [vmem:[#allocation12 + $0xa8] sm:$0xff]
    %v11231 = vld [vmem:[#allocation12 + $0xb0] sm:$0xff]
    %v11232 = vld [vmem:[#allocation12 + $0xb8] sm:$0xff]
    %v11233 = vld [vmem:[#allocation12 + $0xc0] sm:$0xff]
    %v11234 = vld [vmem:[#allocation12 + $0xc8] sm:$0xff]
    %v11235 = vld [vmem:[#allocation12 + $0xd0] sm:$0xff]
    %v11236 = vld [vmem:[#allocation12 + $0xd8] sm:$0xff]
    %v11237 = vld [vmem:[#allocation12 + $0xe0] sm:$0xff]
    %v11238 = vld [vmem:[#allocation12 + $0xe8] sm:$0xff]
    %v11239 = vld [vmem:[#allocation12 + $0xf0] sm:$0xff]
    %v11240 = vld [vmem:[#allocation12 + $0xf8] sm:$0xff]
    %v11241 = vld [vmem:[#allocation12 + $0x100] sm:$0xff]
    %v11242 = vld [vmem:[#allocation12 + $0x108] sm:$0xff]
    %v11243 = vld [vmem:[#allocation12 + $0x110] sm:$0xff]
    %v11244 = vld [vmem:[#allocation12 + $0x118] sm:$0xff]
    %v11245 = vld [vmem:[#allocation12 + $0x120] sm:$0xff]
    %v11246 = vld [vmem:[#allocation12 + $0x128] sm:$0xff]
    %v11247 = vld [vmem:[#allocation12 + $0x130] sm:$0xff]
    %v11248 = vld [vmem:[#allocation12 + $0x138] sm:$0xff]
    %v11249 = vld [vmem:[#allocation12 + $0x140] sm:$0xff]
    %v11250 = vld [vmem:[#allocation12 + $0x148] sm:$0xff]
    %v11251 = vld [vmem:[#allocation12 + $0x150] sm:$0xff]
    %v11252 = vld [vmem:[#allocation12 + $0x158] sm:$0xff]
    %v11253 = vld [vmem:[#allocation12 + $0x160] sm:$0xff]
    %v11254 = vld [vmem:[#allocation12 + $0x168] sm:$0xff]
    %v11255 = vld [vmem:[#allocation12 + $0x170] sm:$0xff]
    %v11256 = vld [vmem:[#allocation12 + $0x178] sm:$0xff]
    %v11257 = vld [vmem:[#allocation12 + $0x180] sm:$0xff]
    %v11258 = vld [vmem:[#allocation12 + $0x188] sm:$0xff]
    %v11259 = vld [vmem:[#allocation12 + $0x190] sm:$0xff]
    %v11260 = vld [vmem:[#allocation12 + $0x198] sm:$0xff]
    %v11261 = vld [vmem:[#allocation12 + $0x1a0] sm:$0xff]
    %v11262 = vld [vmem:[#allocation12 + $0x1a8] sm:$0xff]
    %v11263 = vld [vmem:[#allocation12 + $0x1b0] sm:$0xff]
    %v11264 = vld [vmem:[#allocation12 + $0x1b8] sm:$0xff]
    %v11265 = vld [vmem:[#allocation12 + $0x1c0] sm:$0xff]
    %v11266 = vld [vmem:[#allocation12 + $0x1c8] sm:$0xff]
    %v11267 = vld [vmem:[#allocation12 + $0x1d0] sm:$0xff]
    %v11268 = vld [vmem:[#allocation12 + $0x1d8] sm:$0xff]
    %v11269 = vld [vmem:[#allocation12 + $0x1e0] sm:$0xff]
    %v11270 = vld [vmem:[#allocation12 + $0x1e8] sm:$0xff]
    %v11271 = vld [vmem:[#allocation12 + $0x1f0] sm:$0xff]
    %v11272 = vld [vmem:[#allocation12 + $0x1f8] sm:$0xff]
    %v11273 = vld [vmem:[#allocation12 + $0x200] sm:$0xff]
    %v11274 = vld [vmem:[#allocation12 + $0x208] sm:$0xff]
    %v11275 = vld [vmem:[#allocation12 + $0x210] sm:$0xff]
    %v11276 = vld [vmem:[#allocation12 + $0x218] sm:$0xff]
    %v11277 = vld [vmem:[#allocation12 + $0x220] sm:$0xff]
    %v11278 = vld [vmem:[#allocation12 + $0x228] sm:$0xff]
    %v11279 = vld [vmem:[#allocation12 + $0x230] sm:$0xff]
    %v11280 = vld [vmem:[#allocation12 + $0x238] sm:$0xff]
    %v11281 = vld [vmem:[#allocation12 + $0x240] sm:$0xff]
    %v11282 = vld [vmem:[#allocation12 + $0x248] sm:$0xff]
    %v11283 = vld [vmem:[#allocation12 + $0x250] sm:$0xff]
    %v11284 = vld [vmem:[#allocation12 + $0x258] sm:$0xff]
    %v11285 = vld [vmem:[#allocation12 + $0x260] sm:$0xff]
    %v11286 = vld [vmem:[#allocation12 + $0x268] sm:$0xff]
    %v11287 = vld [vmem:[#allocation12 + $0x270] sm:$0xff]
    %v11288 = vld [vmem:[#allocation12 + $0x278] sm:$0xff]
    %v11289 = vld [vmem:[#allocation12 + $0x280] sm:$0xff]
    %v11290 = vld [vmem:[#allocation12 + $0x288] sm:$0xff]
    %v11291 = vld [vmem:[#allocation12 + $0x290] sm:$0xff]
    %v11292 = vld [vmem:[#allocation12 + $0x298] sm:$0xff]
    %v11293 = vld [vmem:[#allocation12 + $0x2a0] sm:$0xff]
    %v11294 = vld [vmem:[#allocation12 + $0x2a8] sm:$0xff]
    %v11295 = vld [vmem:[#allocation12 + $0x2b0] sm:$0xff]
    %v11296 = vld [vmem:[#allocation12 + $0x2b8] sm:$0xff]
    %v11297 = vld [vmem:[#allocation12 + $0x2c0] sm:$0xff]
    %v11298 = vld [vmem:[#allocation12 + $0x2c8] sm:$0xff]
    %v11299 = vld [vmem:[#allocation12 + $0x2d0] sm:$0xff]
    %v11300 = vld [vmem:[#allocation12 + $0x2d8] sm:$0xff]
    %v11301 = vld [vmem:[#allocation12 + $0x2e0] sm:$0xff]
    %v11302 = vld [vmem:[#allocation12 + $0x2e8] sm:$0xff]
    %v11303 = vld [vmem:[#allocation12 + $0x2f0] sm:$0xff]
    %v11304 = vld [vmem:[#allocation12 + $0x2f8] sm:$0xff]
    %v11305 = vld [vmem:[#allocation12 + $0x300] sm:$0xff]
    %v11306 = vld [vmem:[#allocation12 + $0x308] sm:$0xff]
    %v11307 = vld [vmem:[#allocation12 + $0x310] sm:$0xff]
    %v11308 = vld [vmem:[#allocation12 + $0x318] sm:$0xff]
    %v11309 = vld [vmem:[#allocation12 + $0x320] sm:$0xff]
    %v11310 = vld [vmem:[#allocation12 + $0x328] sm:$0xff]
    %v11311 = vld [vmem:[#allocation12 + $0x330] sm:$0xff]
    %v11312 = vld [vmem:[#allocation12 + $0x338] sm:$0xff]
    %v11313 = vld [vmem:[#allocation12 + $0x340] sm:$0xff]
    %v11314 = vld [vmem:[#allocation12 + $0x348] sm:$0xff]
    %v11315 = vld [vmem:[#allocation12 + $0x350] sm:$0xff]
    %v11316 = vld [vmem:[#allocation12 + $0x358] sm:$0xff]
    %v11317 = vld [vmem:[#allocation12 + $0x360] sm:$0xff]
    %v11318 = vld [vmem:[#allocation12 + $0x368] sm:$0xff]
    %v11319 = vld [vmem:[#allocation12 + $0x370] sm:$0xff]
    %v11320 = vld [vmem:[#allocation12 + $0x378] sm:$0xff]
    %v11321 = vld [vmem:[#allocation12 + $0x380] sm:$0xff]
    %v11322 = vld [vmem:[#allocation12 + $0x388] sm:$0xff]
    %v11323 = vld [vmem:[#allocation12 + $0x390] sm:$0xff]
    %v11324 = vld [vmem:[#allocation12 + $0x398] sm:$0xff]
    %v11325 = vld [vmem:[#allocation12 + $0x3a0] sm:$0xff]
    %v11326 = vld [vmem:[#allocation12 + $0x3a8] sm:$0xff]
    %v11327 = vld [vmem:[#allocation12 + $0x3b0] sm:$0xff]
    %v11328 = vld [vmem:[#allocation12 + $0x3b8] sm:$0xff]
    %v11329 = vld [vmem:[#allocation12 + $0x3c0] sm:$0xff]
    %v11330 = vld [vmem:[#allocation12 + $0x3c8] sm:$0xff]
    %v11331 = vld [vmem:[#allocation12 + $0x3d0] sm:$0xff]
    %v11332 = vld [vmem:[#allocation12 + $0x3d8] sm:$0xff]
    %v11333 = vld [vmem:[#allocation12 + $0x3e0] sm:$0xff]
    %v11334 = vld [vmem:[#allocation12 + $0x3e8] sm:$0xff]
    %v11335 = vld [vmem:[#allocation12 + $0x3f0] sm:$0xff]
    %v11336 = vld [vmem:[#allocation12 + $0x3f8] sm:$0xff]
    %v11337 = vld [vmem:[#allocation12 + $0x400] sm:$0xff]
    %v11338 = vld [vmem:[#allocation12 + $0x408] sm:$0xff]
    %v11339 = vld [vmem:[#allocation12 + $0x410] sm:$0xff]
    %v11340 = vld [vmem:[#allocation12 + $0x418] sm:$0xff]
    %v11341 = vld [vmem:[#allocation12 + $0x420] sm:$0xff]
    %v11342 = vld [vmem:[#allocation12 + $0x428] sm:$0xff]
    %v11343 = vld [vmem:[#allocation12 + $0x430] sm:$0xff]
    %v11344 = vld [vmem:[#allocation12 + $0x438] sm:$0xff]
    %v11345 = vld [vmem:[#allocation12 + $0x440] sm:$0xff]
    %v11346 = vld [vmem:[#allocation12 + $0x448] sm:$0xff]
    %v11347 = vld [vmem:[#allocation12 + $0x450] sm:$0xff]
    %v11348 = vld [vmem:[#allocation12 + $0x458] sm:$0xff]
    %v11349 = vld [vmem:[#allocation12 + $0x460] sm:$0xff]
    %v11350 = vld [vmem:[#allocation12 + $0x468] sm:$0xff]
    %v11351 = vld [vmem:[#allocation12 + $0x470] sm:$0xff]
    %v11352 = vld [vmem:[#allocation12 + $0x478] sm:$0xff]
    %v11353 = vld [vmem:[#allocation12 + $0x480] sm:$0xff]
    %v11354 = vld [vmem:[#allocation12 + $0x488] sm:$0xff]
    %v11355 = vld [vmem:[#allocation12 + $0x490] sm:$0xff]
    %v11356 = vld [vmem:[#allocation12 + $0x498] sm:$0xff]
    %v11357 = vld [vmem:[#allocation12 + $0x4a0] sm:$0xff]
    %v11358 = vld [vmem:[#allocation12 + $0x4a8] sm:$0xff]
    %v11359 = vld [vmem:[#allocation12 + $0x4b0] sm:$0xff]
    %v11360 = vld [vmem:[#allocation12 + $0x4b8] sm:$0xff]
    %v11361 = vld [vmem:[#allocation12 + $0x4c0] sm:$0xff]
    %v11362 = vld [vmem:[#allocation12 + $0x4c8] sm:$0xff]
    %v11363 = vld [vmem:[#allocation12 + $0x4d0] sm:$0xff]
    %v11364 = vld [vmem:[#allocation12 + $0x4d8] sm:$0xff]
    %v11365 = vld [vmem:[#allocation12 + $0x4e0] sm:$0xff]
    %v11366 = vld [vmem:[#allocation12 + $0x4e8] sm:$0xff]
    %v11367 = vld [vmem:[#allocation12 + $0x4f0] sm:$0xff]
    %v11368 = vld [vmem:[#allocation12 + $0x4f8] sm:$0xff]
    %v11369 = vld [vmem:[#allocation12 + $0x500] sm:$0xff]
    %v11370 = vld [vmem:[#allocation12 + $0x508] sm:$0xff]
    %v11371 = vld [vmem:[#allocation12 + $0x510] sm:$0xff]
    %v11372 = vld [vmem:[#allocation12 + $0x518] sm:$0xff]
    %v11373 = vld [vmem:[#allocation12 + $0x520] sm:$0xff]
    %v11374 = vld [vmem:[#allocation12 + $0x528] sm:$0xff]
    %v11375 = vld [vmem:[#allocation12 + $0x530] sm:$0xff]
    %v11376 = vld [vmem:[#allocation12 + $0x538] sm:$0xff]
    %v11377 = vld [vmem:[#allocation12 + $0x540] sm:$0xff]
    %v11378 = vld [vmem:[#allocation12 + $0x548] sm:$0xff]
    %v11379 = vld [vmem:[#allocation12 + $0x550] sm:$0xff]
    %v11380 = vld [vmem:[#allocation12 + $0x558] sm:$0xff]
    %v11381 = vld [vmem:[#allocation12 + $0x560] sm:$0xff]
    %v11382 = vld [vmem:[#allocation12 + $0x568] sm:$0xff]
    %v11383 = vld [vmem:[#allocation12 + $0x570] sm:$0xff]
    %v11384 = vld [vmem:[#allocation12 + $0x578] sm:$0xff]
    %v11385 = vld [vmem:[#allocation12 + $0x580] sm:$0xff]
    %v11386 = vld [vmem:[#allocation12 + $0x588] sm:$0xff]
    %v11387 = vld [vmem:[#allocation12 + $0x590] sm:$0xff]
    %v11388 = vld [vmem:[#allocation12 + $0x598] sm:$0xff]
    %v11389 = vld [vmem:[#allocation12 + $0x5a0] sm:$0xff]
    %v11390 = vld [vmem:[#allocation12 + $0x5a8] sm:$0xff]
    %v11391 = vld [vmem:[#allocation12 + $0x5b0] sm:$0xff]
    %v11392 = vld [vmem:[#allocation12 + $0x5b8] sm:$0xff]
    %v11393 = vld [vmem:[#allocation12 + $0x5c0] sm:$0xff]
    %v11394 = vld [vmem:[#allocation12 + $0x5c8] sm:$0xff]
    %v11395 = vld [vmem:[#allocation12 + $0x5d0] sm:$0xff]
    %v11396 = vld [vmem:[#allocation12 + $0x5d8] sm:$0xff]
    %v11397 = vld [vmem:[#allocation12 + $0x5e0] sm:$0xff]
    %v11398 = vld [vmem:[#allocation12 + $0x5e8] sm:$0xff]
    %v11399 = vld [vmem:[#allocation12 + $0x5f0] sm:$0xff]
    %v11400 = vld [vmem:[#allocation12 + $0x5f8] sm:$0xff]
    %v11401 = vld [vmem:[#allocation12 + $0x600] sm:$0xff]
    %v11402 = vld [vmem:[#allocation12 + $0x608] sm:$0xff]
    %v11403 = vld [vmem:[#allocation12 + $0x610] sm:$0xff]
    %v11404 = vld [vmem:[#allocation12 + $0x618] sm:$0xff]
    %v11405 = vld [vmem:[#allocation12 + $0x620] sm:$0xff]
    %v11406 = vld [vmem:[#allocation12 + $0x628] sm:$0xff]
    %v11407 = vld [vmem:[#allocation12 + $0x630] sm:$0xff]
    %v11408 = vld [vmem:[#allocation12 + $0x638] sm:$0xff]
    %v11409 = vld [vmem:[#allocation12 + $0x640] sm:$0xff]
    %v11410 = vld [vmem:[#allocation12 + $0x648] sm:$0xff]
    %v11411 = vld [vmem:[#allocation12 + $0x650] sm:$0xff]
    %v11412 = vld [vmem:[#allocation12 + $0x658] sm:$0xff]
    %v11413 = vld [vmem:[#allocation12 + $0x660] sm:$0xff]
    %v11414 = vld [vmem:[#allocation12 + $0x668] sm:$0xff]
    %v11415 = vld [vmem:[#allocation12 + $0x670] sm:$0xff]
    %v11416 = vld [vmem:[#allocation12 + $0x678] sm:$0xff]
    %v11417 = vld [vmem:[#allocation12 + $0x680] sm:$0xff]
    %v11418 = vld [vmem:[#allocation12 + $0x688] sm:$0xff]
    %v11419 = vld [vmem:[#allocation12 + $0x690] sm:$0xff]
    %v11420 = vld [vmem:[#allocation12 + $0x698] sm:$0xff]
    %v11421 = vld [vmem:[#allocation12 + $0x6a0] sm:$0xff]
    %v11422 = vld [vmem:[#allocation12 + $0x6a8] sm:$0xff]
    %v11423 = vld [vmem:[#allocation12 + $0x6b0] sm:$0xff]
    %v11424 = vld [vmem:[#allocation12 + $0x6b8] sm:$0xff]
    %v11425 = vld [vmem:[#allocation12 + $0x6c0] sm:$0xff]
    %v11426 = vld [vmem:[#allocation12 + $0x6c8] sm:$0xff]
    %v11427 = vld [vmem:[#allocation12 + $0x6d0] sm:$0xff]
    %v11428 = vld [vmem:[#allocation12 + $0x6d8] sm:$0xff]
    %v11429 = vld [vmem:[#allocation12 + $0x6e0] sm:$0xff]
    %v11430 = vld [vmem:[#allocation12 + $0x6e8] sm:$0xff]
    %v11431 = vld [vmem:[#allocation12 + $0x6f0] sm:$0xff]
    %v11432 = vld [vmem:[#allocation12 + $0x6f8] sm:$0xff]
    %v11433 = vld [vmem:[#allocation12 + $0x700] sm:$0xff]
    %v11434 = vld [vmem:[#allocation12 + $0x708] sm:$0xff]
    %v11435 = vld [vmem:[#allocation12 + $0x710] sm:$0xff]
    %v11436 = vld [vmem:[#allocation12 + $0x718] sm:$0xff]
    %v11437 = vld [vmem:[#allocation12 + $0x720] sm:$0xff]
    %v11438 = vld [vmem:[#allocation12 + $0x728] sm:$0xff]
    %v11439 = vld [vmem:[#allocation12 + $0x730] sm:$0xff]
    %v11440 = vld [vmem:[#allocation12 + $0x738] sm:$0xff]
    %v11441 = vld [vmem:[#allocation12 + $0x740] sm:$0xff]
    %v11442 = vld [vmem:[#allocation12 + $0x748] sm:$0xff]
    %v11443 = vld [vmem:[#allocation12 + $0x750] sm:$0xff]
    %v11444 = vld [vmem:[#allocation12 + $0x758] sm:$0xff]
    %v11445 = vld [vmem:[#allocation12 + $0x760] sm:$0xff]
    %v11446 = vld [vmem:[#allocation12 + $0x768] sm:$0xff]
    %v11447 = vld [vmem:[#allocation12 + $0x770] sm:$0xff]
    %v11448 = vld [vmem:[#allocation12 + $0x778] sm:$0xff]
    %v11449 = vld [vmem:[#allocation12 + $0x780] sm:$0xff]
    %v11450 = vld [vmem:[#allocation12 + $0x788] sm:$0xff]
    %v11451 = vld [vmem:[#allocation12 + $0x790] sm:$0xff]
    %v11452 = vld [vmem:[#allocation12 + $0x798] sm:$0xff]
    %v11453 = vld [vmem:[#allocation12 + $0x7a0] sm:$0xff]
    %v11454 = vld [vmem:[#allocation12 + $0x7a8] sm:$0xff]
    %v11455 = vld [vmem:[#allocation12 + $0x7b0] sm:$0xff]
    %v11456 = vld [vmem:[#allocation12 + $0x7b8] sm:$0xff]
    %v11457 = vld [vmem:[#allocation12 + $0x7c0] sm:$0xff]
    %v11458 = vld [vmem:[#allocation12 + $0x7c8] sm:$0xff]
    %v11459 = vld [vmem:[#allocation12 + $0x7d0] sm:$0xff]
    %v11460 = vld [vmem:[#allocation12 + $0x7d8] sm:$0xff]
    %v11461 = vld [vmem:[#allocation12 + $0x7e0] sm:$0xff]
    %v11462 = vld [vmem:[#allocation12 + $0x7e8] sm:$0xff]
    %v11463 = vld [vmem:[#allocation12 + $0x7f0] sm:$0xff]
    %v11464 = vld [vmem:[#allocation12 + $0x7f8] sm:$0xff]
    %v11465 = vld [vmem:[#allocation12 + $0x800] sm:$0xff]
    %v11466 = vld [vmem:[#allocation12 + $0x808] sm:$0xff]
    %v11467 = vld [vmem:[#allocation12 + $0x810] sm:$0xff]
    %v11468 = vld [vmem:[#allocation12 + $0x818] sm:$0xff]
    %v11469 = vld [vmem:[#allocation12 + $0x820] sm:$0xff]
    %v11470 = vld [vmem:[#allocation12 + $0x828] sm:$0xff]
    %v11471 = vld [vmem:[#allocation12 + $0x830] sm:$0xff]
    %v11472 = vld [vmem:[#allocation12 + $0x838] sm:$0xff]
    %v11473 = vld [vmem:[#allocation12 + $0x840] sm:$0xff]
    %v11474 = vld [vmem:[#allocation12 + $0x848] sm:$0xff]
    %v11475 = vld [vmem:[#allocation12 + $0x850] sm:$0xff]
    %v11476 = vld [vmem:[#allocation12 + $0x858] sm:$0xff]
    %v11477 = vld [vmem:[#allocation12 + $0x860] sm:$0xff]
    %v11478 = vld [vmem:[#allocation12 + $0x868] sm:$0xff]
    %v11479 = vld [vmem:[#allocation12 + $0x870] sm:$0xff]
    %v11480 = vld [vmem:[#allocation12 + $0x878] sm:$0xff]
    %v11481 = vld [vmem:[#allocation12 + $0x880] sm:$0xff]
    %v11482 = vld [vmem:[#allocation12 + $0x888] sm:$0xff]
    %v11483 = vld [vmem:[#allocation12 + $0x890] sm:$0xff]
    %v11484 = vld [vmem:[#allocation12 + $0x898] sm:$0xff]
    %v11485 = vld [vmem:[#allocation12 + $0x8a0] sm:$0xff]
    %v11486 = vld [vmem:[#allocation12 + $0x8a8] sm:$0xff]
    %v11487 = vld [vmem:[#allocation12 + $0x8b0] sm:$0xff]
    %v11488 = vld [vmem:[#allocation12 + $0x8b8] sm:$0xff]
    %v11489 = vld [vmem:[#allocation12 + $0x8c0] sm:$0xff]
    %v11490 = vld [vmem:[#allocation12 + $0x8c8] sm:$0xff]
    %v11491 = vld [vmem:[#allocation12 + $0x8d0] sm:$0xff]
    %v11492 = vld [vmem:[#allocation12 + $0x8d8] sm:$0xff]
    %v11493 = vld [vmem:[#allocation12 + $0x8e0] sm:$0xff]
    %v11494 = vld [vmem:[#allocation12 + $0x8e8] sm:$0xff]
    %v11495 = vld [vmem:[#allocation12 + $0x8f0] sm:$0xff]
    %v11496 = vld [vmem:[#allocation12 + $0x8f8] sm:$0xff]
    %v11497 = vld [vmem:[#allocation12 + $0x900] sm:$0xff]
    %v11498 = vld [vmem:[#allocation12 + $0x908] sm:$0xff]
    %v11499 = vld [vmem:[#allocation12 + $0x910] sm:$0xff]
    %v11500 = vld [vmem:[#allocation12 + $0x918] sm:$0xff]
    %v11501 = vld [vmem:[#allocation12 + $0x920] sm:$0xff]
    %v11502 = vld [vmem:[#allocation12 + $0x928] sm:$0xff]
    %v11503 = vld [vmem:[#allocation12 + $0x930] sm:$0xff]
    %v11504 = vld [vmem:[#allocation12 + $0x938] sm:$0xff]
    %v11505 = vld [vmem:[#allocation12 + $0x940] sm:$0xff]
    %v11506 = vld [vmem:[#allocation12 + $0x948] sm:$0xff]
    %v11507 = vld [vmem:[#allocation12 + $0x950] sm:$0xff]
    %v11508 = vld [vmem:[#allocation12 + $0x958] sm:$0xff]
    %v11509 = vld [vmem:[#allocation12 + $0x960] sm:$0xff]
    %v11510 = vld [vmem:[#allocation12 + $0x968] sm:$0xff]
    %v11511 = vld [vmem:[#allocation12 + $0x970] sm:$0xff]
    %v11512 = vld [vmem:[#allocation12 + $0x978] sm:$0xff]
    %v11513 = vld [vmem:[#allocation12 + $0x980] sm:$0xff]
    %v11514 = vld [vmem:[#allocation12 + $0x988] sm:$0xff]
    %v11515 = vld [vmem:[#allocation12 + $0x990] sm:$0xff]
    %v11516 = vld [vmem:[#allocation12 + $0x998] sm:$0xff]
    %v11517 = vld [vmem:[#allocation12 + $0x9a0] sm:$0xff]
    %v11518 = vld [vmem:[#allocation12 + $0x9a8] sm:$0xff]
    %v11519 = vld [vmem:[#allocation12 + $0x9b0] sm:$0xff]
    %v11520 = vld [vmem:[#allocation12 + $0x9b8] sm:$0xff]
    %v11521 = vld [vmem:[#allocation12 + $0x9c0] sm:$0xff]
    %v11522 = vld [vmem:[#allocation12 + $0x9c8] sm:$0xff]
    %v11523 = vld [vmem:[#allocation12 + $0x9d0] sm:$0xff]
    %v11524 = vld [vmem:[#allocation12 + $0x9d8] sm:$0xff]
    %v11525 = vld [vmem:[#allocation12 + $0x9e0] sm:$0xff]
    %v11526 = vld [vmem:[#allocation12 + $0x9e8] sm:$0xff]
    %v11527 = vld [vmem:[#allocation12 + $0x9f0] sm:$0xff]
    %v11528 = vld [vmem:[#allocation12 + $0x9f8] sm:$0xff]
    %v11529 = vld [vmem:[#allocation12 + $0xa00] sm:$0xff]
    %v11530 = vld [vmem:[#allocation12 + $0xa08] sm:$0xff]
    %v11531 = vld [vmem:[#allocation12 + $0xa10] sm:$0xff]
    %v11532 = vld [vmem:[#allocation12 + $0xa18] sm:$0xff]
    %v11533 = vld [vmem:[#allocation12 + $0xa20] sm:$0xff]
    %v11534 = vld [vmem:[#allocation12 + $0xa28] sm:$0xff]
    %v11535 = vld [vmem:[#allocation12 + $0xa30] sm:$0xff]
    %v11536 = vld [vmem:[#allocation12 + $0xa38] sm:$0xff]
    %v11537 = vld [vmem:[#allocation12 + $0xa40] sm:$0xff]
    %v11538 = vld [vmem:[#allocation12 + $0xa48] sm:$0xff]
    %v11539 = vld [vmem:[#allocation12 + $0xa50] sm:$0xff]
    %v11540 = vld [vmem:[#allocation12 + $0xa58] sm:$0xff]
    %v11541 = vld [vmem:[#allocation12 + $0xa60] sm:$0xff]
    %v11542 = vld [vmem:[#allocation12 + $0xa68] sm:$0xff]
    %v11543 = vld [vmem:[#allocation12 + $0xa70] sm:$0xff]
    %v11544 = vld [vmem:[#allocation12 + $0xa78] sm:$0xff]
    %v11545 = vld [vmem:[#allocation12 + $0xa80] sm:$0xff]
    %v11546 = vld [vmem:[#allocation12 + $0xa88] sm:$0xff]
    %v11547 = vld [vmem:[#allocation12 + $0xa90] sm:$0xff]
    %v11548 = vld [vmem:[#allocation12 + $0xa98] sm:$0xff]
    %v11549 = vld [vmem:[#allocation12 + $0xaa0] sm:$0xff]
    %v11550 = vld [vmem:[#allocation12 + $0xaa8] sm:$0xff]
    %v11551 = vld [vmem:[#allocation12 + $0xab0] sm:$0xff]
    %v11552 = vld [vmem:[#allocation12 + $0xab8] sm:$0xff]
    %v11553 = vld [vmem:[#allocation12 + $0xac0] sm:$0xff]
    %v11554 = vld [vmem:[#allocation12 + $0xac8] sm:$0xff]
    %v11555 = vld [vmem:[#allocation12 + $0xad0] sm:$0xff]
    %v11556 = vld [vmem:[#allocation12 + $0xad8] sm:$0xff]
    %v11557 = vld [vmem:[#allocation12 + $0xae0] sm:$0xff]
    %v11558 = vld [vmem:[#allocation12 + $0xae8] sm:$0xff]
    %v11559 = vld [vmem:[#allocation12 + $0xaf0] sm:$0xff]
    %v11560 = vld [vmem:[#allocation12 + $0xaf8] sm:$0xff]
    %v11561 = vld [vmem:[#allocation12 + $0xb00] sm:$0xff]
    %v11562 = vld [vmem:[#allocation12 + $0xb08] sm:$0xff]
    %v11563 = vld [vmem:[#allocation12 + $0xb10] sm:$0xff]
    %v11564 = vld [vmem:[#allocation12 + $0xb18] sm:$0xff]
    %v11565 = vld [vmem:[#allocation12 + $0xb20] sm:$0xff]
    %v11566 = vld [vmem:[#allocation12 + $0xb28] sm:$0xff]
    %v11567 = vld [vmem:[#allocation12 + $0xb30] sm:$0xff]
    %v11568 = vld [vmem:[#allocation12 + $0xb38] sm:$0xff]
    %v11569 = vld [vmem:[#allocation12 + $0xb40] sm:$0xff]
    %v11570 = vld [vmem:[#allocation12 + $0xb48] sm:$0xff]
    %v11571 = vld [vmem:[#allocation12 + $0xb50] sm:$0xff]
    %v11572 = vld [vmem:[#allocation12 + $0xb58] sm:$0xff]
    %v11573 = vld [vmem:[#allocation12 + $0xb60] sm:$0xff]
    %v11574 = vld [vmem:[#allocation12 + $0xb68] sm:$0xff]
    %v11575 = vld [vmem:[#allocation12 + $0xb70] sm:$0xff]
    %v11576 = vld [vmem:[#allocation12 + $0xb78] sm:$0xff]
    %v11577 = vld [vmem:[#allocation12 + $0xb80] sm:$0xff]
    %v11578 = vld [vmem:[#allocation12 + $0xb88] sm:$0xff]
    %v11579 = vld [vmem:[#allocation12 + $0xb90] sm:$0xff]
    %v11580 = vld [vmem:[#allocation12 + $0xb98] sm:$0xff]
    %v11581 = vld [vmem:[#allocation12 + $0xba0] sm:$0xff]
    %v11582 = vld [vmem:[#allocation12 + $0xba8] sm:$0xff]
    %v11583 = vld [vmem:[#allocation12 + $0xbb0] sm:$0xff]
    %v11584 = vld [vmem:[#allocation12 + $0xbb8] sm:$0xff]
    %v11585 = vld [vmem:[#allocation12 + $0xbc0] sm:$0xff]
    %v11586 = vld [vmem:[#allocation12 + $0xbc8] sm:$0xff]
    %v11587 = vld [vmem:[#allocation12 + $0xbd0] sm:$0xff]
    %v11588 = vld [vmem:[#allocation12 + $0xbd8] sm:$0xff]
    %v11589 = vld [vmem:[#allocation12 + $0xbe0] sm:$0xff]
    %v11590 = vld [vmem:[#allocation12 + $0xbe8] sm:$0xff]
    %v11591 = vld [vmem:[#allocation12 + $0xbf0] sm:$0xff]
    %v11592 = vld [vmem:[#allocation12 + $0xbf8] sm:$0xff]
    %v11593 = vld [vmem:[#allocation14] sm:$0xff]
    %v11595 = vlaneseq
    %v11596 = vshrl.u32 %v11595, 7
    %v11597 = vsub.s32 0, %v11596
    %v11598 = vrot.slane %v11593, %v11597
    %v11599 = vlaneseq
    %v11600 = vshrl.u32 %v11599, 7
    %v11601 = vsub.s32 1, %v11600
    %v11602 = vrot.slane %v11593, %v11601
    %v11603 = vlaneseq
    %v11604 = vshrl.u32 %v11603, 7
    %v11605 = vsub.s32 2, %v11604
    %v11606 = vrot.slane %v11593, %v11605
    %v11607 = vlaneseq
    %v11608 = vshrl.u32 %v11607, 7
    %v11609 = vsub.s32 3, %v11608
    %v11610 = vrot.slane %v11593, %v11609
    %v11611 = vlaneseq
    %v11612 = vshrl.u32 %v11611, 7
    %v11613 = vsub.s32 4, %v11612
    %v11614 = vrot.slane %v11593, %v11613
    %v11615 = vlaneseq
    %v11616 = vshrl.u32 %v11615, 7
    %v11617 = vsub.s32 5, %v11616
    %v11618 = vrot.slane %v11593, %v11617
    %v11619 = vlaneseq
    %v11620 = vshrl.u32 %v11619, 7
    %v11621 = vsub.s32 6, %v11620
    %v11622 = vrot.slane %v11593, %v11621
    %v11623 = vlaneseq
    %v11624 = vshrl.u32 %v11623, 7
    %v11625 = vsub.s32 7, %v11624
    %v11626 = vrot.slane %v11593, %v11625
    %v12019 = vunpack.c.l.b16 %v11209
    %v12020 = vunpack.c.h.b16 %v11209
    %v12021 = vunpack.c.l.b16 %v11210
    %v12022 = vunpack.c.h.b16 %v11210
    %v12023 = vunpack.c.l.b16 %v11211
    %v12024 = vunpack.c.h.b16 %v11211
    %v12025 = vunpack.c.l.b16 %v11212
    %v12026 = vunpack.c.h.b16 %v11212
    %v12027 = vunpack.c.l.b16 %v11213
    %v12028 = vunpack.c.h.b16 %v11213
    %v12029 = vunpack.c.l.b16 %v11214
    %v12030 = vunpack.c.h.b16 %v11214
    %v12031 = vunpack.c.l.b16 %v11215
    %v12032 = vunpack.c.h.b16 %v11215
    %v12033 = vunpack.c.l.b16 %v11216
    %v12034 = vunpack.c.h.b16 %v11216
    %v12035 = vunpack.c.l.b16 %v11217
    %v12036 = vunpack.c.h.b16 %v11217
    %v12037 = vunpack.c.l.b16 %v11218
    %v12038 = vunpack.c.h.b16 %v11218
    %v12039 = vunpack.c.l.b16 %v11219
    %v12040 = vunpack.c.h.b16 %v11219
    %v12041 = vunpack.c.l.b16 %v11220
    %v12042 = vunpack.c.h.b16 %v11220
    %v12043 = vunpack.c.l.b16 %v11221
    %v12044 = vunpack.c.h.b16 %v11221
    %v12045 = vunpack.c.l.b16 %v11222
    %v12046 = vunpack.c.h.b16 %v11222
    %v12047 = vunpack.c.l.b16 %v11223
    %v12048 = vunpack.c.h.b16 %v11223
    %v12049 = vunpack.c.l.b16 %v11224
    %v12050 = vunpack.c.h.b16 %v11224
    %v12051 = vunpack.c.l.b16 %v11225
    %v12052 = vunpack.c.h.b16 %v11225
    %v12053 = vunpack.c.l.b16 %v11226
    %v12054 = vunpack.c.h.b16 %v11226
    %v12055 = vunpack.c.l.b16 %v11227
    %v12056 = vunpack.c.h.b16 %v11227
    %v12057 = vunpack.c.l.b16 %v11228
    %v12058 = vunpack.c.h.b16 %v11228
    %v12059 = vunpack.c.l.b16 %v11229
    %v12060 = vunpack.c.h.b16 %v11229
    %v12061 = vunpack.c.l.b16 %v11230
    %v12062 = vunpack.c.h.b16 %v11230
    %v12063 = vunpack.c.l.b16 %v11231
    %v12064 = vunpack.c.h.b16 %v11231
    %v12065 = vunpack.c.l.b16 %v11232
    %v12066 = vunpack.c.h.b16 %v11232
    %v12067 = vunpack.c.l.b16 %v11233
    %v12068 = vunpack.c.h.b16 %v11233
    %v12069 = vunpack.c.l.b16 %v11234
    %v12070 = vunpack.c.h.b16 %v11234
    %v12071 = vunpack.c.l.b16 %v11235
    %v12072 = vunpack.c.h.b16 %v11235
    %v12073 = vunpack.c.l.b16 %v11236
    %v12074 = vunpack.c.h.b16 %v11236
    %v12075 = vunpack.c.l.b16 %v11237
    %v12076 = vunpack.c.h.b16 %v11237
    %v12077 = vunpack.c.l.b16 %v11238
    %v12078 = vunpack.c.h.b16 %v11238
    %v12079 = vunpack.c.l.b16 %v11239
    %v12080 = vunpack.c.h.b16 %v11239
    %v12081 = vunpack.c.l.b16 %v11240
    %v12082 = vunpack.c.h.b16 %v11240
    %v12083 = vunpack.c.l.b16 %v11241
    %v12084 = vunpack.c.h.b16 %v11241
    %v12085 = vunpack.c.l.b16 %v11242
    %v12086 = vunpack.c.h.b16 %v11242
    %v12087 = vunpack.c.l.b16 %v11243
    %v12088 = vunpack.c.h.b16 %v11243
    %v12089 = vunpack.c.l.b16 %v11244
    %v12090 = vunpack.c.h.b16 %v11244
    %v12091 = vunpack.c.l.b16 %v11245
    %v12092 = vunpack.c.h.b16 %v11245
    %v12093 = vunpack.c.l.b16 %v11246
    %v12094 = vunpack.c.h.b16 %v11246
    %v12095 = vunpack.c.l.b16 %v11247
    %v12096 = vunpack.c.h.b16 %v11247
    %v12097 = vunpack.c.l.b16 %v11248
    %v12098 = vunpack.c.h.b16 %v11248
    %v12099 = vunpack.c.l.b16 %v11249
    %v12100 = vunpack.c.h.b16 %v11249
    %v12101 = vunpack.c.l.b16 %v11250
    %v12102 = vunpack.c.h.b16 %v11250
    %v12103 = vunpack.c.l.b16 %v11251
    %v12104 = vunpack.c.h.b16 %v11251
    %v12105 = vunpack.c.l.b16 %v11252
    %v12106 = vunpack.c.h.b16 %v11252
    %v12107 = vunpack.c.l.b16 %v11253
    %v12108 = vunpack.c.h.b16 %v11253
    %v12109 = vunpack.c.l.b16 %v11254
    %v12110 = vunpack.c.h.b16 %v11254
    %v12111 = vunpack.c.l.b16 %v11255
    %v12112 = vunpack.c.h.b16 %v11255
    %v12113 = vunpack.c.l.b16 %v11256
    %v12114 = vunpack.c.h.b16 %v11256
    %v12115 = vunpack.c.l.b16 %v11257
    %v12116 = vunpack.c.h.b16 %v11257
    %v12117 = vunpack.c.l.b16 %v11258
    %v12118 = vunpack.c.h.b16 %v11258
    %v12119 = vunpack.c.l.b16 %v11259
    %v12120 = vunpack.c.h.b16 %v11259
    %v12121 = vunpack.c.l.b16 %v11260
    %v12122 = vunpack.c.h.b16 %v11260
    %v12123 = vunpack.c.l.b16 %v11261
    %v12124 = vunpack.c.h.b16 %v11261
    %v12125 = vunpack.c.l.b16 %v11262
    %v12126 = vunpack.c.h.b16 %v11262
    %v12127 = vunpack.c.l.b16 %v11263
    %v12128 = vunpack.c.h.b16 %v11263
    %v12129 = vunpack.c.l.b16 %v11264
    %v12130 = vunpack.c.h.b16 %v11264
    %v12131 = vunpack.c.l.b16 %v11265
    %v12132 = vunpack.c.h.b16 %v11265
    %v12133 = vunpack.c.l.b16 %v11266
    %v12134 = vunpack.c.h.b16 %v11266
    %v12135 = vunpack.c.l.b16 %v11267
    %v12136 = vunpack.c.h.b16 %v11267
    %v12137 = vunpack.c.l.b16 %v11268
    %v12138 = vunpack.c.h.b16 %v11268
    %v12139 = vunpack.c.l.b16 %v11269
    %v12140 = vunpack.c.h.b16 %v11269
    %v12141 = vunpack.c.l.b16 %v11270
    %v12142 = vunpack.c.h.b16 %v11270
    %v12143 = vunpack.c.l.b16 %v11271
    %v12144 = vunpack.c.h.b16 %v11271
    %v12145 = vunpack.c.l.b16 %v11272
    %v12146 = vunpack.c.h.b16 %v11272
    %v12147 = vunpack.c.l.b16 %v11273
    %v12148 = vunpack.c.h.b16 %v11273
    %v12149 = vunpack.c.l.b16 %v11274
    %v12150 = vunpack.c.h.b16 %v11274
    %v12151 = vunpack.c.l.b16 %v11275
    %v12152 = vunpack.c.h.b16 %v11275
    %v12153 = vunpack.c.l.b16 %v11276
    %v12154 = vunpack.c.h.b16 %v11276
    %v12155 = vunpack.c.l.b16 %v11277
    %v12156 = vunpack.c.h.b16 %v11277
    %v12157 = vunpack.c.l.b16 %v11278
    %v12158 = vunpack.c.h.b16 %v11278
    %v12159 = vunpack.c.l.b16 %v11279
    %v12160 = vunpack.c.h.b16 %v11279
    %v12161 = vunpack.c.l.b16 %v11280
    %v12162 = vunpack.c.h.b16 %v11280
    %v12163 = vunpack.c.l.b16 %v11281
    %v12164 = vunpack.c.h.b16 %v11281
    %v12165 = vunpack.c.l.b16 %v11282
    %v12166 = vunpack.c.h.b16 %v11282
    %v12167 = vunpack.c.l.b16 %v11283
    %v12168 = vunpack.c.h.b16 %v11283
    %v12169 = vunpack.c.l.b16 %v11284
    %v12170 = vunpack.c.h.b16 %v11284
    %v12171 = vunpack.c.l.b16 %v11285
    %v12172 = vunpack.c.h.b16 %v11285
    %v12173 = vunpack.c.l.b16 %v11286
    %v12174 = vunpack.c.h.b16 %v11286
    %v12175 = vunpack.c.l.b16 %v11287
    %v12176 = vunpack.c.h.b16 %v11287
    %v12177 = vunpack.c.l.b16 %v11288
    %v12178 = vunpack.c.h.b16 %v11288
    %v12179 = vunpack.c.l.b16 %v11289
    %v12180 = vunpack.c.h.b16 %v11289
    %v12181 = vunpack.c.l.b16 %v11290
    %v12182 = vunpack.c.h.b16 %v11290
    %v12183 = vunpack.c.l.b16 %v11291
    %v12184 = vunpack.c.h.b16 %v11291
    %v12185 = vunpack.c.l.b16 %v11292
    %v12186 = vunpack.c.h.b16 %v11292
    %v12187 = vunpack.c.l.b16 %v11293
    %v12188 = vunpack.c.h.b16 %v11293
    %v12189 = vunpack.c.l.b16 %v11294
    %v12190 = vunpack.c.h.b16 %v11294
    %v12191 = vunpack.c.l.b16 %v11295
    %v12192 = vunpack.c.h.b16 %v11295
    %v12193 = vunpack.c.l.b16 %v11296
    %v12194 = vunpack.c.h.b16 %v11296
    %v12195 = vunpack.c.l.b16 %v11297
    %v12196 = vunpack.c.h.b16 %v11297
    %v12197 = vunpack.c.l.b16 %v11298
    %v12198 = vunpack.c.h.b16 %v11298
    %v12199 = vunpack.c.l.b16 %v11299
    %v12200 = vunpack.c.h.b16 %v11299
    %v12201 = vunpack.c.l.b16 %v11300
    %v12202 = vunpack.c.h.b16 %v11300
    %v12203 = vunpack.c.l.b16 %v11301
    %v12204 = vunpack.c.h.b16 %v11301
    %v12205 = vunpack.c.l.b16 %v11302
    %v12206 = vunpack.c.h.b16 %v11302
    %v12207 = vunpack.c.l.b16 %v11303
    %v12208 = vunpack.c.h.b16 %v11303
    %v12209 = vunpack.c.l.b16 %v11304
    %v12210 = vunpack.c.h.b16 %v11304
    %v12211 = vunpack.c.l.b16 %v11305
    %v12212 = vunpack.c.h.b16 %v11305
    %v12213 = vunpack.c.l.b16 %v11306
    %v12214 = vunpack.c.h.b16 %v11306
    %v12215 = vunpack.c.l.b16 %v11307
    %v12216 = vunpack.c.h.b16 %v11307
    %v12217 = vunpack.c.l.b16 %v11308
    %v12218 = vunpack.c.h.b16 %v11308
    %v12219 = vunpack.c.l.b16 %v11309
    %v12220 = vunpack.c.h.b16 %v11309
    %v12221 = vunpack.c.l.b16 %v11310
    %v12222 = vunpack.c.h.b16 %v11310
    %v12223 = vunpack.c.l.b16 %v11311
    %v12224 = vunpack.c.h.b16 %v11311
    %v12225 = vunpack.c.l.b16 %v11312
    %v12226 = vunpack.c.h.b16 %v11312
    %v12227 = vunpack.c.l.b16 %v11313
    %v12228 = vunpack.c.h.b16 %v11313
    %v12229 = vunpack.c.l.b16 %v11314
    %v12230 = vunpack.c.h.b16 %v11314
    %v12231 = vunpack.c.l.b16 %v11315
    %v12232 = vunpack.c.h.b16 %v11315
    %v12233 = vunpack.c.l.b16 %v11316
    %v12234 = vunpack.c.h.b16 %v11316
    %v12235 = vunpack.c.l.b16 %v11317
    %v12236 = vunpack.c.h.b16 %v11317
    %v12237 = vunpack.c.l.b16 %v11318
    %v12238 = vunpack.c.h.b16 %v11318
    %v12239 = vunpack.c.l.b16 %v11319
    %v12240 = vunpack.c.h.b16 %v11319
    %v12241 = vunpack.c.l.b16 %v11320
    %v12242 = vunpack.c.h.b16 %v11320
    %v12243 = vunpack.c.l.b16 %v11321
    %v12244 = vunpack.c.h.b16 %v11321
    %v12245 = vunpack.c.l.b16 %v11322
    %v12246 = vunpack.c.h.b16 %v11322
    %v12247 = vunpack.c.l.b16 %v11323
    %v12248 = vunpack.c.h.b16 %v11323
    %v12249 = vunpack.c.l.b16 %v11324
    %v12250 = vunpack.c.h.b16 %v11324
    %v12251 = vunpack.c.l.b16 %v11325
    %v12252 = vunpack.c.h.b16 %v11325
    %v12253 = vunpack.c.l.b16 %v11326
    %v12254 = vunpack.c.h.b16 %v11326
    %v12255 = vunpack.c.l.b16 %v11327
    %v12256 = vunpack.c.h.b16 %v11327
    %v12257 = vunpack.c.l.b16 %v11328
    %v12258 = vunpack.c.h.b16 %v11328
    %v12259 = vunpack.c.l.b16 %v11329
    %v12260 = vunpack.c.h.b16 %v11329
    %v12261 = vunpack.c.l.b16 %v11330
    %v12262 = vunpack.c.h.b16 %v11330
    %v12263 = vunpack.c.l.b16 %v11331
    %v12264 = vunpack.c.h.b16 %v11331
    %v12265 = vunpack.c.l.b16 %v11332
    %v12266 = vunpack.c.h.b16 %v11332
    %v12267 = vunpack.c.l.b16 %v11333
    %v12268 = vunpack.c.h.b16 %v11333
    %v12269 = vunpack.c.l.b16 %v11334
    %v12270 = vunpack.c.h.b16 %v11334
    %v12271 = vunpack.c.l.b16 %v11335
    %v12272 = vunpack.c.h.b16 %v11335
    %v12273 = vunpack.c.l.b16 %v11336
    %v12274 = vunpack.c.h.b16 %v11336
    %v12275 = vunpack.c.l.b16 %v11337
    %v12276 = vunpack.c.h.b16 %v11337
    %v12277 = vunpack.c.l.b16 %v11338
    %v12278 = vunpack.c.h.b16 %v11338
    %v12279 = vunpack.c.l.b16 %v11339
    %v12280 = vunpack.c.h.b16 %v11339
    %v12281 = vunpack.c.l.b16 %v11340
    %v12282 = vunpack.c.h.b16 %v11340
    %v12283 = vunpack.c.l.b16 %v11341
    %v12284 = vunpack.c.h.b16 %v11341
    %v12285 = vunpack.c.l.b16 %v11342
    %v12286 = vunpack.c.h.b16 %v11342
    %v12287 = vunpack.c.l.b16 %v11343
    %v12288 = vunpack.c.h.b16 %v11343
    %v12289 = vunpack.c.l.b16 %v11344
    %v12290 = vunpack.c.h.b16 %v11344
    %v12291 = vunpack.c.l.b16 %v11345
    %v12292 = vunpack.c.h.b16 %v11345
    %v12293 = vunpack.c.l.b16 %v11346
    %v12294 = vunpack.c.h.b16 %v11346
    %v12295 = vunpack.c.l.b16 %v11347
    %v12296 = vunpack.c.h.b16 %v11347
    %v12297 = vunpack.c.l.b16 %v11348
    %v12298 = vunpack.c.h.b16 %v11348
    %v12299 = vunpack.c.l.b16 %v11349
    %v12300 = vunpack.c.h.b16 %v11349
    %v12301 = vunpack.c.l.b16 %v11350
    %v12302 = vunpack.c.h.b16 %v11350
    %v12303 = vunpack.c.l.b16 %v11351
    %v12304 = vunpack.c.h.b16 %v11351
    %v12305 = vunpack.c.l.b16 %v11352
    %v12306 = vunpack.c.h.b16 %v11352
    %v12307 = vunpack.c.l.b16 %v11353
    %v12308 = vunpack.c.h.b16 %v11353
    %v12309 = vunpack.c.l.b16 %v11354
    %v12310 = vunpack.c.h.b16 %v11354
    %v12311 = vunpack.c.l.b16 %v11355
    %v12312 = vunpack.c.h.b16 %v11355
    %v12313 = vunpack.c.l.b16 %v11356
    %v12314 = vunpack.c.h.b16 %v11356
    %v12315 = vunpack.c.l.b16 %v11357
    %v12316 = vunpack.c.h.b16 %v11357
    %v12317 = vunpack.c.l.b16 %v11358
    %v12318 = vunpack.c.h.b16 %v11358
    %v12319 = vunpack.c.l.b16 %v11359
    %v12320 = vunpack.c.h.b16 %v11359
    %v12321 = vunpack.c.l.b16 %v11360
    %v12322 = vunpack.c.h.b16 %v11360
    %v12323 = vunpack.c.l.b16 %v11361
    %v12324 = vunpack.c.h.b16 %v11361
    %v12325 = vunpack.c.l.b16 %v11362
    %v12326 = vunpack.c.h.b16 %v11362
    %v12327 = vunpack.c.l.b16 %v11363
    %v12328 = vunpack.c.h.b16 %v11363
    %v12329 = vunpack.c.l.b16 %v11364
    %v12330 = vunpack.c.h.b16 %v11364
    %v12331 = vunpack.c.l.b16 %v11365
    %v12332 = vunpack.c.h.b16 %v11365
    %v12333 = vunpack.c.l.b16 %v11366
    %v12334 = vunpack.c.h.b16 %v11366
    %v12335 = vunpack.c.l.b16 %v11367
    %v12336 = vunpack.c.h.b16 %v11367
    %v12337 = vunpack.c.l.b16 %v11368
    %v12338 = vunpack.c.h.b16 %v11368
    %v12339 = vunpack.c.l.b16 %v11369
    %v12340 = vunpack.c.h.b16 %v11369
    %v12341 = vunpack.c.l.b16 %v11370
    %v12342 = vunpack.c.h.b16 %v11370
    %v12343 = vunpack.c.l.b16 %v11371
    %v12344 = vunpack.c.h.b16 %v11371
    %v12345 = vunpack.c.l.b16 %v11372
    %v12346 = vunpack.c.h.b16 %v11372
    %v12347 = vunpack.c.l.b16 %v11373
    %v12348 = vunpack.c.h.b16 %v11373
    %v12349 = vunpack.c.l.b16 %v11374
    %v12350 = vunpack.c.h.b16 %v11374
    %v12351 = vunpack.c.l.b16 %v11375
    %v12352 = vunpack.c.h.b16 %v11375
    %v12353 = vunpack.c.l.b16 %v11376
    %v12354 = vunpack.c.h.b16 %v11376
    %v12355 = vunpack.c.l.b16 %v11377
    %v12356 = vunpack.c.h.b16 %v11377
    %v12357 = vunpack.c.l.b16 %v11378
    %v12358 = vunpack.c.h.b16 %v11378
    %v12359 = vunpack.c.l.b16 %v11379
    %v12360 = vunpack.c.h.b16 %v11379
    %v12361 = vunpack.c.l.b16 %v11380
    %v12362 = vunpack.c.h.b16 %v11380
    %v12363 = vunpack.c.l.b16 %v11381
    %v12364 = vunpack.c.h.b16 %v11381
    %v12365 = vunpack.c.l.b16 %v11382
    %v12366 = vunpack.c.h.b16 %v11382
    %v12367 = vunpack.c.l.b16 %v11383
    %v12368 = vunpack.c.h.b16 %v11383
    %v12369 = vunpack.c.l.b16 %v11384
    %v12370 = vunpack.c.h.b16 %v11384
    %v12371 = vunpack.c.l.b16 %v11385
    %v12372 = vunpack.c.h.b16 %v11385
    %v12373 = vunpack.c.l.b16 %v11386
    %v12374 = vunpack.c.h.b16 %v11386
    %v12375 = vunpack.c.l.b16 %v11387
    %v12376 = vunpack.c.h.b16 %v11387
    %v12377 = vunpack.c.l.b16 %v11388
    %v12378 = vunpack.c.h.b16 %v11388
    %v12379 = vunpack.c.l.b16 %v11389
    %v12380 = vunpack.c.h.b16 %v11389
    %v12381 = vunpack.c.l.b16 %v11390
    %v12382 = vunpack.c.h.b16 %v11390
    %v12383 = vunpack.c.l.b16 %v11391
    %v12384 = vunpack.c.h.b16 %v11391
    %v12385 = vunpack.c.l.b16 %v11392
    %v12386 = vunpack.c.h.b16 %v11392
    %v12387 = vunpack.c.l.b16 %v11393
    %v12388 = vunpack.c.h.b16 %v11393
    %v12389 = vunpack.c.l.b16 %v11394
    %v12390 = vunpack.c.h.b16 %v11394
    %v12391 = vunpack.c.l.b16 %v11395
    %v12392 = vunpack.c.h.b16 %v11395
    %v12393 = vunpack.c.l.b16 %v11396
    %v12394 = vunpack.c.h.b16 %v11396
    %v12395 = vunpack.c.l.b16 %v11397
    %v12396 = vunpack.c.h.b16 %v11397
    %v12397 = vunpack.c.l.b16 %v11398
    %v12398 = vunpack.c.h.b16 %v11398
    %v12399 = vunpack.c.l.b16 %v11399
    %v12400 = vunpack.c.h.b16 %v11399
    %v12401 = vunpack.c.l.b16 %v11400
    %v12402 = vunpack.c.h.b16 %v11400
    %v12403 = vunpack.c.l.b16 %v11401
    %v12404 = vunpack.c.h.b16 %v11401
    %v12405 = vunpack.c.l.b16 %v11402
    %v12406 = vunpack.c.h.b16 %v11402
    %v12407 = vunpack.c.l.b16 %v11403
    %v12408 = vunpack.c.h.b16 %v11403
    %v12409 = vunpack.c.l.b16 %v11404
    %v12410 = vunpack.c.h.b16 %v11404
    %v12411 = vunpack.c.l.b16 %v11405
    %v12412 = vunpack.c.h.b16 %v11405
    %v12413 = vunpack.c.l.b16 %v11406
    %v12414 = vunpack.c.h.b16 %v11406
    %v12415 = vunpack.c.l.b16 %v11407
    %v12416 = vunpack.c.h.b16 %v11407
    %v12417 = vunpack.c.l.b16 %v11408
    %v12418 = vunpack.c.h.b16 %v11408
    %v12419 = vunpack.c.l.b16 %v11409
    %v12420 = vunpack.c.h.b16 %v11409
    %v12421 = vunpack.c.l.b16 %v11410
    %v12422 = vunpack.c.h.b16 %v11410
    %v12423 = vunpack.c.l.b16 %v11411
    %v12424 = vunpack.c.h.b16 %v11411
    %v12425 = vunpack.c.l.b16 %v11412
    %v12426 = vunpack.c.h.b16 %v11412
    %v12427 = vunpack.c.l.b16 %v11413
    %v12428 = vunpack.c.h.b16 %v11413
    %v12429 = vunpack.c.l.b16 %v11414
    %v12430 = vunpack.c.h.b16 %v11414
    %v12431 = vunpack.c.l.b16 %v11415
    %v12432 = vunpack.c.h.b16 %v11415
    %v12433 = vunpack.c.l.b16 %v11416
    %v12434 = vunpack.c.h.b16 %v11416
    %v12435 = vunpack.c.l.b16 %v11417
    %v12436 = vunpack.c.h.b16 %v11417
    %v12437 = vunpack.c.l.b16 %v11418
    %v12438 = vunpack.c.h.b16 %v11418
    %v12439 = vunpack.c.l.b16 %v11419
    %v12440 = vunpack.c.h.b16 %v11419
    %v12441 = vunpack.c.l.b16 %v11420
    %v12442 = vunpack.c.h.b16 %v11420
    %v12443 = vunpack.c.l.b16 %v11421
    %v12444 = vunpack.c.h.b16 %v11421
    %v12445 = vunpack.c.l.b16 %v11422
    %v12446 = vunpack.c.h.b16 %v11422
    %v12447 = vunpack.c.l.b16 %v11423
    %v12448 = vunpack.c.h.b16 %v11423
    %v12449 = vunpack.c.l.b16 %v11424
    %v12450 = vunpack.c.h.b16 %v11424
    %v12451 = vunpack.c.l.b16 %v11425
    %v12452 = vunpack.c.h.b16 %v11425
    %v12453 = vunpack.c.l.b16 %v11426
    %v12454 = vunpack.c.h.b16 %v11426
    %v12455 = vunpack.c.l.b16 %v11427
    %v12456 = vunpack.c.h.b16 %v11427
    %v12457 = vunpack.c.l.b16 %v11428
    %v12458 = vunpack.c.h.b16 %v11428
    %v12459 = vunpack.c.l.b16 %v11429
    %v12460 = vunpack.c.h.b16 %v11429
    %v12461 = vunpack.c.l.b16 %v11430
    %v12462 = vunpack.c.h.b16 %v11430
    %v12463 = vunpack.c.l.b16 %v11431
    %v12464 = vunpack.c.h.b16 %v11431
    %v12465 = vunpack.c.l.b16 %v11432
    %v12466 = vunpack.c.h.b16 %v11432
    %v12467 = vunpack.c.l.b16 %v11433
    %v12468 = vunpack.c.h.b16 %v11433
    %v12469 = vunpack.c.l.b16 %v11434
    %v12470 = vunpack.c.h.b16 %v11434
    %v12471 = vunpack.c.l.b16 %v11435
    %v12472 = vunpack.c.h.b16 %v11435
    %v12473 = vunpack.c.l.b16 %v11436
    %v12474 = vunpack.c.h.b16 %v11436
    %v12475 = vunpack.c.l.b16 %v11437
    %v12476 = vunpack.c.h.b16 %v11437
    %v12477 = vunpack.c.l.b16 %v11438
    %v12478 = vunpack.c.h.b16 %v11438
    %v12479 = vunpack.c.l.b16 %v11439
    %v12480 = vunpack.c.h.b16 %v11439
    %v12481 = vunpack.c.l.b16 %v11440
    %v12482 = vunpack.c.h.b16 %v11440
    %v12483 = vunpack.c.l.b16 %v11441
    %v12484 = vunpack.c.h.b16 %v11441
    %v12485 = vunpack.c.l.b16 %v11442
    %v12486 = vunpack.c.h.b16 %v11442
    %v12487 = vunpack.c.l.b16 %v11443
    %v12488 = vunpack.c.h.b16 %v11443
    %v12489 = vunpack.c.l.b16 %v11444
    %v12490 = vunpack.c.h.b16 %v11444
    %v12491 = vunpack.c.l.b16 %v11445
    %v12492 = vunpack.c.h.b16 %v11445
    %v12493 = vunpack.c.l.b16 %v11446
    %v12494 = vunpack.c.h.b16 %v11446
    %v12495 = vunpack.c.l.b16 %v11447
    %v12496 = vunpack.c.h.b16 %v11447
    %v12497 = vunpack.c.l.b16 %v11448
    %v12498 = vunpack.c.h.b16 %v11448
    %v12499 = vunpack.c.l.b16 %v11449
    %v12500 = vunpack.c.h.b16 %v11449
    %v12501 = vunpack.c.l.b16 %v11450
    %v12502 = vunpack.c.h.b16 %v11450
    %v12503 = vunpack.c.l.b16 %v11451
    %v12504 = vunpack.c.h.b16 %v11451
    %v12505 = vunpack.c.l.b16 %v11452
    %v12506 = vunpack.c.h.b16 %v11452
    %v12507 = vunpack.c.l.b16 %v11453
    %v12508 = vunpack.c.h.b16 %v11453
    %v12509 = vunpack.c.l.b16 %v11454
    %v12510 = vunpack.c.h.b16 %v11454
    %v12511 = vunpack.c.l.b16 %v11455
    %v12512 = vunpack.c.h.b16 %v11455
    %v12513 = vunpack.c.l.b16 %v11456
    %v12514 = vunpack.c.h.b16 %v11456
    %v12515 = vunpack.c.l.b16 %v11457
    %v12516 = vunpack.c.h.b16 %v11457
    %v12517 = vunpack.c.l.b16 %v11458
    %v12518 = vunpack.c.h.b16 %v11458
    %v12519 = vunpack.c.l.b16 %v11459
    %v12520 = vunpack.c.h.b16 %v11459
    %v12521 = vunpack.c.l.b16 %v11460
    %v12522 = vunpack.c.h.b16 %v11460
    %v12523 = vunpack.c.l.b16 %v11461
    %v12524 = vunpack.c.h.b16 %v11461
    %v12525 = vunpack.c.l.b16 %v11462
    %v12526 = vunpack.c.h.b16 %v11462
    %v12527 = vunpack.c.l.b16 %v11463
    %v12528 = vunpack.c.h.b16 %v11463
    %v12529 = vunpack.c.l.b16 %v11464
    %v12530 = vunpack.c.h.b16 %v11464
    %v12531 = vunpack.c.l.b16 %v11465
    %v12532 = vunpack.c.h.b16 %v11465
    %v12533 = vunpack.c.l.b16 %v11466
    %v12534 = vunpack.c.h.b16 %v11466
    %v12535 = vunpack.c.l.b16 %v11467
    %v12536 = vunpack.c.h.b16 %v11467
    %v12537 = vunpack.c.l.b16 %v11468
    %v12538 = vunpack.c.h.b16 %v11468
    %v12539 = vunpack.c.l.b16 %v11469
    %v12540 = vunpack.c.h.b16 %v11469
    %v12541 = vunpack.c.l.b16 %v11470
    %v12542 = vunpack.c.h.b16 %v11470
    %v12543 = vunpack.c.l.b16 %v11471
    %v12544 = vunpack.c.h.b16 %v11471
    %v12545 = vunpack.c.l.b16 %v11472
    %v12546 = vunpack.c.h.b16 %v11472
    %v12547 = vunpack.c.l.b16 %v11473
    %v12548 = vunpack.c.h.b16 %v11473
    %v12549 = vunpack.c.l.b16 %v11474
    %v12550 = vunpack.c.h.b16 %v11474
    %v12551 = vunpack.c.l.b16 %v11475
    %v12552 = vunpack.c.h.b16 %v11475
    %v12553 = vunpack.c.l.b16 %v11476
    %v12554 = vunpack.c.h.b16 %v11476
    %v12555 = vunpack.c.l.b16 %v11477
    %v12556 = vunpack.c.h.b16 %v11477
    %v12557 = vunpack.c.l.b16 %v11478
    %v12558 = vunpack.c.h.b16 %v11478
    %v12559 = vunpack.c.l.b16 %v11479
    %v12560 = vunpack.c.h.b16 %v11479
    %v12561 = vunpack.c.l.b16 %v11480
    %v12562 = vunpack.c.h.b16 %v11480
    %v12563 = vunpack.c.l.b16 %v11481
    %v12564 = vunpack.c.h.b16 %v11481
    %v12565 = vunpack.c.l.b16 %v11482
    %v12566 = vunpack.c.h.b16 %v11482
    %v12567 = vunpack.c.l.b16 %v11483
    %v12568 = vunpack.c.h.b16 %v11483
    %v12569 = vunpack.c.l.b16 %v11484
    %v12570 = vunpack.c.h.b16 %v11484
    %v12571 = vunpack.c.l.b16 %v11485
    %v12572 = vunpack.c.h.b16 %v11485
    %v12573 = vunpack.c.l.b16 %v11486
    %v12574 = vunpack.c.h.b16 %v11486
    %v12575 = vunpack.c.l.b16 %v11487
    %v12576 = vunpack.c.h.b16 %v11487
    %v12577 = vunpack.c.l.b16 %v11488
    %v12578 = vunpack.c.h.b16 %v11488
    %v12579 = vunpack.c.l.b16 %v11489
    %v12580 = vunpack.c.h.b16 %v11489
    %v12581 = vunpack.c.l.b16 %v11490
    %v12582 = vunpack.c.h.b16 %v11490
    %v12583 = vunpack.c.l.b16 %v11491
    %v12584 = vunpack.c.h.b16 %v11491
    %v12585 = vunpack.c.l.b16 %v11492
    %v12586 = vunpack.c.h.b16 %v11492
    %v12587 = vunpack.c.l.b16 %v11493
    %v12588 = vunpack.c.h.b16 %v11493
    %v12589 = vunpack.c.l.b16 %v11494
    %v12590 = vunpack.c.h.b16 %v11494
    %v12591 = vunpack.c.l.b16 %v11495
    %v12592 = vunpack.c.h.b16 %v11495
    %v12593 = vunpack.c.l.b16 %v11496
    %v12594 = vunpack.c.h.b16 %v11496
    %v12595 = vunpack.c.l.b16 %v11497
    %v12596 = vunpack.c.h.b16 %v11497
    %v12597 = vunpack.c.l.b16 %v11498
    %v12598 = vunpack.c.h.b16 %v11498
    %v12599 = vunpack.c.l.b16 %v11499
    %v12600 = vunpack.c.h.b16 %v11499
    %v12601 = vunpack.c.l.b16 %v11500
    %v12602 = vunpack.c.h.b16 %v11500
    %v12603 = vunpack.c.l.b16 %v11501
    %v12604 = vunpack.c.h.b16 %v11501
    %v12605 = vunpack.c.l.b16 %v11502
    %v12606 = vunpack.c.h.b16 %v11502
    %v12607 = vunpack.c.l.b16 %v11503
    %v12608 = vunpack.c.h.b16 %v11503
    %v12609 = vunpack.c.l.b16 %v11504
    %v12610 = vunpack.c.h.b16 %v11504
    %v12611 = vunpack.c.l.b16 %v11505
    %v12612 = vunpack.c.h.b16 %v11505
    %v12613 = vunpack.c.l.b16 %v11506
    %v12614 = vunpack.c.h.b16 %v11506
    %v12615 = vunpack.c.l.b16 %v11507
    %v12616 = vunpack.c.h.b16 %v11507
    %v12617 = vunpack.c.l.b16 %v11508
    %v12618 = vunpack.c.h.b16 %v11508
    %v12619 = vunpack.c.l.b16 %v11509
    %v12620 = vunpack.c.h.b16 %v11509
    %v12621 = vunpack.c.l.b16 %v11510
    %v12622 = vunpack.c.h.b16 %v11510
    %v12623 = vunpack.c.l.b16 %v11511
    %v12624 = vunpack.c.h.b16 %v11511
    %v12625 = vunpack.c.l.b16 %v11512
    %v12626 = vunpack.c.h.b16 %v11512
    %v12627 = vunpack.c.l.b16 %v11513
    %v12628 = vunpack.c.h.b16 %v11513
    %v12629 = vunpack.c.l.b16 %v11514
    %v12630 = vunpack.c.h.b16 %v11514
    %v12631 = vunpack.c.l.b16 %v11515
    %v12632 = vunpack.c.h.b16 %v11515
    %v12633 = vunpack.c.l.b16 %v11516
    %v12634 = vunpack.c.h.b16 %v11516
    %v12635 = vunpack.c.l.b16 %v11517
    %v12636 = vunpack.c.h.b16 %v11517
    %v12637 = vunpack.c.l.b16 %v11518
    %v12638 = vunpack.c.h.b16 %v11518
    %v12639 = vunpack.c.l.b16 %v11519
    %v12640 = vunpack.c.h.b16 %v11519
    %v12641 = vunpack.c.l.b16 %v11520
    %v12642 = vunpack.c.h.b16 %v11520
    %v12643 = vunpack.c.l.b16 %v11521
    %v12644 = vunpack.c.h.b16 %v11521
    %v12645 = vunpack.c.l.b16 %v11522
    %v12646 = vunpack.c.h.b16 %v11522
    %v12647 = vunpack.c.l.b16 %v11523
    %v12648 = vunpack.c.h.b16 %v11523
    %v12649 = vunpack.c.l.b16 %v11524
    %v12650 = vunpack.c.h.b16 %v11524
    %v12651 = vunpack.c.l.b16 %v11525
    %v12652 = vunpack.c.h.b16 %v11525
    %v12653 = vunpack.c.l.b16 %v11526
    %v12654 = vunpack.c.h.b16 %v11526
    %v12655 = vunpack.c.l.b16 %v11527
    %v12656 = vunpack.c.h.b16 %v11527
    %v12657 = vunpack.c.l.b16 %v11528
    %v12658 = vunpack.c.h.b16 %v11528
    %v12659 = vunpack.c.l.b16 %v11529
    %v12660 = vunpack.c.h.b16 %v11529
    %v12661 = vunpack.c.l.b16 %v11530
    %v12662 = vunpack.c.h.b16 %v11530
    %v12663 = vunpack.c.l.b16 %v11531
    %v12664 = vunpack.c.h.b16 %v11531
    %v12665 = vunpack.c.l.b16 %v11532
    %v12666 = vunpack.c.h.b16 %v11532
    %v12667 = vunpack.c.l.b16 %v11533
    %v12668 = vunpack.c.h.b16 %v11533
    %v12669 = vunpack.c.l.b16 %v11534
    %v12670 = vunpack.c.h.b16 %v11534
    %v12671 = vunpack.c.l.b16 %v11535
    %v12672 = vunpack.c.h.b16 %v11535
    %v12673 = vunpack.c.l.b16 %v11536
    %v12674 = vunpack.c.h.b16 %v11536
    %v12675 = vunpack.c.l.b16 %v11537
    %v12676 = vunpack.c.h.b16 %v11537
    %v12677 = vunpack.c.l.b16 %v11538
    %v12678 = vunpack.c.h.b16 %v11538
    %v12679 = vunpack.c.l.b16 %v11539
    %v12680 = vunpack.c.h.b16 %v11539
    %v12681 = vunpack.c.l.b16 %v11540
    %v12682 = vunpack.c.h.b16 %v11540
    %v12683 = vunpack.c.l.b16 %v11541
    %v12684 = vunpack.c.h.b16 %v11541
    %v12685 = vunpack.c.l.b16 %v11542
    %v12686 = vunpack.c.h.b16 %v11542
    %v12687 = vunpack.c.l.b16 %v11543
    %v12688 = vunpack.c.h.b16 %v11543
    %v12689 = vunpack.c.l.b16 %v11544
    %v12690 = vunpack.c.h.b16 %v11544
    %v12691 = vunpack.c.l.b16 %v11545
    %v12692 = vunpack.c.h.b16 %v11545
    %v12693 = vunpack.c.l.b16 %v11546
    %v12694 = vunpack.c.h.b16 %v11546
    %v12695 = vunpack.c.l.b16 %v11547
    %v12696 = vunpack.c.h.b16 %v11547
    %v12697 = vunpack.c.l.b16 %v11548
    %v12698 = vunpack.c.h.b16 %v11548
    %v12699 = vunpack.c.l.b16 %v11549
    %v12700 = vunpack.c.h.b16 %v11549
    %v12701 = vunpack.c.l.b16 %v11550
    %v12702 = vunpack.c.h.b16 %v11550
    %v12703 = vunpack.c.l.b16 %v11551
    %v12704 = vunpack.c.h.b16 %v11551
    %v12705 = vunpack.c.l.b16 %v11552
    %v12706 = vunpack.c.h.b16 %v11552
    %v12707 = vunpack.c.l.b16 %v11553
    %v12708 = vunpack.c.h.b16 %v11553
    %v12709 = vunpack.c.l.b16 %v11554
    %v12710 = vunpack.c.h.b16 %v11554
    %v12711 = vunpack.c.l.b16 %v11555
    %v12712 = vunpack.c.h.b16 %v11555
    %v12713 = vunpack.c.l.b16 %v11556
    %v12714 = vunpack.c.h.b16 %v11556
    %v12715 = vunpack.c.l.b16 %v11557
    %v12716 = vunpack.c.h.b16 %v11557
    %v12717 = vunpack.c.l.b16 %v11558
    %v12718 = vunpack.c.h.b16 %v11558
    %v12719 = vunpack.c.l.b16 %v11559
    %v12720 = vunpack.c.h.b16 %v11559
    %v12721 = vunpack.c.l.b16 %v11560
    %v12722 = vunpack.c.h.b16 %v11560
    %v12723 = vunpack.c.l.b16 %v11561
    %v12724 = vunpack.c.h.b16 %v11561
    %v12725 = vunpack.c.l.b16 %v11562
    %v12726 = vunpack.c.h.b16 %v11562
    %v12727 = vunpack.c.l.b16 %v11563
    %v12728 = vunpack.c.h.b16 %v11563
    %v12729 = vunpack.c.l.b16 %v11564
    %v12730 = vunpack.c.h.b16 %v11564
    %v12731 = vunpack.c.l.b16 %v11565
    %v12732 = vunpack.c.h.b16 %v11565
    %v12733 = vunpack.c.l.b16 %v11566
    %v12734 = vunpack.c.h.b16 %v11566
    %v12735 = vunpack.c.l.b16 %v11567
    %v12736 = vunpack.c.h.b16 %v11567
    %v12737 = vunpack.c.l.b16 %v11568
    %v12738 = vunpack.c.h.b16 %v11568
    %v12739 = vunpack.c.l.b16 %v11569
    %v12740 = vunpack.c.h.b16 %v11569
    %v12741 = vunpack.c.l.b16 %v11570
    %v12742 = vunpack.c.h.b16 %v11570
    %v12743 = vunpack.c.l.b16 %v11571
    %v12744 = vunpack.c.h.b16 %v11571
    %v12745 = vunpack.c.l.b16 %v11572
    %v12746 = vunpack.c.h.b16 %v11572
    %v12747 = vunpack.c.l.b16 %v11573
    %v12748 = vunpack.c.h.b16 %v11573
    %v12749 = vunpack.c.l.b16 %v11574
    %v12750 = vunpack.c.h.b16 %v11574
    %v12751 = vunpack.c.l.b16 %v11575
    %v12752 = vunpack.c.h.b16 %v11575
    %v12753 = vunpack.c.l.b16 %v11576
    %v12754 = vunpack.c.h.b16 %v11576
    %v12755 = vunpack.c.l.b16 %v11577
    %v12756 = vunpack.c.h.b16 %v11577
    %v12757 = vunpack.c.l.b16 %v11578
    %v12758 = vunpack.c.h.b16 %v11578
    %v12759 = vunpack.c.l.b16 %v11579
    %v12760 = vunpack.c.h.b16 %v11579
    %v12761 = vunpack.c.l.b16 %v11580
    %v12762 = vunpack.c.h.b16 %v11580
    %v12763 = vunpack.c.l.b16 %v11581
    %v12764 = vunpack.c.h.b16 %v11581
    %v12765 = vunpack.c.l.b16 %v11582
    %v12766 = vunpack.c.h.b16 %v11582
    %v12767 = vunpack.c.l.b16 %v11583
    %v12768 = vunpack.c.h.b16 %v11583
    %v12769 = vunpack.c.l.b16 %v11584
    %v12770 = vunpack.c.h.b16 %v11584
    %v12771 = vunpack.c.l.b16 %v11585
    %v12772 = vunpack.c.h.b16 %v11585
    %v12773 = vunpack.c.l.b16 %v11586
    %v12774 = vunpack.c.h.b16 %v11586
    %v12775 = vunpack.c.l.b16 %v11587
    %v12776 = vunpack.c.h.b16 %v11587
    %v12777 = vunpack.c.l.b16 %v11588
    %v12778 = vunpack.c.h.b16 %v11588
    %v12779 = vunpack.c.l.b16 %v11589
    %v12780 = vunpack.c.h.b16 %v11589
    %v12781 = vunpack.c.l.b16 %v11590
    %v12782 = vunpack.c.h.b16 %v11590
    %v12783 = vunpack.c.l.b16 %v11591
    %v12784 = vunpack.c.h.b16 %v11591
    %v12785 = vunpack.c.l.b16 %v11592
    %v12786 = vunpack.c.h.b16 %v11592
    %v12787 = vpack.c.b16 %v12027, %v12019
    %v12788 = vpack.c.b16 %v12028, %v12020
    %v12789 = vpack.c.b16 %v12029, %v12021
    %v12790 = vpack.c.b16 %v12030, %v12022
    %v12791 = vpack.c.b16 %v12031, %v12023
    %v12792 = vpack.c.b16 %v12032, %v12024
    %v12793 = vpack.c.b16 %v12033, %v12025
    %v12794 = vpack.c.b16 %v12034, %v12026
    %v12795 = vpack.c.b16 %v12043, %v12035
    %v12796 = vpack.c.b16 %v12044, %v12036
    %v12797 = vpack.c.b16 %v12045, %v12037
    %v12798 = vpack.c.b16 %v12046, %v12038
    %v12799 = vpack.c.b16 %v12047, %v12039
    %v12800 = vpack.c.b16 %v12048, %v12040
    %v12801 = vpack.c.b16 %v12049, %v12041
    %v12802 = vpack.c.b16 %v12050, %v12042
    %v12803 = vpack.c.b16 %v12059, %v12051
    %v12804 = vpack.c.b16 %v12060, %v12052
    %v12805 = vpack.c.b16 %v12061, %v12053
    %v12806 = vpack.c.b16 %v12062, %v12054
    %v12807 = vpack.c.b16 %v12063, %v12055
    %v12808 = vpack.c.b16 %v12064, %v12056
    %v12809 = vpack.c.b16 %v12065, %v12057
    %v12810 = vpack.c.b16 %v12066, %v12058
    %v12811 = vpack.c.b16 %v12075, %v12067
    %v12812 = vpack.c.b16 %v12076, %v12068
    %v12813 = vpack.c.b16 %v12077, %v12069
    %v12814 = vpack.c.b16 %v12078, %v12070
    %v12815 = vpack.c.b16 %v12079, %v12071
    %v12816 = vpack.c.b16 %v12080, %v12072
    %v12817 = vpack.c.b16 %v12081, %v12073
    %v12818 = vpack.c.b16 %v12082, %v12074
    %v12819 = vpack.c.b16 %v12091, %v12083
    %v12820 = vpack.c.b16 %v12092, %v12084
    %v12821 = vpack.c.b16 %v12093, %v12085
    %v12822 = vpack.c.b16 %v12094, %v12086
    %v12823 = vpack.c.b16 %v12095, %v12087
    %v12824 = vpack.c.b16 %v12096, %v12088
    %v12825 = vpack.c.b16 %v12097, %v12089
    %v12826 = vpack.c.b16 %v12098, %v12090
    %v12827 = vpack.c.b16 %v12107, %v12099
    %v12828 = vpack.c.b16 %v12108, %v12100
    %v12829 = vpack.c.b16 %v12109, %v12101
    %v12830 = vpack.c.b16 %v12110, %v12102
    %v12831 = vpack.c.b16 %v12111, %v12103
    %v12832 = vpack.c.b16 %v12112, %v12104
    %v12833 = vpack.c.b16 %v12113, %v12105
    %v12834 = vpack.c.b16 %v12114, %v12106
    %v12835 = vpack.c.b16 %v12123, %v12115
    %v12836 = vpack.c.b16 %v12124, %v12116
    %v12837 = vpack.c.b16 %v12125, %v12117
    %v12838 = vpack.c.b16 %v12126, %v12118
    %v12839 = vpack.c.b16 %v12127, %v12119
    %v12840 = vpack.c.b16 %v12128, %v12120
    %v12841 = vpack.c.b16 %v12129, %v12121
    %v12842 = vpack.c.b16 %v12130, %v12122
    %v12843 = vpack.c.b16 %v12139, %v12131
    %v12844 = vpack.c.b16 %v12140, %v12132
    %v12845 = vpack.c.b16 %v12141, %v12133
    %v12846 = vpack.c.b16 %v12142, %v12134
    %v12847 = vpack.c.b16 %v12143, %v12135
    %v12848 = vpack.c.b16 %v12144, %v12136
    %v12849 = vpack.c.b16 %v12145, %v12137
    %v12850 = vpack.c.b16 %v12146, %v12138
    %v12851 = vpack.c.b16 %v12155, %v12147
    %v12852 = vpack.c.b16 %v12156, %v12148
    %v12853 = vpack.c.b16 %v12157, %v12149
    %v12854 = vpack.c.b16 %v12158, %v12150
    %v12855 = vpack.c.b16 %v12159, %v12151
    %v12856 = vpack.c.b16 %v12160, %v12152
    %v12857 = vpack.c.b16 %v12161, %v12153
    %v12858 = vpack.c.b16 %v12162, %v12154
    %v12859 = vpack.c.b16 %v12171, %v12163
    %v12860 = vpack.c.b16 %v12172, %v12164
    %v12861 = vpack.c.b16 %v12173, %v12165
    %v12862 = vpack.c.b16 %v12174, %v12166
    %v12863 = vpack.c.b16 %v12175, %v12167
    %v12864 = vpack.c.b16 %v12176, %v12168
    %v12865 = vpack.c.b16 %v12177, %v12169
    %v12866 = vpack.c.b16 %v12178, %v12170
    %v12867 = vpack.c.b16 %v12187, %v12179
    %v12868 = vpack.c.b16 %v12188, %v12180
    %v12869 = vpack.c.b16 %v12189, %v12181
    %v12870 = vpack.c.b16 %v12190, %v12182
    %v12871 = vpack.c.b16 %v12191, %v12183
    %v12872 = vpack.c.b16 %v12192, %v12184
    %v12873 = vpack.c.b16 %v12193, %v12185
    %v12874 = vpack.c.b16 %v12194, %v12186
    %v12875 = vpack.c.b16 %v12203, %v12195
    %v12876 = vpack.c.b16 %v12204, %v12196
    %v12877 = vpack.c.b16 %v12205, %v12197
    %v12878 = vpack.c.b16 %v12206, %v12198
    %v12879 = vpack.c.b16 %v12207, %v12199
    %v12880 = vpack.c.b16 %v12208, %v12200
    %v12881 = vpack.c.b16 %v12209, %v12201
    %v12882 = vpack.c.b16 %v12210, %v12202
    %v12883 = vpack.c.b16 %v12219, %v12211
    %v12884 = vpack.c.b16 %v12220, %v12212
    %v12885 = vpack.c.b16 %v12221, %v12213
    %v12886 = vpack.c.b16 %v12222, %v12214
    %v12887 = vpack.c.b16 %v12223, %v12215
    %v12888 = vpack.c.b16 %v12224, %v12216
    %v12889 = vpack.c.b16 %v12225, %v12217
    %v12890 = vpack.c.b16 %v12226, %v12218
    %v12891 = vpack.c.b16 %v12235, %v12227
    %v12892 = vpack.c.b16 %v12236, %v12228
    %v12893 = vpack.c.b16 %v12237, %v12229
    %v12894 = vpack.c.b16 %v12238, %v12230
    %v12895 = vpack.c.b16 %v12239, %v12231
    %v12896 = vpack.c.b16 %v12240, %v12232
    %v12897 = vpack.c.b16 %v12241, %v12233
    %v12898 = vpack.c.b16 %v12242, %v12234
    %v12899 = vpack.c.b16 %v12251, %v12243
    %v12900 = vpack.c.b16 %v12252, %v12244
    %v12901 = vpack.c.b16 %v12253, %v12245
    %v12902 = vpack.c.b16 %v12254, %v12246
    %v12903 = vpack.c.b16 %v12255, %v12247
    %v12904 = vpack.c.b16 %v12256, %v12248
    %v12905 = vpack.c.b16 %v12257, %v12249
    %v12906 = vpack.c.b16 %v12258, %v12250
    %v12907 = vpack.c.b16 %v12267, %v12259
    %v12908 = vpack.c.b16 %v12268, %v12260
    %v12909 = vpack.c.b16 %v12269, %v12261
    %v12910 = vpack.c.b16 %v12270, %v12262
    %v12911 = vpack.c.b16 %v12271, %v12263
    %v12912 = vpack.c.b16 %v12272, %v12264
    %v12913 = vpack.c.b16 %v12273, %v12265
    %v12914 = vpack.c.b16 %v12274, %v12266
    %v12915 = vpack.c.b16 %v12283, %v12275
    %v12916 = vpack.c.b16 %v12284, %v12276
    %v12917 = vpack.c.b16 %v12285, %v12277
    %v12918 = vpack.c.b16 %v12286, %v12278
    %v12919 = vpack.c.b16 %v12287, %v12279
    %v12920 = vpack.c.b16 %v12288, %v12280
    %v12921 = vpack.c.b16 %v12289, %v12281
    %v12922 = vpack.c.b16 %v12290, %v12282
    %v12923 = vpack.c.b16 %v12299, %v12291
    %v12924 = vpack.c.b16 %v12300, %v12292
    %v12925 = vpack.c.b16 %v12301, %v12293
    %v12926 = vpack.c.b16 %v12302, %v12294
    %v12927 = vpack.c.b16 %v12303, %v12295
    %v12928 = vpack.c.b16 %v12304, %v12296
    %v12929 = vpack.c.b16 %v12305, %v12297
    %v12930 = vpack.c.b16 %v12306, %v12298
    %v12931 = vpack.c.b16 %v12315, %v12307
    %v12932 = vpack.c.b16 %v12316, %v12308
    %v12933 = vpack.c.b16 %v12317, %v12309
    %v12934 = vpack.c.b16 %v12318, %v12310
    %v12935 = vpack.c.b16 %v12319, %v12311
    %v12936 = vpack.c.b16 %v12320, %v12312
    %v12937 = vpack.c.b16 %v12321, %v12313
    %v12938 = vpack.c.b16 %v12322, %v12314
    %v12939 = vpack.c.b16 %v12331, %v12323
    %v12940 = vpack.c.b16 %v12332, %v12324
    %v12941 = vpack.c.b16 %v12333, %v12325
    %v12942 = vpack.c.b16 %v12334, %v12326
    %v12943 = vpack.c.b16 %v12335, %v12327
    %v12944 = vpack.c.b16 %v12336, %v12328
    %v12945 = vpack.c.b16 %v12337, %v12329
    %v12946 = vpack.c.b16 %v12338, %v12330
    %v12947 = vpack.c.b16 %v12347, %v12339
    %v12948 = vpack.c.b16 %v12348, %v12340
    %v12949 = vpack.c.b16 %v12349, %v12341
    %v12950 = vpack.c.b16 %v12350, %v12342
    %v12951 = vpack.c.b16 %v12351, %v12343
    %v12952 = vpack.c.b16 %v12352, %v12344
    %v12953 = vpack.c.b16 %v12353, %v12345
    %v12954 = vpack.c.b16 %v12354, %v12346
    %v12955 = vpack.c.b16 %v12363, %v12355
    %v12956 = vpack.c.b16 %v12364, %v12356
    %v12957 = vpack.c.b16 %v12365, %v12357
    %v12958 = vpack.c.b16 %v12366, %v12358
    %v12959 = vpack.c.b16 %v12367, %v12359
    %v12960 = vpack.c.b16 %v12368, %v12360
    %v12961 = vpack.c.b16 %v12369, %v12361
    %v12962 = vpack.c.b16 %v12370, %v12362
    %v12963 = vpack.c.b16 %v12379, %v12371
    %v12964 = vpack.c.b16 %v12380, %v12372
    %v12965 = vpack.c.b16 %v12381, %v12373
    %v12966 = vpack.c.b16 %v12382, %v12374
    %v12967 = vpack.c.b16 %v12383, %v12375
    %v12968 = vpack.c.b16 %v12384, %v12376
    %v12969 = vpack.c.b16 %v12385, %v12377
    %v12970 = vpack.c.b16 %v12386, %v12378
    %v12971 = vpack.c.b16 %v12395, %v12387
    %v12972 = vpack.c.b16 %v12396, %v12388
    %v12973 = vpack.c.b16 %v12397, %v12389
    %v12974 = vpack.c.b16 %v12398, %v12390
    %v12975 = vpack.c.b16 %v12399, %v12391
    %v12976 = vpack.c.b16 %v12400, %v12392
    %v12977 = vpack.c.b16 %v12401, %v12393
    %v12978 = vpack.c.b16 %v12402, %v12394
    %v12979 = vpack.c.b16 %v12411, %v12403
    %v12980 = vpack.c.b16 %v12412, %v12404
    %v12981 = vpack.c.b16 %v12413, %v12405
    %v12982 = vpack.c.b16 %v12414, %v12406
    %v12983 = vpack.c.b16 %v12415, %v12407
    %v12984 = vpack.c.b16 %v12416, %v12408
    %v12985 = vpack.c.b16 %v12417, %v12409
    %v12986 = vpack.c.b16 %v12418, %v12410
    %v12987 = vpack.c.b16 %v12427, %v12419
    %v12988 = vpack.c.b16 %v12428, %v12420
    %v12989 = vpack.c.b16 %v12429, %v12421
    %v12990 = vpack.c.b16 %v12430, %v12422
    %v12991 = vpack.c.b16 %v12431, %v12423
    %v12992 = vpack.c.b16 %v12432, %v12424
    %v12993 = vpack.c.b16 %v12433, %v12425
    %v12994 = vpack.c.b16 %v12434, %v12426
    %v12995 = vpack.c.b16 %v12443, %v12435
    %v12996 = vpack.c.b16 %v12444, %v12436
    %v12997 = vpack.c.b16 %v12445, %v12437
    %v12998 = vpack.c.b16 %v12446, %v12438
    %v12999 = vpack.c.b16 %v12447, %v12439
    %v13000 = vpack.c.b16 %v12448, %v12440
    %v13001 = vpack.c.b16 %v12449, %v12441
    %v13002 = vpack.c.b16 %v12450, %v12442
    %v13003 = vpack.c.b16 %v12459, %v12451
    %v13004 = vpack.c.b16 %v12460, %v12452
    %v13005 = vpack.c.b16 %v12461, %v12453
    %v13006 = vpack.c.b16 %v12462, %v12454
    %v13007 = vpack.c.b16 %v12463, %v12455
    %v13008 = vpack.c.b16 %v12464, %v12456
    %v13009 = vpack.c.b16 %v12465, %v12457
    %v13010 = vpack.c.b16 %v12466, %v12458
    %v13011 = vpack.c.b16 %v12475, %v12467
    %v13012 = vpack.c.b16 %v12476, %v12468
    %v13013 = vpack.c.b16 %v12477, %v12469
    %v13014 = vpack.c.b16 %v12478, %v12470
    %v13015 = vpack.c.b16 %v12479, %v12471
    %v13016 = vpack.c.b16 %v12480, %v12472
    %v13017 = vpack.c.b16 %v12481, %v12473
    %v13018 = vpack.c.b16 %v12482, %v12474
    %v13019 = vpack.c.b16 %v12491, %v12483
    %v13020 = vpack.c.b16 %v12492, %v12484
    %v13021 = vpack.c.b16 %v12493, %v12485
    %v13022 = vpack.c.b16 %v12494, %v12486
    %v13023 = vpack.c.b16 %v12495, %v12487
    %v13024 = vpack.c.b16 %v12496, %v12488
    %v13025 = vpack.c.b16 %v12497, %v12489
    %v13026 = vpack.c.b16 %v12498, %v12490
    %v13027 = vpack.c.b16 %v12507, %v12499
    %v13028 = vpack.c.b16 %v12508, %v12500
    %v13029 = vpack.c.b16 %v12509, %v12501
    %v13030 = vpack.c.b16 %v12510, %v12502
    %v13031 = vpack.c.b16 %v12511, %v12503
    %v13032 = vpack.c.b16 %v12512, %v12504
    %v13033 = vpack.c.b16 %v12513, %v12505
    %v13034 = vpack.c.b16 %v12514, %v12506
    %v13035 = vpack.c.b16 %v12523, %v12515
    %v13036 = vpack.c.b16 %v12524, %v12516
    %v13037 = vpack.c.b16 %v12525, %v12517
    %v13038 = vpack.c.b16 %v12526, %v12518
    %v13039 = vpack.c.b16 %v12527, %v12519
    %v13040 = vpack.c.b16 %v12528, %v12520
    %v13041 = vpack.c.b16 %v12529, %v12521
    %v13042 = vpack.c.b16 %v12530, %v12522
    %v13043 = vpack.c.b16 %v12539, %v12531
    %v13044 = vpack.c.b16 %v12540, %v12532
    %v13045 = vpack.c.b16 %v12541, %v12533
    %v13046 = vpack.c.b16 %v12542, %v12534
    %v13047 = vpack.c.b16 %v12543, %v12535
    %v13048 = vpack.c.b16 %v12544, %v12536
    %v13049 = vpack.c.b16 %v12545, %v12537
    %v13050 = vpack.c.b16 %v12546, %v12538
    %v13051 = vpack.c.b16 %v12555, %v12547
    %v13052 = vpack.c.b16 %v12556, %v12548
    %v13053 = vpack.c.b16 %v12557, %v12549
    %v13054 = vpack.c.b16 %v12558, %v12550
    %v13055 = vpack.c.b16 %v12559, %v12551
    %v13056 = vpack.c.b16 %v12560, %v12552
    %v13057 = vpack.c.b16 %v12561, %v12553
    %v13058 = vpack.c.b16 %v12562, %v12554
    %v13059 = vpack.c.b16 %v12571, %v12563
    %v13060 = vpack.c.b16 %v12572, %v12564
    %v13061 = vpack.c.b16 %v12573, %v12565
    %v13062 = vpack.c.b16 %v12574, %v12566
    %v13063 = vpack.c.b16 %v12575, %v12567
    %v13064 = vpack.c.b16 %v12576, %v12568
    %v13065 = vpack.c.b16 %v12577, %v12569
    %v13066 = vpack.c.b16 %v12578, %v12570
    %v13067 = vpack.c.b16 %v12587, %v12579
    %v13068 = vpack.c.b16 %v12588, %v12580
    %v13069 = vpack.c.b16 %v12589, %v12581
    %v13070 = vpack.c.b16 %v12590, %v12582
    %v13071 = vpack.c.b16 %v12591, %v12583
    %v13072 = vpack.c.b16 %v12592, %v12584
    %v13073 = vpack.c.b16 %v12593, %v12585
    %v13074 = vpack.c.b16 %v12594, %v12586
    %v13075 = vpack.c.b16 %v12603, %v12595
    %v13076 = vpack.c.b16 %v12604, %v12596
    %v13077 = vpack.c.b16 %v12605, %v12597
    %v13078 = vpack.c.b16 %v12606, %v12598
    %v13079 = vpack.c.b16 %v12607, %v12599
    %v13080 = vpack.c.b16 %v12608, %v12600
    %v13081 = vpack.c.b16 %v12609, %v12601
    %v13082 = vpack.c.b16 %v12610, %v12602
    %v13083 = vpack.c.b16 %v12619, %v12611
    %v13084 = vpack.c.b16 %v12620, %v12612
    %v13085 = vpack.c.b16 %v12621, %v12613
    %v13086 = vpack.c.b16 %v12622, %v12614
    %v13087 = vpack.c.b16 %v12623, %v12615
    %v13088 = vpack.c.b16 %v12624, %v12616
    %v13089 = vpack.c.b16 %v12625, %v12617
    %v13090 = vpack.c.b16 %v12626, %v12618
    %v13091 = vpack.c.b16 %v12635, %v12627
    %v13092 = vpack.c.b16 %v12636, %v12628
    %v13093 = vpack.c.b16 %v12637, %v12629
    %v13094 = vpack.c.b16 %v12638, %v12630
    %v13095 = vpack.c.b16 %v12639, %v12631
    %v13096 = vpack.c.b16 %v12640, %v12632
    %v13097 = vpack.c.b16 %v12641, %v12633
    %v13098 = vpack.c.b16 %v12642, %v12634
    %v13099 = vpack.c.b16 %v12651, %v12643
    %v13100 = vpack.c.b16 %v12652, %v12644
    %v13101 = vpack.c.b16 %v12653, %v12645
    %v13102 = vpack.c.b16 %v12654, %v12646
    %v13103 = vpack.c.b16 %v12655, %v12647
    %v13104 = vpack.c.b16 %v12656, %v12648
    %v13105 = vpack.c.b16 %v12657, %v12649
    %v13106 = vpack.c.b16 %v12658, %v12650
    %v13107 = vpack.c.b16 %v12667, %v12659
    %v13108 = vpack.c.b16 %v12668, %v12660
    %v13109 = vpack.c.b16 %v12669, %v12661
    %v13110 = vpack.c.b16 %v12670, %v12662
    %v13111 = vpack.c.b16 %v12671, %v12663
    %v13112 = vpack.c.b16 %v12672, %v12664
    %v13113 = vpack.c.b16 %v12673, %v12665
    %v13114 = vpack.c.b16 %v12674, %v12666
    %v13115 = vpack.c.b16 %v12683, %v12675
    %v13116 = vpack.c.b16 %v12684, %v12676
    %v13117 = vpack.c.b16 %v12685, %v12677
    %v13118 = vpack.c.b16 %v12686, %v12678
    %v13119 = vpack.c.b16 %v12687, %v12679
    %v13120 = vpack.c.b16 %v12688, %v12680
    %v13121 = vpack.c.b16 %v12689, %v12681
    %v13122 = vpack.c.b16 %v12690, %v12682
    %v13123 = vpack.c.b16 %v12699, %v12691
    %v13124 = vpack.c.b16 %v12700, %v12692
    %v13125 = vpack.c.b16 %v12701, %v12693
    %v13126 = vpack.c.b16 %v12702, %v12694
    %v13127 = vpack.c.b16 %v12703, %v12695
    %v13128 = vpack.c.b16 %v12704, %v12696
    %v13129 = vpack.c.b16 %v12705, %v12697
    %v13130 = vpack.c.b16 %v12706, %v12698
    %v13131 = vpack.c.b16 %v12715, %v12707
    %v13132 = vpack.c.b16 %v12716, %v12708
    %v13133 = vpack.c.b16 %v12717, %v12709
    %v13134 = vpack.c.b16 %v12718, %v12710
    %v13135 = vpack.c.b16 %v12719, %v12711
    %v13136 = vpack.c.b16 %v12720, %v12712
    %v13137 = vpack.c.b16 %v12721, %v12713
    %v13138 = vpack.c.b16 %v12722, %v12714
    %v13139 = vpack.c.b16 %v12731, %v12723
    %v13140 = vpack.c.b16 %v12732, %v12724
    %v13141 = vpack.c.b16 %v12733, %v12725
    %v13142 = vpack.c.b16 %v12734, %v12726
    %v13143 = vpack.c.b16 %v12735, %v12727
    %v13144 = vpack.c.b16 %v12736, %v12728
    %v13145 = vpack.c.b16 %v12737, %v12729
    %v13146 = vpack.c.b16 %v12738, %v12730
    %v13147 = vpack.c.b16 %v12747, %v12739
    %v13148 = vpack.c.b16 %v12748, %v12740
    %v13149 = vpack.c.b16 %v12749, %v12741
    %v13150 = vpack.c.b16 %v12750, %v12742
    %v13151 = vpack.c.b16 %v12751, %v12743
    %v13152 = vpack.c.b16 %v12752, %v12744
    %v13153 = vpack.c.b16 %v12753, %v12745
    %v13154 = vpack.c.b16 %v12754, %v12746
    %v13155 = vpack.c.b16 %v12763, %v12755
    %v13156 = vpack.c.b16 %v12764, %v12756
    %v13157 = vpack.c.b16 %v12765, %v12757
    %v13158 = vpack.c.b16 %v12766, %v12758
    %v13159 = vpack.c.b16 %v12767, %v12759
    %v13160 = vpack.c.b16 %v12768, %v12760
    %v13161 = vpack.c.b16 %v12769, %v12761
    %v13162 = vpack.c.b16 %v12770, %v12762
    %v13163 = vpack.c.b16 %v12779, %v12771
    %v13164 = vpack.c.b16 %v12780, %v12772
    %v13165 = vpack.c.b16 %v12781, %v12773
    %v13166 = vpack.c.b16 %v12782, %v12774
    %v13167 = vpack.c.b16 %v12783, %v12775
    %v13168 = vpack.c.b16 %v12784, %v12776
    %v13169 = vpack.c.b16 %v12785, %v12777
    %v13170 = vpack.c.b16 %v12786, %v12778
    %13555 = vmatprep.subr.bf16.mxu0 %v12788
    %13556 = vmatpush1.bf16.msra.mxu0 %v12787
    %13557 = vmatprep.subr.bf16.mxu0 %v12796
    %13558 = vmatpush1.bf16.msra.mxu0 %v12795
    %13559 = vmatprep.subr.bf16.mxu0 %v12804
    %13560 = vmatpush1.bf16.msra.mxu0 %v12803
    %13561 = vmatprep.subr.bf16.mxu0 %v12812
    %13562 = vmatpush1.bf16.msra.mxu0 %v12811
    %13563 = vmatprep.subr.bf16.mxu0 %v12820
    %13564 = vmatpush1.bf16.msra.mxu0 %v12819
    %13565 = vmatprep.subr.bf16.mxu0 %v12828
    %13566 = vmatpush1.bf16.msra.mxu0 %v12827
    %13567 = vmatprep.subr.bf16.mxu0 %v12836
    %13568 = vmatpush1.bf16.msra.mxu0 %v12835
    %13569 = vmatprep.subr.bf16.mxu0 %v12844
    %13570 = vmatpush1.bf16.msra.mxu0 %v12843
    %13571 = vmatprep.subr.bf16.mxu0 %v12852
    %13572 = vmatpush1.bf16.msra.mxu0 %v12851
    %13573 = vmatprep.subr.bf16.mxu0 %v12860
    %13574 = vmatpush1.bf16.msra.mxu0 %v12859
    %13575 = vmatprep.subr.bf16.mxu0 %v12868
    %13576 = vmatpush1.bf16.msra.mxu0 %v12867
    %13577 = vmatprep.subr.bf16.mxu0 %v12876
    %13578 = vmatpush1.bf16.msra.mxu0 %v12875
    %13579 = vmatprep.subr.bf16.mxu0 %v12884
    %13580 = vmatpush1.bf16.msra.mxu0 %v12883
    %13581 = vmatprep.subr.bf16.mxu0 %v12892
    %13582 = vmatpush1.bf16.msra.mxu0 %v12891
    %13583 = vmatprep.subr.bf16.mxu0 %v12900
    %13584 = vmatpush1.bf16.msra.mxu0 %v12899
    %13585 = vmatprep.subr.bf16.mxu0 %v12908
    %13586 = vmatpush1.bf16.msra.mxu0 %v12907
    %13587 = vmatprep.mubr.bf16.mxu0 %v11204
    %13588 = vmatmul.mubr.bf16.gmra.mrb[0].mxu0 %v11203
    %v13589 = vpop.f32.mrb[0].mxu0
    %v13590 = vadd.f32 %v11598, %v13589
    %v13591 = vpop.f32.mrb[0].mxu0
    %v13592 = vadd.f32 %v11602, %v13591
    %v13593 = vpop.f32.mrb[0].mxu0
    %v13594 = vadd.f32 %v11598, %v13593
    %v13595 = vpop.f32.mrb[0].mxu0
    %v13596 = vadd.f32 %v11602, %v13595
    %13597 = vdwg.mxu0
    %13598 = vmatprep.subr.bf16.mxu0 %v12916
    %13599 = vmatpush1.bf16.msra.mxu0 %v12915
    %13600 = vmatprep.subr.bf16.mxu0 %v12924
    %13601 = vmatpush1.bf16.msra.mxu0 %v12923
    %13602 = vmatprep.subr.bf16.mxu0 %v12932
    %13603 = vmatpush1.bf16.msra.mxu0 %v12931
    %13604 = vmatprep.subr.bf16.mxu0 %v12940
    %13605 = vmatpush1.bf16.msra.mxu0 %v12939
    %13606 = vmatprep.subr.bf16.mxu0 %v12948
    %13607 = vmatpush1.bf16.msra.mxu0 %v12947
    %13608 = vmatprep.subr.bf16.mxu0 %v12956
    %13609 = vmatpush1.bf16.msra.mxu0 %v12955
    %13610 = vmatprep.subr.bf16.mxu0 %v12964
    %13611 = vmatpush1.bf16.msra.mxu0 %v12963
    %13612 = vmatprep.subr.bf16.mxu0 %v12972
    %13613 = vmatpush1.bf16.msra.mxu0 %v12971
    %13614 = vmatprep.subr.bf16.mxu0 %v12980
    %13615 = vmatpush1.bf16.msra.mxu0 %v12979
    %13616 = vmatprep.subr.bf16.mxu0 %v12988
    %13617 = vmatpush1.bf16.msra.mxu0 %v12987
    %13618 = vmatprep.subr.bf16.mxu0 %v12996
    %13619 = vmatpush1.bf16.msra.mxu0 %v12995
    %13620 = vmatprep.subr.bf16.mxu0 %v13004
    %13621 = vmatpush1.bf16.msra.mxu0 %v13003
    %13622 = vmatprep.subr.bf16.mxu0 %v13012
    %13623 = vmatpush1.bf16.msra.mxu0 %v13011
    %13624 = vmatprep.subr.bf16.mxu0 %v13020
    %13625 = vmatpush1.bf16.msra.mxu0 %v13019
    %13626 = vmatprep.subr.bf16.mxu0 %v13028
    %13627 = vmatpush1.bf16.msra.mxu0 %v13027
    %13628 = vmatprep.subr.bf16.mxu0 %v13036
    %13629 = vmatpush1.bf16.msra.mxu0 %v13035
    %13630 = vmatprep.mubr.bf16.mxu0 %v11206
    %13631 = vmatmul.mubr.bf16.gmra.mrb[0].mxu0 %v11205
    %v13632 = vpop.f32.mrb[0].mxu0
    %v13633 = vadd.f32 %v13590, %v13632
    %v13634 = vpop.f32.mrb[0].mxu0
    %v13635 = vadd.f32 %v13592, %v13634
    %v13636 = vpop.f32.mrb[0].mxu0
    %v13637 = vadd.f32 %v13594, %v13636
    %v13638 = vpop.f32.mrb[0].mxu0
    %v13639 = vadd.f32 %v13596, %v13638
    %13640 = vdwg.mxu0
    %13641 = vmatprep.subr.bf16.mxu0 %v13044
    %13642 = vmatpush1.bf16.msra.mxu0 %v13043
    %13643 = vmatprep.subr.bf16.mxu0 %v13052
    %13644 = vmatpush1.bf16.msra.mxu0 %v13051
    %13645 = vmatprep.subr.bf16.mxu0 %v13060
    %13646 = vmatpush1.bf16.msra.mxu0 %v13059
    %13647 = vmatprep.subr.bf16.mxu0 %v13068
    %13648 = vmatpush1.bf16.msra.mxu0 %v13067
    %13649 = vmatprep.subr.bf16.mxu0 %v13076
    %13650 = vmatpush1.bf16.msra.mxu0 %v13075
    %13651 = vmatprep.subr.bf16.mxu0 %v13084
    %13652 = vmatpush1.bf16.msra.mxu0 %v13083
    %13653 = vmatprep.subr.bf16.mxu0 %v13092
    %13654 = vmatpush1.bf16.msra.mxu0 %v13091
    %13655 = vmatprep.subr.bf16.mxu0 %v13100
    %13656 = vmatpush1.bf16.msra.mxu0 %v13099
    %13657 = vmatprep.subr.bf16.mxu0 %v13108
    %13658 = vmatpush1.bf16.msra.mxu0 %v13107
    %13659 = vmatprep.subr.bf16.mxu0 %v13116
    %13660 = vmatpush1.bf16.msra.mxu0 %v13115
    %13661 = vmatprep.subr.bf16.mxu0 %v13124
    %13662 = vmatpush1.bf16.msra.mxu0 %v13123
    %13663 = vmatprep.subr.bf16.mxu0 %v13132
    %13664 = vmatpush1.bf16.msra.mxu0 %v13131
    %13665 = vmatprep.subr.bf16.mxu0 %v13140
    %13666 = vmatpush1.bf16.msra.mxu0 %v13139
    %13667 = vmatprep.subr.bf16.mxu0 %v13148
    %13668 = vmatpush1.bf16.msra.mxu0 %v13147
    %13669 = vmatprep.subr.bf16.mxu0 %v13156
    %13670 = vmatpush1.bf16.msra.mxu0 %v13155
    %13671 = vmatprep.subr.bf16.mxu0 %v13164
    %13672 = vmatpush1.bf16.msra.mxu0 %v13163
    %13673 = vmatprep.mubr.bf16.mxu0 %v11208
    %13674 = vmatmul.mubr.bf16.gmra.mrb[0].mxu0 %v11207
    %v13675 = vpop.f32.mrb[0].mxu0
    %v13676 = vadd.f32 %v13633, %v13675
    %v13677 = vpop.f32.mrb[0].mxu0
    %v13678 = vadd.f32 %v13635, %v13677
    %v13679 = vpop.f32.mrb[0].mxu0
    %v13680 = vadd.f32 %v13637, %v13679
    %v13681 = vpop.f32.mrb[0].mxu0
    %v13682 = vadd.f32 %v13639, %v13681
    %13683 = vdwg.mxu0
    %13684 = vmatprep.subr.bf16.mxu0 %v12790
    %13685 = vmatpush1.bf16.msra.mxu0 %v12789
    %13686 = vmatprep.subr.bf16.mxu0 %v12798
    %13687 = vmatpush1.bf16.msra.mxu0 %v12797
    %13688 = vmatprep.subr.bf16.mxu0 %v12806
    %13689 = vmatpush1.bf16.msra.mxu0 %v12805
    %13690 = vmatprep.subr.bf16.mxu0 %v12814
    %13691 = vmatpush1.bf16.msra.mxu0 %v12813
    %13692 = vmatprep.subr.bf16.mxu0 %v12822
    %13693 = vmatpush1.bf16.msra.mxu0 %v12821
    %13694 = vmatprep.subr.bf16.mxu0 %v12830
    %13695 = vmatpush1.bf16.msra.mxu0 %v12829
    %13696 = vmatprep.subr.bf16.mxu0 %v12838
    %13697 = vmatpush1.bf16.msra.mxu0 %v12837
    %13698 = vmatprep.subr.bf16.mxu0 %v12846
    %13699 = vmatpush1.bf16.msra.mxu0 %v12845
    %13700 = vmatprep.subr.bf16.mxu0 %v12854
    %13701 = vmatpush1.bf16.msra.mxu0 %v12853
    %13702 = vmatprep.subr.bf16.mxu0 %v12862
    %13703 = vmatpush1.bf16.msra.mxu0 %v12861
    %13704 = vmatprep.subr.bf16.mxu0 %v12870
    %13705 = vmatpush1.bf16.msra.mxu0 %v12869
    %13706 = vmatprep.subr.bf16.mxu0 %v12878
    %13707 = vmatpush1.bf16.msra.mxu0 %v12877
    %13708 = vmatprep.subr.bf16.mxu0 %v12886
    %13709 = vmatpush1.bf16.msra.mxu0 %v12885
    %13710 = vmatprep.subr.bf16.mxu0 %v12894
    %13711 = vmatpush1.bf16.msra.mxu0 %v12893
    %13712 = vmatprep.subr.bf16.mxu0 %v12902
    %13713 = vmatpush1.bf16.msra.mxu0 %v12901
    %13714 = vmatprep.subr.bf16.mxu0 %v12910
    %13715 = vmatpush1.bf16.msra.mxu0 %v12909
    %13716 = vmatprep.mubr.bf16.mxu0 %v11204
    %13717 = vmatmul.mubr.bf16.gmra.mrb[0].mxu0 %v11203
    %v13718 = vpop.f32.mrb[0].mxu0
    %v13719 = vadd.f32 %v11606, %v13718
    %v13720 = vpop.f32.mrb[0].mxu0
    %v13721 = vadd.f32 %v11610, %v13720
    %v13722 = vpop.f32.mrb[0].mxu0
    %v13723 = vadd.f32 %v11606, %v13722
    %v13724 = vpop.f32.mrb[0].mxu0
    %v13725 = vadd.f32 %v11610, %v13724
    %13726 = vdwg.mxu0
    %13727 = vmatprep.subr.bf16.mxu0 %v12918
    %13728 = vmatpush1.bf16.msra.mxu0 %v12917
    %13729 = vmatprep.subr.bf16.mxu0 %v12926
    %13730 = vmatpush1.bf16.msra.mxu0 %v12925
    %13731 = vmatprep.subr.bf16.mxu0 %v12934
    %13732 = vmatpush1.bf16.msra.mxu0 %v12933
    %13733 = vmatprep.subr.bf16.mxu0 %v12942
    %13734 = vmatpush1.bf16.msra.mxu0 %v12941
    %13735 = vmatprep.subr.bf16.mxu0 %v12950
    %13736 = vmatpush1.bf16.msra.mxu0 %v12949
    %13737 = vmatprep.subr.bf16.mxu0 %v12958
    %13738 = vmatpush1.bf16.msra.mxu0 %v12957
    %13739 = vmatprep.subr.bf16.mxu0 %v12966
    %13740 = vmatpush1.bf16.msra.mxu0 %v12965
    %13741 = vmatprep.subr.bf16.mxu0 %v12974
    %13742 = vmatpush1.bf16.msra.mxu0 %v12973
    %13743 = vmatprep.subr.bf16.mxu0 %v12982
    %13744 = vmatpush1.bf16.msra.mxu0 %v12981
    %13745 = vmatprep.subr.bf16.mxu0 %v12990
    %13746 = vmatpush1.bf16.msra.mxu0 %v12989
    %13747 = vmatprep.subr.bf16.mxu0 %v12998
    %13748 = vmatpush1.bf16.msra.mxu0 %v12997
    %13749 = vmatprep.subr.bf16.mxu0 %v13006
    %13750 = vmatpush1.bf16.msra.mxu0 %v13005
    %13751 = vmatprep.subr.bf16.mxu0 %v13014
    %13752 = vmatpush1.bf16.msra.mxu0 %v13013
    %13753 = vmatprep.subr.bf16.mxu0 %v13022
    %13754 = vmatpush1.bf16.msra.mxu0 %v13021
    %13755 = vmatprep.subr.bf16.mxu0 %v13030
    %13756 = vmatpush1.bf16.msra.mxu0 %v13029
    %13757 = vmatprep.subr.bf16.mxu0 %v13038
    %13758 = vmatpush1.bf16.msra.mxu0 %v13037
    %13759 = vmatprep.mubr.bf16.mxu0 %v11206
    %13760 = vmatmul.mubr.bf16.gmra.mrb[0].mxu0 %v11205
    %v13761 = vpop.f32.mrb[0].mxu0
    %v13762 = vadd.f32 %v13719, %v13761
    %v13763 = vpop.f32.mrb[0].mxu0
    %v13764 = vadd.f32 %v13721, %v13763
    %v13765 = vpop.f32.mrb[0].mxu0
    %v13766 = vadd.f32 %v13723, %v13765
    %v13767 = vpop.f32.mrb[0].mxu0
    %v13768 = vadd.f32 %v13725, %v13767
    %13769 = vdwg.mxu0
    %13770 = vmatprep.subr.bf16.mxu0 %v13046
    %13771 = vmatpush1.bf16.msra.mxu0 %v13045
    %13772 = vmatprep.subr.bf16.mxu0 %v13054
    %13773 = vmatpush1.bf16.msra.mxu0 %v13053
    %13774 = vmatprep.subr.bf16.mxu0 %v13062
    %13775 = vmatpush1.bf16.msra.mxu0 %v13061
    %13776 = vmatprep.subr.bf16.mxu0 %v13070
    %13777 = vmatpush1.bf16.msra.mxu0 %v13069
    %13778 = vmatprep.subr.bf16.mxu0 %v13078
    %13779 = vmatpush1.bf16.msra.mxu0 %v13077
    %13780 = vmatprep.subr.bf16.mxu0 %v13086
    %13781 = vmatpush1.bf16.msra.mxu0 %v13085
    %13782 = vmatprep.subr.bf16.mxu0 %v13094
    %13783 = vmatpush1.bf16.msra.mxu0 %v13093
    %13784 = vmatprep.subr.bf16.mxu0 %v13102
    %13785 = vmatpush1.bf16.msra.mxu0 %v13101
    %13786 = vmatprep.subr.bf16.mxu0 %v13110
    %13787 = vmatpush1.bf16.msra.mxu0 %v13109
    %13788 = vmatprep.subr.bf16.mxu0 %v13118
    %13789 = vmatpush1.bf16.msra.mxu0 %v13117
    %13790 = vmatprep.subr.bf16.mxu0 %v13126
    %13791 = vmatpush1.bf16.msra.mxu0 %v13125
    %13792 = vmatprep.subr.bf16.mxu0 %v13134
    %13793 = vmatpush1.bf16.msra.mxu0 %v13133
    %13794 = vmatprep.subr.bf16.mxu0 %v13142
    %13795 = vmatpush1.bf16.msra.mxu0 %v13141
    %13796 = vmatprep.subr.bf16.mxu0 %v13150
    %13797 = vmatpush1.bf16.msra.mxu0 %v13149
    %13798 = vmatprep.subr.bf16.mxu0 %v13158
    %13799 = vmatpush1.bf16.msra.mxu0 %v13157
    %13800 = vmatprep.subr.bf16.mxu0 %v13166
    %13801 = vmatpush1.bf16.msra.mxu0 %v13165
    %13802 = vmatprep.mubr.bf16.mxu0 %v11208
    %13803 = vmatmul.mubr.bf16.gmra.mrb[0].mxu0 %v11207
    %v13804 = vpop.f32.mrb[0].mxu0
    %v13805 = vadd.f32 %v13762, %v13804
    %v13806 = vpop.f32.mrb[0].mxu0
    %v13807 = vadd.f32 %v13764, %v13806
    %v13808 = vpop.f32.mrb[0].mxu0
    %v13809 = vadd.f32 %v13766, %v13808
    %v13810 = vpop.f32.mrb[0].mxu0
    %v13811 = vadd.f32 %v13768, %v13810
    %13812 = vdwg.mxu0
    %13813 = vmatprep.subr.bf16.mxu0 %v12792
    %13814 = vmatpush1.bf16.msra.mxu0 %v12791
    %13815 = vmatprep.subr.bf16.mxu0 %v12800
    %13816 = vmatpush1.bf16.msra.mxu0 %v12799
    %13817 = vmatprep.subr.bf16.mxu0 %v12808
    %13818 = vmatpush1.bf16.msra.mxu0 %v12807
    %13819 = vmatprep.subr.bf16.mxu0 %v12816
    %13820 = vmatpush1.bf16.msra.mxu0 %v12815
    %13821 = vmatprep.subr.bf16.mxu0 %v12824
    %13822 = vmatpush1.bf16.msra.mxu0 %v12823
    %13823 = vmatprep.subr.bf16.mxu0 %v12832
    %13824 = vmatpush1.bf16.msra.mxu0 %v12831
    %13825 = vmatprep.subr.bf16.mxu0 %v12840
    %13826 = vmatpush1.bf16.msra.mxu0 %v12839
    %13827 = vmatprep.subr.bf16.mxu0 %v12848
    %13828 = vmatpush1.bf16.msra.mxu0 %v12847
    %13829 = vmatprep.subr.bf16.mxu0 %v12856
    %13830 = vmatpush1.bf16.msra.mxu0 %v12855
    %13831 = vmatprep.subr.bf16.mxu0 %v12864
    %13832 = vmatpush1.bf16.msra.mxu0 %v12863
    %13833 = vmatprep.subr.bf16.mxu0 %v12872
    %13834 = vmatpush1.bf16.msra.mxu0 %v12871
    %13835 = vmatprep.subr.bf16.mxu0 %v12880
    %13836 = vmatpush1.bf16.msra.mxu0 %v12879
    %13837 = vmatprep.subr.bf16.mxu0 %v12888
    %13838 = vmatpush1.bf16.msra.mxu0 %v12887
    %13839 = vmatprep.subr.bf16.mxu0 %v12896
    %13840 = vmatpush1.bf16.msra.mxu0 %v12895
    %13841 = vmatprep.subr.bf16.mxu0 %v12904
    %13842 = vmatpush1.bf16.msra.mxu0 %v12903
    %13843 = vmatprep.subr.bf16.mxu0 %v12912
    %13844 = vmatpush1.bf16.msra.mxu0 %v12911
    %13845 = vmatprep.mubr.bf16.mxu0 %v11204
    %13846 = vmatmul.mubr.bf16.gmra.mrb[0].mxu0 %v11203
    %v13847 = vpop.f32.mrb[0].mxu0
    %v13848 = vadd.f32 %v11614, %v13847
    %v13849 = vpop.f32.mrb[0].mxu0
    %v13850 = vadd.f32 %v11618, %v13849
    %v13851 = vpop.f32.mrb[0].mxu0
    %v13852 = vadd.f32 %v11614, %v13851
    %v13853 = vpop.f32.mrb[0].mxu0
    %v13854 = vadd.f32 %v11618, %v13853
    %13855 = vdwg.mxu0
    %13856 = vmatprep.subr.bf16.mxu0 %v12920
    %13857 = vmatpush1.bf16.msra.mxu0 %v12919
    %13858 = vmatprep.subr.bf16.mxu0 %v12928
    %13859 = vmatpush1.bf16.msra.mxu0 %v12927
    %13860 = vmatprep.subr.bf16.mxu0 %v12936
    %13861 = vmatpush1.bf16.msra.mxu0 %v12935
    %13862 = vmatprep.subr.bf16.mxu0 %v12944
    %13863 = vmatpush1.bf16.msra.mxu0 %v12943
    %13864 = vmatprep.subr.bf16.mxu0 %v12952
    %13865 = vmatpush1.bf16.msra.mxu0 %v12951
    %13866 = vmatprep.subr.bf16.mxu0 %v12960
    %13867 = vmatpush1.bf16.msra.mxu0 %v12959
    %13868 = vmatprep.subr.bf16.mxu0 %v12968
    %13869 = vmatpush1.bf16.msra.mxu0 %v12967
    %13870 = vmatprep.subr.bf16.mxu0 %v12976
    %13871 = vmatpush1.bf16.msra.mxu0 %v12975
    %13872 = vmatprep.subr.bf16.mxu0 %v12984
    %13873 = vmatpush1.bf16.msra.mxu0 %v12983
    %13874 = vmatprep.subr.bf16.mxu0 %v12992
    %13875 = vmatpush1.bf16.msra.mxu0 %v12991
    %13876 = vmatprep.subr.bf16.mxu0 %v13000
    %13877 = vmatpush1.bf16.msra.mxu0 %v12999
    %13878 = vmatprep.subr.bf16.mxu0 %v13008
    %13879 = vmatpush1.bf16.msra.mxu0 %v13007
    %13880 = vmatprep.subr.bf16.mxu0 %v13016
    %13881 = vmatpush1.bf16.msra.mxu0 %v13015
    %13882 = vmatprep.subr.bf16.mxu0 %v13024
    %13883 = vmatpush1.bf16.msra.mxu0 %v13023
    %13884 = vmatprep.subr.bf16.mxu0 %v13032
    %13885 = vmatpush1.bf16.msra.mxu0 %v13031
    %13886 = vmatprep.subr.bf16.mxu0 %v13040
    %13887 = vmatpush1.bf16.msra.mxu0 %v13039
    %13888 = vmatprep.mubr.bf16.mxu0 %v11206
    %13889 = vmatmul.mubr.bf16.gmra.mrb[0].mxu0 %v11205
    %v13890 = vpop.f32.mrb[0].mxu0
    %v13891 = vadd.f32 %v13848, %v13890
    %v13892 = vpop.f32.mrb[0].mxu0
    %v13893 = vadd.f32 %v13850, %v13892
    %v13894 = vpop.f32.mrb[0].mxu0
    %v13895 = vadd.f32 %v13852, %v13894
    %v13896 = vpop.f32.mrb[0].mxu0
    %v13897 = vadd.f32 %v13854, %v13896
    %13898 = vdwg.mxu0
    %13899 = vmatprep.subr.bf16.mxu0 %v13048
    %13900 = vmatpush1.bf16.msra.mxu0 %v13047
    %13901 = vmatprep.subr.bf16.mxu0 %v13056
    %13902 = vmatpush1.bf16.msra.mxu0 %v13055
    %13903 = vmatprep.subr.bf16.mxu0 %v13064
    %13904 = vmatpush1.bf16.msra.mxu0 %v13063
    %13905 = vmatprep.subr.bf16.mxu0 %v13072
    %13906 = vmatpush1.bf16.msra.mxu0 %v13071
    %13907 = vmatprep.subr.bf16.mxu0 %v13080
    %13908 = vmatpush1.bf16.msra.mxu0 %v13079
    %13909 = vmatprep.subr.bf16.mxu0 %v13088
    %13910 = vmatpush1.bf16.msra.mxu0 %v13087
    %13911 = vmatprep.subr.bf16.mxu0 %v13096
    %13912 = vmatpush1.bf16.msra.mxu0 %v13095
    %13913 = vmatprep.subr.bf16.mxu0 %v13104
    %13914 = vmatpush1.bf16.msra.mxu0 %v13103
    %13915 = vmatprep.subr.bf16.mxu0 %v13112
    %13916 = vmatpush1.bf16.msra.mxu0 %v13111
    %13917 = vmatprep.subr.bf16.mxu0 %v13120
    %13918 = vmatpush1.bf16.msra.mxu0 %v13119
    %13919 = vmatprep.subr.bf16.mxu0 %v13128
    %13920 = vmatpush1.bf16.msra.mxu0 %v13127
    %13921 = vmatprep.subr.bf16.mxu0 %v13136
    %13922 = vmatpush1.bf16.msra.mxu0 %v13135
    %13923 = vmatprep.subr.bf16.mxu0 %v13144
    %13924 = vmatpush1.bf16.msra.mxu0 %v13143
    %13925 = vmatprep.subr.bf16.mxu0 %v13152
    %13926 = vmatpush1.bf16.msra.mxu0 %v13151
    %13927 = vmatprep.subr.bf16.mxu0 %v13160
    %13928 = vmatpush1.bf16.msra.mxu0 %v13159
    %13929 = vmatprep.subr.bf16.mxu0 %v13168
    %13930 = vmatpush1.bf16.msra.mxu0 %v13167
    %13931 = vmatprep.mubr.bf16.mxu0 %v11208
    %13932 = vmatmul.mubr.bf16.gmra.mrb[0].mxu0 %v11207
    %v13933 = vpop.f32.mrb[0].mxu0
    %v13934 = vadd.f32 %v13891, %v13933
    %v13935 = vpop.f32.mrb[0].mxu0
    %v13936 = vadd.f32 %v13893, %v13935
    %v13937 = vpop.f32.mrb[0].mxu0
    %v13938 = vadd.f32 %v13895, %v13937
    %v13939 = vpop.f32.mrb[0].mxu0
    %v13940 = vadd.f32 %v13897, %v13939
    %13941 = vdwg.mxu0
    %13942 = vmatprep.subr.bf16.mxu0 %v12794
    %13943 = vmatpush1.bf16.msra.mxu0 %v12793
    %13944 = vmatprep.subr.bf16.mxu0 %v12802
    %13945 = vmatpush1.bf16.msra.mxu0 %v12801
    %13946 = vmatprep.subr.bf16.mxu0 %v12810
    %13947 = vmatpush1.bf16.msra.mxu0 %v12809
    %13948 = vmatprep.subr.bf16.mxu0 %v12818
    %13949 = vmatpush1.bf16.msra.mxu0 %v12817
    %13950 = vmatprep.subr.bf16.mxu0 %v12826
    %13951 = vmatpush1.bf16.msra.mxu0 %v12825
    %13952 = vmatprep.subr.bf16.mxu0 %v12834
    %13953 = vmatpush1.bf16.msra.mxu0 %v12833
    %13954 = vmatprep.subr.bf16.mxu0 %v12842
    %13955 = vmatpush1.bf16.msra.mxu0 %v12841
    %13956 = vmatprep.subr.bf16.mxu0 %v12850
    %13957 = vmatpush1.bf16.msra.mxu0 %v12849
    %13958 = vmatprep.subr.bf16.mxu0 %v12858
    %13959 = vmatpush1.bf16.msra.mxu0 %v12857
    %13960 = vmatprep.subr.bf16.mxu0 %v12866
    %13961 = vmatpush1.bf16.msra.mxu0 %v12865
    %13962 = vmatprep.subr.bf16.mxu0 %v12874
    %13963 = vmatpush1.bf16.msra.mxu0 %v12873
    %13964 = vmatprep.subr.bf16.mxu0 %v12882
    %13965 = vmatpush1.bf16.msra.mxu0 %v12881
    %13966 = vmatprep.subr.bf16.mxu0 %v12890
    %13967 = vmatpush1.bf16.msra.mxu0 %v12889
    %13968 = vmatprep.subr.bf16.mxu0 %v12898
    %13969 = vmatpush1.bf16.msra.mxu0 %v12897
    %13970 = vmatprep.subr.bf16.mxu0 %v12906
    %13971 = vmatpush1.bf16.msra.mxu0 %v12905
    %13972 = vmatprep.subr.bf16.mxu0 %v12914
    %13973 = vmatpush1.bf16.msra.mxu0 %v12913
    %13974 = vmatprep.mubr.bf16.mxu0 %v11204
    %13975 = vmatmul.mubr.bf16.gmra.mrb[0].mxu0 %v11203
    %v13976 = vpop.f32.mrb[0].mxu0
    %v13977 = vadd.f32 %v11622, %v13976
    %v13978 = vpop.f32.mrb[0].mxu0
    %v13979 = vadd.f32 %v11626, %v13978
    %v13980 = vpop.f32.mrb[0].mxu0
    %v13981 = vadd.f32 %v11622, %v13980
    %v13982 = vpop.f32.mrb[0].mxu0
    %v13983 = vadd.f32 %v11626, %v13982
    %13984 = vdwg.mxu0
    %13985 = vmatprep.subr.bf16.mxu0 %v12922
    %13986 = vmatpush1.bf16.msra.mxu0 %v12921
    %13987 = vmatprep.subr.bf16.mxu0 %v12930
    %13988 = vmatpush1.bf16.msra.mxu0 %v12929
    %13989 = vmatprep.subr.bf16.mxu0 %v12938
    %13990 = vmatpush1.bf16.msra.mxu0 %v12937
    %13991 = vmatprep.subr.bf16.mxu0 %v12946
    %13992 = vmatpush1.bf16.msra.mxu0 %v12945
    %13993 = vmatprep.subr.bf16.mxu0 %v12954
    %13994 = vmatpush1.bf16.msra.mxu0 %v12953
    %13995 = vmatprep.subr.bf16.mxu0 %v12962
    %13996 = vmatpush1.bf16.msra.mxu0 %v12961
    %13997 = vmatprep.subr.bf16.mxu0 %v12970
    %13998 = vmatpush1.bf16.msra.mxu0 %v12969
    %13999 = vmatprep.subr.bf16.mxu0 %v12978
    %14000 = vmatpush1.bf16.msra.mxu0 %v12977
    %14001 = vmatprep.subr.bf16.mxu0 %v12986
    %14002 = vmatpush1.bf16.msra.mxu0 %v12985
    %14003 = vmatprep.subr.bf16.mxu0 %v12994
    %14004 = vmatpush1.bf16.msra.mxu0 %v12993
    %14005 = vmatprep.subr.bf16.mxu0 %v13002
    %14006 = vmatpush1.bf16.msra.mxu0 %v13001
    %14007 = vmatprep.subr.bf16.mxu0 %v13010
    %14008 = vmatpush1.bf16.msra.mxu0 %v13009
    %14009 = vmatprep.subr.bf16.mxu0 %v13018
    %14010 = vmatpush1.bf16.msra.mxu0 %v13017
    %14011 = vmatprep.subr.bf16.mxu0 %v13026
    %14012 = vmatpush1.bf16.msra.mxu0 %v13025
    %14013 = vmatprep.subr.bf16.mxu0 %v13034
    %14014 = vmatpush1.bf16.msra.mxu0 %v13033
    %14015 = vmatprep.subr.bf16.mxu0 %v13042
    %14016 = vmatpush1.bf16.msra.mxu0 %v13041
    %14017 = vmatprep.mubr.bf16.mxu0 %v11206
    %14018 = vmatmul.mubr.bf16.gmra.mrb[0].mxu0 %v11205
    %v14019 = vpop.f32.mrb[0].mxu0
    %v14020 = vadd.f32 %v13977, %v14019
    %v14021 = vpop.f32.mrb[0].mxu0
    %v14022 = vadd.f32 %v13979, %v14021
    %v14023 = vpop.f32.mrb[0].mxu0
    %v14024 = vadd.f32 %v13981, %v14023
    %v14025 = vpop.f32.mrb[0].mxu0
    %v14026 = vadd.f32 %v13983, %v14025
    %14027 = vdwg.mxu0
    %14028 = vmatprep.subr.bf16.mxu0 %v13050
    %14029 = vmatpush1.bf16.msra.mxu0 %v13049
    %14030 = vmatprep.subr.bf16.mxu0 %v13058
    %14031 = vmatpush1.bf16.msra.mxu0 %v13057
    %14032 = vmatprep.subr.bf16.mxu0 %v13066
    %14033 = vmatpush1.bf16.msra.mxu0 %v13065
    %14034 = vmatprep.subr.bf16.mxu0 %v13074
    %14035 = vmatpush1.bf16.msra.mxu0 %v13073
    %14036 = vmatprep.subr.bf16.mxu0 %v13082
    %14037 = vmatpush1.bf16.msra.mxu0 %v13081
    %14038 = vmatprep.subr.bf16.mxu0 %v13090
    %14039 = vmatpush1.bf16.msra.mxu0 %v13089
    %14040 = vmatprep.subr.bf16.mxu0 %v13098
    %14041 = vmatpush1.bf16.msra.mxu0 %v13097
    %14042 = vmatprep.subr.bf16.mxu0 %v13106
    %14043 = vmatpush1.bf16.msra.mxu0 %v13105
    %14044 = vmatprep.subr.bf16.mxu0 %v13114
    %14045 = vmatpush1.bf16.msra.mxu0 %v13113
    %14046 = vmatprep.subr.bf16.mxu0 %v13122
    %14047 = vmatpush1.bf16.msra.mxu0 %v13121
    %14048 = vmatprep.subr.bf16.mxu0 %v13130
    %14049 = vmatpush1.bf16.msra.mxu0 %v13129
    %14050 = vmatprep.subr.bf16.mxu0 %v13138
    %14051 = vmatpush1.bf16.msra.mxu0 %v13137
    %14052 = vmatprep.subr.bf16.mxu0 %v13146
    %14053 = vmatpush1.bf16.msra.mxu0 %v13145
    %14054 = vmatprep.subr.bf16.mxu0 %v13154
    %14055 = vmatpush1.bf16.msra.mxu0 %v13153
    %14056 = vmatprep.subr.bf16.mxu0 %v13162
    %14057 = vmatpush1.bf16.msra.mxu0 %v13161
    %14058 = vmatprep.subr.bf16.mxu0 %v13170
    %14059 = vmatpush1.bf16.msra.mxu0 %v13169
    %14060 = vmatprep.mubr.bf16.mxu0 %v11208
    %14061 = vmatmul.mubr.bf16.gmra.mrb[0].mxu0 %v11207
    %v14062 = vpop.f32.mrb[0].mxu0
    %v14063 = vadd.f32 %v14020, %v14062
    %v14064 = vpop.f32.mrb[0].mxu0
    %v14065 = vadd.f32 %v14022, %v14064
    %v14066 = vpop.f32.mrb[0].mxu0
    %v14067 = vadd.f32 %v14024, %v14066
    %v14068 = vpop.f32.mrb[0].mxu0
    %v14069 = vadd.f32 %v14026, %v14068
    %14070 = vdwg.mxu0
    %14071 = vst [vmem:[#allocation15] sm:$0xff] %v13676
    %14072 = vst [vmem:[#allocation15 + $0x8] sm:$0xff] %v13678
    %14073 = vst [vmem:[#allocation15 + $0x10] sm:$0xff] %v13805
    %14074 = vst [vmem:[#allocation15 + $0x18] sm:$0xff] %v13807
    %14075 = vst [vmem:[#allocation15 + $0x20] sm:$0xff] %v13934
    %14076 = vst [vmem:[#allocation15 + $0x28] sm:$0xff] %v13936
    %14077 = vst [vmem:[#allocation15 + $0x30] sm:$0xff] %v14063
    %14078 = vst [vmem:[#allocation15 + $0x38] sm:$0xff] %v14065
    %14079 = vst [vmem:[#allocation15 + $0x40] sm:$0xff] %v13680
    %14080 = vst [vmem:[#allocation15 + $0x48] sm:$0xff] %v13682
    %14081 = vst [vmem:[#allocation15 + $0x50] sm:$0xff] %v13809
    %14082 = vst [vmem:[#allocation15 + $0x58] sm:$0xff] %v13811
    %14083 = vst [vmem:[#allocation15 + $0x60] sm:$0xff] %v13938
    %14084 = vst [vmem:[#allocation15 + $0x68] sm:$0xff] %v13940
    %14085 = vst [vmem:[#allocation15 + $0x70] sm:$0xff] %v14067
    %14086 = vst [vmem:[#allocation15 + $0x78] sm:$0xff] %v14069
    // Predicated region
    $region58: #{tpu_custom_call.1} parent=1 // pred_check
      _
    $region59: #{tpu_custom_call.1} parent=1 // pred_check_branch
      %14088 = sbr.rel (0) target = $region61
    $region60: #{tpu_custom_call.1} parent=1 // pred_region
      %s14090 = ssub.s32 2048, 2048
      %14091 = vsyncadd [#allocation5], %s14090
      %s14092 = sshll.u32 [#allocation15], 4
      %s14093 = int_to_ptr.vmem [resolvable:$true] %s14092
      %14098 = dma.vmem_to_hbm [thread:$0]  %s14093, 2048, %s7, [#allocation5], 1024, 1024, 64
    $region61: #{tpu_custom_call.1} parent=1 // pred_fallthru
      _
    // Predicated region
    $region62: #{tpu_custom_call.1} parent=1 // pred_check
      _
    $region63: #{tpu_custom_call.1} parent=1 // pred_check_branch
      %14100 = sbr.rel (0) target = $region65
    $region64: #{tpu_custom_call.1} parent=1 // pred_region
      %14101 = dma.done [#allocation5], 2048
    $region65: #{tpu_custom_call.1} parent=1 // pred_fallthru
      _
    %14102 = vsyncpa [#allocation4], 1
    %14103 = vsyncpa [#allocation7], 1
    %14104 = vsyncpa [#allocation10], 1
    %14105 = vsyncpa [#allocation13], 1
    %14106 = vsyncpa [#allocation5], 1

</llo_original>
